<compile_context>
chip_gen: v7x
topology: tpu7x:2x2x1
jax: 0.10.0
libtpu: 0.0.40
codegen_flags: <defaults>
</compile_context>

<pallas_src>
import jax
import jax.numpy as jnp
from jax.experimental import pallas as pl
from jax.experimental.pallas import tpu as pltpu

RGB_MEAN = jnp.array([0.4488, 0.4371, 0.4040], dtype=jnp.float32)

# Stay well inside v7x's 64 MiB physical VMEM; plenty for v5e/v6e too.
_VMEM_LIMIT = 48 * 1024 * 1024


# ----------------------------------------------------------------------------
# Pallas kernels
# ----------------------------------------------------------------------------
def gemm_bias_relu_kernel(x_ref, w_ref, b_ref, o_ref):
    """One matmul + bias + ReLU.  x:(M,K) bf16, w:(K,Cout) bf16, b:(1,Cout) f32."""
    acc = jnp.dot(x_ref[...], w_ref[...], preferred_element_type=jnp.float32)
    o_ref[...] = jnp.maximum(acc + b_ref[...], 0.0).astype(o_ref.dtype)


def make_conv3x3_gemm_kernel(Mp, Wp, Cin):
    """3x3 conv as a single K=9*Cin matmul; patches built in VMEM.

    g_ref:     (L, Cin) bf16  flattened zero-padded image with Wp+1 extra zero
                              rows top/bottom (L = Mp + 2*Wp + 2, Mp = Hp*Wp).
    w_ref:     (9*Cin, Cout) bf16
    b_ref:     (1, Cout) f32
    o_ref:     (Mp, Cout) f32  conv output on the padded (Hp, Wp) grid
                               (interior rows are the valid outputs).
    patch_ref: (Mp, 9*Cin) bf16 VMEM scratch (im2col lives only in VMEM).
    """
    def kernel(g_ref, w_ref, b_ref, o_ref, patch_ref):
        # Upcast once so the unaligned row-shifted slices below are plain f32
        # sublane slices (avoids packed-dtype shuffles); cast back to bf16
        # at the aligned scratch stores.
        g = g_ref[...].astype(jnp.float32)
        for t in range(9):                       # static unroll, 9 taps
            off = (t // 3) * Wp + (t % 3)        # tap (dy,dx) = row shift dy*Wp+dx
            patch_ref[:, t * Cin:(t + 1) * Cin] = (
                g[off:off + Mp, :].astype(jnp.bfloat16))
        acc = jnp.dot(patch_ref[...], w_ref[...],
                      preferred_element_type=jnp.float32)
        o_ref[...] = jnp.maximum(acc + b_ref[...], 0.0).astype(o_ref.dtype)
    return kernel


def maxpool4_kernel(a_ref, b_ref, c_ref, d_ref, o_ref):
    """2x2/stride-2 max pool; the 4 window positions arrive as separate refs."""
    o_ref[...] = jnp.maximum(jnp.maximum(a_ref[...], b_ref[...]),
                             jnp.maximum(c_ref[...], d_ref[...]))


# ----------------------------------------------------------------------------
# Wrappers (padding / flattening / slicing glue stays in plain JAX)
# ----------------------------------------------------------------------------
def conv3x3_relu_first(x, w, b):
    """First conv (Cin=3). Wrapper-side patch build, K padded 27 -> 32.

    x: (N,H,W,3) f32 (already mean-shifted), w: (3,3,3,Cout), b: (Cout,).
    """
    N, H, W, Cin = x.shape
    Cout = w.shape[-1]
    HW = H * W
    K = 9 * Cin
    Kpad = 32  # lane-align the contraction; never expose a lane dim of 3

    xp = jnp.pad(x, ((0, 0), (1, 1), (1, 1), (0, 0)))
    taps = jnp.concatenate(
        [xp[:, dy:dy + H, dx:dx + W, :] for dy in range(3) for dx in range(3)],
        axis=-1)                                          # (N, H, W, 27)
    taps = taps.reshape(N, HW, K)
    taps = jnp.pad(taps, ((0, 0), (0, 0), (0, Kpad - K))).astype(jnp.bfloat16)
    wk = jnp.pad(w.reshape(K, Cout), ((0, Kpad - K), (0, 0))).astype(jnp.bfloat16)
    b2 = b.reshape(1, Cout).astype(jnp.float32)

    out = pl.pallas_call(
        gemm_bias_relu_kernel,
        out_shape=jax.ShapeDtypeStruct((N, HW, Cout), jnp.float32),
        grid=(N,),
        in_specs=[
            pl.BlockSpec((None, HW, Kpad), lambda n: (n, 0, 0)),
            pl.BlockSpec((Kpad, Cout), lambda n: (0, 0)),
            pl.BlockSpec((1, Cout), lambda n: (0, 0)),
        ],
        out_specs=pl.BlockSpec((None, HW, Cout), lambda n: (n, 0, 0)),
        compiler_params=pltpu.CompilerParams(
            dimension_semantics=("parallel",),
            vmem_limit_bytes=_VMEM_LIMIT),
    )(taps, wk, b2)
    return out.reshape(N, H, W, Cout)


def conv3x3_relu(x, w, b):
    """3x3 conv + ReLU, zero pad 1 (PyTorch Conv2d(pad=1) semantics).

    x: (N,H,W,Cin) f32, w: (3,3,Cin,Cout) HWIO, b: (Cout,).
    Compact padded-flat layout: only ~1.3x (border) extra rows in HBM instead
    of a 9x im2col copy; the 9-way replication happens in VMEM only.
    """
    N, H, W, Cin = x.shape
    Cout = w.shape[-1]
    Hp, Wp = H + 2, W + 2
    Mp = Hp * Wp
    E = Wp + 1                     # guard rows so every tap is a valid slice
    L = Mp + 2 * E

    g = jnp.pad(x, ((0, 0), (1, 1), (1, 1), (0, 0)))      # zero pad (PyTorch)
    g = g.reshape(N, Mp, Cin)
    g = jnp.pad(g, ((0, 0), (E, E), (0, 0))).astype(jnp.bfloat16)   # (N, L, Cin)

    w9 = w.reshape(9 * Cin, Cout).astype(jnp.bfloat16)    # tap-major, matches kernel
    b2 = b.reshape(1, Cout).astype(jnp.float32)

    # TODO(synk): for large TTSR inputs, add an M-tile grid axis with halo'd
    # G rows (manual DMA) instead of one whole image per grid step.
    out = pl.pallas_call(
        make_conv3x3_gemm_kernel(Mp, Wp, Cin),
        out_shape=jax.ShapeDtypeStruct((N, Mp, Cout), jnp.float32),
        grid=(N,),
        in_specs=[
            pl.BlockSpec((None, L, Cin), lambda n: (n, 0, 0)),
            pl.BlockSpec((9 * Cin, Cout), lambda n: (0, 0)),
            pl.BlockSpec((1, Cout), lambda n: (0, 0)),
        ],
        out_specs=pl.BlockSpec((None, Mp, Cout), lambda n: (n, 0, 0)),
        scratch_shapes=[pltpu.VMEM((Mp, 9 * Cin), jnp.bfloat16)],
        compiler_params=pltpu.CompilerParams(
            dimension_semantics=("parallel",),
            vmem_limit_bytes=_VMEM_LIMIT),
    )(g, w9, b2)
    # Valid conv outputs are the interior of the padded (Hp, Wp) grid.
    return out.reshape(N, Hp, Wp, Cout)[:, 1:H + 1, 1:W + 1, :]


def maxpool2x2(x):
    """x: (N,H,W,C) -> (N,H/2,W/2,C), kernel 2, stride 2 (VGG MaxPool2d)."""
    N, H, W, C = x.shape
    H2, W2 = H // 2, W // 2
    # The 4 window positions as cheap XLA strided slices (no transpose copy).
    p00 = x[:, 0::2, 0::2, :]
    p01 = x[:, 0::2, 1::2, :]
    p10 = x[:, 1::2, 0::2, :]
    p11 = x[:, 1::2, 1::2, :]
    spec = pl.BlockSpec((None, H2, W2, C), lambda n: (n, 0, 0, 0))
    return pl.pallas_call(
        maxpool4_kernel,
        out_shape=jax.ShapeDtypeStruct((N, H2, W2, C), x.dtype),
        grid=(N,),
        in_specs=[spec, spec, spec, spec],
        out_specs=spec,
        compiler_params=pltpu.CompilerParams(
            dimension_semantics=("parallel",),
            vmem_limit_bytes=_VMEM_LIMIT),
    )(p00, p01, p10, p11)


# ----------------------------------------------------------------------------
# LTE parameters (deterministic synthetic init; shapes = VGG19 features 0..11)
# ----------------------------------------------------------------------------
def init_lte_params(key):
    def conv_init(k, cin, cout):
        kw, kb = jax.random.split(k)
        fan_in = 3 * 3 * cin
        w = jax.random.normal(kw, (3, 3, cin, cout), jnp.float32) * (2.0 / fan_in) ** 0.5
        b = jax.random.normal(kb, (cout,), jnp.float32) * 0.01
        return w, b

    ks = jax.random.split(key, 5)
    p = {}
    p["w1_1"], p["b1_1"] = conv_init(ks[0], 3, 64)      # vgg features[0]
    p["w1_2"], p["b1_2"] = conv_init(ks[1], 64, 64)     # vgg features[2]
    p["w2_1"], p["b2_1"] = conv_init(ks[2], 64, 128)    # vgg features[5]
    p["w2_2"], p["b2_2"] = conv_init(ks[3], 128, 128)   # vgg features[7]
    p["w3_1"], p["b3_1"] = conv_init(ks[4], 128, 256)   # vgg features[10]
    return p


# ----------------------------------------------------------------------------
# Forward
# ----------------------------------------------------------------------------
@jax.jit
def lte_forward(x_nchw, params):
    # layout: input NCHW (PyTorch), compute in NHWC, outputs returned as NCHW.
    x = jnp.transpose(x_nchw, (0, 2, 3, 1)).astype(jnp.float32)

    # sub_mean (MeanShift, sign=-1) folded into conv1_1's input prep: exact,
    # since the reference zero-pads the already-shifted input.
    x = x - RGB_MEAN
    x = conv3x3_relu_first(x, params["w1_1"], params["b1_1"])   # slice1
    x_lv1 = x
    # TODO(synk): the reference calls self.add_mean (a 3->3 channel MeanShift)
    # on 64/128/256-channel features, which is ill-defined and would raise in
    # PyTorch; we return the slice activations directly (original TTSR LTE).

    x = conv3x3_relu(x, params["w1_2"], params["b1_2"])         # slice2
    x = maxpool2x2(x)
    x = conv3x3_relu(x, params["w2_1"], params["b2_1"])
    x_lv2 = x

    x = conv3x3_relu(x, params["w2_2"], params["b2_2"])         # slice3
    x = maxpool2x2(x)
    x = conv3x3_relu(x, params["w3_1"], params["b3_1"])
    x_lv3 = x

    to_nchw = lambda t: jnp.transpose(t, (0, 3, 1, 2))
    return to_nchw(x_lv1), to_nchw(x_lv2), to_nchw(x_lv3)


# ----------------------------------------------------------------------------
# Pure-JAX f32 reference (for a loose parity check against bf16 kernels)
# ----------------------------------------------------------------------------
def reference_forward(x_nchw, params):
    x = jnp.transpose(x_nchw, (0, 2, 3, 1)).astype(jnp.float32) - RGB_MEAN
    dn = ("NHWC", "HWIO", "NHWC")

    def conv(t, w, b):
        y = jax.lax.conv_general_dilated(t, w, (1, 1), "SAME",
                                         dimension_numbers=dn) + b
        return jax.nn.relu(y)

    def pool(t):
        return jax.lax.reduce_window(t, -jnp.inf, jax.lax.max,
                                     (1, 2, 2, 1), (1, 2, 2, 1), "VALID")

    x = conv(x, params["w1_1"], params["b1_1"]); lv1 = x
    x = conv(x, params["w1_2"], params["b1_2"]); x = pool(x)
    x = conv(x, params["w2_1"], params["b2_1"]); lv2 = x
    x = conv(x, params["w2_2"], params["b2_2"]); x = pool(x)
    x = conv(x, params["w3_1"], params["b3_1"]); lv3 = x
    t = lambda a: jnp.transpose(a, (0, 3, 1, 2))
    return t(lv1), t(lv2), t(lv3)


if __name__ == "__main__":
    key = jax.random.PRNGKey(0)
    k_params, k_x = jax.random.split(key)

    params = init_lte_params(k_params)
    x = jax.random.uniform(k_x, (2, 3, 16, 16), dtype=jnp.float32)  # NCHW RGB in [0,1]

    outs = lte_forward(x, params)
    jax.block_until_ready(outs)
    x_lv1, x_lv2, x_lv3 = outs

    assert x_lv1.shape == (2, 64, 16, 16), x_lv1.shape
    assert x_lv2.shape == (2, 128, 8, 8), x_lv2.shape
    assert x_lv3.shape == (2, 256, 4, 4), x_lv3.shape
    assert all(bool(jnp.all(jnp.isfinite(o))) for o in outs)

    # Loose parity check vs. an f32 XLA reference (kernels use bf16 operands).
    refs = reference_forward(x, params)
    for got, ref in zip(outs, refs):
        err = float(jnp.max(jnp.abs(got - ref)))
        scale = float(jnp.max(jnp.abs(ref))) + 1.0
        assert err <= 0.1 * scale, (err, scale)

    print("KERNEL_OK")
</pallas_src>

<mosaic_0001>
module attributes {stable_mosaic.version = 11 : i64} {
  func.func @gemm_bias_relu_kernel(%arg0: i32, %arg1: memref<1x256x32xbf16, #tpu.memory_space<vmem>>, %arg2: memref<32x64xbf16, #tpu.memory_space<vmem>>, %arg3: memref<1x64xf32, #tpu.memory_space<vmem>>, %arg4: memref<1x256x64xf32, #tpu.memory_space<vmem>>) attributes {dimension_semantics = [#tpu.dimension_semantics<parallel>], iteration_bounds = array<i64: 2>, scalar_prefetch = 0 : i64, scratch_operands = 0 : i64, tpu.core_type = #tpu.core_type<tc>, window_params = [{transform_indices = @transform_0, window_bounds = array<i64: 1, 256, 32>}, {pipeline_mode = #tpu.pipeline_mode<synchronous>, transform_indices = @transform_1, window_bounds = array<i64: 32, 64>}, {pipeline_mode = #tpu.pipeline_mode<synchronous>, transform_indices = @transform_2, window_bounds = array<i64: 1, 64>}, {transform_indices = @transform_3, window_bounds = array<i64: 1, 256, 64>}]} {
    %c0 = arith.constant 0 : index
    %c0_0 = arith.constant 0 : index
    %c0_1 = arith.constant 0 : index
    %0 = vector.load %arg1[%c0, %c0_0, %c0_1] : memref<1x256x32xbf16, #tpu.memory_space<vmem>>, vector<1x256x32xbf16>
    %1 = vector.shape_cast %0 : vector<1x256x32xbf16> to vector<256x32xbf16>
    %c0_2 = arith.constant 0 : index
    %c0_3 = arith.constant 0 : index
    %2 = vector.load %arg2[%c0_2, %c0_3] : memref<32x64xbf16, #tpu.memory_space<vmem>>, vector<32x64xbf16>
    %cst = arith.constant dense<0.000000e+00> : vector<256x64xf32>
    %3 = tpu.matmul %1, %2, %cst {dimension_numbers = #tpu.dot_dimension_numbers<[1], [0], [0], [1], [0, 0, 1, 1], [], []>} : vector<256x32xbf16>, vector<32x64xbf16>, vector<256x64xf32> -> vector<256x64xf32>
    %c0_4 = arith.constant 0 : index
    %c0_5 = arith.constant 0 : index
    %4 = vector.load %arg3[%c0_4, %c0_5] : memref<1x64xf32, #tpu.memory_space<vmem>>, vector<1x64xf32>
    %5 = vector.broadcast %4 : vector<1x64xf32> to vector<256x64xf32>
    %6 = arith.addf %3, %5 : vector<256x64xf32>
    %cst_6 = arith.constant 0.000000e+00 : f32
    %7 = vector.broadcast %cst_6 : f32 to vector<256x64xf32>
    %8 = arith.maximumf %6, %7 : vector<256x64xf32>
    %c0_7 = arith.constant 0 : index
    %c0_8 = arith.constant 0 : index
    %c0_9 = arith.constant 0 : index
    %9 = vector.load %arg4[%c0_7, %c0_8, %c0_9] : memref<1x256x64xf32, #tpu.memory_space<vmem>>, vector<1x256x64xf32>
    %10 = vector.shape_cast %9 : vector<1x256x64xf32> to vector<256x64xf32>
    %11 = vector.shape_cast %8 : vector<256x64xf32> to vector<1x256x64xf32>
    tpu.vector_store %arg4[%c0_7, %c0_8, %c0_9], %11 {strides = array<i32>} : memref<1x256x64xf32, #tpu.memory_space<vmem>>, vector<1x256x64xf32>,
    return
  }
  func.func @transform_0(%arg0: i32) -> (i32, i32, i32) {
    %c0_i32 = arith.constant 0 : i32
    %c0_i32_0 = arith.constant 0 : i32
    %c0_i32_1 = arith.constant 0 : i32
    return %arg0, %c0_i32, %c0_i32_0 : i32, i32, i32
  }
  func.func @transform_1(%arg0: i32) -> (i32, i32) {
    %c0_i32 = arith.constant 0 : i32
    %c0_i32_0 = arith.constant 0 : i32
    %c0_i32_1 = arith.constant 0 : i32
    return %c0_i32, %c0_i32_0 : i32, i32
  }
  func.func @transform_2(%arg0: i32) -> (i32, i32) {
    %c0_i32 = arith.constant 0 : i32
    %c0_i32_0 = arith.constant 0 : i32
    %c0_i32_1 = arith.constant 0 : i32
    return %c0_i32, %c0_i32_0 : i32, i32
  }
  func.func @transform_3(%arg0: i32) -> (i32, i32, i32) {
    %c0_i32 = arith.constant 0 : i32
    %c0_i32_0 = arith.constant 0 : i32
    %c0_i32_1 = arith.constant 0 : i32
    return %arg0, %c0_i32, %c0_i32_0 : i32, i32, i32
  }
}

module attributes {stable_mosaic.version = 11 : i64} {
  func.func @kernel(%arg0: i32, %arg1: memref<1x362x64xbf16, #tpu.memory_space<vmem>>, %arg2: memref<576x64xbf16, #tpu.memory_space<vmem>>, %arg3: memref<1x64xf32, #tpu.memory_space<vmem>>, %arg4: memref<1x324x64xf32, #tpu.memory_space<vmem>>, %arg5: memref<324x576xbf16, #tpu.memory_space<vmem>>) attributes {dimension_semantics = [#tpu.dimension_semantics<parallel>], iteration_bounds = array<i64: 2>, scalar_prefetch = 0 : i64, scratch_operands = 1 : i64, tpu.core_type = #tpu.core_type<tc>, window_params = [{transform_indices = @transform_0, window_bounds = array<i64: 1, 362, 64>}, {pipeline_mode = #tpu.pipeline_mode<synchronous>, transform_indices = @transform_1, window_bounds = array<i64: 576, 64>}, {pipeline_mode = #tpu.pipeline_mode<synchronous>, transform_indices = @transform_2, window_bounds = array<i64: 1, 64>}, {transform_indices = @transform_3, window_bounds = array<i64: 1, 324, 64>}]} {
    %c0 = arith.constant 0 : index
    %c0_0 = arith.constant 0 : index
    %c0_1 = arith.constant 0 : index
    %0 = vector.load %arg1[%c0, %c0_0, %c0_1] : memref<1x362x64xbf16, #tpu.memory_space<vmem>>, vector<1x362x64xbf16>
    %1 = vector.shape_cast %0 : vector<1x362x64xbf16> to vector<362x64xbf16>
    %2 = arith.extf %1 : vector<362x64xbf16> to vector<362x64xf32>
    %3 = vector.extract_strided_slice %2 {offsets = [0, 0], sizes = [324, 64], strides = [1, 1]} : vector<362x64xf32> to vector<324x64xf32>
    %4 = arith.truncf %3 : vector<324x64xf32> to vector<324x64xbf16>
    %c0_2 = arith.constant 0 : index
    %c0_3 = arith.constant 0 : index
    %5 = vector.load %arg5[%c0_2, %c0_3] : memref<324x576xbf16, #tpu.memory_space<vmem>>, vector<324x64xbf16>
    tpu.vector_store %arg5[%c0_2, %c0_3], %4 {strides = array<i32>} : memref<324x576xbf16, #tpu.memory_space<vmem>>, vector<324x64xbf16>,
    %6 = vector.extract_strided_slice %2 {offsets = [1, 0], sizes = [324, 64], strides = [1, 1]} : vector<362x64xf32> to vector<324x64xf32>
    %7 = arith.truncf %6 : vector<324x64xf32> to vector<324x64xbf16>
    %c0_4 = arith.constant 0 : index
    %c64 = arith.constant 64 : index
    %8 = vector.load %arg5[%c0_4, %c64] : memref<324x576xbf16, #tpu.memory_space<vmem>>, vector<324x64xbf16>
    tpu.vector_store %arg5[%c0_4, %c64], %7 {strides = array<i32>} : memref<324x576xbf16, #tpu.memory_space<vmem>>, vector<324x64xbf16>,
    %9 = vector.extract_strided_slice %2 {offsets = [2, 0], sizes = [324, 64], strides = [1, 1]} : vector<362x64xf32> to vector<324x64xf32>
    %10 = arith.truncf %9 : vector<324x64xf32> to vector<324x64xbf16>
    %c0_5 = arith.constant 0 : index
    %c128 = arith.constant 128 : index
    %11 = vector.load %arg5[%c0_5, %c128] : memref<324x576xbf16, #tpu.memory_space<vmem>>, vector<324x64xbf16>
    tpu.vector_store %arg5[%c0_5, %c128], %10 {strides = array<i32>} : memref<324x576xbf16, #tpu.memory_space<vmem>>, vector<324x64xbf16>,
    %12 = vector.extract_strided_slice %2 {offsets = [18, 0], sizes = [324, 64], strides = [1, 1]} : vector<362x64xf32> to vector<324x64xf32>
    %13 = arith.truncf %12 : vector<324x64xf32> to vector<324x64xbf16>
    %c0_6 = arith.constant 0 : index
    %c192 = arith.constant 192 : index
    %14 = vector.load %arg5[%c0_6, %c192] : memref<324x576xbf16, #tpu.memory_space<vmem>>, vector<324x64xbf16>
    tpu.vector_store %arg5[%c0_6, %c192], %13 {strides = array<i32>} : memref<324x576xbf16, #tpu.memory_space<vmem>>, vector<324x64xbf16>,
    %15 = vector.extract_strided_slice %2 {offsets = [19, 0], sizes = [324, 64], strides = [1, 1]} : vector<362x64xf32> to vector<324x64xf32>
    %16 = arith.truncf %15 : vector<324x64xf32> to vector<324x64xbf16>
    %c0_7 = arith.constant 0 : index
    %c256 = arith.constant 256 : index
    %17 = vector.load %arg5[%c0_7, %c256] : memref<324x576xbf16, #tpu.memory_space<vmem>>, vector<324x64xbf16>
    tpu.vector_store %arg5[%c0_7, %c256], %16 {strides = array<i32>} : memref<324x576xbf16, #tpu.memory_space<vmem>>, vector<324x64xbf16>,
    %18 = vector.extract_strided_slice %2 {offsets = [20, 0], sizes = [324, 64], strides = [1, 1]} : vector<362x64xf32> to vector<324x64xf32>
    %19 = arith.truncf %18 : vector<324x64xf32> to vector<324x64xbf16>
    %c0_8 = arith.constant 0 : index
    %c320 = arith.constant 320 : index
    %20 = vector.load %arg5[%c0_8, %c320] : memref<324x576xbf16, #tpu.memory_space<vmem>>, vector<324x64xbf16>
    tpu.vector_store %arg5[%c0_8, %c320], %19 {strides = array<i32>} : memref<324x576xbf16, #tpu.memory_space<vmem>>, vector<324x64xbf16>,
    %21 = vector.extract_strided_slice %2 {offsets = [36, 0], sizes = [324, 64], strides = [1, 1]} : vector<362x64xf32> to vector<324x64xf32>
    %22 = arith.truncf %21 : vector<324x64xf32> to vector<324x64xbf16>
    %c0_9 = arith.constant 0 : index
    %c384 = arith.constant 384 : index
    %23 = vector.load %arg5[%c0_9, %c384] : memref<324x576xbf16, #tpu.memory_space<vmem>>, vector<324x64xbf16>
    tpu.vector_store %arg5[%c0_9, %c384], %22 {strides = array<i32>} : memref<324x576xbf16, #tpu.memory_space<vmem>>, vector<324x64xbf16>,
    %24 = vector.extract_strided_slice %2 {offsets = [37, 0], sizes = [324, 64], strides = [1, 1]} : vector<362x64xf32> to vector<324x64xf32>
    %25 = arith.truncf %24 : vector<324x64xf32> to vector<324x64xbf16>
    %c0_10 = arith.constant 0 : index
    %c448 = arith.constant 448 : index
    %26 = vector.load %arg5[%c0_10, %c448] : memref<324x576xbf16, #tpu.memory_space<vmem>>, vector<324x64xbf16>
    tpu.vector_store %arg5[%c0_10, %c448], %25 {strides = array<i32>} : memref<324x576xbf16, #tpu.memory_space<vmem>>, vector<324x64xbf16>,
    %27 = vector.extract_strided_slice %2 {offsets = [38, 0], sizes = [324, 64], strides = [1, 1]} : vector<362x64xf32> to vector<324x64xf32>
    %28 = arith.truncf %27 : vector<324x64xf32> to vector<324x64xbf16>
    %c0_11 = arith.constant 0 : index
    %c512 = arith.constant 512 : index
    %29 = vector.load %arg5[%c0_11, %c512] : memref<324x576xbf16, #tpu.memory_space<vmem>>, vector<324x64xbf16>
    tpu.vector_store %arg5[%c0_11, %c512], %28 {strides = array<i32>} : memref<324x576xbf16, #tpu.memory_space<vmem>>, vector<324x64xbf16>,
    %c0_12 = arith.constant 0 : index
    %c0_13 = arith.constant 0 : index
    %30 = vector.load %arg5[%c0_12, %c0_13] : memref<324x576xbf16, #tpu.memory_space<vmem>>, vector<324x576xbf16>
    %c0_14 = arith.constant 0 : index
    %c0_15 = arith.constant 0 : index
    %31 = vector.load %arg2[%c0_14, %c0_15] : memref<576x64xbf16, #tpu.memory_space<vmem>>, vector<576x64xbf16>
    %cst = arith.constant dense<0.000000e+00> : vector<324x64xf32>
    %32 = tpu.matmul %30, %31, %cst {dimension_numbers = #tpu.dot_dimension_numbers<[1], [0], [0], [1], [0, 0, 1, 1], [], []>} : vector<324x576xbf16>, vector<576x64xbf16>, vector<324x64xf32> -> vector<324x64xf32>
    %c0_16 = arith.constant 0 : index
    %c0_17 = arith.constant 0 : index
    %33 = vector.load %arg3[%c0_16, %c0_17] : memref<1x64xf32, #tpu.memory_space<vmem>>, vector<1x64xf32>
    %34 = vector.broadcast %33 : vector<1x64xf32> to vector<324x64xf32>
    %35 = arith.addf %32, %34 : vector<324x64xf32>
    %cst_18 = arith.constant 0.000000e+00 : f32
    %36 = vector.broadcast %cst_18 : f32 to vector<324x64xf32>
    %37 = arith.maximumf %35, %36 : vector<324x64xf32>
    %c0_19 = arith.constant 0 : index
    %c0_20 = arith.constant 0 : index
    %c0_21 = arith.constant 0 : index
    %38 = vector.load %arg4[%c0_19, %c0_20, %c0_21] : memref<1x324x64xf32, #tpu.memory_space<vmem>>, vector<1x324x64xf32>
    %39 = vector.shape_cast %38 : vector<1x324x64xf32> to vector<324x64xf32>
    %40 = vector.shape_cast %37 : vector<324x64xf32> to vector<1x324x64xf32>
    tpu.vector_store %arg4[%c0_19, %c0_20, %c0_21], %40 {strides = array<i32>} : memref<1x324x64xf32, #tpu.memory_space<vmem>>, vector<1x324x64xf32>,
    return
  }
  func.func @transform_0(%arg0: i32) -> (i32, i32, i32) {
    %c0_i32 = arith.constant 0 : i32
    %c0_i32_0 = arith.constant 0 : i32
    %c0_i32_1 = arith.constant 0 : i32
    return %arg0, %c0_i32, %c0_i32_0 : i32, i32, i32
  }
  func.func @transform_1(%arg0: i32) -> (i32, i32) {
    %c0_i32 = arith.constant 0 : i32
    %c0_i32_0 = arith.constant 0 : i32
    %c0_i32_1 = arith.constant 0 : i32
    return %c0_i32, %c0_i32_0 : i32, i32
  }
  func.func @transform_2(%arg0: i32) -> (i32, i32) {
    %c0_i32 = arith.constant 0 : i32
    %c0_i32_0 = arith.constant 0 : i32
    %c0_i32_1 = arith.constant 0 : i32
    return %c0_i32, %c0_i32_0 : i32, i32
  }
  func.func @transform_3(%arg0: i32) -> (i32, i32, i32) {
    %c0_i32 = arith.constant 0 : i32
    %c0_i32_0 = arith.constant 0 : i32
    %c0_i32_1 = arith.constant 0 : i32
    return %arg0, %c0_i32, %c0_i32_0 : i32, i32, i32
  }
}

module attributes {stable_mosaic.version = 11 : i64} {
  func.func @maxpool4_kernel(%arg0: i32, %arg1: memref<1x8x8x64xf32, #tpu.memory_space<vmem>>, %arg2: memref<1x8x8x64xf32, #tpu.memory_space<vmem>>, %arg3: memref<1x8x8x64xf32, #tpu.memory_space<vmem>>, %arg4: memref<1x8x8x64xf32, #tpu.memory_space<vmem>>, %arg5: memref<1x8x8x64xf32, #tpu.memory_space<vmem>>) attributes {dimension_semantics = [#tpu.dimension_semantics<parallel>], iteration_bounds = array<i64: 2>, scalar_prefetch = 0 : i64, scratch_operands = 0 : i64, tpu.core_type = #tpu.core_type<tc>, window_params = [{transform_indices = @transform_0, window_bounds = array<i64: 1, 8, 8, 64>}, {transform_indices = @transform_1, window_bounds = array<i64: 1, 8, 8, 64>}, {transform_indices = @transform_2, window_bounds = array<i64: 1, 8, 8, 64>}, {transform_indices = @transform_3, window_bounds = array<i64: 1, 8, 8, 64>}, {transform_indices = @transform_4, window_bounds = array<i64: 1, 8, 8, 64>}]} {
    %c0 = arith.constant 0 : index
    %c0_0 = arith.constant 0 : index
    %c0_1 = arith.constant 0 : index
    %c0_2 = arith.constant 0 : index
    %0 = vector.load %arg1[%c0, %c0_0, %c0_1, %c0_2] : memref<1x8x8x64xf32, #tpu.memory_space<vmem>>, vector<1x8x8x64xf32>
    %1 = vector.shape_cast %0 : vector<1x8x8x64xf32> to vector<8x8x64xf32>
    %c0_3 = arith.constant 0 : index
    %c0_4 = arith.constant 0 : index
    %c0_5 = arith.constant 0 : index
    %c0_6 = arith.constant 0 : index
    %2 = vector.load %arg2[%c0_3, %c0_4, %c0_5, %c0_6] : memref<1x8x8x64xf32, #tpu.memory_space<vmem>>, vector<1x8x8x64xf32>
    %3 = vector.shape_cast %2 : vector<1x8x8x64xf32> to vector<8x8x64xf32>
    %4 = arith.maximumf %1, %3 : vector<8x8x64xf32>
    %c0_7 = arith.constant 0 : index
    %c0_8 = arith.constant 0 : index
    %c0_9 = arith.constant 0 : index
    %c0_10 = arith.constant 0 : index
    %5 = vector.load %arg3[%c0_7, %c0_8, %c0_9, %c0_10] : memref<1x8x8x64xf32, #tpu.memory_space<vmem>>, vector<1x8x8x64xf32>
    %6 = vector.shape_cast %5 : vector<1x8x8x64xf32> to vector<8x8x64xf32>
    %c0_11 = arith.constant 0 : index
    %c0_12 = arith.constant 0 : index
    %c0_13 = arith.constant 0 : index
    %c0_14 = arith.constant 0 : index
    %7 = vector.load %arg4[%c0_11, %c0_12, %c0_13, %c0_14] : memref<1x8x8x64xf32, #tpu.memory_space<vmem>>, vector<1x8x8x64xf32>
    %8 = vector.shape_cast %7 : vector<1x8x8x64xf32> to vector<8x8x64xf32>
    %9 = arith.maximumf %6, %8 : vector<8x8x64xf32>
    %10 = arith.maximumf %4, %9 : vector<8x8x64xf32>
    %c0_15 = arith.constant 0 : index
    %c0_16 = arith.constant 0 : index
    %c0_17 = arith.constant 0 : index
    %c0_18 = arith.constant 0 : index
    %11 = vector.load %arg5[%c0_15, %c0_16, %c0_17, %c0_18] : memref<1x8x8x64xf32, #tpu.memory_space<vmem>>, vector<1x8x8x64xf32>
    %12 = vector.shape_cast %11 : vector<1x8x8x64xf32> to vector<8x8x64xf32>
    %13 = vector.shape_cast %10 : vector<8x8x64xf32> to vector<1x8x8x64xf32>
    tpu.vector_store %arg5[%c0_15, %c0_16, %c0_17, %c0_18], %13 {strides = array<i32>} : memref<1x8x8x64xf32, #tpu.memory_space<vmem>>, vector<1x8x8x64xf32>,
    return
  }
  func.func @transform_0(%arg0: i32) -> (i32, i32, i32, i32) {
    %c0_i32 = arith.constant 0 : i32
    %c0_i32_0 = arith.constant 0 : i32
    %c0_i32_1 = arith.constant 0 : i32
    %c0_i32_2 = arith.constant 0 : i32
    return %arg0, %c0_i32, %c0_i32_0, %c0_i32_1 : i32, i32, i32, i32
  }
  func.func @transform_1(%arg0: i32) -> (i32, i32, i32, i32) {
    %c0_i32 = arith.constant 0 : i32
    %c0_i32_0 = arith.constant 0 : i32
    %c0_i32_1 = arith.constant 0 : i32
    %c0_i32_2 = arith.constant 0 : i32
    return %arg0, %c0_i32, %c0_i32_0, %c0_i32_1 : i32, i32, i32, i32
  }
  func.func @transform_2(%arg0: i32) -> (i32, i32, i32, i32) {
    %c0_i32 = arith.constant 0 : i32
    %c0_i32_0 = arith.constant 0 : i32
    %c0_i32_1 = arith.constant 0 : i32
    %c0_i32_2 = arith.constant 0 : i32
    return %arg0, %c0_i32, %c0_i32_0, %c0_i32_1 : i32, i32, i32, i32
  }
  func.func @transform_3(%arg0: i32) -> (i32, i32, i32, i32) {
    %c0_i32 = arith.constant 0 : i32
    %c0_i32_0 = arith.constant 0 : i32
    %c0_i32_1 = arith.constant 0 : i32
    %c0_i32_2 = arith.constant 0 : i32
    return %arg0, %c0_i32, %c0_i32_0, %c0_i32_1 : i32, i32, i32, i32
  }
  func.func @transform_4(%arg0: i32) -> (i32, i32, i32, i32) {
    %c0_i32 = arith.constant 0 : i32
    %c0_i32_0 = arith.constant 0 : i32
    %c0_i32_1 = arith.constant 0 : i32
    %c0_i32_2 = arith.constant 0 : i32
    return %arg0, %c0_i32, %c0_i32_0, %c0_i32_1 : i32, i32, i32, i32
  }
}

module attributes {stable_mosaic.version = 11 : i64} {
  func.func @kernel(%arg0: i32, %arg1: memref<1x122x64xbf16, #tpu.memory_space<vmem>>, %arg2: memref<576x128xbf16, #tpu.memory_space<vmem>>, %arg3: memref<1x128xf32, #tpu.memory_space<vmem>>, %arg4: memref<1x100x128xf32, #tpu.memory_space<vmem>>, %arg5: memref<100x576xbf16, #tpu.memory_space<vmem>>) attributes {dimension_semantics = [#tpu.dimension_semantics<parallel>], iteration_bounds = array<i64: 2>, scalar_prefetch = 0 : i64, scratch_operands = 1 : i64, tpu.core_type = #tpu.core_type<tc>, window_params = [{transform_indices = @transform_0, window_bounds = array<i64: 1, 122, 64>}, {pipeline_mode = #tpu.pipeline_mode<synchronous>, transform_indices = @transform_1, window_bounds = array<i64: 576, 128>}, {pipeline_mode = #tpu.pipeline_mode<synchronous>, transform_indices = @transform_2, window_bounds = array<i64: 1, 128>}, {transform_indices = @transform_3, window_bounds = array<i64: 1, 100, 128>}]} {
    %c0 = arith.constant 0 : index
    %c0_0 = arith.constant 0 : index
    %c0_1 = arith.constant 0 : index
    %0 = vector.load %arg1[%c0, %c0_0, %c0_1] : memref<1x122x64xbf16, #tpu.memory_space<vmem>>, vector<1x122x64xbf16>
    %1 = vector.shape_cast %0 : vector<1x122x64xbf16> to vector<122x64xbf16>
    %2 = arith.extf %1 : vector<122x64xbf16> to vector<122x64xf32>
    %3 = vector.extract_strided_slice %2 {offsets = [0, 0], sizes = [100, 64], strides = [1, 1]} : vector<122x64xf32> to vector<100x64xf32>
    %4 = arith.truncf %3 : vector<100x64xf32> to vector<100x64xbf16>
    %c0_2 = arith.constant 0 : index
    %c0_3 = arith.constant 0 : index
    %5 = vector.load %arg5[%c0_2, %c0_3] : memref<100x576xbf16, #tpu.memory_space<vmem>>, vector<100x64xbf16>
    tpu.vector_store %arg5[%c0_2, %c0_3], %4 {strides = array<i32>} : memref<100x576xbf16, #tpu.memory_space<vmem>>, vector<100x64xbf16>,
    %6 = vector.extract_strided_slice %2 {offsets = [1, 0], sizes = [100, 64], strides = [1, 1]} : vector<122x64xf32> to vector<100x64xf32>
    %7 = arith.truncf %6 : vector<100x64xf32> to vector<100x64xbf16>
    %c0_4 = arith.constant 0 : index
    %c64 = arith.constant 64 : index
    %8 = vector.load %arg5[%c0_4, %c64] : memref<100x576xbf16, #tpu.memory_space<vmem>>, vector<100x64xbf16>
    tpu.vector_store %arg5[%c0_4, %c64], %7 {strides = array<i32>} : memref<100x576xbf16, #tpu.memory_space<vmem>>, vector<100x64xbf16>,
    %9 = vector.extract_strided_slice %2 {offsets = [2, 0], sizes = [100, 64], strides = [1, 1]} : vector<122x64xf32> to vector<100x64xf32>
    %10 = arith.truncf %9 : vector<100x64xf32> to vector<100x64xbf16>
    %c0_5 = arith.constant 0 : index
    %c128 = arith.constant 128 : index
    %11 = vector.load %arg5[%c0_5, %c128] : memref<100x576xbf16, #tpu.memory_space<vmem>>, vector<100x64xbf16>
    tpu.vector_store %arg5[%c0_5, %c128], %10 {strides = array<i32>} : memref<100x576xbf16, #tpu.memory_space<vmem>>, vector<100x64xbf16>,
    %12 = vector.extract_strided_slice %2 {offsets = [10, 0], sizes = [100, 64], strides = [1, 1]} : vector<122x64xf32> to vector<100x64xf32>
    %13 = arith.truncf %12 : vector<100x64xf32> to vector<100x64xbf16>
    %c0_6 = arith.constant 0 : index
    %c192 = arith.constant 192 : index
    %14 = vector.load %arg5[%c0_6, %c192] : memref<100x576xbf16, #tpu.memory_space<vmem>>, vector<100x64xbf16>
    tpu.vector_store %arg5[%c0_6, %c192], %13 {strides = array<i32>} : memref<100x576xbf16, #tpu.memory_space<vmem>>, vector<100x64xbf16>,
    %15 = vector.extract_strided_slice %2 {offsets = [11, 0], sizes = [100, 64], strides = [1, 1]} : vector<122x64xf32> to vector<100x64xf32>
    %16 = arith.truncf %15 : vector<100x64xf32> to vector<100x64xbf16>
    %c0_7 = arith.constant 0 : index
    %c256 = arith.constant 256 : index
    %17 = vector.load %arg5[%c0_7, %c256] : memref<100x576xbf16, #tpu.memory_space<vmem>>, vector<100x64xbf16>
    tpu.vector_store %arg5[%c0_7, %c256], %16 {strides = array<i32>} : memref<100x576xbf16, #tpu.memory_space<vmem>>, vector<100x64xbf16>,
    %18 = vector.extract_strided_slice %2 {offsets = [12, 0], sizes = [100, 64], strides = [1, 1]} : vector<122x64xf32> to vector<100x64xf32>
    %19 = arith.truncf %18 : vector<100x64xf32> to vector<100x64xbf16>
    %c0_8 = arith.constant 0 : index
    %c320 = arith.constant 320 : index
    %20 = vector.load %arg5[%c0_8, %c320] : memref<100x576xbf16, #tpu.memory_space<vmem>>, vector<100x64xbf16>
    tpu.vector_store %arg5[%c0_8, %c320], %19 {strides = array<i32>} : memref<100x576xbf16, #tpu.memory_space<vmem>>, vector<100x64xbf16>,
    %21 = vector.extract_strided_slice %2 {offsets = [20, 0], sizes = [100, 64], strides = [1, 1]} : vector<122x64xf32> to vector<100x64xf32>
    %22 = arith.truncf %21 : vector<100x64xf32> to vector<100x64xbf16>
    %c0_9 = arith.constant 0 : index
    %c384 = arith.constant 384 : index
    %23 = vector.load %arg5[%c0_9, %c384] : memref<100x576xbf16, #tpu.memory_space<vmem>>, vector<100x64xbf16>
    tpu.vector_store %arg5[%c0_9, %c384], %22 {strides = array<i32>} : memref<100x576xbf16, #tpu.memory_space<vmem>>, vector<100x64xbf16>,
    %24 = vector.extract_strided_slice %2 {offsets = [21, 0], sizes = [100, 64], strides = [1, 1]} : vector<122x64xf32> to vector<100x64xf32>
    %25 = arith.truncf %24 : vector<100x64xf32> to vector<100x64xbf16>
    %c0_10 = arith.constant 0 : index
    %c448 = arith.constant 448 : index
    %26 = vector.load %arg5[%c0_10, %c448] : memref<100x576xbf16, #tpu.memory_space<vmem>>, vector<100x64xbf16>
    tpu.vector_store %arg5[%c0_10, %c448], %25 {strides = array<i32>} : memref<100x576xbf16, #tpu.memory_space<vmem>>, vector<100x64xbf16>,
    %27 = vector.extract_strided_slice %2 {offsets = [22, 0], sizes = [100, 64], strides = [1, 1]} : vector<122x64xf32> to vector<100x64xf32>
    %28 = arith.truncf %27 : vector<100x64xf32> to vector<100x64xbf16>
    %c0_11 = arith.constant 0 : index
    %c512 = arith.constant 512 : index
    %29 = vector.load %arg5[%c0_11, %c512] : memref<100x576xbf16, #tpu.memory_space<vmem>>, vector<100x64xbf16>
    tpu.vector_store %arg5[%c0_11, %c512], %28 {strides = array<i32>} : memref<100x576xbf16, #tpu.memory_space<vmem>>, vector<100x64xbf16>,
    %c0_12 = arith.constant 0 : index
    %c0_13 = arith.constant 0 : index
    %30 = vector.load %arg5[%c0_12, %c0_13] : memref<100x576xbf16, #tpu.memory_space<vmem>>, vector<100x576xbf16>
    %c0_14 = arith.constant 0 : index
    %c0_15 = arith.constant 0 : index
    %31 = vector.load %arg2[%c0_14, %c0_15] : memref<576x128xbf16, #tpu.memory_space<vmem>>, vector<576x128xbf16>
    %cst = arith.constant dense<0.000000e+00> : vector<100x128xf32>
    %32 = tpu.matmul %30, %31, %cst {dimension_numbers = #tpu.dot_dimension_numbers<[1], [0], [0], [1], [0, 0, 1, 1], [], []>} : vector<100x576xbf16>, vector<576x128xbf16>, vector<100x128xf32> -> vector<100x128xf32>
    %c0_16 = arith.constant 0 : index
    %c0_17 = arith.constant 0 : index
    %33 = vector.load %arg3[%c0_16, %c0_17] : memref<1x128xf32, #tpu.memory_space<vmem>>, vector<1x128xf32>
    %34 = vector.broadcast %33 : vector<1x128xf32> to vector<100x128xf32>
    %35 = arith.addf %32, %34 : vector<100x128xf32>
    %cst_18 = arith.constant 0.000000e+00 : f32
    %36 = vector.broadcast %cst_18 : f32 to vector<100x128xf32>
    %37 = arith.maximumf %35, %36 : vector<100x128xf32>
    %c0_19 = arith.constant 0 : index
    %c0_20 = arith.constant 0 : index
    %c0_21 = arith.constant 0 : index
    %38 = vector.load %arg4[%c0_19, %c0_20, %c0_21] : memref<1x100x128xf32, #tpu.memory_space<vmem>>, vector<1x100x128xf32>
    %39 = vector.shape_cast %38 : vector<1x100x128xf32> to vector<100x128xf32>
    %40 = vector.shape_cast %37 : vector<100x128xf32> to vector<1x100x128xf32>
    tpu.vector_store %arg4[%c0_19, %c0_20, %c0_21], %40 {strides = array<i32>} : memref<1x100x128xf32, #tpu.memory_space<vmem>>, vector<1x100x128xf32>,
    return
  }
  func.func @transform_0(%arg0: i32) -> (i32, i32, i32) {
    %c0_i32 = arith.constant 0 : i32
    %c0_i32_0 = arith.constant 0 : i32
    %c0_i32_1 = arith.constant 0 : i32
    return %arg0, %c0_i32, %c0_i32_0 : i32, i32, i32
  }
  func.func @transform_1(%arg0: i32) -> (i32, i32) {
    %c0_i32 = arith.constant 0 : i32
    %c0_i32_0 = arith.constant 0 : i32
    %c0_i32_1 = arith.constant 0 : i32
    return %c0_i32, %c0_i32_0 : i32, i32
  }
  func.func @transform_2(%arg0: i32) -> (i32, i32) {
    %c0_i32 = arith.constant 0 : i32
    %c0_i32_0 = arith.constant 0 : i32
    %c0_i32_1 = arith.constant 0 : i32
    return %c0_i32, %c0_i32_0 : i32, i32
  }
  func.func @transform_3(%arg0: i32) -> (i32, i32, i32) {
    %c0_i32 = arith.constant 0 : i32
    %c0_i32_0 = arith.constant 0 : i32
    %c0_i32_1 = arith.constant 0 : i32
    return %arg0, %c0_i32, %c0_i32_0 : i32, i32, i32
  }
}

module attributes {stable_mosaic.version = 11 : i64} {
  func.func @kernel(%arg0: i32, %arg1: memref<1x122x128xbf16, #tpu.memory_space<vmem>>, %arg2: memref<1152x128xbf16, #tpu.memory_space<vmem>>, %arg3: memref<1x128xf32, #tpu.memory_space<vmem>>, %arg4: memref<1x100x128xf32, #tpu.memory_space<vmem>>, %arg5: memref<100x1152xbf16, #tpu.memory_space<vmem>>) attributes {dimension_semantics = [#tpu.dimension_semantics<parallel>], iteration_bounds = array<i64: 2>, scalar_prefetch = 0 : i64, scratch_operands = 1 : i64, tpu.core_type = #tpu.core_type<tc>, window_params = [{transform_indices = @transform_0, window_bounds = array<i64: 1, 122, 128>}, {pipeline_mode = #tpu.pipeline_mode<synchronous>, transform_indices = @transform_1, window_bounds = array<i64: 1152, 128>}, {pipeline_mode = #tpu.pipeline_mode<synchronous>, transform_indices = @transform_2, window_bounds = array<i64: 1, 128>}, {transform_indices = @transform_3, window_bounds = array<i64: 1, 100, 128>}]} {
    %c0 = arith.constant 0 : index
    %c0_0 = arith.constant 0 : index
    %c0_1 = arith.constant 0 : index
    %0 = vector.load %arg1[%c0, %c0_0, %c0_1] : memref<1x122x128xbf16, #tpu.memory_space<vmem>>, vector<1x122x128xbf16>
    %1 = vector.shape_cast %0 : vector<1x122x128xbf16> to vector<122x128xbf16>
    %2 = arith.extf %1 : vector<122x128xbf16> to vector<122x128xf32>
    %3 = vector.extract_strided_slice %2 {offsets = [0, 0], sizes = [100, 128], strides = [1, 1]} : vector<122x128xf32> to vector<100x128xf32>
    %4 = arith.truncf %3 : vector<100x128xf32> to vector<100x128xbf16>
    %c0_2 = arith.constant 0 : index
    %c0_3 = arith.constant 0 : index
    %5 = vector.load %arg5[%c0_2, %c0_3] : memref<100x1152xbf16, #tpu.memory_space<vmem>>, vector<100x128xbf16>
    tpu.vector_store %arg5[%c0_2, %c0_3], %4 {strides = array<i32>} : memref<100x1152xbf16, #tpu.memory_space<vmem>>, vector<100x128xbf16>,
    %6 = vector.extract_strided_slice %2 {offsets = [1, 0], sizes = [100, 128], strides = [1, 1]} : vector<122x128xf32> to vector<100x128xf32>
    %7 = arith.truncf %6 : vector<100x128xf32> to vector<100x128xbf16>
    %c0_4 = arith.constant 0 : index
    %c128 = arith.constant 128 : index
    %8 = vector.load %arg5[%c0_4, %c128] : memref<100x1152xbf16, #tpu.memory_space<vmem>>, vector<100x128xbf16>
    tpu.vector_store %arg5[%c0_4, %c128], %7 {strides = array<i32>} : memref<100x1152xbf16, #tpu.memory_space<vmem>>, vector<100x128xbf16>,
    %9 = vector.extract_strided_slice %2 {offsets = [2, 0], sizes = [100, 128], strides = [1, 1]} : vector<122x128xf32> to vector<100x128xf32>
    %10 = arith.truncf %9 : vector<100x128xf32> to vector<100x128xbf16>
    %c0_5 = arith.constant 0 : index
    %c256 = arith.constant 256 : index
    %11 = vector.load %arg5[%c0_5, %c256] : memref<100x1152xbf16, #tpu.memory_space<vmem>>, vector<100x128xbf16>
    tpu.vector_store %arg5[%c0_5, %c256], %10 {strides = array<i32>} : memref<100x1152xbf16, #tpu.memory_space<vmem>>, vector<100x128xbf16>,
    %12 = vector.extract_strided_slice %2 {offsets = [10, 0], sizes = [100, 128], strides = [1, 1]} : vector<122x128xf32> to vector<100x128xf32>
    %13 = arith.truncf %12 : vector<100x128xf32> to vector<100x128xbf16>
    %c0_6 = arith.constant 0 : index
    %c384 = arith.constant 384 : index
    %14 = vector.load %arg5[%c0_6, %c384] : memref<100x1152xbf16, #tpu.memory_space<vmem>>, vector<100x128xbf16>
    tpu.vector_store %arg5[%c0_6, %c384], %13 {strides = array<i32>} : memref<100x1152xbf16, #tpu.memory_space<vmem>>, vector<100x128xbf16>,
    %15 = vector.extract_strided_slice %2 {offsets = [11, 0], sizes = [100, 128], strides = [1, 1]} : vector<122x128xf32> to vector<100x128xf32>
    %16 = arith.truncf %15 : vector<100x128xf32> to vector<100x128xbf16>
    %c0_7 = arith.constant 0 : index
    %c512 = arith.constant 512 : index
    %17 = vector.load %arg5[%c0_7, %c512] : memref<100x1152xbf16, #tpu.memory_space<vmem>>, vector<100x128xbf16>
    tpu.vector_store %arg5[%c0_7, %c512], %16 {strides = array<i32>} : memref<100x1152xbf16, #tpu.memory_space<vmem>>, vector<100x128xbf16>,
    %18 = vector.extract_strided_slice %2 {offsets = [12, 0], sizes = [100, 128], strides = [1, 1]} : vector<122x128xf32> to vector<100x128xf32>
    %19 = arith.truncf %18 : vector<100x128xf32> to vector<100x128xbf16>
    %c0_8 = arith.constant 0 : index
    %c640 = arith.constant 640 : index
    %20 = vector.load %arg5[%c0_8, %c640] : memref<100x1152xbf16, #tpu.memory_space<vmem>>, vector<100x128xbf16>
    tpu.vector_store %arg5[%c0_8, %c640], %19 {strides = array<i32>} : memref<100x1152xbf16, #tpu.memory_space<vmem>>, vector<100x128xbf16>,
    %21 = vector.extract_strided_slice %2 {offsets = [20, 0], sizes = [100, 128], strides = [1, 1]} : vector<122x128xf32> to vector<100x128xf32>
    %22 = arith.truncf %21 : vector<100x128xf32> to vector<100x128xbf16>
    %c0_9 = arith.constant 0 : index
    %c768 = arith.constant 768 : index
    %23 = vector.load %arg5[%c0_9, %c768] : memref<100x1152xbf16, #tpu.memory_space<vmem>>, vector<100x128xbf16>
    tpu.vector_store %arg5[%c0_9, %c768], %22 {strides = array<i32>} : memref<100x1152xbf16, #tpu.memory_space<vmem>>, vector<100x128xbf16>,
    %24 = vector.extract_strided_slice %2 {offsets = [21, 0], sizes = [100, 128], strides = [1, 1]} : vector<122x128xf32> to vector<100x128xf32>
    %25 = arith.truncf %24 : vector<100x128xf32> to vector<100x128xbf16>
    %c0_10 = arith.constant 0 : index
    %c896 = arith.constant 896 : index
    %26 = vector.load %arg5[%c0_10, %c896] : memref<100x1152xbf16, #tpu.memory_space<vmem>>, vector<100x128xbf16>
    tpu.vector_store %arg5[%c0_10, %c896], %25 {strides = array<i32>} : memref<100x1152xbf16, #tpu.memory_space<vmem>>, vector<100x128xbf16>,
    %27 = vector.extract_strided_slice %2 {offsets = [22, 0], sizes = [100, 128], strides = [1, 1]} : vector<122x128xf32> to vector<100x128xf32>
    %28 = arith.truncf %27 : vector<100x128xf32> to vector<100x128xbf16>
    %c0_11 = arith.constant 0 : index
    %c1024 = arith.constant 1024 : index
    %29 = vector.load %arg5[%c0_11, %c1024] : memref<100x1152xbf16, #tpu.memory_space<vmem>>, vector<100x128xbf16>
    tpu.vector_store %arg5[%c0_11, %c1024], %28 {strides = array<i32>} : memref<100x1152xbf16, #tpu.memory_space<vmem>>, vector<100x128xbf16>,
    %c0_12 = arith.constant 0 : index
    %c0_13 = arith.constant 0 : index
    %30 = vector.load %arg5[%c0_12, %c0_13] : memref<100x1152xbf16, #tpu.memory_space<vmem>>, vector<100x1152xbf16>
    %c0_14 = arith.constant 0 : index
    %c0_15 = arith.constant 0 : index
    %31 = vector.load %arg2[%c0_14, %c0_15] : memref<1152x128xbf16, #tpu.memory_space<vmem>>, vector<1152x128xbf16>
    %cst = arith.constant dense<0.000000e+00> : vector<100x128xf32>
    %32 = tpu.matmul %30, %31, %cst {dimension_numbers = #tpu.dot_dimension_numbers<[1], [0], [0], [1], [0, 0, 1, 1], [], []>} : vector<100x1152xbf16>, vector<1152x128xbf16>, vector<100x128xf32> -> vector<100x128xf32>
    %c0_16 = arith.constant 0 : index
    %c0_17 = arith.constant 0 : index
    %33 = vector.load %arg3[%c0_16, %c0_17] : memref<1x128xf32, #tpu.memory_space<vmem>>, vector<1x128xf32>
    %34 = vector.broadcast %33 : vector<1x128xf32> to vector<100x128xf32>
    %35 = arith.addf %32, %34 : vector<100x128xf32>
    %cst_18 = arith.constant 0.000000e+00 : f32
    %36 = vector.broadcast %cst_18 : f32 to vector<100x128xf32>
    %37 = arith.maximumf %35, %36 : vector<100x128xf32>
    %c0_19 = arith.constant 0 : index
    %c0_20 = arith.constant 0 : index
    %c0_21 = arith.constant 0 : index
    %38 = vector.load %arg4[%c0_19, %c0_20, %c0_21] : memref<1x100x128xf32, #tpu.memory_space<vmem>>, vector<1x100x128xf32>
    %39 = vector.shape_cast %38 : vector<1x100x128xf32> to vector<100x128xf32>
    %40 = vector.shape_cast %37 : vector<100x128xf32> to vector<1x100x128xf32>
    tpu.vector_store %arg4[%c0_19, %c0_20, %c0_21], %40 {strides = array<i32>} : memref<1x100x128xf32, #tpu.memory_space<vmem>>, vector<1x100x128xf32>,
    return
  }
  func.func @transform_0(%arg0: i32) -> (i32, i32, i32) {
    %c0_i32 = arith.constant 0 : i32
    %c0_i32_0 = arith.constant 0 : i32
    %c0_i32_1 = arith.constant 0 : i32
    return %arg0, %c0_i32, %c0_i32_0 : i32, i32, i32
  }
  func.func @transform_1(%arg0: i32) -> (i32, i32) {
    %c0_i32 = arith.constant 0 : i32
    %c0_i32_0 = arith.constant 0 : i32
    %c0_i32_1 = arith.constant 0 : i32
    return %c0_i32, %c0_i32_0 : i32, i32
  }
  func.func @transform_2(%arg0: i32) -> (i32, i32) {
    %c0_i32 = arith.constant 0 : i32
    %c0_i32_0 = arith.constant 0 : i32
    %c0_i32_1 = arith.constant 0 : i32
    return %c0_i32, %c0_i32_0 : i32, i32
  }
  func.func @transform_3(%arg0: i32) -> (i32, i32, i32) {
    %c0_i32 = arith.constant 0 : i32
    %c0_i32_0 = arith.constant 0 : i32
    %c0_i32_1 = arith.constant 0 : i32
    return %arg0, %c0_i32, %c0_i32_0 : i32, i32, i32
  }
}

module attributes {stable_mosaic.version = 11 : i64} {
  func.func @maxpool4_kernel(%arg0: i32, %arg1: memref<1x4x4x128xf32, #tpu.memory_space<vmem>>, %arg2: memref<1x4x4x128xf32, #tpu.memory_space<vmem>>, %arg3: memref<1x4x4x128xf32, #tpu.memory_space<vmem>>, %arg4: memref<1x4x4x128xf32, #tpu.memory_space<vmem>>, %arg5: memref<1x4x4x128xf32, #tpu.memory_space<vmem>>) attributes {dimension_semantics = [#tpu.dimension_semantics<parallel>], iteration_bounds = array<i64: 2>, scalar_prefetch = 0 : i64, scratch_operands = 0 : i64, tpu.core_type = #tpu.core_type<tc>, window_params = [{transform_indices = @transform_0, window_bounds = array<i64: 1, 4, 4, 128>}, {transform_indices = @transform_1, window_bounds = array<i64: 1, 4, 4, 128>}, {transform_indices = @transform_2, window_bounds = array<i64: 1, 4, 4, 128>}, {transform_indices = @transform_3, window_bounds = array<i64: 1, 4, 4, 128>}, {transform_indices = @transform_4, window_bounds = array<i64: 1, 4, 4, 128>}]} {
    %c0 = arith.constant 0 : index
    %c0_0 = arith.constant 0 : index
    %c0_1 = arith.constant 0 : index
    %c0_2 = arith.constant 0 : index
    %0 = vector.load %arg1[%c0, %c0_0, %c0_1, %c0_2] : memref<1x4x4x128xf32, #tpu.memory_space<vmem>>, vector<1x4x4x128xf32>
    %1 = vector.shape_cast %0 : vector<1x4x4x128xf32> to vector<4x4x128xf32>
    %c0_3 = arith.constant 0 : index
    %c0_4 = arith.constant 0 : index
    %c0_5 = arith.constant 0 : index
    %c0_6 = arith.constant 0 : index
    %2 = vector.load %arg2[%c0_3, %c0_4, %c0_5, %c0_6] : memref<1x4x4x128xf32, #tpu.memory_space<vmem>>, vector<1x4x4x128xf32>
    %3 = vector.shape_cast %2 : vector<1x4x4x128xf32> to vector<4x4x128xf32>
    %4 = arith.maximumf %1, %3 : vector<4x4x128xf32>
    %c0_7 = arith.constant 0 : index
    %c0_8 = arith.constant 0 : index
    %c0_9 = arith.constant 0 : index
    %c0_10 = arith.constant 0 : index
    %5 = vector.load %arg3[%c0_7, %c0_8, %c0_9, %c0_10] : memref<1x4x4x128xf32, #tpu.memory_space<vmem>>, vector<1x4x4x128xf32>
    %6 = vector.shape_cast %5 : vector<1x4x4x128xf32> to vector<4x4x128xf32>
    %c0_11 = arith.constant 0 : index
    %c0_12 = arith.constant 0 : index
    %c0_13 = arith.constant 0 : index
    %c0_14 = arith.constant 0 : index
    %7 = vector.load %arg4[%c0_11, %c0_12, %c0_13, %c0_14] : memref<1x4x4x128xf32, #tpu.memory_space<vmem>>, vector<1x4x4x128xf32>
    %8 = vector.shape_cast %7 : vector<1x4x4x128xf32> to vector<4x4x128xf32>
    %9 = arith.maximumf %6, %8 : vector<4x4x128xf32>
    %10 = arith.maximumf %4, %9 : vector<4x4x128xf32>
    %c0_15 = arith.constant 0 : index
    %c0_16 = arith.constant 0 : index
    %c0_17 = arith.constant 0 : index
    %c0_18 = arith.constant 0 : index
    %11 = vector.load %arg5[%c0_15, %c0_16, %c0_17, %c0_18] : memref<1x4x4x128xf32, #tpu.memory_space<vmem>>, vector<1x4x4x128xf32>
    %12 = vector.shape_cast %11 : vector<1x4x4x128xf32> to vector<4x4x128xf32>
    %13 = vector.shape_cast %10 : vector<4x4x128xf32> to vector<1x4x4x128xf32>
    tpu.vector_store %arg5[%c0_15, %c0_16, %c0_17, %c0_18], %13 {strides = array<i32>} : memref<1x4x4x128xf32, #tpu.memory_space<vmem>>, vector<1x4x4x128xf32>,
    return
  }
  func.func @transform_0(%arg0: i32) -> (i32, i32, i32, i32) {
    %c0_i32 = arith.constant 0 : i32
    %c0_i32_0 = arith.constant 0 : i32
    %c0_i32_1 = arith.constant 0 : i32
    %c0_i32_2 = arith.constant 0 : i32
    return %arg0, %c0_i32, %c0_i32_0, %c0_i32_1 : i32, i32, i32, i32
  }
  func.func @transform_1(%arg0: i32) -> (i32, i32, i32, i32) {
    %c0_i32 = arith.constant 0 : i32
    %c0_i32_0 = arith.constant 0 : i32
    %c0_i32_1 = arith.constant 0 : i32
    %c0_i32_2 = arith.constant 0 : i32
    return %arg0, %c0_i32, %c0_i32_0, %c0_i32_1 : i32, i32, i32, i32
  }
  func.func @transform_2(%arg0: i32) -> (i32, i32, i32, i32) {
    %c0_i32 = arith.constant 0 : i32
    %c0_i32_0 = arith.constant 0 : i32
    %c0_i32_1 = arith.constant 0 : i32
    %c0_i32_2 = arith.constant 0 : i32
    return %arg0, %c0_i32, %c0_i32_0, %c0_i32_1 : i32, i32, i32, i32
  }
  func.func @transform_3(%arg0: i32) -> (i32, i32, i32, i32) {
    %c0_i32 = arith.constant 0 : i32
    %c0_i32_0 = arith.constant 0 : i32
    %c0_i32_1 = arith.constant 0 : i32
    %c0_i32_2 = arith.constant 0 : i32
    return %arg0, %c0_i32, %c0_i32_0, %c0_i32_1 : i32, i32, i32, i32
  }
  func.func @transform_4(%arg0: i32) -> (i32, i32, i32, i32) {
    %c0_i32 = arith.constant 0 : i32
    %c0_i32_0 = arith.constant 0 : i32
    %c0_i32_1 = arith.constant 0 : i32
    %c0_i32_2 = arith.constant 0 : i32
    return %arg0, %c0_i32, %c0_i32_0, %c0_i32_1 : i32, i32, i32, i32
  }
}

module attributes {stable_mosaic.version = 11 : i64} {
  func.func @kernel(%arg0: i32, %arg1: memref<1x50x128xbf16, #tpu.memory_space<vmem>>, %arg2: memref<1152x256xbf16, #tpu.memory_space<vmem>>, %arg3: memref<1x256xf32, #tpu.memory_space<vmem>>, %arg4: memref<1x36x256xf32, #tpu.memory_space<vmem>>, %arg5: memref<36x1152xbf16, #tpu.memory_space<vmem>>) attributes {dimension_semantics = [#tpu.dimension_semantics<parallel>], iteration_bounds = array<i64: 2>, scalar_prefetch = 0 : i64, scratch_operands = 1 : i64, tpu.core_type = #tpu.core_type<tc>, window_params = [{transform_indices = @transform_0, window_bounds = array<i64: 1, 50, 128>}, {pipeline_mode = #tpu.pipeline_mode<synchronous>, transform_indices = @transform_1, window_bounds = array<i64: 1152, 256>}, {pipeline_mode = #tpu.pipeline_mode<synchronous>, transform_indices = @transform_2, window_bounds = array<i64: 1, 256>}, {transform_indices = @transform_3, window_bounds = array<i64: 1, 36, 256>}]} {
    %c0 = arith.constant 0 : index
    %c0_0 = arith.constant 0 : index
    %c0_1 = arith.constant 0 : index
    %0 = vector.load %arg1[%c0, %c0_0, %c0_1] : memref<1x50x128xbf16, #tpu.memory_space<vmem>>, vector<1x50x128xbf16>
    %1 = vector.shape_cast %0 : vector<1x50x128xbf16> to vector<50x128xbf16>
    %2 = arith.extf %1 : vector<50x128xbf16> to vector<50x128xf32>
    %3 = vector.extract_strided_slice %2 {offsets = [0, 0], sizes = [36, 128], strides = [1, 1]} : vector<50x128xf32> to vector<36x128xf32>
    %4 = arith.truncf %3 : vector<36x128xf32> to vector<36x128xbf16>
    %c0_2 = arith.constant 0 : index
    %c0_3 = arith.constant 0 : index
    %5 = vector.load %arg5[%c0_2, %c0_3] : memref<36x1152xbf16, #tpu.memory_space<vmem>>, vector<36x128xbf16>
    tpu.vector_store %arg5[%c0_2, %c0_3], %4 {strides = array<i32>} : memref<36x1152xbf16, #tpu.memory_space<vmem>>, vector<36x128xbf16>,
    %6 = vector.extract_strided_slice %2 {offsets = [1, 0], sizes = [36, 128], strides = [1, 1]} : vector<50x128xf32> to vector<36x128xf32>
    %7 = arith.truncf %6 : vector<36x128xf32> to vector<36x128xbf16>
    %c0_4 = arith.constant 0 : index
    %c128 = arith.constant 128 : index
    %8 = vector.load %arg5[%c0_4, %c128] : memref<36x1152xbf16, #tpu.memory_space<vmem>>, vector<36x128xbf16>
    tpu.vector_store %arg5[%c0_4, %c128], %7 {strides = array<i32>} : memref<36x1152xbf16, #tpu.memory_space<vmem>>, vector<36x128xbf16>,
    %9 = vector.extract_strided_slice %2 {offsets = [2, 0], sizes = [36, 128], strides = [1, 1]} : vector<50x128xf32> to vector<36x128xf32>
    %10 = arith.truncf %9 : vector<36x128xf32> to vector<36x128xbf16>
    %c0_5 = arith.constant 0 : index
    %c256 = arith.constant 256 : index
    %11 = vector.load %arg5[%c0_5, %c256] : memref<36x1152xbf16, #tpu.memory_space<vmem>>, vector<36x128xbf16>
    tpu.vector_store %arg5[%c0_5, %c256], %10 {strides = array<i32>} : memref<36x1152xbf16, #tpu.memory_space<vmem>>, vector<36x128xbf16>,
    %12 = vector.extract_strided_slice %2 {offsets = [6, 0], sizes = [36, 128], strides = [1, 1]} : vector<50x128xf32> to vector<36x128xf32>
    %13 = arith.truncf %12 : vector<36x128xf32> to vector<36x128xbf16>
    %c0_6 = arith.constant 0 : index
    %c384 = arith.constant 384 : index
    %14 = vector.load %arg5[%c0_6, %c384] : memref<36x1152xbf16, #tpu.memory_space<vmem>>, vector<36x128xbf16>
    tpu.vector_store %arg5[%c0_6, %c384], %13 {strides = array<i32>} : memref<36x1152xbf16, #tpu.memory_space<vmem>>, vector<36x128xbf16>,
    %15 = vector.extract_strided_slice %2 {offsets = [7, 0], sizes = [36, 128], strides = [1, 1]} : vector<50x128xf32> to vector<36x128xf32>
    %16 = arith.truncf %15 : vector<36x128xf32> to vector<36x128xbf16>
    %c0_7 = arith.constant 0 : index
    %c512 = arith.constant 512 : index
    %17 = vector.load %arg5[%c0_7, %c512] : memref<36x1152xbf16, #tpu.memory_space<vmem>>, vector<36x128xbf16>
    tpu.vector_store %arg5[%c0_7, %c512], %16 {strides = array<i32>} : memref<36x1152xbf16, #tpu.memory_space<vmem>>, vector<36x128xbf16>,
    %18 = vector.extract_strided_slice %2 {offsets = [8, 0], sizes = [36, 128], strides = [1, 1]} : vector<50x128xf32> to vector<36x128xf32>
    %19 = arith.truncf %18 : vector<36x128xf32> to vector<36x128xbf16>
    %c0_8 = arith.constant 0 : index
    %c640 = arith.constant 640 : index
    %20 = vector.load %arg5[%c0_8, %c640] : memref<36x1152xbf16, #tpu.memory_space<vmem>>, vector<36x128xbf16>
    tpu.vector_store %arg5[%c0_8, %c640], %19 {strides = array<i32>} : memref<36x1152xbf16, #tpu.memory_space<vmem>>, vector<36x128xbf16>,
    %21 = vector.extract_strided_slice %2 {offsets = [12, 0], sizes = [36, 128], strides = [1, 1]} : vector<50x128xf32> to vector<36x128xf32>
    %22 = arith.truncf %21 : vector<36x128xf32> to vector<36x128xbf16>
    %c0_9 = arith.constant 0 : index
    %c768 = arith.constant 768 : index
    %23 = vector.load %arg5[%c0_9, %c768] : memref<36x1152xbf16, #tpu.memory_space<vmem>>, vector<36x128xbf16>
    tpu.vector_store %arg5[%c0_9, %c768], %22 {strides = array<i32>} : memref<36x1152xbf16, #tpu.memory_space<vmem>>, vector<36x128xbf16>,
    %24 = vector.extract_strided_slice %2 {offsets = [13, 0], sizes = [36, 128], strides = [1, 1]} : vector<50x128xf32> to vector<36x128xf32>
    %25 = arith.truncf %24 : vector<36x128xf32> to vector<36x128xbf16>
    %c0_10 = arith.constant 0 : index
    %c896 = arith.constant 896 : index
    %26 = vector.load %arg5[%c0_10, %c896] : memref<36x1152xbf16, #tpu.memory_space<vmem>>, vector<36x128xbf16>
    tpu.vector_store %arg5[%c0_10, %c896], %25 {strides = array<i32>} : memref<36x1152xbf16, #tpu.memory_space<vmem>>, vector<36x128xbf16>,
    %27 = vector.extract_strided_slice %2 {offsets = [14, 0], sizes = [36, 128], strides = [1, 1]} : vector<50x128xf32> to vector<36x128xf32>
    %28 = arith.truncf %27 : vector<36x128xf32> to vector<36x128xbf16>
    %c0_11 = arith.constant 0 : index
    %c1024 = arith.constant 1024 : index
    %29 = vector.load %arg5[%c0_11, %c1024] : memref<36x1152xbf16, #tpu.memory_space<vmem>>, vector<36x128xbf16>
    tpu.vector_store %arg5[%c0_11, %c1024], %28 {strides = array<i32>} : memref<36x1152xbf16, #tpu.memory_space<vmem>>, vector<36x128xbf16>,
    %c0_12 = arith.constant 0 : index
    %c0_13 = arith.constant 0 : index
    %30 = vector.load %arg5[%c0_12, %c0_13] : memref<36x1152xbf16, #tpu.memory_space<vmem>>, vector<36x1152xbf16>
    %c0_14 = arith.constant 0 : index
    %c0_15 = arith.constant 0 : index
    %31 = vector.load %arg2[%c0_14, %c0_15] : memref<1152x256xbf16, #tpu.memory_space<vmem>>, vector<1152x256xbf16>
    %cst = arith.constant dense<0.000000e+00> : vector<36x256xf32>
    %32 = tpu.matmul %30, %31, %cst {dimension_numbers = #tpu.dot_dimension_numbers<[1], [0], [0], [1], [0, 0, 1, 1], [], []>} : vector<36x1152xbf16>, vector<1152x256xbf16>, vector<36x256xf32> -> vector<36x256xf32>
    %c0_16 = arith.constant 0 : index
    %c0_17 = arith.constant 0 : index
    %33 = vector.load %arg3[%c0_16, %c0_17] : memref<1x256xf32, #tpu.memory_space<vmem>>, vector<1x256xf32>
    %34 = vector.broadcast %33 : vector<1x256xf32> to vector<36x256xf32>
    %35 = arith.addf %32, %34 : vector<36x256xf32>
    %cst_18 = arith.constant 0.000000e+00 : f32
    %36 = vector.broadcast %cst_18 : f32 to vector<36x256xf32>
    %37 = arith.maximumf %35, %36 : vector<36x256xf32>
    %c0_19 = arith.constant 0 : index
    %c0_20 = arith.constant 0 : index
    %c0_21 = arith.constant 0 : index
    %38 = vector.load %arg4[%c0_19, %c0_20, %c0_21] : memref<1x36x256xf32, #tpu.memory_space<vmem>>, vector<1x36x256xf32>
    %39 = vector.shape_cast %38 : vector<1x36x256xf32> to vector<36x256xf32>
    %40 = vector.shape_cast %37 : vector<36x256xf32> to vector<1x36x256xf32>
    tpu.vector_store %arg4[%c0_19, %c0_20, %c0_21], %40 {strides = array<i32>} : memref<1x36x256xf32, #tpu.memory_space<vmem>>, vector<1x36x256xf32>,
    return
  }
  func.func @transform_0(%arg0: i32) -> (i32, i32, i32) {
    %c0_i32 = arith.constant 0 : i32
    %c0_i32_0 = arith.constant 0 : i32
    %c0_i32_1 = arith.constant 0 : i32
    return %arg0, %c0_i32, %c0_i32_0 : i32, i32, i32
  }
  func.func @transform_1(%arg0: i32) -> (i32, i32) {
    %c0_i32 = arith.constant 0 : i32
    %c0_i32_0 = arith.constant 0 : i32
    %c0_i32_1 = arith.constant 0 : i32
    return %c0_i32, %c0_i32_0 : i32, i32
  }
  func.func @transform_2(%arg0: i32) -> (i32, i32) {
    %c0_i32 = arith.constant 0 : i32
    %c0_i32_0 = arith.constant 0 : i32
    %c0_i32_1 = arith.constant 0 : i32
    return %c0_i32, %c0_i32_0 : i32, i32
  }
  func.func @transform_3(%arg0: i32) -> (i32, i32, i32) {
    %c0_i32 = arith.constant 0 : i32
    %c0_i32_0 = arith.constant 0 : i32
    %c0_i32_1 = arith.constant 0 : i32
    return %arg0, %c0_i32, %c0_i32_0 : i32, i32, i32
  }
}

</mosaic_0001>

<llo_original>
// kernel: lte_forward.7
$region0: #{lte_forward.7}
  #allocation0 [shape = 'u32[]', space=smem, size = 0x4, offset = 0x4, fixed_abs, tag = 'smem constant byte address 0x4 - core index']
  #allocation1 [shape = 'u32[144,128]{1,0:T(1,128)}', space=vmem, size = 0x12000, scoped, tag = 'internal scratch']
  %s0 = inlined_call_operand.vmem [shape: bf16[2,256,32], index: 0, kind: input, shape index: {}]
  %s1 = inlined_call_operand.vmem [shape: bf16[32,64], index: 1, kind: input, shape index: {}]
  %s2 = inlined_call_operand.vmem [shape: f32[1,64], index: 2, kind: input, shape index: {}]
  %s3 = inlined_call_operand.vmem [shape: f32[2,256,64], index: 3, kind: output, shape index: {}]
  %s4 = sld [smem:[#allocation0]]
  $region45: #{lte_forward.7} parent=0
    _
  %s6 = ssub.s32 1, %s4
  %s7 = scalar_select 0, %s6, %s4
  loop: start=0, step=1, limit=4
  $region2: #{lte_forward.7} parent=0 // loop_pre_header
    _
  $region3: #{lte_forward.7} parent=0 // loop_header
    %s9 = sphi 0, %s13
    %p10 = scmp.ge.s32.totalorder %s9, 4
    %s19 = sphi 0, %s21
    %s22 = sphi 0, %s19
    %s23 = sphi 0, %s22
    %s39 = sphi 0, %s23
    %s43 = sphi 0, %s43
    %s45 = sphi 0, %s43
    %s46 = sphi 0, %s45
    %s60 = sphi 0, %s46
    %s64 = sphi 0, %s64
    %s66 = sphi 0, %s64
    %s67 = sphi 0, %s66
    %s81 = sphi 0, %s67
    %s87 = sphi 0, %s89
    %s90 = sphi 0, %s87
    %s91 = sphi 0, %s90
    %s107 = sphi 0, %s91
  $region4: #{lte_forward.7} parent=0 // loop_header_branch
    %12 = sbr.rel (%p10) target = $region8
  $region5: #{lte_forward.7} parent=0 // loop_body
    %s14 = ssub.s32 %s9, 1
    %s15 = ssub.s32 %s9, 2
    %s16 = sadd.s32 %s9, 1
    %s17 = ssub.s32 %s9, %s16
    %p18 = scmp.eq.s32.totalorder %s17, 0
    %s20 = sadd.s32 %s19, 1
    %s21 = scalar_select %p18, %s19, %s20
    %p24 = pneg %p18
    %p25 = scmp.eq.s32.totalorder %s9, 1
    %p26 = por %p24, %p25
    %p27 = scmp.ne.s32.totalorder %s19, %s22
    %p28 = scmp.eq.s32.totalorder %s9, 0
    %p29 = por %p27, %p28
    %p30 = scmp.ne.s32.totalorder %s19, %s22
    %p31 = scmp.eq.s32.totalorder %s14, 1
    %p32 = por %p30, %p31
    %p33 = scmp.ne.s32.totalorder %s22, %s23
    %p34 = scmp.eq.s32.totalorder %s14, 0
    %p35 = por %p33, %p34
    %p36 = scmp.ne.s32.totalorder %s22, %s23
    %p37 = scmp.eq.s32.totalorder %s15, 1
    %p38 = por %p36, %p37
    %p40 = scmp.ne.s32.totalorder %s23, %s39
    %p41 = scmp.eq.s32.totalorder %s15, 0
    %p42 = por %p40, %p41
    %s44 = sadd.s32 %s43, 1
    %p47 = scmp.eq.s32.totalorder %s9, 1
    %p48 = scmp.ne.s32.totalorder %s43, %s45
    %p49 = scmp.eq.s32.totalorder %s9, 0
    %p50 = por %p48, %p49
    %p51 = scmp.ne.s32.totalorder %s43, %s45
    %p52 = scmp.eq.s32.totalorder %s14, 1
    %p53 = por %p51, %p52
    %p54 = scmp.ne.s32.totalorder %s45, %s46
    %p55 = scmp.eq.s32.totalorder %s14, 0
    %p56 = por %p54, %p55
    %p57 = scmp.ne.s32.totalorder %s45, %s46
    %p58 = scmp.eq.s32.totalorder %s15, 1
    %p59 = por %p57, %p58
    %p61 = scmp.ne.s32.totalorder %s46, %s60
    %p62 = scmp.eq.s32.totalorder %s15, 0
    %p63 = por %p61, %p62
    %s65 = sadd.s32 %s64, 1
    %p68 = scmp.eq.s32.totalorder %s9, 1
    %p69 = scmp.ne.s32.totalorder %s64, %s66
    %p70 = scmp.eq.s32.totalorder %s9, 0
    %p71 = por %p69, %p70
    %p72 = scmp.ne.s32.totalorder %s64, %s66
    %p73 = scmp.eq.s32.totalorder %s14, 1
    %p74 = por %p72, %p73
    %p75 = scmp.ne.s32.totalorder %s66, %s67
    %p76 = scmp.eq.s32.totalorder %s14, 0
    %p77 = por %p75, %p76
    %p78 = scmp.ne.s32.totalorder %s66, %s67
    %p79 = scmp.eq.s32.totalorder %s15, 1
    %p80 = por %p78, %p79
    %p82 = scmp.ne.s32.totalorder %s67, %s81
    %p83 = scmp.eq.s32.totalorder %s15, 0
    %p84 = por %p82, %p83
    %s85 = ssub.s32 %s9, %s16
    %p86 = scmp.eq.s32.totalorder %s85, 0
    %s88 = sadd.s32 %s87, 1
    %s89 = scalar_select %p86, %s87, %s88
    %p92 = pneg %p86
    %p93 = scmp.eq.s32.totalorder %s9, 1
    %p94 = por %p92, %p93
    %p95 = scmp.ne.s32.totalorder %s87, %s90
    %p96 = scmp.eq.s32.totalorder %s9, 0
    %p97 = por %p95, %p96
    %p98 = scmp.ne.s32.totalorder %s87, %s90
    %p99 = scmp.eq.s32.totalorder %s14, 1
    %p100 = por %p98, %p99
    %p101 = scmp.ne.s32.totalorder %s90, %s91
    %p102 = scmp.eq.s32.totalorder %s14, 0
    %p103 = por %p101, %p102
    %p104 = scmp.ne.s32.totalorder %s90, %s91
    %p105 = scmp.eq.s32.totalorder %s15, 1
    %p106 = por %p104, %p105
    %p108 = scmp.ne.s32.totalorder %s91, %s107
    %p109 = scmp.eq.s32.totalorder %s15, 0
    %p110 = por %p108, %p109
    %p111 = scmp.le.s32.totalorder 1, %s9
    %p112 = scmp.lt.s32.totalorder %s9, 3
    %p113 = pnand %p111, %p112
    %p114 = pneg %p113
    // Predicated region
    $region9: #{lte_forward.7} parent=5 // pred_check
      _
    $region10: #{lte_forward.7} parent=5 // pred_check_branch
      %116 = sbr.rel (%p113) target = $region12
    $region11: #{lte_forward.7} parent=5 // pred_region
      %s117 = ssub.s32 %s9, 1
      // Predicated region
      $region13: #{lte_forward.7} parent=11 // pred_check
        %p118 = pneg %p56
      $region14: #{lte_forward.7} parent=11 // pred_check_branch
        %120 = sbr.rel (%p118) target = $region16
      $region15: #{lte_forward.7} parent=11 // pred_region
        _
      $region16: #{lte_forward.7} parent=11 // pred_fallthru
        _
      // Predicated region
      $region17: #{lte_forward.7} parent=11 // pred_check
        %p121 = pneg %p77
      $region18: #{lte_forward.7} parent=11 // pred_check_branch
        %123 = sbr.rel (%p121) target = $region20
      $region19: #{lte_forward.7} parent=11 // pred_region
        _
      $region20: #{lte_forward.7} parent=11 // pred_fallthru
        _
    $region12: #{lte_forward.7} parent=5 // pred_fallthru
      _
    %p124 = scmp.lt.s32.totalorder %s9, 2
    // Predicated region
    $region21: #{lte_forward.7} parent=5 // pred_check
      %p125 = pneg %p124
    $region22: #{lte_forward.7} parent=5 // pred_check_branch
      %127 = sbr.rel (%p125) target = $region24
    $region23: #{lte_forward.7} parent=5 // pred_region
      // Predicated region
      $region25: #{lte_forward.7} parent=23 // pred_check
        %p128 = pneg %p29
      $region26: #{lte_forward.7} parent=23 // pred_check_branch
        %130 = sbr.rel (%p128) target = $region28
      $region27: #{lte_forward.7} parent=23 // pred_region
        %p131 = scmp.lt.s32.totalorder %s9, 1
        %s132 = scalar_select %p131, %s9, 1
        %s133 = smul.addr %s132, 32
        %s134 = smul.addr %s133, 4
        %s135 = scalar_lea.vmem %s0, %s134
      $region28: #{lte_forward.7} parent=23 // pred_fallthru
        _
    $region24: #{lte_forward.7} parent=5 // pred_fallthru
      _
    %p136 = scmp.le.s32.totalorder 1, %s9
    %p137 = scmp.lt.s32.totalorder %s9, 3
    %p138 = pnand %p136, %p137
    %p139 = pneg %p138
    // Predicated region
    $region29: #{lte_forward.7} parent=5 // pred_check
      _
    $region30: #{lte_forward.7} parent=5 // pred_check_branch
      %141 = sbr.rel (%p138) target = $region32
    $region31: #{lte_forward.7} parent=5 // pred_region
      %s142 = ssub.s32 %s9, 1
      %p143 = scmp.lt.s32.totalorder %s14, 1
      %s144 = scalar_select %p143, %s14, 1
      %s145 = smul.addr %s144, 32
      %s146 = smul.addr %s145, 4
      %s147 = scalar_lea.vmem %s0, %s146
      %p148 = pneg %p35
      %p149 = pneg %p32
      %p150 = pneg %p56
      %p151 = pneg %p53
      %p152 = pneg %p77
      %p153 = pneg %p74
      %p154 = pneg %p103
      %p155 = pneg %p100
      %p156 = scmp.lt.s32.totalorder %s14, 1
      %s157 = scalar_select %p156, %s14, 1
      %s158 = smul.addr %s157, 32
      %s159 = smul.addr %s158, 8
      %s160 = scalar_lea.vmem %s3, %s159
      %p161 = scmp.lt.s32.totalorder %s14, 1
      %s162 = scalar_select %p161, %s14, 1
      %s163 = smul.addr %s162, 32
      %s164 = smul.addr %s163, 4
      %s165 = scalar_lea.vmem %s0, %s164
      %p166 = scmp.lt.s32.totalorder %s14, 1
      %s167 = scalar_select %p166, %s14, 1
      %s168 = smul.addr %s167, 32
      %s169 = smul.addr %s168, 8
      %s170 = scalar_lea.vmem %s3, %s169
      %v172 = vld [vmem:[%s165] sm:$0xf]
      %v173 = vld [vmem:[%s165 + $0x4] sm:$0xf]
      %v174 = vld [vmem:[%s165 + $0x8] sm:$0xf]
      %v175 = vld [vmem:[%s165 + $0xc] sm:$0xf]
      %v176 = vld [vmem:[%s165 + $0x10] sm:$0xf]
      %v177 = vld [vmem:[%s165 + $0x14] sm:$0xf]
      %v178 = vld [vmem:[%s165 + $0x18] sm:$0xf]
      %v179 = vld [vmem:[%s165 + $0x1c] sm:$0xf]
      %v180 = vld [vmem:[%s165 + $0x20] sm:$0xf]
      %v181 = vld [vmem:[%s165 + $0x24] sm:$0xf]
      %v182 = vld [vmem:[%s165 + $0x28] sm:$0xf]
      %v183 = vld [vmem:[%s165 + $0x2c] sm:$0xf]
      %v184 = vld [vmem:[%s165 + $0x30] sm:$0xf]
      %v185 = vld [vmem:[%s165 + $0x34] sm:$0xf]
      %v186 = vld [vmem:[%s165 + $0x38] sm:$0xf]
      %v187 = vld [vmem:[%s165 + $0x3c] sm:$0xf]
      %v188 = vld [vmem:[%s165 + $0x40] sm:$0xf]
      %v189 = vld [vmem:[%s165 + $0x44] sm:$0xf]
      %v190 = vld [vmem:[%s165 + $0x48] sm:$0xf]
      %v191 = vld [vmem:[%s165 + $0x4c] sm:$0xf]
      %v192 = vld [vmem:[%s165 + $0x50] sm:$0xf]
      %v193 = vld [vmem:[%s165 + $0x54] sm:$0xf]
      %v194 = vld [vmem:[%s165 + $0x58] sm:$0xf]
      %v195 = vld [vmem:[%s165 + $0x5c] sm:$0xf]
      %v196 = vld [vmem:[%s165 + $0x60] sm:$0xf]
      %v197 = vld [vmem:[%s165 + $0x64] sm:$0xf]
      %v198 = vld [vmem:[%s165 + $0x68] sm:$0xf]
      %v199 = vld [vmem:[%s165 + $0x6c] sm:$0xf]
      %v200 = vld [vmem:[%s165 + $0x70] sm:$0xf]
      %v201 = vld [vmem:[%s165 + $0x74] sm:$0xf]
      %v202 = vld [vmem:[%s165 + $0x78] sm:$0xf]
      %v203 = vld [vmem:[%s165 + $0x7c] sm:$0xf]
      %v204 = vld [vmem:[%s1] sm:$0xf]
      %v205 = vld [vmem:[%s1 + $0x4] sm:$0xf]
      %v206 = vld [vmem:[%s1 + $0x8] sm:$0xf]
      %v207 = vld [vmem:[%s1 + $0xc] sm:$0xf]
      %v208 = vld [vmem:[%s2] sm:$0x1]
      %v210 = vlaneseq
      %v211 = vshrl.u32 %v210, 7
      %v212 = vsub.s32 0, %v211
      %v213 = vrot.slane %v208, %v212
      %v247 = vunpack.c.l.b16 %v172
      %v248 = vunpack.c.l.b16 %v173
      %v249 = vunpack.c.l.b16 %v174
      %v250 = vunpack.c.l.b16 %v175
      %v251 = vunpack.c.l.b16 %v176
      %v252 = vunpack.c.l.b16 %v177
      %v253 = vunpack.c.l.b16 %v178
      %v254 = vunpack.c.l.b16 %v179
      %v255 = vunpack.c.l.b16 %v180
      %v256 = vunpack.c.l.b16 %v181
      %v257 = vunpack.c.l.b16 %v182
      %v258 = vunpack.c.l.b16 %v183
      %v259 = vunpack.c.l.b16 %v184
      %v260 = vunpack.c.l.b16 %v185
      %v261 = vunpack.c.l.b16 %v186
      %v262 = vunpack.c.l.b16 %v187
      %v263 = vunpack.c.l.b16 %v188
      %v264 = vunpack.c.l.b16 %v189
      %v265 = vunpack.c.l.b16 %v190
      %v266 = vunpack.c.l.b16 %v191
      %v267 = vunpack.c.l.b16 %v192
      %v268 = vunpack.c.l.b16 %v193
      %v269 = vunpack.c.l.b16 %v194
      %v270 = vunpack.c.l.b16 %v195
      %v271 = vunpack.c.l.b16 %v196
      %v272 = vunpack.c.l.b16 %v197
      %v273 = vunpack.c.l.b16 %v198
      %v274 = vunpack.c.l.b16 %v199
      %v275 = vunpack.c.l.b16 %v200
      %v276 = vunpack.c.l.b16 %v201
      %v277 = vunpack.c.l.b16 %v202
      %v278 = vunpack.c.l.b16 %v203
      %v279 = vpack.c.b16 %v248, %v247
      %v280 = vpack.c.b16 %v250, %v249
      %v281 = vpack.c.b16 %v252, %v251
      %v282 = vpack.c.b16 %v254, %v253
      %v283 = vpack.c.b16 %v256, %v255
      %v284 = vpack.c.b16 %v258, %v257
      %v285 = vpack.c.b16 %v260, %v259
      %v286 = vpack.c.b16 %v262, %v261
      %v287 = vpack.c.b16 %v264, %v263
      %v288 = vpack.c.b16 %v266, %v265
      %v289 = vpack.c.b16 %v268, %v267
      %v290 = vpack.c.b16 %v270, %v269
      %v291 = vpack.c.b16 %v272, %v271
      %v292 = vpack.c.b16 %v274, %v273
      %v293 = vpack.c.b16 %v276, %v275
      %v294 = vpack.c.b16 %v278, %v277
      %v299 = vunpack.c.l.b16 %v204
      %v300 = vunpack.c.l.b16 %v205
      %v301 = vunpack.c.l.b16 %v206
      %v302 = vunpack.c.l.b16 %v207
      %v303 = vpack.c.b16 %v300, %v299
      %v304 = vpack.c.b16 %v302, %v301
      %vm307 = vcmask 261120
      %v309 = vsel %vm307, %v279, 0
      %v312 = vsel %vm307, %v280, 0
      %v315 = vsel %vm307, %v281, 0
      %v318 = vsel %vm307, %v282, 0
      %v321 = vsel %vm307, %v283, 0
      %v324 = vsel %vm307, %v284, 0
      %v327 = vsel %vm307, %v285, 0
      %v330 = vsel %vm307, %v286, 0
      %v333 = vsel %vm307, %v287, 0
      %v336 = vsel %vm307, %v288, 0
      %v339 = vsel %vm307, %v289, 0
      %v342 = vsel %vm307, %v290, 0
      %v345 = vsel %vm307, %v291, 0
      %v348 = vsel %vm307, %v292, 0
      %v351 = vsel %vm307, %v293, 0
      %v354 = vsel %vm307, %v294, 0
      %356 = vmatprep.subr.bf16.mxu0 0
      %357 = vmatpush1.bf16.msra.mxu0 %v303
      %358 = vmatprep.subr.bf16.mxu0 0
      %359 = vmatpush1.bf16.msra.mxu0 %v304
      %360 = vmatprep.subr.bf16.mxu0 0
      %361 = vmatpush1.bf16.msra.mxu0 0
      %362 = vmatprep.subr.bf16.mxu0 0
      %363 = vmatpush1.bf16.msra.mxu0 0
      %364 = vmatprep.subr.bf16.mxu0 0
      %365 = vmatpush1.bf16.msra.mxu0 0
      %366 = vmatprep.subr.bf16.mxu0 0
      %367 = vmatpush1.bf16.msra.mxu0 0
      %368 = vmatprep.subr.bf16.mxu0 0
      %369 = vmatpush1.bf16.msra.mxu0 0
      %370 = vmatprep.subr.bf16.mxu0 0
      %371 = vmatpush1.bf16.msra.mxu0 0
      %372 = vmatprep.subr.bf16.mxu0 0
      %373 = vmatpush1.bf16.msra.mxu0 0
      %374 = vmatprep.subr.bf16.mxu0 0
      %375 = vmatpush1.bf16.msra.mxu0 0
      %376 = vmatprep.subr.bf16.mxu0 0
      %377 = vmatpush1.bf16.msra.mxu0 0
      %378 = vmatprep.subr.bf16.mxu0 0
      %379 = vmatpush1.bf16.msra.mxu0 0
      %380 = vmatprep.subr.bf16.mxu0 0
      %381 = vmatpush1.bf16.msra.mxu0 0
      %382 = vmatprep.subr.bf16.mxu0 0
      %383 = vmatpush1.bf16.msra.mxu0 0
      %384 = vmatprep.subr.bf16.mxu0 0
      %385 = vmatpush1.bf16.msra.mxu0 0
      %386 = vmatprep.subr.bf16.mxu0 0
      %387 = vmatpush1.bf16.msra.mxu0 0
      %388 = vmatprep.mubr.bf16.mxu0 0
      %389 = vmatmul.mubr.bf16.gmra.mrb[0].mxu0 %v309
      %v390 = vpop.f32.mrb[0].mxu0
      %v391 = vadd.f32 %v213, %v390
      %v392 = vpop.f32.mrb[0].mxu0
      %v393 = vpop.f32.mrb[0].mxu0
      %v394 = vadd.f32 %v213, %v393
      %v395 = vpop.f32.mrb[0].mxu0
      %396 = vmatprep.mubr.bf16.mxu0 0
      %397 = vmatmul.mubr.bf16.gmra.mrb[0].mxu0 %v312
      %v398 = vpop.f32.mrb[0].mxu0
      %v399 = vadd.f32 %v213, %v398
      %v400 = vpop.f32.mrb[0].mxu0
      %v401 = vpop.f32.mrb[0].mxu0
      %v402 = vadd.f32 %v213, %v401
      %v403 = vpop.f32.mrb[0].mxu0
      %404 = vmatprep.mubr.bf16.mxu0 0
      %405 = vmatmul.mubr.bf16.gmra.mrb[0].mxu0 %v315
      %v406 = vpop.f32.mrb[0].mxu0
      %v407 = vadd.f32 %v213, %v406
      %v408 = vpop.f32.mrb[0].mxu0
      %v409 = vpop.f32.mrb[0].mxu0
      %v410 = vadd.f32 %v213, %v409
      %v411 = vpop.f32.mrb[0].mxu0
      %412 = vmatprep.mubr.bf16.mxu0 0
      %413 = vmatmul.mubr.bf16.gmra.mrb[0].mxu0 %v318
      %v414 = vpop.f32.mrb[0].mxu0
      %v415 = vadd.f32 %v213, %v414
      %v416 = vpop.f32.mrb[0].mxu0
      %v417 = vpop.f32.mrb[0].mxu0
      %v418 = vadd.f32 %v213, %v417
      %v419 = vpop.f32.mrb[0].mxu0
      %420 = vmatprep.mubr.bf16.mxu0 0
      %421 = vmatmul.mubr.bf16.gmra.mrb[0].mxu0 %v321
      %v422 = vpop.f32.mrb[0].mxu0
      %v423 = vadd.f32 %v213, %v422
      %v424 = vpop.f32.mrb[0].mxu0
      %v425 = vpop.f32.mrb[0].mxu0
      %v426 = vadd.f32 %v213, %v425
      %v427 = vpop.f32.mrb[0].mxu0
      %428 = vmatprep.mubr.bf16.mxu0 0
      %429 = vmatmul.mubr.bf16.gmra.mrb[0].mxu0 %v324
      %v430 = vpop.f32.mrb[0].mxu0
      %v431 = vadd.f32 %v213, %v430
      %v432 = vpop.f32.mrb[0].mxu0
      %v433 = vpop.f32.mrb[0].mxu0
      %v434 = vadd.f32 %v213, %v433
      %v435 = vpop.f32.mrb[0].mxu0
      %436 = vmatprep.mubr.bf16.mxu0 0
      %437 = vmatmul.mubr.bf16.gmra.mrb[0].mxu0 %v327
      %v438 = vpop.f32.mrb[0].mxu0
      %v439 = vadd.f32 %v213, %v438
      %v440 = vpop.f32.mrb[0].mxu0
      %v441 = vpop.f32.mrb[0].mxu0
      %v442 = vadd.f32 %v213, %v441
      %v443 = vpop.f32.mrb[0].mxu0
      %444 = vmatprep.mubr.bf16.mxu0 0
      %445 = vmatmul.mubr.bf16.gmra.mrb[0].mxu0 %v330
      %v446 = vpop.f32.mrb[0].mxu0
      %v447 = vadd.f32 %v213, %v446
      %v448 = vpop.f32.mrb[0].mxu0
      %v449 = vpop.f32.mrb[0].mxu0
      %v450 = vadd.f32 %v213, %v449
      %v451 = vpop.f32.mrb[0].mxu0
      %452 = vmatprep.mubr.bf16.mxu0 0
      %453 = vmatmul.mubr.bf16.gmra.mrb[0].mxu0 %v333
      %v454 = vpop.f32.mrb[0].mxu0
      %v455 = vadd.f32 %v213, %v454
      %v456 = vpop.f32.mrb[0].mxu0
      %v457 = vpop.f32.mrb[0].mxu0
      %v458 = vadd.f32 %v213, %v457
      %v459 = vpop.f32.mrb[0].mxu0
      %460 = vmatprep.mubr.bf16.mxu0 0
      %461 = vmatmul.mubr.bf16.gmra.mrb[0].mxu0 %v336
      %v462 = vpop.f32.mrb[0].mxu0
      %v463 = vadd.f32 %v213, %v462
      %v464 = vpop.f32.mrb[0].mxu0
      %v465 = vpop.f32.mrb[0].mxu0
      %v466 = vadd.f32 %v213, %v465
      %v467 = vpop.f32.mrb[0].mxu0
      %468 = vmatprep.mubr.bf16.mxu0 0
      %469 = vmatmul.mubr.bf16.gmra.mrb[0].mxu0 %v339
      %v470 = vpop.f32.mrb[0].mxu0
      %v471 = vadd.f32 %v213, %v470
      %v472 = vpop.f32.mrb[0].mxu0
      %v473 = vpop.f32.mrb[0].mxu0
      %v474 = vadd.f32 %v213, %v473
      %v475 = vpop.f32.mrb[0].mxu0
      %476 = vmatprep.mubr.bf16.mxu0 0
      %477 = vmatmul.mubr.bf16.gmra.mrb[0].mxu0 %v342
      %v478 = vpop.f32.mrb[0].mxu0
      %v479 = vadd.f32 %v213, %v478
      %v480 = vpop.f32.mrb[0].mxu0
      %v481 = vpop.f32.mrb[0].mxu0
      %v482 = vadd.f32 %v213, %v481
      %v483 = vpop.f32.mrb[0].mxu0
      %484 = vmatprep.mubr.bf16.mxu0 0
      %485 = vmatmul.mubr.bf16.gmra.mrb[0].mxu0 %v345
      %v486 = vpop.f32.mrb[0].mxu0
      %v487 = vadd.f32 %v213, %v486
      %v488 = vpop.f32.mrb[0].mxu0
      %v489 = vpop.f32.mrb[0].mxu0
      %v490 = vadd.f32 %v213, %v489
      %v491 = vpop.f32.mrb[0].mxu0
      %492 = vmatprep.mubr.bf16.mxu0 0
      %493 = vmatmul.mubr.bf16.gmra.mrb[0].mxu0 %v348
      %v494 = vpop.f32.mrb[0].mxu0
      %v495 = vadd.f32 %v213, %v494
      %v496 = vpop.f32.mrb[0].mxu0
      %v497 = vpop.f32.mrb[0].mxu0
      %v498 = vadd.f32 %v213, %v497
      %v499 = vpop.f32.mrb[0].mxu0
      %500 = vmatprep.mubr.bf16.mxu0 0
      %501 = vmatmul.mubr.bf16.gmra.mrb[0].mxu0 %v351
      %v502 = vpop.f32.mrb[0].mxu0
      %v503 = vadd.f32 %v213, %v502
      %v504 = vpop.f32.mrb[0].mxu0
      %v505 = vpop.f32.mrb[0].mxu0
      %v506 = vadd.f32 %v213, %v505
      %v507 = vpop.f32.mrb[0].mxu0
      %508 = vmatprep.mubr.bf16.mxu0 0
      %509 = vmatmul.mubr.bf16.gmra.mrb[0].mxu0 %v354
      %v510 = vpop.f32.mrb[0].mxu0
      %v511 = vadd.f32 %v213, %v510
      %v512 = vpop.f32.mrb[0].mxu0
      %v513 = vpop.f32.mrb[0].mxu0
      %v514 = vadd.f32 %v213, %v513
      %v515 = vpop.f32.mrb[0].mxu0
      %516 = vdwg.mxu0
      %v517 = vmax.f32 %v391, 0.0
      %v518 = vmax.f32 %v394, 0.0
      %v519 = vmax.f32 %v399, 0.0
      %v520 = vmax.f32 %v402, 0.0
      %v521 = vmax.f32 %v407, 0.0
      %v522 = vmax.f32 %v410, 0.0
      %v523 = vmax.f32 %v415, 0.0
      %v524 = vmax.f32 %v418, 0.0
      %v525 = vmax.f32 %v423, 0.0
      %v526 = vmax.f32 %v426, 0.0
      %v527 = vmax.f32 %v431, 0.0
      %v528 = vmax.f32 %v434, 0.0
      %v529 = vmax.f32 %v439, 0.0
      %v530 = vmax.f32 %v442, 0.0
      %v531 = vmax.f32 %v447, 0.0
      %v532 = vmax.f32 %v450, 0.0
      %v533 = vmax.f32 %v455, 0.0
      %v534 = vmax.f32 %v458, 0.0
      %v535 = vmax.f32 %v463, 0.0
      %v536 = vmax.f32 %v466, 0.0
      %v537 = vmax.f32 %v471, 0.0
      %v538 = vmax.f32 %v474, 0.0
      %v539 = vmax.f32 %v479, 0.0
      %v540 = vmax.f32 %v482, 0.0
      %v541 = vmax.f32 %v487, 0.0
      %v542 = vmax.f32 %v490, 0.0
      %v543 = vmax.f32 %v495, 0.0
      %v544 = vmax.f32 %v498, 0.0
      %v545 = vmax.f32 %v503, 0.0
      %v546 = vmax.f32 %v506, 0.0
      %v547 = vmax.f32 %v511, 0.0
      %v548 = vmax.f32 %v514, 0.0
      %vm549 = vcmask 523264
      %550 = vst.msk [vmem:[%s170] sm:$0xff] %vm549, %v517
      %551 = vst.msk [vmem:[%s170 + $0x8] sm:$0xff] %vm549, %v518
      %552 = vst.msk [vmem:[%s170 + $0x10] sm:$0xff] %vm549, %v519
      %553 = vst.msk [vmem:[%s170 + $0x18] sm:$0xff] %vm549, %v520
      %554 = vst.msk [vmem:[%s170 + $0x20] sm:$0xff] %vm549, %v521
      %555 = vst.msk [vmem:[%s170 + $0x28] sm:$0xff] %vm549, %v522
      %556 = vst.msk [vmem:[%s170 + $0x30] sm:$0xff] %vm549, %v523
      %557 = vst.msk [vmem:[%s170 + $0x38] sm:$0xff] %vm549, %v524
      %558 = vst.msk [vmem:[%s170 + $0x40] sm:$0xff] %vm549, %v525
      %559 = vst.msk [vmem:[%s170 + $0x48] sm:$0xff] %vm549, %v526
      %560 = vst.msk [vmem:[%s170 + $0x50] sm:$0xff] %vm549, %v527
      %561 = vst.msk [vmem:[%s170 + $0x58] sm:$0xff] %vm549, %v528
      %562 = vst.msk [vmem:[%s170 + $0x60] sm:$0xff] %vm549, %v529
      %563 = vst.msk [vmem:[%s170 + $0x68] sm:$0xff] %vm549, %v530
      %564 = vst.msk [vmem:[%s170 + $0x70] sm:$0xff] %vm549, %v531
      %565 = vst.msk [vmem:[%s170 + $0x78] sm:$0xff] %vm549, %v532
      %566 = vst.msk [vmem:[%s170 + $0x80] sm:$0xff] %vm549, %v533
      %567 = vst.msk [vmem:[%s170 + $0x88] sm:$0xff] %vm549, %v534
      %568 = vst.msk [vmem:[%s170 + $0x90] sm:$0xff] %vm549, %v535
      %569 = vst.msk [vmem:[%s170 + $0x98] sm:$0xff] %vm549, %v536
      %570 = vst.msk [vmem:[%s170 + $0xa0] sm:$0xff] %vm549, %v537
      %571 = vst.msk [vmem:[%s170 + $0xa8] sm:$0xff] %vm549, %v538
      %572 = vst.msk [vmem:[%s170 + $0xb0] sm:$0xff] %vm549, %v539
      %573 = vst.msk [vmem:[%s170 + $0xb8] sm:$0xff] %vm549, %v540
      %574 = vst.msk [vmem:[%s170 + $0xc0] sm:$0xff] %vm549, %v541
      %575 = vst.msk [vmem:[%s170 + $0xc8] sm:$0xff] %vm549, %v542
      %576 = vst.msk [vmem:[%s170 + $0xd0] sm:$0xff] %vm549, %v543
      %577 = vst.msk [vmem:[%s170 + $0xd8] sm:$0xff] %vm549, %v544
      %578 = vst.msk [vmem:[%s170 + $0xe0] sm:$0xff] %vm549, %v545
      %579 = vst.msk [vmem:[%s170 + $0xe8] sm:$0xff] %vm549, %v546
      %580 = vst.msk [vmem:[%s170 + $0xf0] sm:$0xff] %vm549, %v547
      %581 = vst.msk [vmem:[%s170 + $0xf8] sm:$0xff] %vm549, %v548
      %p582 = scmp.lt.s32.totalorder %s14, 1
      %s583 = scalar_select %p582, %s14, 1
      %s584 = smul.addr %s583, 32
      %s585 = smul.addr %s584, 8
      %s586 = scalar_lea.vmem %s3, %s585
      // Predicated region
      $region33: #{lte_forward.7} parent=31 // pred_check
        %p587 = pneg %p100
      $region34: #{lte_forward.7} parent=31 // pred_check_branch
        %589 = sbr.rel (%p587) target = $region36
      $region35: #{lte_forward.7} parent=31 // pred_region
        _
      $region36: #{lte_forward.7} parent=31 // pred_fallthru
        _
    $region32: #{lte_forward.7} parent=5 // pred_fallthru
      _
    %p590 = scmp.le.s32.totalorder 2, %s9
    // Predicated region
    $region37: #{lte_forward.7} parent=5 // pred_check
      %p591 = pneg %p590
    $region38: #{lte_forward.7} parent=5 // pred_check_branch
      %593 = sbr.rel (%p591) target = $region40
    $region39: #{lte_forward.7} parent=5 // pred_region
      %s594 = ssub.s32 %s9, 2
      // Predicated region
      $region41: #{lte_forward.7} parent=39 // pred_check
        %p595 = pneg %p106
      $region42: #{lte_forward.7} parent=39 // pred_check_branch
        %597 = sbr.rel (%p595) target = $region44
      $region43: #{lte_forward.7} parent=39 // pred_region
        %p598 = scmp.lt.s32.totalorder %s15, 1
        %s599 = scalar_select %p598, %s15, 1
        %s600 = smul.addr %s599, 32
        %s601 = smul.addr %s600, 8
        %s602 = scalar_lea.vmem %s3, %s601
      $region44: #{lte_forward.7} parent=39 // pred_fallthru
        _
    $region40: #{lte_forward.7} parent=5 // pred_fallthru
      _
  $region6: #{lte_forward.7} parent=0 // loop_footer
    %s13 = sadd.s32 1, %s9
  $region7: #{lte_forward.7} parent=0 // loop_footer_branch
    %8 = sbr.rel target = $region3
  $region8: #{lte_forward.7} parent=0 // loop_exit
    _

// kernel: lte_forward.9
$region0: #{lte_forward.9}
  #allocation0 [shape = 'u32[]', space=smem, size = 0x4, offset = 0x4, fixed_abs, tag = 'smem constant byte address 0x4 - core index']
  #allocation1 [shape = 'u32[144,128]{1,0:T(1,128)}', space=vmem, size = 0x12000, scoped, tag = 'internal scratch']
  %s0 = inlined_call_operand.vmem [shape: f32[2,8,8,64], index: 0, kind: input, shape index: {}]
  %s1 = inlined_call_operand.vmem [shape: f32[2,8,8,64], index: 1, kind: input, shape index: {}]
  %s2 = inlined_call_operand.vmem [shape: f32[2,8,8,64], index: 2, kind: input, shape index: {}]
  %s3 = inlined_call_operand.vmem [shape: f32[2,8,8,64], index: 3, kind: input, shape index: {}]
  %s4 = inlined_call_operand.vmem [shape: f32[2,8,8,64], index: 4, kind: output, shape index: {}]
  %s5 = sld [smem:[#allocation0]]
  $region49: #{lte_forward.9} parent=0
    _
  %s7 = ssub.s32 1, %s5
  %s8 = scalar_select 0, %s7, %s5
  loop: start=0, step=1, limit=4
  $region2: #{lte_forward.9} parent=0 // loop_pre_header
    _
  $region3: #{lte_forward.9} parent=0 // loop_header
    %s10 = sphi 0, %s14
    %p11 = scmp.ge.s32.totalorder %s10, 4
    %s20 = sphi 0, %s22
    %s23 = sphi 0, %s20
    %s24 = sphi 0, %s23
    %s40 = sphi 0, %s24
    %s46 = sphi 0, %s48
    %s49 = sphi 0, %s46
    %s50 = sphi 0, %s49
    %s66 = sphi 0, %s50
    %s72 = sphi 0, %s74
    %s75 = sphi 0, %s72
    %s76 = sphi 0, %s75
    %s92 = sphi 0, %s76
    %s98 = sphi 0, %s100
    %s101 = sphi 0, %s98
    %s102 = sphi 0, %s101
    %s118 = sphi 0, %s102
    %s124 = sphi 0, %s126
    %s127 = sphi 0, %s124
    %s128 = sphi 0, %s127
    %s144 = sphi 0, %s128
  $region4: #{lte_forward.9} parent=0 // loop_header_branch
    %13 = sbr.rel (%p11) target = $region8
  $region5: #{lte_forward.9} parent=0 // loop_body
    %s15 = ssub.s32 %s10, 1
    %s16 = ssub.s32 %s10, 2
    %s17 = sadd.s32 %s10, 1
    %s18 = ssub.s32 %s10, %s17
    %p19 = scmp.eq.s32.totalorder %s18, 0
    %s21 = sadd.s32 %s20, 1
    %s22 = scalar_select %p19, %s20, %s21
    %p25 = pneg %p19
    %p26 = scmp.eq.s32.totalorder %s10, 1
    %p27 = por %p25, %p26
    %p28 = scmp.ne.s32.totalorder %s20, %s23
    %p29 = scmp.eq.s32.totalorder %s10, 0
    %p30 = por %p28, %p29
    %p31 = scmp.ne.s32.totalorder %s20, %s23
    %p32 = scmp.eq.s32.totalorder %s15, 1
    %p33 = por %p31, %p32
    %p34 = scmp.ne.s32.totalorder %s23, %s24
    %p35 = scmp.eq.s32.totalorder %s15, 0
    %p36 = por %p34, %p35
    %p37 = scmp.ne.s32.totalorder %s23, %s24
    %p38 = scmp.eq.s32.totalorder %s16, 1
    %p39 = por %p37, %p38
    %p41 = scmp.ne.s32.totalorder %s24, %s40
    %p42 = scmp.eq.s32.totalorder %s16, 0
    %p43 = por %p41, %p42
    %s44 = ssub.s32 %s10, %s17
    %p45 = scmp.eq.s32.totalorder %s44, 0
    %s47 = sadd.s32 %s46, 1
    %s48 = scalar_select %p45, %s46, %s47
    %p51 = pneg %p45
    %p52 = scmp.eq.s32.totalorder %s10, 1
    %p53 = por %p51, %p52
    %p54 = scmp.ne.s32.totalorder %s46, %s49
    %p55 = scmp.eq.s32.totalorder %s10, 0
    %p56 = por %p54, %p55
    %p57 = scmp.ne.s32.totalorder %s46, %s49
    %p58 = scmp.eq.s32.totalorder %s15, 1
    %p59 = por %p57, %p58
    %p60 = scmp.ne.s32.totalorder %s49, %s50
    %p61 = scmp.eq.s32.totalorder %s15, 0
    %p62 = por %p60, %p61
    %p63 = scmp.ne.s32.totalorder %s49, %s50
    %p64 = scmp.eq.s32.totalorder %s16, 1
    %p65 = por %p63, %p64
    %p67 = scmp.ne.s32.totalorder %s50, %s66
    %p68 = scmp.eq.s32.totalorder %s16, 0
    %p69 = por %p67, %p68
    %s70 = ssub.s32 %s10, %s17
    %p71 = scmp.eq.s32.totalorder %s70, 0
    %s73 = sadd.s32 %s72, 1
    %s74 = scalar_select %p71, %s72, %s73
    %p77 = pneg %p71
    %p78 = scmp.eq.s32.totalorder %s10, 1
    %p79 = por %p77, %p78
    %p80 = scmp.ne.s32.totalorder %s72, %s75
    %p81 = scmp.eq.s32.totalorder %s10, 0
    %p82 = por %p80, %p81
    %p83 = scmp.ne.s32.totalorder %s72, %s75
    %p84 = scmp.eq.s32.totalorder %s15, 1
    %p85 = por %p83, %p84
    %p86 = scmp.ne.s32.totalorder %s75, %s76
    %p87 = scmp.eq.s32.totalorder %s15, 0
    %p88 = por %p86, %p87
    %p89 = scmp.ne.s32.totalorder %s75, %s76
    %p90 = scmp.eq.s32.totalorder %s16, 1
    %p91 = por %p89, %p90
    %p93 = scmp.ne.s32.totalorder %s76, %s92
    %p94 = scmp.eq.s32.totalorder %s16, 0
    %p95 = por %p93, %p94
    %s96 = ssub.s32 %s10, %s17
    %p97 = scmp.eq.s32.totalorder %s96, 0
    %s99 = sadd.s32 %s98, 1
    %s100 = scalar_select %p97, %s98, %s99
    %p103 = pneg %p97
    %p104 = scmp.eq.s32.totalorder %s10, 1
    %p105 = por %p103, %p104
    %p106 = scmp.ne.s32.totalorder %s98, %s101
    %p107 = scmp.eq.s32.totalorder %s10, 0
    %p108 = por %p106, %p107
    %p109 = scmp.ne.s32.totalorder %s98, %s101
    %p110 = scmp.eq.s32.totalorder %s15, 1
    %p111 = por %p109, %p110
    %p112 = scmp.ne.s32.totalorder %s101, %s102
    %p113 = scmp.eq.s32.totalorder %s15, 0
    %p114 = por %p112, %p113
    %p115 = scmp.ne.s32.totalorder %s101, %s102
    %p116 = scmp.eq.s32.totalorder %s16, 1
    %p117 = por %p115, %p116
    %p119 = scmp.ne.s32.totalorder %s102, %s118
    %p120 = scmp.eq.s32.totalorder %s16, 0
    %p121 = por %p119, %p120
    %s122 = ssub.s32 %s10, %s17
    %p123 = scmp.eq.s32.totalorder %s122, 0
    %s125 = sadd.s32 %s124, 1
    %s126 = scalar_select %p123, %s124, %s125
    %p129 = pneg %p123
    %p130 = scmp.eq.s32.totalorder %s10, 1
    %p131 = por %p129, %p130
    %p132 = scmp.ne.s32.totalorder %s124, %s127
    %p133 = scmp.eq.s32.totalorder %s10, 0
    %p134 = por %p132, %p133
    %p135 = scmp.ne.s32.totalorder %s124, %s127
    %p136 = scmp.eq.s32.totalorder %s15, 1
    %p137 = por %p135, %p136
    %p138 = scmp.ne.s32.totalorder %s127, %s128
    %p139 = scmp.eq.s32.totalorder %s15, 0
    %p140 = por %p138, %p139
    %p141 = scmp.ne.s32.totalorder %s127, %s128
    %p142 = scmp.eq.s32.totalorder %s16, 1
    %p143 = por %p141, %p142
    %p145 = scmp.ne.s32.totalorder %s128, %s144
    %p146 = scmp.eq.s32.totalorder %s16, 0
    %p147 = por %p145, %p146
    %p148 = scmp.le.s32.totalorder 1, %s10
    %p149 = scmp.lt.s32.totalorder %s10, 3
    %p150 = pnand %p148, %p149
    %p151 = pneg %p150
    // Predicated region
    $region9: #{lte_forward.9} parent=5 // pred_check
      _
    $region10: #{lte_forward.9} parent=5 // pred_check_branch
      %153 = sbr.rel (%p150) target = $region12
    $region11: #{lte_forward.9} parent=5 // pred_region
      %s154 = ssub.s32 %s10, 1
    $region12: #{lte_forward.9} parent=5 // pred_fallthru
      _
    %p155 = scmp.lt.s32.totalorder %s10, 2
    // Predicated region
    $region13: #{lte_forward.9} parent=5 // pred_check
      %p156 = pneg %p155
    $region14: #{lte_forward.9} parent=5 // pred_check_branch
      %158 = sbr.rel (%p156) target = $region16
    $region15: #{lte_forward.9} parent=5 // pred_region
      // Predicated region
      $region17: #{lte_forward.9} parent=15 // pred_check
        %p159 = pneg %p30
      $region18: #{lte_forward.9} parent=15 // pred_check_branch
        %161 = sbr.rel (%p159) target = $region20
      $region19: #{lte_forward.9} parent=15 // pred_region
        %p162 = scmp.lt.s32.totalorder %s10, 1
        %s163 = scalar_select %p162, %s10, 1
        %s164 = smul.addr %s163, 8
        %s165 = smul.addr %s164, 8
        %s166 = scalar_lea.vmem %s0, %s165
      $region20: #{lte_forward.9} parent=15 // pred_fallthru
        _
      // Predicated region
      $region21: #{lte_forward.9} parent=15 // pred_check
        %p167 = pneg %p56
      $region22: #{lte_forward.9} parent=15 // pred_check_branch
        %169 = sbr.rel (%p167) target = $region24
      $region23: #{lte_forward.9} parent=15 // pred_region
        %p170 = scmp.lt.s32.totalorder %s10, 1
        %s171 = scalar_select %p170, %s10, 1
        %s172 = smul.addr %s171, 8
        %s173 = smul.addr %s172, 8
        %s174 = scalar_lea.vmem %s1, %s173
      $region24: #{lte_forward.9} parent=15 // pred_fallthru
        _
      // Predicated region
      $region25: #{lte_forward.9} parent=15 // pred_check
        %p175 = pneg %p82
      $region26: #{lte_forward.9} parent=15 // pred_check_branch
        %177 = sbr.rel (%p175) target = $region28
      $region27: #{lte_forward.9} parent=15 // pred_region
        %p178 = scmp.lt.s32.totalorder %s10, 1
        %s179 = scalar_select %p178, %s10, 1
        %s180 = smul.addr %s179, 8
        %s181 = smul.addr %s180, 8
        %s182 = scalar_lea.vmem %s2, %s181
      $region28: #{lte_forward.9} parent=15 // pred_fallthru
        _
      // Predicated region
      $region29: #{lte_forward.9} parent=15 // pred_check
        %p183 = pneg %p108
      $region30: #{lte_forward.9} parent=15 // pred_check_branch
        %185 = sbr.rel (%p183) target = $region32
      $region31: #{lte_forward.9} parent=15 // pred_region
        %p186 = scmp.lt.s32.totalorder %s10, 1
        %s187 = scalar_select %p186, %s10, 1
        %s188 = smul.addr %s187, 8
        %s189 = smul.addr %s188, 8
        %s190 = scalar_lea.vmem %s3, %s189
      $region32: #{lte_forward.9} parent=15 // pred_fallthru
        _
    $region16: #{lte_forward.9} parent=5 // pred_fallthru
      _
    %p191 = scmp.le.s32.totalorder 1, %s10
    %p192 = scmp.lt.s32.totalorder %s10, 3
    %p193 = pnand %p191, %p192
    %p194 = pneg %p193
    // Predicated region
    $region33: #{lte_forward.9} parent=5 // pred_check
      _
    $region34: #{lte_forward.9} parent=5 // pred_check_branch
      %196 = sbr.rel (%p193) target = $region36
    $region35: #{lte_forward.9} parent=5 // pred_region
      %s197 = ssub.s32 %s10, 1
      %p198 = scmp.lt.s32.totalorder %s15, 1
      %s199 = scalar_select %p198, %s15, 1
      %s200 = smul.addr %s199, 8
      %s201 = smul.addr %s200, 8
      %s202 = scalar_lea.vmem %s0, %s201
      %p203 = pneg %p36
      %p204 = pneg %p33
      %p205 = scmp.lt.s32.totalorder %s15, 1
      %s206 = scalar_select %p205, %s15, 1
      %s207 = smul.addr %s206, 8
      %s208 = smul.addr %s207, 8
      %s209 = scalar_lea.vmem %s1, %s208
      %p210 = pneg %p62
      %p211 = pneg %p59
      %p212 = scmp.lt.s32.totalorder %s15, 1
      %s213 = scalar_select %p212, %s15, 1
      %s214 = smul.addr %s213, 8
      %s215 = smul.addr %s214, 8
      %s216 = scalar_lea.vmem %s2, %s215
      %p217 = pneg %p88
      %p218 = pneg %p85
      %p219 = scmp.lt.s32.totalorder %s15, 1
      %s220 = scalar_select %p219, %s15, 1
      %s221 = smul.addr %s220, 8
      %s222 = smul.addr %s221, 8
      %s223 = scalar_lea.vmem %s3, %s222
      %p224 = pneg %p114
      %p225 = pneg %p111
      %p226 = pneg %p140
      %p227 = pneg %p137
      %p228 = scmp.lt.s32.totalorder %s15, 1
      %s229 = scalar_select %p228, %s15, 1
      %s230 = smul.addr %s229, 8
      %s231 = smul.addr %s230, 8
      %s232 = scalar_lea.vmem %s4, %s231
      %p233 = scmp.lt.s32.totalorder %s15, 1
      %s234 = scalar_select %p233, %s15, 1
      %s235 = smul.addr %s234, 8
      %s236 = smul.addr %s235, 8
      %s237 = scalar_lea.vmem %s0, %s236
      %p238 = scmp.lt.s32.totalorder %s15, 1
      %s239 = scalar_select %p238, %s15, 1
      %s240 = smul.addr %s239, 8
      %s241 = smul.addr %s240, 8
      %s242 = scalar_lea.vmem %s1, %s241
      %p243 = scmp.lt.s32.totalorder %s15, 1
      %s244 = scalar_select %p243, %s15, 1
      %s245 = smul.addr %s244, 8
      %s246 = smul.addr %s245, 8
      %s247 = scalar_lea.vmem %s2, %s246
      %p248 = scmp.lt.s32.totalorder %s15, 1
      %s249 = scalar_select %p248, %s15, 1
      %s250 = smul.addr %s249, 8
      %s251 = smul.addr %s250, 8
      %s252 = scalar_lea.vmem %s3, %s251
      %p253 = scmp.lt.s32.totalorder %s15, 1
      %s254 = scalar_select %p253, %s15, 1
      %s255 = smul.addr %s254, 8
      %s256 = smul.addr %s255, 8
      %s257 = scalar_lea.vmem %s4, %s256
      %v258 = vld [vmem:[%s237] sm:$0xff]
      %v259 = vld [vmem:[%s237 + $0x8] sm:$0xff]
      %v260 = vld [vmem:[%s237 + $0x10] sm:$0xff]
      %v261 = vld [vmem:[%s237 + $0x18] sm:$0xff]
      %v262 = vld [vmem:[%s237 + $0x20] sm:$0xff]
      %v263 = vld [vmem:[%s237 + $0x28] sm:$0xff]
      %v264 = vld [vmem:[%s237 + $0x30] sm:$0xff]
      %v265 = vld [vmem:[%s237 + $0x38] sm:$0xff]
      %v266 = vld [vmem:[%s242] sm:$0xff]
      %v267 = vld [vmem:[%s242 + $0x8] sm:$0xff]
      %v268 = vld [vmem:[%s242 + $0x10] sm:$0xff]
      %v269 = vld [vmem:[%s242 + $0x18] sm:$0xff]
      %v270 = vld [vmem:[%s242 + $0x20] sm:$0xff]
      %v271 = vld [vmem:[%s242 + $0x28] sm:$0xff]
      %v272 = vld [vmem:[%s242 + $0x30] sm:$0xff]
      %v273 = vld [vmem:[%s242 + $0x38] sm:$0xff]
      %v274 = vmax.f32 %v258, %v266
      %v275 = vmax.f32 %v259, %v267
      %v276 = vmax.f32 %v260, %v268
      %v277 = vmax.f32 %v261, %v269
      %v278 = vmax.f32 %v262, %v270
      %v279 = vmax.f32 %v263, %v271
      %v280 = vmax.f32 %v264, %v272
      %v281 = vmax.f32 %v265, %v273
      %v282 = vld [vmem:[%s247] sm:$0xff]
      %v283 = vld [vmem:[%s247 + $0x8] sm:$0xff]
      %v284 = vld [vmem:[%s247 + $0x10] sm:$0xff]
      %v285 = vld [vmem:[%s247 + $0x18] sm:$0xff]
      %v286 = vld [vmem:[%s247 + $0x20] sm:$0xff]
      %v287 = vld [vmem:[%s247 + $0x28] sm:$0xff]
      %v288 = vld [vmem:[%s247 + $0x30] sm:$0xff]
      %v289 = vld [vmem:[%s247 + $0x38] sm:$0xff]
      %v290 = vld [vmem:[%s252] sm:$0xff]
      %v291 = vld [vmem:[%s252 + $0x8] sm:$0xff]
      %v292 = vld [vmem:[%s252 + $0x10] sm:$0xff]
      %v293 = vld [vmem:[%s252 + $0x18] sm:$0xff]
      %v294 = vld [vmem:[%s252 + $0x20] sm:$0xff]
      %v295 = vld [vmem:[%s252 + $0x28] sm:$0xff]
      %v296 = vld [vmem:[%s252 + $0x30] sm:$0xff]
      %v297 = vld [vmem:[%s252 + $0x38] sm:$0xff]
      %v298 = vmax.f32 %v282, %v290
      %v299 = vmax.f32 %v283, %v291
      %v300 = vmax.f32 %v284, %v292
      %v301 = vmax.f32 %v285, %v293
      %v302 = vmax.f32 %v286, %v294
      %v303 = vmax.f32 %v287, %v295
      %v304 = vmax.f32 %v288, %v296
      %v305 = vmax.f32 %v289, %v297
      %v306 = vmax.f32 %v274, %v298
      %v307 = vmax.f32 %v275, %v299
      %v308 = vmax.f32 %v276, %v300
      %v309 = vmax.f32 %v277, %v301
      %v310 = vmax.f32 %v278, %v302
      %v311 = vmax.f32 %v279, %v303
      %v312 = vmax.f32 %v280, %v304
      %v313 = vmax.f32 %v281, %v305
      %vm314 = vcmask 523264
      %315 = vst.msk [vmem:[%s257] sm:$0xff] %vm314, %v306
      %316 = vst.msk [vmem:[%s257 + $0x8] sm:$0xff] %vm314, %v307
      %317 = vst.msk [vmem:[%s257 + $0x10] sm:$0xff] %vm314, %v308
      %318 = vst.msk [vmem:[%s257 + $0x18] sm:$0xff] %vm314, %v309
      %319 = vst.msk [vmem:[%s257 + $0x20] sm:$0xff] %vm314, %v310
      %320 = vst.msk [vmem:[%s257 + $0x28] sm:$0xff] %vm314, %v311
      %321 = vst.msk [vmem:[%s257 + $0x30] sm:$0xff] %vm314, %v312
      %322 = vst.msk [vmem:[%s257 + $0x38] sm:$0xff] %vm314, %v313
      %p323 = scmp.lt.s32.totalorder %s15, 1
      %s324 = scalar_select %p323, %s15, 1
      %s325 = smul.addr %s324, 8
      %s326 = smul.addr %s325, 8
      %s327 = scalar_lea.vmem %s4, %s326
      // Predicated region
      $region37: #{lte_forward.9} parent=35 // pred_check
        %p328 = pneg %p137
      $region38: #{lte_forward.9} parent=35 // pred_check_branch
        %330 = sbr.rel (%p328) target = $region40
      $region39: #{lte_forward.9} parent=35 // pred_region
        _
      $region40: #{lte_forward.9} parent=35 // pred_fallthru
        _
    $region36: #{lte_forward.9} parent=5 // pred_fallthru
      _
    %p331 = scmp.le.s32.totalorder 2, %s10
    // Predicated region
    $region41: #{lte_forward.9} parent=5 // pred_check
      %p332 = pneg %p331
    $region42: #{lte_forward.9} parent=5 // pred_check_branch
      %334 = sbr.rel (%p332) target = $region44
    $region43: #{lte_forward.9} parent=5 // pred_region
      %s335 = ssub.s32 %s10, 2
      // Predicated region
      $region45: #{lte_forward.9} parent=43 // pred_check
        %p336 = pneg %p143
      $region46: #{lte_forward.9} parent=43 // pred_check_branch
        %338 = sbr.rel (%p336) target = $region48
      $region47: #{lte_forward.9} parent=43 // pred_region
        %p339 = scmp.lt.s32.totalorder %s16, 1
        %s340 = scalar_select %p339, %s16, 1
        %s341 = smul.addr %s340, 8
        %s342 = smul.addr %s341, 8
        %s343 = scalar_lea.vmem %s4, %s342
      $region48: #{lte_forward.9} parent=43 // pred_fallthru
        _
    $region44: #{lte_forward.9} parent=5 // pred_fallthru
      _
  $region6: #{lte_forward.9} parent=0 // loop_footer
    %s14 = sadd.s32 1, %s10
  $region7: #{lte_forward.9} parent=0 // loop_footer_branch
    %9 = sbr.rel target = $region3
  $region8: #{lte_forward.9} parent=0 // loop_exit
    _

// kernel: lte_forward.10
$region0: #{lte_forward.10}
  #allocation0 [shape = 'u32[]', space=smem, size = 0x4, offset = 0x4, fixed_abs, tag = 'smem constant byte address 0x4 - core index']
  #allocation1 [shape = 'u32[144,128]{1,0:T(1,128)}', space=vmem, size = 0x12000, scoped, tag = 'internal scratch']
  #allocation2 [shape = 'bf16[100,576]{1,0:T(8,128)(2,1)}', space=vmem, size = 0x20800, scoped, tag = 'scratch operand']
  %s0 = inlined_call_operand.vmem [shape: bf16[2,122,64], index: 0, kind: input, shape index: {}]
  %s1 = inlined_call_operand.vmem [shape: bf16[576,128], index: 1, kind: input, shape index: {}]
  %s2 = inlined_call_operand.vmem [shape: f32[1,128], index: 2, kind: input, shape index: {}]
  %s3 = inlined_call_operand.vmem [shape: f32[2,100,128], index: 3, kind: output, shape index: {}]
  %s4 = sld [smem:[#allocation0]]
  $region45: #{lte_forward.10} parent=0
    _
  %s6 = ssub.s32 1, %s4
  %s7 = scalar_select 0, %s6, %s4
  loop: start=0, step=1, limit=4
  $region2: #{lte_forward.10} parent=0 // loop_pre_header
    _
  $region3: #{lte_forward.10} parent=0 // loop_header
    %s9 = sphi 0, %s13
    %p10 = scmp.ge.s32.totalorder %s9, 4
    %s19 = sphi 0, %s21
    %s22 = sphi 0, %s19
    %s23 = sphi 0, %s22
    %s39 = sphi 0, %s23
    %s43 = sphi 0, %s43
    %s45 = sphi 0, %s43
    %s46 = sphi 0, %s45
    %s60 = sphi 0, %s46
    %s64 = sphi 0, %s64
    %s66 = sphi 0, %s64
    %s67 = sphi 0, %s66
    %s81 = sphi 0, %s67
    %s87 = sphi 0, %s89
    %s90 = sphi 0, %s87
    %s91 = sphi 0, %s90
    %s107 = sphi 0, %s91
  $region4: #{lte_forward.10} parent=0 // loop_header_branch
    %12 = sbr.rel (%p10) target = $region8
  $region5: #{lte_forward.10} parent=0 // loop_body
    %s14 = ssub.s32 %s9, 1
    %s15 = ssub.s32 %s9, 2
    %s16 = sadd.s32 %s9, 1
    %s17 = ssub.s32 %s9, %s16
    %p18 = scmp.eq.s32.totalorder %s17, 0
    %s20 = sadd.s32 %s19, 1
    %s21 = scalar_select %p18, %s19, %s20
    %p24 = pneg %p18
    %p25 = scmp.eq.s32.totalorder %s9, 1
    %p26 = por %p24, %p25
    %p27 = scmp.ne.s32.totalorder %s19, %s22
    %p28 = scmp.eq.s32.totalorder %s9, 0
    %p29 = por %p27, %p28
    %p30 = scmp.ne.s32.totalorder %s19, %s22
    %p31 = scmp.eq.s32.totalorder %s14, 1
    %p32 = por %p30, %p31
    %p33 = scmp.ne.s32.totalorder %s22, %s23
    %p34 = scmp.eq.s32.totalorder %s14, 0
    %p35 = por %p33, %p34
    %p36 = scmp.ne.s32.totalorder %s22, %s23
    %p37 = scmp.eq.s32.totalorder %s15, 1
    %p38 = por %p36, %p37
    %p40 = scmp.ne.s32.totalorder %s23, %s39
    %p41 = scmp.eq.s32.totalorder %s15, 0
    %p42 = por %p40, %p41
    %s44 = sadd.s32 %s43, 1
    %p47 = scmp.eq.s32.totalorder %s9, 1
    %p48 = scmp.ne.s32.totalorder %s43, %s45
    %p49 = scmp.eq.s32.totalorder %s9, 0
    %p50 = por %p48, %p49
    %p51 = scmp.ne.s32.totalorder %s43, %s45
    %p52 = scmp.eq.s32.totalorder %s14, 1
    %p53 = por %p51, %p52
    %p54 = scmp.ne.s32.totalorder %s45, %s46
    %p55 = scmp.eq.s32.totalorder %s14, 0
    %p56 = por %p54, %p55
    %p57 = scmp.ne.s32.totalorder %s45, %s46
    %p58 = scmp.eq.s32.totalorder %s15, 1
    %p59 = por %p57, %p58
    %p61 = scmp.ne.s32.totalorder %s46, %s60
    %p62 = scmp.eq.s32.totalorder %s15, 0
    %p63 = por %p61, %p62
    %s65 = sadd.s32 %s64, 1
    %p68 = scmp.eq.s32.totalorder %s9, 1
    %p69 = scmp.ne.s32.totalorder %s64, %s66
    %p70 = scmp.eq.s32.totalorder %s9, 0
    %p71 = por %p69, %p70
    %p72 = scmp.ne.s32.totalorder %s64, %s66
    %p73 = scmp.eq.s32.totalorder %s14, 1
    %p74 = por %p72, %p73
    %p75 = scmp.ne.s32.totalorder %s66, %s67
    %p76 = scmp.eq.s32.totalorder %s14, 0
    %p77 = por %p75, %p76
    %p78 = scmp.ne.s32.totalorder %s66, %s67
    %p79 = scmp.eq.s32.totalorder %s15, 1
    %p80 = por %p78, %p79
    %p82 = scmp.ne.s32.totalorder %s67, %s81
    %p83 = scmp.eq.s32.totalorder %s15, 0
    %p84 = por %p82, %p83
    %s85 = ssub.s32 %s9, %s16
    %p86 = scmp.eq.s32.totalorder %s85, 0
    %s88 = sadd.s32 %s87, 1
    %s89 = scalar_select %p86, %s87, %s88
    %p92 = pneg %p86
    %p93 = scmp.eq.s32.totalorder %s9, 1
    %p94 = por %p92, %p93
    %p95 = scmp.ne.s32.totalorder %s87, %s90
    %p96 = scmp.eq.s32.totalorder %s9, 0
    %p97 = por %p95, %p96
    %p98 = scmp.ne.s32.totalorder %s87, %s90
    %p99 = scmp.eq.s32.totalorder %s14, 1
    %p100 = por %p98, %p99
    %p101 = scmp.ne.s32.totalorder %s90, %s91
    %p102 = scmp.eq.s32.totalorder %s14, 0
    %p103 = por %p101, %p102
    %p104 = scmp.ne.s32.totalorder %s90, %s91
    %p105 = scmp.eq.s32.totalorder %s15, 1
    %p106 = por %p104, %p105
    %p108 = scmp.ne.s32.totalorder %s91, %s107
    %p109 = scmp.eq.s32.totalorder %s15, 0
    %p110 = por %p108, %p109
    %p111 = scmp.le.s32.totalorder 1, %s9
    %p112 = scmp.lt.s32.totalorder %s9, 3
    %p113 = pnand %p111, %p112
    %p114 = pneg %p113
    // Predicated region
    $region9: #{lte_forward.10} parent=5 // pred_check
      _
    $region10: #{lte_forward.10} parent=5 // pred_check_branch
      %116 = sbr.rel (%p113) target = $region12
    $region11: #{lte_forward.10} parent=5 // pred_region
      %s117 = ssub.s32 %s9, 1
      // Predicated region
      $region13: #{lte_forward.10} parent=11 // pred_check
        %p118 = pneg %p56
      $region14: #{lte_forward.10} parent=11 // pred_check_branch
        %120 = sbr.rel (%p118) target = $region16
      $region15: #{lte_forward.10} parent=11 // pred_region
        _
      $region16: #{lte_forward.10} parent=11 // pred_fallthru
        _
      // Predicated region
      $region17: #{lte_forward.10} parent=11 // pred_check
        %p121 = pneg %p77
      $region18: #{lte_forward.10} parent=11 // pred_check_branch
        %123 = sbr.rel (%p121) target = $region20
      $region19: #{lte_forward.10} parent=11 // pred_region
        _
      $region20: #{lte_forward.10} parent=11 // pred_fallthru
        _
    $region12: #{lte_forward.10} parent=5 // pred_fallthru
      _
    %p124 = scmp.lt.s32.totalorder %s9, 2
    // Predicated region
    $region21: #{lte_forward.10} parent=5 // pred_check
      %p125 = pneg %p124
    $region22: #{lte_forward.10} parent=5 // pred_check_branch
      %127 = sbr.rel (%p125) target = $region24
    $region23: #{lte_forward.10} parent=5 // pred_region
      // Predicated region
      $region25: #{lte_forward.10} parent=23 // pred_check
        %p128 = pneg %p29
      $region26: #{lte_forward.10} parent=23 // pred_check_branch
        %130 = sbr.rel (%p128) target = $region28
      $region27: #{lte_forward.10} parent=23 // pred_region
        %p131 = scmp.lt.s32.totalorder %s9, 1
        %s132 = scalar_select %p131, %s9, 1
        %s133 = smul.addr %s132, 16
        %s134 = smul.addr %s133, 4
        %s135 = scalar_lea.vmem %s0, %s134
      $region28: #{lte_forward.10} parent=23 // pred_fallthru
        _
    $region24: #{lte_forward.10} parent=5 // pred_fallthru
      _
    %p136 = scmp.le.s32.totalorder 1, %s9
    %p137 = scmp.lt.s32.totalorder %s9, 3
    %p138 = pnand %p136, %p137
    %p139 = pneg %p138
    // Predicated region
    $region29: #{lte_forward.10} parent=5 // pred_check
      _
    $region30: #{lte_forward.10} parent=5 // pred_check_branch
      %141 = sbr.rel (%p138) target = $region32
    $region31: #{lte_forward.10} parent=5 // pred_region
      %s142 = ssub.s32 %s9, 1
      %p143 = scmp.lt.s32.totalorder %s14, 1
      %s144 = scalar_select %p143, %s14, 1
      %s145 = smul.addr %s144, 16
      %s146 = smul.addr %s145, 4
      %s147 = scalar_lea.vmem %s0, %s146
      %p148 = pneg %p35
      %p149 = pneg %p32
      %p150 = pneg %p56
      %p151 = pneg %p53
      %p152 = pneg %p77
      %p153 = pneg %p74
      %p154 = pneg %p103
      %p155 = pneg %p100
      %p156 = scmp.lt.s32.totalorder %s14, 1
      %s157 = scalar_select %p156, %s14, 1
      %s158 = smul.addr %s157, 13
      %s159 = smul.addr %s158, 8
      %s160 = scalar_lea.vmem %s3, %s159
      %p161 = scmp.lt.s32.totalorder %s14, 1
      %s162 = scalar_select %p161, %s14, 1
      %s163 = smul.addr %s162, 16
      %s164 = smul.addr %s163, 4
      %s165 = scalar_lea.vmem %s0, %s164
      %p166 = scmp.lt.s32.totalorder %s14, 1
      %s167 = scalar_select %p166, %s14, 1
      %s168 = smul.addr %s167, 13
      %s169 = smul.addr %s168, 8
      %s170 = scalar_lea.vmem %s3, %s169
      %v172 = vld [vmem:[%s165] sm:$0xf]
      %v173 = vld [vmem:[%s165 + $0x4] sm:$0xf]
      %v174 = vld [vmem:[%s165 + $0x8] sm:$0xf]
      %v175 = vld [vmem:[%s165 + $0xc] sm:$0xf]
      %v176 = vld [vmem:[%s165 + $0x10] sm:$0xf]
      %v177 = vld [vmem:[%s165 + $0x14] sm:$0xf]
      %v178 = vld [vmem:[%s165 + $0x18] sm:$0xf]
      %v179 = vld [vmem:[%s165 + $0x1c] sm:$0xf]
      %v180 = vld [vmem:[%s165 + $0x20] sm:$0xf]
      %v181 = vld [vmem:[%s165 + $0x24] sm:$0xf]
      %v182 = vld [vmem:[%s165 + $0x28] sm:$0xf]
      %v183 = vld [vmem:[%s165 + $0x2c] sm:$0xf]
      %v184 = vld [vmem:[%s165 + $0x30] sm:$0xf]
      %v185 = vld [vmem:[%s165 + $0x34] sm:$0xf]
      %v186 = vld [vmem:[%s165 + $0x38] sm:$0xf]
      %v187 = vld [vmem:[%s165 + $0x3c] sm:$0x1]
      %v188 = vunpack.c.l.bf16 %v172
      %v189 = vunpack.c.l.bf16 %v173
      %v190 = vunpack.c.l.bf16 %v174
      %v191 = vunpack.c.l.bf16 %v175
      %v192 = vunpack.c.l.bf16 %v176
      %v193 = vunpack.c.l.bf16 %v177
      %v194 = vunpack.c.l.bf16 %v178
      %v195 = vunpack.c.l.bf16 %v179
      %v196 = vunpack.c.l.bf16 %v180
      %v197 = vunpack.c.l.bf16 %v181
      %v198 = vunpack.c.l.bf16 %v182
      %v199 = vunpack.c.l.bf16 %v183
      %v200 = vunpack.c.l.bf16 %v184
      %v201 = vunpack.c.l.bf16 %v185
      %v202 = vunpack.c.l.bf16 %v186
      %v203 = vunpack.c.l.bf16 %v187
      %v204 = vpack.c.bf16 %v189, %v188
      %v205 = vpack.c.bf16 %v191, %v190
      %v206 = vpack.c.bf16 %v193, %v192
      %v207 = vpack.c.bf16 %v195, %v194
      %v208 = vpack.c.bf16 %v197, %v196
      %v209 = vpack.c.bf16 %v199, %v198
      %v210 = vpack.c.bf16 %v200, %v200
      %v218 = vunpack.c.l.b16 %v204
      %v219 = vunpack.c.h.b16 %v204
      %v220 = vunpack.c.l.b16 %v205
      %v221 = vunpack.c.h.b16 %v205
      %v222 = vunpack.c.l.b16 %v206
      %v223 = vunpack.c.h.b16 %v206
      %v224 = vunpack.c.l.b16 %v207
      %v225 = vunpack.c.h.b16 %v207
      %v226 = vunpack.c.l.b16 %v208
      %v227 = vunpack.c.h.b16 %v208
      %v228 = vunpack.c.l.b16 %v209
      %v229 = vunpack.c.h.b16 %v209
      %v230 = vunpack.c.l.b16 %v210
      %v231 = vpack.c.b16 %v218, %v218
      %v232 = vpack.c.b16 %v219, %v219
      %v233 = vpack.c.b16 %v220, %v220
      %v234 = vpack.c.b16 %v221, %v221
      %v235 = vpack.c.b16 %v222, %v222
      %v236 = vpack.c.b16 %v223, %v223
      %v237 = vpack.c.b16 %v224, %v224
      %v238 = vpack.c.b16 %v225, %v225
      %v239 = vpack.c.b16 %v226, %v226
      %v240 = vpack.c.b16 %v227, %v227
      %v241 = vpack.c.b16 %v228, %v228
      %v242 = vpack.c.b16 %v229, %v229
      %v243 = vpack.c.b16 %v230, %v230
      %vm257 = vcmask 519168
      %258 = vst.msk [vmem:[#allocation2] sm:$0xf] %vm257, %v231
      %259 = vst.msk [vmem:[#allocation2 + $0x14] sm:$0xf] %vm257, %v232
      %260 = vst.msk [vmem:[#allocation2 + $0x28] sm:$0xf] %vm257, %v233
      %261 = vst.msk [vmem:[#allocation2 + $0x3c] sm:$0xf] %vm257, %v234
      %262 = vst.msk [vmem:[#allocation2 + $0x50] sm:$0xf] %vm257, %v235
      %263 = vst.msk [vmem:[#allocation2 + $0x64] sm:$0xf] %vm257, %v236
      %264 = vst.msk [vmem:[#allocation2 + $0x78] sm:$0xf] %vm257, %v237
      %265 = vst.msk [vmem:[#allocation2 + $0x8c] sm:$0xf] %vm257, %v238
      %266 = vst.msk [vmem:[#allocation2 + $0xa0] sm:$0xf] %vm257, %v239
      %267 = vst.msk [vmem:[#allocation2 + $0xb4] sm:$0xf] %vm257, %v240
      %268 = vst.msk [vmem:[#allocation2 + $0xc8] sm:$0xf] %vm257, %v241
      %269 = vst.msk [vmem:[#allocation2 + $0xdc] sm:$0xf] %vm257, %v242
      %vm270 = vcmask 517120
      %271 = vst.msk [vmem:[#allocation2 + $0xf0] sm:$0x3] %vm270, %v243
      %vm272 = vsmask.f32 3328
      %vm273 = vsmask.f32 7440
      %vm274 = vmor %vm272, %vm273
      %v276 = vshrl.u32 %v231, 16
      %v278 = vrot.slane %v276, 4
      %v279 = vshll.u32 %v231, 16
      %v281 = vrot.slane %v279, 5
      %v282 = vor.u32 %v278, %v281
      %v283 = vrot.slane %v282, 4
      %v285 = vshll.u32 %v232, 16
      %v287 = vrot.slane %v285, 5
      %v288 = vsel %vm274, %v283, %v287
      %v289 = vshrl.u32 %v232, 16
      %v291 = vrot.slane %v289, 4
      %v292 = vor.u32 %v291, %v287
      %v293 = vrot.slane %v292, 4
      %v295 = vshll.u32 %v233, 16
      %v297 = vrot.slane %v295, 5
      %v298 = vsel %vm274, %v293, %v297
      %v299 = vshrl.u32 %v233, 16
      %v301 = vrot.slane %v299, 4
      %v302 = vor.u32 %v301, %v297
      %v303 = vrot.slane %v302, 4
      %v305 = vshll.u32 %v234, 16
      %v307 = vrot.slane %v305, 5
      %v308 = vsel %vm274, %v303, %v307
      %v309 = vshrl.u32 %v234, 16
      %v311 = vrot.slane %v309, 4
      %v312 = vor.u32 %v311, %v307
      %v313 = vrot.slane %v312, 4
      %v315 = vshll.u32 %v235, 16
      %v317 = vrot.slane %v315, 5
      %v318 = vsel %vm274, %v313, %v317
      %v319 = vshrl.u32 %v235, 16
      %v321 = vrot.slane %v319, 4
      %v322 = vor.u32 %v321, %v317
      %v323 = vrot.slane %v322, 4
      %v325 = vshll.u32 %v236, 16
      %v327 = vrot.slane %v325, 5
      %v328 = vsel %vm274, %v323, %v327
      %v329 = vshrl.u32 %v236, 16
      %v331 = vrot.slane %v329, 4
      %v332 = vor.u32 %v331, %v327
      %v333 = vrot.slane %v332, 4
      %v335 = vshll.u32 %v237, 16
      %v337 = vrot.slane %v335, 5
      %v338 = vsel %vm274, %v333, %v337
      %v339 = vshrl.u32 %v237, 16
      %v341 = vrot.slane %v339, 4
      %v342 = vor.u32 %v341, %v337
      %v343 = vrot.slane %v342, 4
      %v345 = vshll.u32 %v238, 16
      %v347 = vrot.slane %v345, 5
      %v348 = vsel %vm274, %v343, %v347
      %v349 = vshrl.u32 %v238, 16
      %v351 = vrot.slane %v349, 4
      %v352 = vor.u32 %v351, %v347
      %v353 = vrot.slane %v352, 4
      %v355 = vshll.u32 %v239, 16
      %v357 = vrot.slane %v355, 5
      %v358 = vsel %vm274, %v353, %v357
      %v359 = vshrl.u32 %v239, 16
      %v361 = vrot.slane %v359, 4
      %v362 = vor.u32 %v361, %v357
      %v363 = vrot.slane %v362, 4
      %v365 = vshll.u32 %v240, 16
      %v367 = vrot.slane %v365, 5
      %v368 = vsel %vm274, %v363, %v367
      %v369 = vshrl.u32 %v240, 16
      %v371 = vrot.slane %v369, 4
      %v372 = vor.u32 %v371, %v367
      %v373 = vrot.slane %v372, 4
      %v375 = vshll.u32 %v241, 16
      %v377 = vrot.slane %v375, 5
      %v378 = vsel %vm274, %v373, %v377
      %v379 = vshrl.u32 %v241, 16
      %v381 = vrot.slane %v379, 4
      %v382 = vor.u32 %v381, %v377
      %v383 = vrot.slane %v382, 4
      %v385 = vshll.u32 %v242, 16
      %v387 = vrot.slane %v385, 5
      %v388 = vsel %vm274, %v383, %v387
      %v389 = vshrl.u32 %v242, 16
      %v391 = vrot.slane %v389, 4
      %v392 = vor.u32 %v391, %v387
      %v393 = vrot.slane %v392, 4
      %v395 = vshll.u32 %v243, 16
      %v397 = vrot.slane %v395, 5
      %v398 = vsel %vm274, %v393, %v397
      %v399 = vshrl.u32 %v243, 16
      %v401 = vrot.slane %v399, 4
      %v402 = vor.u32 %v401, %v397
      %v403 = vrot.slane %v402, 4
      %404 = vrot.lane.b32.xlu0 %v288, 64
      %v405 = vpop.permute.xlu0 %404
      %406 = vrot.lane.b32.xlu0 %v298, 64
      %v407 = vpop.permute.xlu0 %406
      %408 = vrot.lane.b32.xlu0 %v308, 64
      %v409 = vpop.permute.xlu0 %408
      %410 = vrot.lane.b32.xlu0 %v318, 64
      %v411 = vpop.permute.xlu0 %410
      %412 = vrot.lane.b32.xlu0 %v328, 64
      %v413 = vpop.permute.xlu0 %412
      %414 = vrot.lane.b32.xlu0 %v338, 64
      %v415 = vpop.permute.xlu0 %414
      %416 = vrot.lane.b32.xlu0 %v348, 64
      %v417 = vpop.permute.xlu0 %416
      %418 = vrot.lane.b32.xlu0 %v358, 64
      %v419 = vpop.permute.xlu0 %418
      %420 = vrot.lane.b32.xlu0 %v368, 64
      %v421 = vpop.permute.xlu0 %420
      %422 = vrot.lane.b32.xlu0 %v378, 64
      %v423 = vpop.permute.xlu0 %422
      %424 = vrot.lane.b32.xlu0 %v388, 64
      %v425 = vpop.permute.xlu0 %424
      %426 = vrot.lane.b32.xlu0 %v398, 64
      %v427 = vpop.permute.xlu0 %426
      %428 = vrot.lane.b32.xlu0 %v403, 64
      %v429 = vpop.permute.xlu0 %428
      %vm443 = vcmask 1043968
      %444 = vst.msk [vmem:[#allocation2] sm:$0xf] %vm443, %v405
      %445 = vst.msk [vmem:[#allocation2 + $0x14] sm:$0xf] %vm443, %v407
      %446 = vst.msk [vmem:[#allocation2 + $0x28] sm:$0xf] %vm443, %v409
      %447 = vst.msk [vmem:[#allocation2 + $0x3c] sm:$0xf] %vm443, %v411
      %448 = vst.msk [vmem:[#allocation2 + $0x50] sm:$0xf] %vm443, %v413
      %449 = vst.msk [vmem:[#allocation2 + $0x64] sm:$0xf] %vm443, %v415
      %450 = vst.msk [vmem:[#allocation2 + $0x78] sm:$0xf] %vm443, %v417
      %451 = vst.msk [vmem:[#allocation2 + $0x8c] sm:$0xf] %vm443, %v419
      %452 = vst.msk [vmem:[#allocation2 + $0xa0] sm:$0xf] %vm443, %v421
      %453 = vst.msk [vmem:[#allocation2 + $0xb4] sm:$0xf] %vm443, %v423
      %454 = vst.msk [vmem:[#allocation2 + $0xc8] sm:$0xf] %vm443, %v425
      %455 = vst.msk [vmem:[#allocation2 + $0xdc] sm:$0xf] %vm443, %v427
      %vm456 = vcmask 1041920
      %457 = vst.msk [vmem:[#allocation2 + $0xf0] sm:$0x3] %vm456, %v429
      %vm458 = vcmask 1042432
      %vm459 = vcmask 1046532
      %vm460 = vmor %vm458, %vm459
      %v461 = vrot.slane %v231, 5
      %v462 = vrot.slane %v461, 4
      %v463 = vrot.slane %v232, 5
      %v464 = vsel %vm460, %v462, %v463
      %v465 = vrot.slane %v463, 4
      %v466 = vrot.slane %v233, 5
      %v467 = vsel %vm460, %v465, %v466
      %v468 = vrot.slane %v466, 4
      %v469 = vrot.slane %v234, 5
      %v470 = vsel %vm460, %v468, %v469
      %v471 = vrot.slane %v469, 4
      %v472 = vrot.slane %v235, 5
      %v473 = vsel %vm460, %v471, %v472
      %v474 = vrot.slane %v472, 4
      %v475 = vrot.slane %v236, 5
      %v476 = vsel %vm460, %v474, %v475
      %v477 = vrot.slane %v475, 4
      %v478 = vrot.slane %v237, 5
      %v479 = vsel %vm460, %v477, %v478
      %v480 = vrot.slane %v478, 4
      %v481 = vrot.slane %v238, 5
      %v482 = vsel %vm460, %v480, %v481
      %v483 = vrot.slane %v481, 4
      %v484 = vrot.slane %v239, 5
      %v485 = vsel %vm460, %v483, %v484
      %v486 = vrot.slane %v484, 4
      %v487 = vrot.slane %v240, 5
      %v488 = vsel %vm460, %v486, %v487
      %v489 = vrot.slane %v487, 4
      %v490 = vrot.slane %v241, 5
      %v491 = vsel %vm460, %v489, %v490
      %v492 = vrot.slane %v490, 4
      %v493 = vrot.slane %v242, 5
      %v494 = vsel %vm460, %v492, %v493
      %v495 = vrot.slane %v493, 4
      %v496 = vrot.slane %v243, 5
      %v497 = vsel %vm460, %v495, %v496
      %v498 = vrot.slane %v496, 4
      %512 = vst.msk [vmem:[#allocation2 + $0x4] sm:$0xf] %vm257, %v464
      %513 = vst.msk [vmem:[#allocation2 + $0x18] sm:$0xf] %vm257, %v467
      %514 = vst.msk [vmem:[#allocation2 + $0x2c] sm:$0xf] %vm257, %v470
      %515 = vst.msk [vmem:[#allocation2 + $0x40] sm:$0xf] %vm257, %v473
      %516 = vst.msk [vmem:[#allocation2 + $0x54] sm:$0xf] %vm257, %v476
      %517 = vst.msk [vmem:[#allocation2 + $0x68] sm:$0xf] %vm257, %v479
      %518 = vst.msk [vmem:[#allocation2 + $0x7c] sm:$0xf] %vm257, %v482
      %519 = vst.msk [vmem:[#allocation2 + $0x90] sm:$0xf] %vm257, %v485
      %520 = vst.msk [vmem:[#allocation2 + $0xa4] sm:$0xf] %vm257, %v488
      %521 = vst.msk [vmem:[#allocation2 + $0xb8] sm:$0xf] %vm257, %v491
      %522 = vst.msk [vmem:[#allocation2 + $0xcc] sm:$0xf] %vm257, %v494
      %523 = vst.msk [vmem:[#allocation2 + $0xe0] sm:$0xf] %vm257, %v497
      %524 = vst.msk [vmem:[#allocation2 + $0xf4] sm:$0x3] %vm270, %v498
      %v525 = vpack.c.bf16 %v190, %v189
      %v526 = vpack.c.bf16 %v192, %v191
      %v527 = vpack.c.bf16 %v194, %v193
      %v528 = vpack.c.bf16 %v196, %v195
      %v529 = vpack.c.bf16 %v198, %v197
      %v530 = vpack.c.bf16 %v200, %v199
      %v531 = vpack.c.bf16 %v201, %v201
      %v539 = vunpack.c.l.b16 %v525
      %v540 = vunpack.c.h.b16 %v525
      %v541 = vunpack.c.l.b16 %v526
      %v542 = vunpack.c.h.b16 %v526
      %v543 = vunpack.c.l.b16 %v527
      %v544 = vunpack.c.h.b16 %v527
      %v545 = vunpack.c.l.b16 %v528
      %v546 = vunpack.c.h.b16 %v528
      %v547 = vunpack.c.l.b16 %v529
      %v548 = vunpack.c.h.b16 %v529
      %v549 = vunpack.c.l.b16 %v530
      %v550 = vunpack.c.h.b16 %v530
      %v551 = vunpack.c.l.b16 %v531
      %v552 = vpack.c.b16 %v539, %v539
      %v553 = vpack.c.b16 %v540, %v540
      %v554 = vpack.c.b16 %v541, %v541
      %v555 = vpack.c.b16 %v542, %v542
      %v556 = vpack.c.b16 %v543, %v543
      %v557 = vpack.c.b16 %v544, %v544
      %v558 = vpack.c.b16 %v545, %v545
      %v559 = vpack.c.b16 %v546, %v546
      %v560 = vpack.c.b16 %v547, %v547
      %v561 = vpack.c.b16 %v548, %v548
      %v562 = vpack.c.b16 %v549, %v549
      %v563 = vpack.c.b16 %v550, %v550
      %v564 = vpack.c.b16 %v551, %v551
      %v565 = vrot.slane %v552, 5
      %v566 = vrot.slane %v565, 4
      %v567 = vrot.slane %v553, 5
      %v568 = vsel %vm460, %v566, %v567
      %v569 = vrot.slane %v567, 4
      %v570 = vrot.slane %v554, 5
      %v571 = vsel %vm460, %v569, %v570
      %v572 = vrot.slane %v570, 4
      %v573 = vrot.slane %v555, 5
      %v574 = vsel %vm460, %v572, %v573
      %v575 = vrot.slane %v573, 4
      %v576 = vrot.slane %v556, 5
      %v577 = vsel %vm460, %v575, %v576
      %v578 = vrot.slane %v576, 4
      %v579 = vrot.slane %v557, 5
      %v580 = vsel %vm460, %v578, %v579
      %v581 = vrot.slane %v579, 4
      %v582 = vrot.slane %v558, 5
      %v583 = vsel %vm460, %v581, %v582
      %v584 = vrot.slane %v582, 4
      %v585 = vrot.slane %v559, 5
      %v586 = vsel %vm460, %v584, %v585
      %v587 = vrot.slane %v585, 4
      %v588 = vrot.slane %v560, 5
      %v589 = vsel %vm460, %v587, %v588
      %v590 = vrot.slane %v588, 4
      %v591 = vrot.slane %v561, 5
      %v592 = vsel %vm460, %v590, %v591
      %v593 = vrot.slane %v591, 4
      %v594 = vrot.slane %v562, 5
      %v595 = vsel %vm460, %v593, %v594
      %v596 = vrot.slane %v594, 4
      %v597 = vrot.slane %v563, 5
      %v598 = vsel %vm460, %v596, %v597
      %v599 = vrot.slane %v597, 4
      %v600 = vrot.slane %v564, 5
      %v601 = vsel %vm460, %v599, %v600
      %v602 = vrot.slane %v600, 4
      %603 = vrot.lane.b32.xlu0 %v568, 64
      %v604 = vpop.permute.xlu0 %603
      %605 = vrot.lane.b32.xlu0 %v571, 64
      %v606 = vpop.permute.xlu0 %605
      %607 = vrot.lane.b32.xlu0 %v574, 64
      %v608 = vpop.permute.xlu0 %607
      %609 = vrot.lane.b32.xlu0 %v577, 64
      %v610 = vpop.permute.xlu0 %609
      %611 = vrot.lane.b32.xlu0 %v580, 64
      %v612 = vpop.permute.xlu0 %611
      %613 = vrot.lane.b32.xlu0 %v583, 64
      %v614 = vpop.permute.xlu0 %613
      %615 = vrot.lane.b32.xlu0 %v586, 64
      %v616 = vpop.permute.xlu0 %615
      %617 = vrot.lane.b32.xlu0 %v589, 64
      %v618 = vpop.permute.xlu0 %617
      %619 = vrot.lane.b32.xlu0 %v592, 64
      %v620 = vpop.permute.xlu0 %619
      %621 = vrot.lane.b32.xlu0 %v595, 64
      %v622 = vpop.permute.xlu0 %621
      %623 = vrot.lane.b32.xlu0 %v598, 64
      %v624 = vpop.permute.xlu0 %623
      %625 = vrot.lane.b32.xlu0 %v601, 64
      %v626 = vpop.permute.xlu0 %625
      %627 = vrot.lane.b32.xlu0 %v602, 64
      %v628 = vpop.permute.xlu0 %627
      %642 = vst.msk [vmem:[#allocation2 + $0x4] sm:$0xf] %vm443, %v604
      %643 = vst.msk [vmem:[#allocation2 + $0x18] sm:$0xf] %vm443, %v606
      %644 = vst.msk [vmem:[#allocation2 + $0x2c] sm:$0xf] %vm443, %v608
      %645 = vst.msk [vmem:[#allocation2 + $0x40] sm:$0xf] %vm443, %v610
      %646 = vst.msk [vmem:[#allocation2 + $0x54] sm:$0xf] %vm443, %v612
      %647 = vst.msk [vmem:[#allocation2 + $0x68] sm:$0xf] %vm443, %v614
      %648 = vst.msk [vmem:[#allocation2 + $0x7c] sm:$0xf] %vm443, %v616
      %649 = vst.msk [vmem:[#allocation2 + $0x90] sm:$0xf] %vm443, %v618
      %650 = vst.msk [vmem:[#allocation2 + $0xa4] sm:$0xf] %vm443, %v620
      %651 = vst.msk [vmem:[#allocation2 + $0xb8] sm:$0xf] %vm443, %v622
      %652 = vst.msk [vmem:[#allocation2 + $0xcc] sm:$0xf] %vm443, %v624
      %653 = vst.msk [vmem:[#allocation2 + $0xe0] sm:$0xf] %vm443, %v626
      %654 = vst.msk [vmem:[#allocation2 + $0xf4] sm:$0x3] %vm456, %v628
      %vm655 = vsmask.f32 2304
      %vm656 = vsmask.f32 6416
      %vm657 = vmor %vm655, %vm656
      %v659 = vshrl.u32 %v552, 16
      %v661 = vrot.slane %v659, 5
      %v662 = vshll.u32 %v552, 16
      %v664 = vrot.slane %v662, 6
      %v665 = vor.u32 %v661, %v664
      %v666 = vrot.slane %v665, 4
      %v668 = vshrl.u32 %v553, 16
      %v670 = vrot.slane %v668, 5
      %v671 = vshll.u32 %v553, 16
      %v673 = vrot.slane %v671, 6
      %v674 = vor.u32 %v670, %v673
      %v675 = vsel %vm657, %v666, %v674
      %v676 = vrot.slane %v674, 4
      %v678 = vshrl.u32 %v554, 16
      %v680 = vrot.slane %v678, 5
      %v681 = vshll.u32 %v554, 16
      %v683 = vrot.slane %v681, 6
      %v684 = vor.u32 %v680, %v683
      %v685 = vsel %vm657, %v676, %v684
      %v686 = vrot.slane %v684, 4
      %v688 = vshrl.u32 %v555, 16
      %v690 = vrot.slane %v688, 5
      %v691 = vshll.u32 %v555, 16
      %v693 = vrot.slane %v691, 6
      %v694 = vor.u32 %v690, %v693
      %v695 = vsel %vm657, %v686, %v694
      %v696 = vrot.slane %v694, 4
      %v698 = vshrl.u32 %v556, 16
      %v700 = vrot.slane %v698, 5
      %v701 = vshll.u32 %v556, 16
      %v703 = vrot.slane %v701, 6
      %v704 = vor.u32 %v700, %v703
      %v705 = vsel %vm657, %v696, %v704
      %v706 = vrot.slane %v704, 4
      %v708 = vshrl.u32 %v557, 16
      %v710 = vrot.slane %v708, 5
      %v711 = vshll.u32 %v557, 16
      %v713 = vrot.slane %v711, 6
      %v714 = vor.u32 %v710, %v713
      %v715 = vsel %vm657, %v706, %v714
      %v716 = vrot.slane %v714, 4
      %v718 = vshrl.u32 %v558, 16
      %v720 = vrot.slane %v718, 5
      %v721 = vshll.u32 %v558, 16
      %v723 = vrot.slane %v721, 6
      %v724 = vor.u32 %v720, %v723
      %v725 = vsel %vm657, %v716, %v724
      %v726 = vrot.slane %v724, 4
      %v728 = vshrl.u32 %v559, 16
      %v730 = vrot.slane %v728, 5
      %v731 = vshll.u32 %v559, 16
      %v733 = vrot.slane %v731, 6
      %v734 = vor.u32 %v730, %v733
      %v735 = vsel %vm657, %v726, %v734
      %v736 = vrot.slane %v734, 4
      %v738 = vshrl.u32 %v560, 16
      %v740 = vrot.slane %v738, 5
      %v741 = vshll.u32 %v560, 16
      %v743 = vrot.slane %v741, 6
      %v744 = vor.u32 %v740, %v743
      %v745 = vsel %vm657, %v736, %v744
      %v746 = vrot.slane %v744, 4
      %v748 = vshrl.u32 %v561, 16
      %v750 = vrot.slane %v748, 5
      %v751 = vshll.u32 %v561, 16
      %v753 = vrot.slane %v751, 6
      %v754 = vor.u32 %v750, %v753
      %v755 = vsel %vm657, %v746, %v754
      %v756 = vrot.slane %v754, 4
      %v758 = vshrl.u32 %v562, 16
      %v760 = vrot.slane %v758, 5
      %v761 = vshll.u32 %v562, 16
      %v763 = vrot.slane %v761, 6
      %v764 = vor.u32 %v760, %v763
      %v765 = vsel %vm657, %v756, %v764
      %v766 = vrot.slane %v764, 4
      %v768 = vshrl.u32 %v563, 16
      %v770 = vrot.slane %v768, 5
      %v771 = vshll.u32 %v563, 16
      %v773 = vrot.slane %v771, 6
      %v774 = vor.u32 %v770, %v773
      %v775 = vsel %vm657, %v766, %v774
      %v776 = vrot.slane %v774, 4
      %v778 = vshrl.u32 %v564, 16
      %v780 = vrot.slane %v778, 5
      %v781 = vshll.u32 %v564, 16
      %v783 = vrot.slane %v781, 6
      %v784 = vor.u32 %v780, %v783
      %v785 = vsel %vm657, %v776, %v784
      %v786 = vrot.slane %v784, 4
      %800 = vst.msk [vmem:[#allocation2 + $0x8] sm:$0xf] %vm257, %v675
      %801 = vst.msk [vmem:[#allocation2 + $0x1c] sm:$0xf] %vm257, %v685
      %802 = vst.msk [vmem:[#allocation2 + $0x30] sm:$0xf] %vm257, %v695
      %803 = vst.msk [vmem:[#allocation2 + $0x44] sm:$0xf] %vm257, %v705
      %804 = vst.msk [vmem:[#allocation2 + $0x58] sm:$0xf] %vm257, %v715
      %805 = vst.msk [vmem:[#allocation2 + $0x6c] sm:$0xf] %vm257, %v725
      %806 = vst.msk [vmem:[#allocation2 + $0x80] sm:$0xf] %vm257, %v735
      %807 = vst.msk [vmem:[#allocation2 + $0x94] sm:$0xf] %vm257, %v745
      %808 = vst.msk [vmem:[#allocation2 + $0xa8] sm:$0xf] %vm257, %v755
      %809 = vst.msk [vmem:[#allocation2 + $0xbc] sm:$0xf] %vm257, %v765
      %810 = vst.msk [vmem:[#allocation2 + $0xd0] sm:$0xf] %vm257, %v775
      %811 = vst.msk [vmem:[#allocation2 + $0xe4] sm:$0xf] %vm257, %v785
      %812 = vst.msk [vmem:[#allocation2 + $0xf8] sm:$0x3] %vm270, %v786
      %vm813 = vcmask 1041408
      %vm814 = vcmask 1045508
      %vm815 = vmor %vm813, %vm814
      %v816 = vrot.slane %v552, 6
      %v817 = vrot.slane %v816, 4
      %v818 = vrot.slane %v553, 6
      %v819 = vsel %vm815, %v817, %v818
      %v820 = vrot.slane %v818, 4
      %v821 = vrot.slane %v554, 6
      %v822 = vsel %vm815, %v820, %v821
      %v823 = vrot.slane %v821, 4
      %v824 = vrot.slane %v555, 6
      %v825 = vsel %vm815, %v823, %v824
      %v826 = vrot.slane %v824, 4
      %v827 = vrot.slane %v556, 6
      %v828 = vsel %vm815, %v826, %v827
      %v829 = vrot.slane %v827, 4
      %v830 = vrot.slane %v557, 6
      %v831 = vsel %vm815, %v829, %v830
      %v832 = vrot.slane %v830, 4
      %v833 = vrot.slane %v558, 6
      %v834 = vsel %vm815, %v832, %v833
      %v835 = vrot.slane %v833, 4
      %v836 = vrot.slane %v559, 6
      %v837 = vsel %vm815, %v835, %v836
      %v838 = vrot.slane %v836, 4
      %v839 = vrot.slane %v560, 6
      %v840 = vsel %vm815, %v838, %v839
      %v841 = vrot.slane %v839, 4
      %v842 = vrot.slane %v561, 6
      %v843 = vsel %vm815, %v841, %v842
      %v844 = vrot.slane %v842, 4
      %v845 = vrot.slane %v562, 6
      %v846 = vsel %vm815, %v844, %v845
      %v847 = vrot.slane %v845, 4
      %v848 = vrot.slane %v563, 6
      %v849 = vsel %vm815, %v847, %v848
      %v850 = vrot.slane %v848, 4
      %v851 = vrot.slane %v564, 6
      %v852 = vsel %vm815, %v850, %v851
      %v853 = vrot.slane %v851, 4
      %854 = vrot.lane.b32.xlu0 %v819, 64
      %v855 = vpop.permute.xlu0 %854
      %856 = vrot.lane.b32.xlu0 %v822, 64
      %v857 = vpop.permute.xlu0 %856
      %858 = vrot.lane.b32.xlu0 %v825, 64
      %v859 = vpop.permute.xlu0 %858
      %860 = vrot.lane.b32.xlu0 %v828, 64
      %v861 = vpop.permute.xlu0 %860
      %862 = vrot.lane.b32.xlu0 %v831, 64
      %v863 = vpop.permute.xlu0 %862
      %864 = vrot.lane.b32.xlu0 %v834, 64
      %v865 = vpop.permute.xlu0 %864
      %866 = vrot.lane.b32.xlu0 %v837, 64
      %v867 = vpop.permute.xlu0 %866
      %868 = vrot.lane.b32.xlu0 %v840, 64
      %v869 = vpop.permute.xlu0 %868
      %870 = vrot.lane.b32.xlu0 %v843, 64
      %v871 = vpop.permute.xlu0 %870
      %872 = vrot.lane.b32.xlu0 %v846, 64
      %v873 = vpop.permute.xlu0 %872
      %874 = vrot.lane.b32.xlu0 %v849, 64
      %v875 = vpop.permute.xlu0 %874
      %876 = vrot.lane.b32.xlu0 %v852, 64
      %v877 = vpop.permute.xlu0 %876
      %878 = vrot.lane.b32.xlu0 %v853, 64
      %v879 = vpop.permute.xlu0 %878
      %893 = vst.msk [vmem:[#allocation2 + $0x8] sm:$0xf] %vm443, %v855
      %894 = vst.msk [vmem:[#allocation2 + $0x1c] sm:$0xf] %vm443, %v857
      %895 = vst.msk [vmem:[#allocation2 + $0x30] sm:$0xf] %vm443, %v859
      %896 = vst.msk [vmem:[#allocation2 + $0x44] sm:$0xf] %vm443, %v861
      %897 = vst.msk [vmem:[#allocation2 + $0x58] sm:$0xf] %vm443, %v863
      %898 = vst.msk [vmem:[#allocation2 + $0x6c] sm:$0xf] %vm443, %v865
      %899 = vst.msk [vmem:[#allocation2 + $0x80] sm:$0xf] %vm443, %v867
      %900 = vst.msk [vmem:[#allocation2 + $0x94] sm:$0xf] %vm443, %v869
      %901 = vst.msk [vmem:[#allocation2 + $0xa8] sm:$0xf] %vm443, %v871
      %902 = vst.msk [vmem:[#allocation2 + $0xbc] sm:$0xf] %vm443, %v873
      %903 = vst.msk [vmem:[#allocation2 + $0xd0] sm:$0xf] %vm443, %v875
      %904 = vst.msk [vmem:[#allocation2 + $0xe4] sm:$0xf] %vm443, %v877
      %905 = vst.msk [vmem:[#allocation2 + $0xf8] sm:$0x3] %vm456, %v879
      %v906 = vpack.c.bf16 %v201, %v200
      %v907 = vpack.c.bf16 %v202, %v202
      %v910 = vunpack.c.l.b16 %v906
      %v911 = vunpack.c.h.b16 %v906
      %v912 = vunpack.c.l.b16 %v907
      %v913 = vpack.c.b16 %v910, %v910
      %v914 = vpack.c.b16 %v911, %v911
      %v915 = vpack.c.b16 %v912, %v912
      %v916 = vrot.slane %v233, 6
      %v917 = vrot.slane %v916, 4
      %v918 = vrot.slane %v234, 6
      %v919 = vsel %vm815, %v917, %v918
      %v920 = vrot.slane %v918, 4
      %v921 = vrot.slane %v235, 6
      %v922 = vsel %vm815, %v920, %v921
      %v923 = vrot.slane %v921, 4
      %v924 = vrot.slane %v236, 6
      %v925 = vsel %vm815, %v923, %v924
      %v926 = vrot.slane %v924, 4
      %v927 = vrot.slane %v237, 6
      %v928 = vsel %vm815, %v926, %v927
      %v929 = vrot.slane %v927, 4
      %v930 = vrot.slane %v238, 6
      %v931 = vsel %vm815, %v929, %v930
      %v932 = vrot.slane %v930, 4
      %v933 = vrot.slane %v239, 6
      %v934 = vsel %vm815, %v932, %v933
      %v935 = vrot.slane %v933, 4
      %v936 = vrot.slane %v240, 6
      %v937 = vsel %vm815, %v935, %v936
      %v938 = vrot.slane %v936, 4
      %v939 = vrot.slane %v241, 6
      %v940 = vsel %vm815, %v938, %v939
      %v941 = vrot.slane %v939, 4
      %v942 = vrot.slane %v242, 6
      %v943 = vsel %vm815, %v941, %v942
      %v944 = vrot.slane %v942, 4
      %v945 = vrot.slane %v913, 6
      %v946 = vsel %vm815, %v944, %v945
      %v947 = vrot.slane %v945, 4
      %v948 = vrot.slane %v914, 6
      %v949 = vsel %vm815, %v947, %v948
      %v950 = vrot.slane %v948, 4
      %v951 = vrot.slane %v915, 6
      %v952 = vsel %vm815, %v950, %v951
      %v953 = vrot.slane %v951, 4
      %967 = vst.msk [vmem:[#allocation2 + $0xc] sm:$0xf] %vm257, %v919
      %968 = vst.msk [vmem:[#allocation2 + $0x20] sm:$0xf] %vm257, %v922
      %969 = vst.msk [vmem:[#allocation2 + $0x34] sm:$0xf] %vm257, %v925
      %970 = vst.msk [vmem:[#allocation2 + $0x48] sm:$0xf] %vm257, %v928
      %971 = vst.msk [vmem:[#allocation2 + $0x5c] sm:$0xf] %vm257, %v931
      %972 = vst.msk [vmem:[#allocation2 + $0x70] sm:$0xf] %vm257, %v934
      %973 = vst.msk [vmem:[#allocation2 + $0x84] sm:$0xf] %vm257, %v937
      %974 = vst.msk [vmem:[#allocation2 + $0x98] sm:$0xf] %vm257, %v940
      %975 = vst.msk [vmem:[#allocation2 + $0xac] sm:$0xf] %vm257, %v943
      %976 = vst.msk [vmem:[#allocation2 + $0xc0] sm:$0xf] %vm257, %v946
      %977 = vst.msk [vmem:[#allocation2 + $0xd4] sm:$0xf] %vm257, %v949
      %978 = vst.msk [vmem:[#allocation2 + $0xe8] sm:$0xf] %vm257, %v952
      %979 = vst.msk [vmem:[#allocation2 + $0xfc] sm:$0x3] %vm270, %v953
      %v980 = vpack.c.bf16 %v203, %v202
      %v982 = vunpack.c.l.b16 %v980
      %v983 = vunpack.c.h.b16 %v980
      %v984 = vpack.c.b16 %v982, %v982
      %v985 = vpack.c.b16 %v983, %v983
      %vm986 = vsmask.f32 1280
      %vm987 = vsmask.f32 5392
      %vm988 = vmor %vm986, %vm987
      %v989 = vrot.slane %v299, 6
      %v990 = vrot.slane %v295, 7
      %v991 = vor.u32 %v989, %v990
      %v992 = vrot.slane %v991, 4
      %v993 = vrot.slane %v309, 6
      %v994 = vrot.slane %v305, 7
      %v995 = vor.u32 %v993, %v994
      %v996 = vsel %vm988, %v992, %v995
      %v997 = vrot.slane %v995, 4
      %v998 = vrot.slane %v319, 6
      %v999 = vrot.slane %v315, 7
      %v1000 = vor.u32 %v998, %v999
      %v1001 = vsel %vm988, %v997, %v1000
      %v1002 = vrot.slane %v1000, 4
      %v1003 = vrot.slane %v329, 6
      %v1004 = vrot.slane %v325, 7
      %v1005 = vor.u32 %v1003, %v1004
      %v1006 = vsel %vm988, %v1002, %v1005
      %v1007 = vrot.slane %v1005, 4
      %v1008 = vrot.slane %v339, 6
      %v1009 = vrot.slane %v335, 7
      %v1010 = vor.u32 %v1008, %v1009
      %v1011 = vsel %vm988, %v1007, %v1010
      %v1012 = vrot.slane %v1010, 4
      %v1013 = vrot.slane %v349, 6
      %v1014 = vrot.slane %v345, 7
      %v1015 = vor.u32 %v1013, %v1014
      %v1016 = vsel %vm988, %v1012, %v1015
      %v1017 = vrot.slane %v1015, 4
      %v1018 = vrot.slane %v359, 6
      %v1019 = vrot.slane %v355, 7
      %v1020 = vor.u32 %v1018, %v1019
      %v1021 = vsel %vm988, %v1017, %v1020
      %v1022 = vrot.slane %v1020, 4
      %v1023 = vrot.slane %v369, 6
      %v1024 = vrot.slane %v365, 7
      %v1025 = vor.u32 %v1023, %v1024
      %v1026 = vsel %vm988, %v1022, %v1025
      %v1027 = vrot.slane %v1025, 4
      %v1028 = vrot.slane %v379, 6
      %v1029 = vrot.slane %v375, 7
      %v1030 = vor.u32 %v1028, %v1029
      %v1031 = vsel %vm988, %v1027, %v1030
      %v1032 = vrot.slane %v1030, 4
      %v1033 = vrot.slane %v389, 6
      %v1034 = vrot.slane %v385, 7
      %v1035 = vor.u32 %v1033, %v1034
      %v1036 = vsel %vm988, %v1032, %v1035
      %v1037 = vrot.slane %v1035, 4
      %v1039 = vshrl.u32 %v913, 16
      %v1041 = vrot.slane %v1039, 6
      %v1042 = vshll.u32 %v913, 16
      %v1044 = vrot.slane %v1042, 7
      %v1045 = vor.u32 %v1041, %v1044
      %v1046 = vsel %vm988, %v1037, %v1045
      %v1047 = vrot.slane %v1045, 4
      %v1049 = vshrl.u32 %v914, 16
      %v1051 = vrot.slane %v1049, 6
      %v1052 = vshll.u32 %v914, 16
      %v1054 = vrot.slane %v1052, 7
      %v1055 = vor.u32 %v1051, %v1054
      %v1056 = vsel %vm988, %v1047, %v1055
      %v1057 = vrot.slane %v1055, 4
      %v1059 = vshrl.u32 %v984, 16
      %v1061 = vrot.slane %v1059, 6
      %v1062 = vshll.u32 %v984, 16
      %v1064 = vrot.slane %v1062, 7
      %v1065 = vor.u32 %v1061, %v1064
      %v1066 = vsel %vm988, %v1057, %v1065
      %v1067 = vrot.slane %v1065, 4
      %v1069 = vshll.u32 %v985, 16
      %v1071 = vrot.slane %v1069, 7
      %v1072 = vsel %vm988, %v1067, %v1071
      %1073 = vrot.lane.b32.xlu0 %v996, 64
      %v1074 = vpop.permute.xlu0 %1073
      %1075 = vrot.lane.b32.xlu0 %v1001, 64
      %v1076 = vpop.permute.xlu0 %1075
      %1077 = vrot.lane.b32.xlu0 %v1006, 64
      %v1078 = vpop.permute.xlu0 %1077
      %1079 = vrot.lane.b32.xlu0 %v1011, 64
      %v1080 = vpop.permute.xlu0 %1079
      %1081 = vrot.lane.b32.xlu0 %v1016, 64
      %v1082 = vpop.permute.xlu0 %1081
      %1083 = vrot.lane.b32.xlu0 %v1021, 64
      %v1084 = vpop.permute.xlu0 %1083
      %1085 = vrot.lane.b32.xlu0 %v1026, 64
      %v1086 = vpop.permute.xlu0 %1085
      %1087 = vrot.lane.b32.xlu0 %v1031, 64
      %v1088 = vpop.permute.xlu0 %1087
      %1089 = vrot.lane.b32.xlu0 %v1036, 64
      %v1090 = vpop.permute.xlu0 %1089
      %1091 = vrot.lane.b32.xlu0 %v1046, 64
      %v1092 = vpop.permute.xlu0 %1091
      %1093 = vrot.lane.b32.xlu0 %v1056, 64
      %v1094 = vpop.permute.xlu0 %1093
      %1095 = vrot.lane.b32.xlu0 %v1066, 64
      %v1096 = vpop.permute.xlu0 %1095
      %1097 = vrot.lane.b32.xlu0 %v1072, 64
      %v1098 = vpop.permute.xlu0 %1097
      %1112 = vst.msk [vmem:[#allocation2 + $0xc] sm:$0xf] %vm443, %v1074
      %1113 = vst.msk [vmem:[#allocation2 + $0x20] sm:$0xf] %vm443, %v1076
      %1114 = vst.msk [vmem:[#allocation2 + $0x34] sm:$0xf] %vm443, %v1078
      %1115 = vst.msk [vmem:[#allocation2 + $0x48] sm:$0xf] %vm443, %v1080
      %1116 = vst.msk [vmem:[#allocation2 + $0x5c] sm:$0xf] %vm443, %v1082
      %1117 = vst.msk [vmem:[#allocation2 + $0x70] sm:$0xf] %vm443, %v1084
      %1118 = vst.msk [vmem:[#allocation2 + $0x84] sm:$0xf] %vm443, %v1086
      %1119 = vst.msk [vmem:[#allocation2 + $0x98] sm:$0xf] %vm443, %v1088
      %1120 = vst.msk [vmem:[#allocation2 + $0xac] sm:$0xf] %vm443, %v1090
      %1121 = vst.msk [vmem:[#allocation2 + $0xc0] sm:$0xf] %vm443, %v1092
      %1122 = vst.msk [vmem:[#allocation2 + $0xd4] sm:$0xf] %vm443, %v1094
      %1123 = vst.msk [vmem:[#allocation2 + $0xe8] sm:$0xf] %vm443, %v1096
      %1124 = vst.msk [vmem:[#allocation2 + $0xfc] sm:$0x3] %vm456, %v1098
      %vm1125 = vcmask 1040384
      %vm1126 = vcmask 1044484
      %vm1127 = vmor %vm1125, %vm1126
      %v1128 = vrot.slane %v233, 7
      %v1129 = vrot.slane %v1128, 4
      %v1130 = vrot.slane %v234, 7
      %v1131 = vsel %vm1127, %v1129, %v1130
      %v1132 = vrot.slane %v1130, 4
      %v1133 = vrot.slane %v235, 7
      %v1134 = vsel %vm1127, %v1132, %v1133
      %v1135 = vrot.slane %v1133, 4
      %v1136 = vrot.slane %v236, 7
      %v1137 = vsel %vm1127, %v1135, %v1136
      %v1138 = vrot.slane %v1136, 4
      %v1139 = vrot.slane %v237, 7
      %v1140 = vsel %vm1127, %v1138, %v1139
      %v1141 = vrot.slane %v1139, 4
      %v1142 = vrot.slane %v238, 7
      %v1143 = vsel %vm1127, %v1141, %v1142
      %v1144 = vrot.slane %v1142, 4
      %v1145 = vrot.slane %v239, 7
      %v1146 = vsel %vm1127, %v1144, %v1145
      %v1147 = vrot.slane %v1145, 4
      %v1148 = vrot.slane %v240, 7
      %v1149 = vsel %vm1127, %v1147, %v1148
      %v1150 = vrot.slane %v1148, 4
      %v1151 = vrot.slane %v241, 7
      %v1152 = vsel %vm1127, %v1150, %v1151
      %v1153 = vrot.slane %v1151, 4
      %v1154 = vrot.slane %v242, 7
      %v1155 = vsel %vm1127, %v1153, %v1154
      %v1156 = vrot.slane %v1154, 4
      %v1157 = vrot.slane %v913, 7
      %v1158 = vsel %vm1127, %v1156, %v1157
      %v1159 = vrot.slane %v1157, 4
      %v1160 = vrot.slane %v914, 7
      %v1161 = vsel %vm1127, %v1159, %v1160
      %v1162 = vrot.slane %v1160, 4
      %v1163 = vrot.slane %v984, 7
      %v1164 = vsel %vm1127, %v1162, %v1163
      %v1165 = vrot.slane %v1163, 4
      %v1166 = vrot.slane %v985, 7
      %v1167 = vsel %vm1127, %v1165, %v1166
      %1181 = vst.msk [vmem:[#allocation2 + $0x10] sm:$0xf] %vm257, %v1131
      %1182 = vst.msk [vmem:[#allocation2 + $0x24] sm:$0xf] %vm257, %v1134
      %1183 = vst.msk [vmem:[#allocation2 + $0x38] sm:$0xf] %vm257, %v1137
      %1184 = vst.msk [vmem:[#allocation2 + $0x4c] sm:$0xf] %vm257, %v1140
      %1185 = vst.msk [vmem:[#allocation2 + $0x60] sm:$0xf] %vm257, %v1143
      %1186 = vst.msk [vmem:[#allocation2 + $0x74] sm:$0xf] %vm257, %v1146
      %1187 = vst.msk [vmem:[#allocation2 + $0x88] sm:$0xf] %vm257, %v1149
      %1188 = vst.msk [vmem:[#allocation2 + $0x9c] sm:$0xf] %vm257, %v1152
      %1189 = vst.msk [vmem:[#allocation2 + $0xb0] sm:$0xf] %vm257, %v1155
      %1190 = vst.msk [vmem:[#allocation2 + $0xc4] sm:$0xf] %vm257, %v1158
      %1191 = vst.msk [vmem:[#allocation2 + $0xd8] sm:$0xf] %vm257, %v1161
      %1192 = vst.msk [vmem:[#allocation2 + $0xec] sm:$0xf] %vm257, %v1164
      %1193 = vst.msk [vmem:[#allocation2 + $0x100] sm:$0x3] %vm270, %v1167
      %v1194 = vld [vmem:[#allocation2] sm:$0xff]
      %v1195 = vld [vmem:[#allocation2 + $0x8] sm:$0xff]
      %v1196 = vld [vmem:[#allocation2 + $0x10] sm:$0xf]
      %v1197 = vld [vmem:[#allocation2 + $0x14] sm:$0xff]
      %v1198 = vld [vmem:[#allocation2 + $0x1c] sm:$0xff]
      %v1199 = vld [vmem:[#allocation2 + $0x24] sm:$0xf]
      %v1200 = vld [vmem:[#allocation2 + $0x28] sm:$0xff]
      %v1201 = vld [vmem:[#allocation2 + $0x30] sm:$0xff]
      %v1202 = vld [vmem:[#allocation2 + $0x38] sm:$0xf]
      %v1203 = vld [vmem:[#allocation2 + $0x3c] sm:$0xff]
      %v1204 = vld [vmem:[#allocation2 + $0x44] sm:$0xff]
      %v1205 = vld [vmem:[#allocation2 + $0x4c] sm:$0xf]
      %v1206 = vld [vmem:[#allocation2 + $0x50] sm:$0xff]
      %v1207 = vld [vmem:[#allocation2 + $0x58] sm:$0xff]
      %v1208 = vld [vmem:[#allocation2 + $0x60] sm:$0xf]
      %v1209 = vld [vmem:[#allocation2 + $0x64] sm:$0xff]
      %v1210 = vld [vmem:[#allocation2 + $0x6c] sm:$0xff]
      %v1211 = vld [vmem:[#allocation2 + $0x74] sm:$0xf]
      %v1212 = vld [vmem:[#allocation2 + $0x78] sm:$0xff]
      %v1213 = vld [vmem:[#allocation2 + $0x80] sm:$0xff]
      %v1214 = vld [vmem:[#allocation2 + $0x88] sm:$0xf]
      %v1215 = vld [vmem:[#allocation2 + $0x8c] sm:$0xff]
      %v1216 = vld [vmem:[#allocation2 + $0x94] sm:$0xff]
      %v1217 = vld [vmem:[#allocation2 + $0x9c] sm:$0xf]
      %v1218 = vld [vmem:[#allocation2 + $0xa0] sm:$0xff]
      %v1219 = vld [vmem:[#allocation2 + $0xa8] sm:$0xff]
      %v1220 = vld [vmem:[#allocation2 + $0xb0] sm:$0xf]
      %v1221 = vld [vmem:[#allocation2 + $0xb4] sm:$0xff]
      %v1222 = vld [vmem:[#allocation2 + $0xbc] sm:$0xff]
      %v1223 = vld [vmem:[#allocation2 + $0xc4] sm:$0xf]
      %v1224 = vld [vmem:[#allocation2 + $0xc8] sm:$0xff]
      %v1225 = vld [vmem:[#allocation2 + $0xd0] sm:$0xff]
      %v1226 = vld [vmem:[#allocation2 + $0xd8] sm:$0xf]
      %v1227 = vld [vmem:[#allocation2 + $0xdc] sm:$0xff]
      %v1228 = vld [vmem:[#allocation2 + $0xe4] sm:$0xff]
      %v1229 = vld [vmem:[#allocation2 + $0xec] sm:$0xf]
      %v1230 = vld [vmem:[#allocation2 + $0xf0] sm:$0x33]
      %v1231 = vld [vmem:[#allocation2 + $0xf8] sm:$0x33]
      %v1232 = vld [vmem:[#allocation2 + $0x100] sm:$0x3]
      %v1233 = vld [vmem:[%s1] sm:$0xf]
      %v1234 = vld [vmem:[%s1 + $0x4] sm:$0xf]
      %v1235 = vld [vmem:[%s1 + $0x8] sm:$0xf]
      %v1236 = vld [vmem:[%s1 + $0xc] sm:$0xf]
      %v1237 = vld [vmem:[%s1 + $0x10] sm:$0xf]
      %v1238 = vld [vmem:[%s1 + $0x14] sm:$0xf]
      %v1239 = vld [vmem:[%s1 + $0x18] sm:$0xf]
      %v1240 = vld [vmem:[%s1 + $0x1c] sm:$0xf]
      %v1241 = vld [vmem:[%s1 + $0x20] sm:$0xf]
      %v1242 = vld [vmem:[%s1 + $0x24] sm:$0xf]
      %v1243 = vld [vmem:[%s1 + $0x28] sm:$0xf]
      %v1244 = vld [vmem:[%s1 + $0x2c] sm:$0xf]
      %v1245 = vld [vmem:[%s1 + $0x30] sm:$0xf]
      %v1246 = vld [vmem:[%s1 + $0x34] sm:$0xf]
      %v1247 = vld [vmem:[%s1 + $0x38] sm:$0xf]
      %v1248 = vld [vmem:[%s1 + $0x3c] sm:$0xf]
      %v1249 = vld [vmem:[%s1 + $0x40] sm:$0xf]
      %v1250 = vld [vmem:[%s1 + $0x44] sm:$0xf]
      %v1251 = vld [vmem:[%s1 + $0x48] sm:$0xf]
      %v1252 = vld [vmem:[%s1 + $0x4c] sm:$0xf]
      %v1253 = vld [vmem:[%s1 + $0x50] sm:$0xf]
      %v1254 = vld [vmem:[%s1 + $0x54] sm:$0xf]
      %v1255 = vld [vmem:[%s1 + $0x58] sm:$0xf]
      %v1256 = vld [vmem:[%s1 + $0x5c] sm:$0xf]
      %v1257 = vld [vmem:[%s1 + $0x60] sm:$0xf]
      %v1258 = vld [vmem:[%s1 + $0x64] sm:$0xf]
      %v1259 = vld [vmem:[%s1 + $0x68] sm:$0xf]
      %v1260 = vld [vmem:[%s1 + $0x6c] sm:$0xf]
      %v1261 = vld [vmem:[%s1 + $0x70] sm:$0xf]
      %v1262 = vld [vmem:[%s1 + $0x74] sm:$0xf]
      %v1263 = vld [vmem:[%s1 + $0x78] sm:$0xf]
      %v1264 = vld [vmem:[%s1 + $0x7c] sm:$0xf]
      %v1265 = vld [vmem:[%s1 + $0x80] sm:$0xf]
      %v1266 = vld [vmem:[%s1 + $0x84] sm:$0xf]
      %v1267 = vld [vmem:[%s1 + $0x88] sm:$0xf]
      %v1268 = vld [vmem:[%s1 + $0x8c] sm:$0xf]
      %v1269 = vld [vmem:[%s1 + $0x90] sm:$0xf]
      %v1270 = vld [vmem:[%s1 + $0x94] sm:$0xf]
      %v1271 = vld [vmem:[%s1 + $0x98] sm:$0xf]
      %v1272 = vld [vmem:[%s1 + $0x9c] sm:$0xf]
      %v1273 = vld [vmem:[%s1 + $0xa0] sm:$0xf]
      %v1274 = vld [vmem:[%s1 + $0xa4] sm:$0xf]
      %v1275 = vld [vmem:[%s1 + $0xa8] sm:$0xf]
      %v1276 = vld [vmem:[%s1 + $0xac] sm:$0xf]
      %v1277 = vld [vmem:[%s1 + $0xb0] sm:$0xf]
      %v1278 = vld [vmem:[%s1 + $0xb4] sm:$0xf]
      %v1279 = vld [vmem:[%s1 + $0xb8] sm:$0xf]
      %v1280 = vld [vmem:[%s1 + $0xbc] sm:$0xf]
      %v1281 = vld [vmem:[%s1 + $0xc0] sm:$0xf]
      %v1282 = vld [vmem:[%s1 + $0xc4] sm:$0xf]
      %v1283 = vld [vmem:[%s1 + $0xc8] sm:$0xf]
      %v1284 = vld [vmem:[%s1 + $0xcc] sm:$0xf]
      %v1285 = vld [vmem:[%s1 + $0xd0] sm:$0xf]
      %v1286 = vld [vmem:[%s1 + $0xd4] sm:$0xf]
      %v1287 = vld [vmem:[%s1 + $0xd8] sm:$0xf]
      %v1288 = vld [vmem:[%s1 + $0xdc] sm:$0xf]
      %v1289 = vld [vmem:[%s1 + $0xe0] sm:$0xf]
      %v1290 = vld [vmem:[%s1 + $0xe4] sm:$0xf]
      %v1291 = vld [vmem:[%s1 + $0xe8] sm:$0xf]
      %v1292 = vld [vmem:[%s1 + $0xec] sm:$0xf]
      %v1293 = vld [vmem:[%s1 + $0xf0] sm:$0xf]
      %v1294 = vld [vmem:[%s1 + $0xf4] sm:$0xf]
      %v1295 = vld [vmem:[%s1 + $0xf8] sm:$0xf]
      %v1296 = vld [vmem:[%s1 + $0xfc] sm:$0xf]
      %v1297 = vld [vmem:[%s1 + $0x100] sm:$0xf]
      %v1298 = vld [vmem:[%s1 + $0x104] sm:$0xf]
      %v1299 = vld [vmem:[%s1 + $0x108] sm:$0xf]
      %v1300 = vld [vmem:[%s1 + $0x10c] sm:$0xf]
      %v1301 = vld [vmem:[%s1 + $0x110] sm:$0xf]
      %v1302 = vld [vmem:[%s1 + $0x114] sm:$0xf]
      %v1303 = vld [vmem:[%s1 + $0x118] sm:$0xf]
      %v1304 = vld [vmem:[%s1 + $0x11c] sm:$0xf]
      %v1305 = vld [vmem:[%s2] sm:$0x1]
      %v1307 = vlaneseq
      %v1308 = vshrl.u32 %v1307, 7
      %v1309 = vsub.s32 0, %v1308
      %v1310 = vrot.slane %v1305, %v1309
      %v1351 = vunpack.c.l.b16 %v1194
      %v1352 = vunpack.c.h.b16 %v1194
      %v1353 = vunpack.c.l.b16 %v1195
      %v1354 = vunpack.c.h.b16 %v1195
      %v1355 = vunpack.c.l.b16 %v1196
      %v1356 = vunpack.c.l.b16 %v1197
      %v1357 = vunpack.c.h.b16 %v1197
      %v1358 = vunpack.c.l.b16 %v1198
      %v1359 = vunpack.c.h.b16 %v1198
      %v1360 = vunpack.c.l.b16 %v1199
      %v1361 = vunpack.c.l.b16 %v1200
      %v1362 = vunpack.c.h.b16 %v1200
      %v1363 = vunpack.c.l.b16 %v1201
      %v1364 = vunpack.c.h.b16 %v1201
      %v1365 = vunpack.c.l.b16 %v1202
      %v1366 = vunpack.c.l.b16 %v1203
      %v1367 = vunpack.c.h.b16 %v1203
      %v1368 = vunpack.c.l.b16 %v1204
      %v1369 = vunpack.c.h.b16 %v1204
      %v1370 = vunpack.c.l.b16 %v1205
      %v1371 = vunpack.c.l.b16 %v1206
      %v1372 = vunpack.c.h.b16 %v1206
      %v1373 = vunpack.c.l.b16 %v1207
      %v1374 = vunpack.c.h.b16 %v1207
      %v1375 = vunpack.c.l.b16 %v1208
      %v1376 = vunpack.c.l.b16 %v1209
      %v1377 = vunpack.c.h.b16 %v1209
      %v1378 = vunpack.c.l.b16 %v1210
      %v1379 = vunpack.c.h.b16 %v1210
      %v1380 = vunpack.c.l.b16 %v1211
      %v1381 = vunpack.c.l.b16 %v1212
      %v1382 = vunpack.c.h.b16 %v1212
      %v1383 = vunpack.c.l.b16 %v1213
      %v1384 = vunpack.c.h.b16 %v1213
      %v1385 = vunpack.c.l.b16 %v1214
      %v1386 = vunpack.c.l.b16 %v1215
      %v1387 = vunpack.c.h.b16 %v1215
      %v1388 = vunpack.c.l.b16 %v1216
      %v1389 = vunpack.c.h.b16 %v1216
      %v1390 = vunpack.c.l.b16 %v1217
      %v1391 = vunpack.c.l.b16 %v1218
      %v1392 = vunpack.c.h.b16 %v1218
      %v1393 = vunpack.c.l.b16 %v1219
      %v1394 = vunpack.c.h.b16 %v1219
      %v1395 = vunpack.c.l.b16 %v1220
      %v1396 = vunpack.c.l.b16 %v1221
      %v1397 = vunpack.c.h.b16 %v1221
      %v1398 = vunpack.c.l.b16 %v1222
      %v1399 = vunpack.c.h.b16 %v1222
      %v1400 = vunpack.c.l.b16 %v1223
      %v1401 = vunpack.c.l.b16 %v1224
      %v1402 = vunpack.c.h.b16 %v1224
      %v1403 = vunpack.c.l.b16 %v1225
      %v1404 = vunpack.c.h.b16 %v1225
      %v1405 = vunpack.c.l.b16 %v1226
      %v1406 = vunpack.c.l.b16 %v1227
      %v1407 = vunpack.c.h.b16 %v1227
      %v1408 = vunpack.c.l.b16 %v1228
      %v1409 = vunpack.c.h.b16 %v1228
      %v1410 = vunpack.c.l.b16 %v1229
      %v1411 = vunpack.c.l.b16 %v1230
      %v1412 = vunpack.c.h.b16 %v1230
      %v1413 = vunpack.c.l.b16 %v1231
      %v1414 = vunpack.c.h.b16 %v1231
      %v1415 = vunpack.c.l.b16 %v1232
      %v1416 = vpack.c.b16 %v1356, %v1351
      %v1417 = vpack.c.b16 %v1357, %v1352
      %v1418 = vpack.c.b16 %v1358, %v1353
      %v1419 = vpack.c.b16 %v1359, %v1354
      %v1420 = vpack.c.b16 %v1360, %v1355
      %v1421 = vpack.c.b16 %v1366, %v1361
      %v1422 = vpack.c.b16 %v1367, %v1362
      %v1423 = vpack.c.b16 %v1368, %v1363
      %v1424 = vpack.c.b16 %v1369, %v1364
      %v1425 = vpack.c.b16 %v1370, %v1365
      %v1426 = vpack.c.b16 %v1376, %v1371
      %v1427 = vpack.c.b16 %v1377, %v1372
      %v1428 = vpack.c.b16 %v1378, %v1373
      %v1429 = vpack.c.b16 %v1379, %v1374
      %v1430 = vpack.c.b16 %v1380, %v1375
      %v1431 = vpack.c.b16 %v1386, %v1381
      %v1432 = vpack.c.b16 %v1387, %v1382
      %v1433 = vpack.c.b16 %v1388, %v1383
      %v1434 = vpack.c.b16 %v1389, %v1384
      %v1435 = vpack.c.b16 %v1390, %v1385
      %v1436 = vpack.c.b16 %v1396, %v1391
      %v1437 = vpack.c.b16 %v1397, %v1392
      %v1438 = vpack.c.b16 %v1398, %v1393
      %v1439 = vpack.c.b16 %v1399, %v1394
      %v1440 = vpack.c.b16 %v1400, %v1395
      %v1441 = vpack.c.b16 %v1406, %v1401
      %v1442 = vpack.c.b16 %v1407, %v1402
      %v1443 = vpack.c.b16 %v1408, %v1403
      %v1444 = vpack.c.b16 %v1409, %v1404
      %v1445 = vpack.c.b16 %v1410, %v1405
      %v1446 = vpack.c.b16 %v1411, %v1411
      %v1447 = vpack.c.b16 %v1412, %v1412
      %v1448 = vpack.c.b16 %v1413, %v1413
      %v1449 = vpack.c.b16 %v1414, %v1414
      %v1450 = vpack.c.b16 %v1415, %v1415
      %v1551 = vunpack.c.l.b16 %v1233
      %v1552 = vunpack.c.l.b16 %v1234
      %v1553 = vunpack.c.l.b16 %v1235
      %v1554 = vunpack.c.l.b16 %v1236
      %v1555 = vunpack.c.l.b16 %v1237
      %v1556 = vunpack.c.l.b16 %v1238
      %v1557 = vunpack.c.l.b16 %v1239
      %v1558 = vunpack.c.l.b16 %v1240
      %v1559 = vunpack.c.l.b16 %v1241
      %v1560 = vunpack.c.l.b16 %v1242
      %v1561 = vunpack.c.l.b16 %v1243
      %v1562 = vunpack.c.l.b16 %v1244
      %v1563 = vunpack.c.l.b16 %v1245
      %v1564 = vunpack.c.l.b16 %v1246
      %v1565 = vunpack.c.l.b16 %v1247
      %v1566 = vunpack.c.l.b16 %v1248
      %v1567 = vunpack.c.l.b16 %v1249
      %v1568 = vunpack.c.l.b16 %v1250
      %v1569 = vunpack.c.l.b16 %v1251
      %v1570 = vunpack.c.l.b16 %v1252
      %v1571 = vunpack.c.l.b16 %v1253
      %v1572 = vunpack.c.l.b16 %v1254
      %v1573 = vunpack.c.l.b16 %v1255
      %v1574 = vunpack.c.l.b16 %v1256
      %v1575 = vunpack.c.l.b16 %v1257
      %v1576 = vunpack.c.l.b16 %v1258
      %v1577 = vunpack.c.l.b16 %v1259
      %v1578 = vunpack.c.l.b16 %v1260
      %v1579 = vunpack.c.l.b16 %v1261
      %v1580 = vunpack.c.l.b16 %v1262
      %v1581 = vunpack.c.l.b16 %v1263
      %v1582 = vunpack.c.l.b16 %v1264
      %v1583 = vunpack.c.l.b16 %v1265
      %v1584 = vunpack.c.l.b16 %v1266
      %v1585 = vunpack.c.l.b16 %v1267
      %v1586 = vunpack.c.l.b16 %v1268
      %v1587 = vunpack.c.l.b16 %v1269
      %v1588 = vunpack.c.l.b16 %v1270
      %v1589 = vunpack.c.l.b16 %v1271
      %v1590 = vunpack.c.l.b16 %v1272
      %v1591 = vunpack.c.l.b16 %v1273
      %v1592 = vunpack.c.l.b16 %v1274
      %v1593 = vunpack.c.l.b16 %v1275
      %v1594 = vunpack.c.l.b16 %v1276
      %v1595 = vunpack.c.l.b16 %v1277
      %v1596 = vunpack.c.l.b16 %v1278
      %v1597 = vunpack.c.l.b16 %v1279
      %v1598 = vunpack.c.l.b16 %v1280
      %v1599 = vunpack.c.l.b16 %v1281
      %v1600 = vunpack.c.l.b16 %v1282
      %v1601 = vunpack.c.l.b16 %v1283
      %v1602 = vunpack.c.l.b16 %v1284
      %v1603 = vunpack.c.l.b16 %v1285
      %v1604 = vunpack.c.l.b16 %v1286
      %v1605 = vunpack.c.l.b16 %v1287
      %v1606 = vunpack.c.l.b16 %v1288
      %v1607 = vunpack.c.l.b16 %v1289
      %v1608 = vunpack.c.l.b16 %v1290
      %v1609 = vunpack.c.l.b16 %v1291
      %v1610 = vunpack.c.l.b16 %v1292
      %v1611 = vunpack.c.l.b16 %v1293
      %v1612 = vunpack.c.l.b16 %v1294
      %v1613 = vunpack.c.l.b16 %v1295
      %v1614 = vunpack.c.l.b16 %v1296
      %v1615 = vunpack.c.l.b16 %v1297
      %v1616 = vunpack.c.l.b16 %v1298
      %v1617 = vunpack.c.l.b16 %v1299
      %v1618 = vunpack.c.l.b16 %v1300
      %v1619 = vunpack.c.l.b16 %v1301
      %v1620 = vunpack.c.l.b16 %v1302
      %v1621 = vunpack.c.l.b16 %v1303
      %v1622 = vunpack.c.l.b16 %v1304
      %v1623 = vpack.c.b16 %v1552, %v1551
      %v1624 = vpack.c.b16 %v1554, %v1553
      %v1625 = vpack.c.b16 %v1556, %v1555
      %v1626 = vpack.c.b16 %v1558, %v1557
      %v1627 = vpack.c.b16 %v1560, %v1559
      %v1628 = vpack.c.b16 %v1562, %v1561
      %v1629 = vpack.c.b16 %v1564, %v1563
      %v1630 = vpack.c.b16 %v1566, %v1565
      %v1631 = vpack.c.b16 %v1568, %v1567
      %v1632 = vpack.c.b16 %v1570, %v1569
      %v1633 = vpack.c.b16 %v1572, %v1571
      %v1634 = vpack.c.b16 %v1574, %v1573
      %v1635 = vpack.c.b16 %v1576, %v1575
      %v1636 = vpack.c.b16 %v1578, %v1577
      %v1637 = vpack.c.b16 %v1580, %v1579
      %v1638 = vpack.c.b16 %v1582, %v1581
      %v1639 = vpack.c.b16 %v1584, %v1583
      %v1640 = vpack.c.b16 %v1586, %v1585
      %v1641 = vpack.c.b16 %v1588, %v1587
      %v1642 = vpack.c.b16 %v1590, %v1589
      %v1643 = vpack.c.b16 %v1592, %v1591
      %v1644 = vpack.c.b16 %v1594, %v1593
      %v1645 = vpack.c.b16 %v1596, %v1595
      %v1646 = vpack.c.b16 %v1598, %v1597
      %v1647 = vpack.c.b16 %v1600, %v1599
      %v1648 = vpack.c.b16 %v1602, %v1601
      %v1649 = vpack.c.b16 %v1604, %v1603
      %v1650 = vpack.c.b16 %v1606, %v1605
      %v1651 = vpack.c.b16 %v1608, %v1607
      %v1652 = vpack.c.b16 %v1610, %v1609
      %v1653 = vpack.c.b16 %v1612, %v1611
      %v1654 = vpack.c.b16 %v1614, %v1613
      %v1655 = vpack.c.b16 %v1616, %v1615
      %v1656 = vpack.c.b16 %v1618, %v1617
      %v1657 = vpack.c.b16 %v1620, %v1619
      %v1658 = vpack.c.b16 %v1622, %v1621
      %vm1695 = vcmask 523264
      %v1697 = vsel %vm1695, %v1420, 0
      %v1700 = vsel %vm1695, %v1425, 0
      %v1703 = vsel %vm1695, %v1430, 0
      %v1706 = vsel %vm1695, %v1435, 0
      %v1709 = vsel %vm1695, %v1440, 0
      %v1712 = vsel %vm1695, %v1445, 0
      %v1715 = vsel %vm1695, %v1450, 0
      %1717 = vmatprep.subr.bf16.mxu0 0
      %1718 = vmatpush1.bf16.msra.mxu0 %v1623
      %1719 = vmatprep.subr.bf16.mxu0 0
      %1720 = vmatpush1.bf16.msra.mxu0 %v1624
      %1721 = vmatprep.subr.bf16.mxu0 0
      %1722 = vmatpush1.bf16.msra.mxu0 %v1625
      %1723 = vmatprep.subr.bf16.mxu0 0
      %1724 = vmatpush1.bf16.msra.mxu0 %v1626
      %1725 = vmatprep.subr.bf16.mxu0 0
      %1726 = vmatpush1.bf16.msra.mxu0 %v1627
      %1727 = vmatprep.subr.bf16.mxu0 0
      %1728 = vmatpush1.bf16.msra.mxu0 %v1628
      %1729 = vmatprep.subr.bf16.mxu0 0
      %1730 = vmatpush1.bf16.msra.mxu0 %v1629
      %1731 = vmatprep.subr.bf16.mxu0 0
      %1732 = vmatpush1.bf16.msra.mxu0 %v1630
      %1733 = vmatprep.subr.bf16.mxu0 0
      %1734 = vmatpush1.bf16.msra.mxu0 %v1631
      %1735 = vmatprep.subr.bf16.mxu0 0
      %1736 = vmatpush1.bf16.msra.mxu0 %v1632
      %1737 = vmatprep.subr.bf16.mxu0 0
      %1738 = vmatpush1.bf16.msra.mxu0 %v1633
      %1739 = vmatprep.subr.bf16.mxu0 0
      %1740 = vmatpush1.bf16.msra.mxu0 %v1634
      %1741 = vmatprep.subr.bf16.mxu0 0
      %1742 = vmatpush1.bf16.msra.mxu0 %v1635
      %1743 = vmatprep.subr.bf16.mxu0 0
      %1744 = vmatpush1.bf16.msra.mxu0 %v1636
      %1745 = vmatprep.subr.bf16.mxu0 0
      %1746 = vmatpush1.bf16.msra.mxu0 %v1637
      %1747 = vmatprep.subr.bf16.mxu0 0
      %1748 = vmatpush1.bf16.msra.mxu0 %v1638
      %1749 = vmatprep.mubr.bf16.mxu0 %v1417
      %1750 = vmatmul.mubr.bf16.gmra.mrb[0].mxu0 %v1416
      %v1751 = vpop.f32.mrb[0].mxu0
      %v1752 = vadd.f32 %v1310, %v1751
      %v1753 = vpop.f32.mrb[0].mxu0
      %v1754 = vpop.f32.mrb[0].mxu0
      %v1755 = vadd.f32 %v1310, %v1754
      %v1756 = vpop.f32.mrb[0].mxu0
      %1757 = vmatprep.mubr.bf16.mxu0 %v1422
      %1758 = vmatmul.mubr.bf16.gmra.mrb[0].mxu0 %v1421
      %v1759 = vpop.f32.mrb[0].mxu0
      %v1760 = vadd.f32 %v1310, %v1759
      %v1761 = vpop.f32.mrb[0].mxu0
      %v1762 = vpop.f32.mrb[0].mxu0
      %v1763 = vadd.f32 %v1310, %v1762
      %v1764 = vpop.f32.mrb[0].mxu0
      %1765 = vmatprep.mubr.bf16.mxu0 %v1427
      %1766 = vmatmul.mubr.bf16.gmra.mrb[0].mxu0 %v1426
      %v1767 = vpop.f32.mrb[0].mxu0
      %v1768 = vadd.f32 %v1310, %v1767
      %v1769 = vpop.f32.mrb[0].mxu0
      %v1770 = vpop.f32.mrb[0].mxu0
      %v1771 = vadd.f32 %v1310, %v1770
      %v1772 = vpop.f32.mrb[0].mxu0
      %1773 = vmatprep.mubr.bf16.mxu0 %v1432
      %1774 = vmatmul.mubr.bf16.gmra.mrb[0].mxu0 %v1431
      %v1775 = vpop.f32.mrb[0].mxu0
      %v1776 = vadd.f32 %v1310, %v1775
      %v1777 = vpop.f32.mrb[0].mxu0
      %v1778 = vpop.f32.mrb[0].mxu0
      %v1779 = vadd.f32 %v1310, %v1778
      %v1780 = vpop.f32.mrb[0].mxu0
      %1781 = vmatprep.mubr.bf16.mxu0 %v1437
      %1782 = vmatmul.mubr.bf16.gmra.mrb[0].mxu0 %v1436
      %v1783 = vpop.f32.mrb[0].mxu0
      %v1784 = vadd.f32 %v1310, %v1783
      %v1785 = vpop.f32.mrb[0].mxu0
      %v1786 = vpop.f32.mrb[0].mxu0
      %v1787 = vadd.f32 %v1310, %v1786
      %v1788 = vpop.f32.mrb[0].mxu0
      %1789 = vmatprep.mubr.bf16.mxu0 %v1442
      %1790 = vmatmul.mubr.bf16.gmra.mrb[0].mxu0 %v1441
      %v1791 = vpop.f32.mrb[0].mxu0
      %v1792 = vadd.f32 %v1310, %v1791
      %v1793 = vpop.f32.mrb[0].mxu0
      %v1794 = vpop.f32.mrb[0].mxu0
      %v1795 = vadd.f32 %v1310, %v1794
      %v1796 = vpop.f32.mrb[0].mxu0
      %1797 = vmatprep.mubr.bf16.mxu0 %v1447
      %1798 = vmatmul.mubr.bf16.gmra.mrb[0].mxu0 %v1446
      %v1799 = vpop.f32.mrb[0].mxu0
      %v1800 = vadd.f32 %v1310, %v1799
      %v1801 = vpop.f32.mrb[0].mxu0
      %v1802 = vpop.f32.mrb[0].mxu0
      %v1803 = vpop.f32.mrb[0].mxu0
      %1804 = vdwg.mxu0
      %1805 = vmatprep.subr.bf16.mxu0 0
      %1806 = vmatpush1.bf16.msra.mxu0 %v1639
      %1807 = vmatprep.subr.bf16.mxu0 0
      %1808 = vmatpush1.bf16.msra.mxu0 %v1640
      %1809 = vmatprep.subr.bf16.mxu0 0
      %1810 = vmatpush1.bf16.msra.mxu0 %v1641
      %1811 = vmatprep.subr.bf16.mxu0 0
      %1812 = vmatpush1.bf16.msra.mxu0 %v1642
      %1813 = vmatprep.subr.bf16.mxu0 0
      %1814 = vmatpush1.bf16.msra.mxu0 %v1643
      %1815 = vmatprep.subr.bf16.mxu0 0
      %1816 = vmatpush1.bf16.msra.mxu0 %v1644
      %1817 = vmatprep.subr.bf16.mxu0 0
      %1818 = vmatpush1.bf16.msra.mxu0 %v1645
      %1819 = vmatprep.subr.bf16.mxu0 0
      %1820 = vmatpush1.bf16.msra.mxu0 %v1646
      %1821 = vmatprep.subr.bf16.mxu0 0
      %1822 = vmatpush1.bf16.msra.mxu0 %v1647
      %1823 = vmatprep.subr.bf16.mxu0 0
      %1824 = vmatpush1.bf16.msra.mxu0 %v1648
      %1825 = vmatprep.subr.bf16.mxu0 0
      %1826 = vmatpush1.bf16.msra.mxu0 %v1649
      %1827 = vmatprep.subr.bf16.mxu0 0
      %1828 = vmatpush1.bf16.msra.mxu0 %v1650
      %1829 = vmatprep.subr.bf16.mxu0 0
      %1830 = vmatpush1.bf16.msra.mxu0 %v1651
      %1831 = vmatprep.subr.bf16.mxu0 0
      %1832 = vmatpush1.bf16.msra.mxu0 %v1652
      %1833 = vmatprep.subr.bf16.mxu0 0
      %1834 = vmatpush1.bf16.msra.mxu0 %v1653
      %1835 = vmatprep.subr.bf16.mxu0 0
      %1836 = vmatpush1.bf16.msra.mxu0 %v1654
      %1837 = vmatprep.mubr.bf16.mxu0 %v1419
      %1838 = vmatmul.mubr.bf16.gmra.mrb[0].mxu0 %v1418
      %v1839 = vpop.f32.mrb[0].mxu0
      %v1840 = vadd.f32 %v1752, %v1839
      %v1841 = vpop.f32.mrb[0].mxu0
      %v1842 = vpop.f32.mrb[0].mxu0
      %v1843 = vadd.f32 %v1755, %v1842
      %v1844 = vpop.f32.mrb[0].mxu0
      %1845 = vmatprep.mubr.bf16.mxu0 %v1424
      %1846 = vmatmul.mubr.bf16.gmra.mrb[0].mxu0 %v1423
      %v1847 = vpop.f32.mrb[0].mxu0
      %v1848 = vadd.f32 %v1760, %v1847
      %v1849 = vpop.f32.mrb[0].mxu0
      %v1850 = vpop.f32.mrb[0].mxu0
      %v1851 = vadd.f32 %v1763, %v1850
      %v1852 = vpop.f32.mrb[0].mxu0
      %1853 = vmatprep.mubr.bf16.mxu0 %v1429
      %1854 = vmatmul.mubr.bf16.gmra.mrb[0].mxu0 %v1428
      %v1855 = vpop.f32.mrb[0].mxu0
      %v1856 = vadd.f32 %v1768, %v1855
      %v1857 = vpop.f32.mrb[0].mxu0
      %v1858 = vpop.f32.mrb[0].mxu0
      %v1859 = vadd.f32 %v1771, %v1858
      %v1860 = vpop.f32.mrb[0].mxu0
      %1861 = vmatprep.mubr.bf16.mxu0 %v1434
      %1862 = vmatmul.mubr.bf16.gmra.mrb[0].mxu0 %v1433
      %v1863 = vpop.f32.mrb[0].mxu0
      %v1864 = vadd.f32 %v1776, %v1863
      %v1865 = vpop.f32.mrb[0].mxu0
      %v1866 = vpop.f32.mrb[0].mxu0
      %v1867 = vadd.f32 %v1779, %v1866
      %v1868 = vpop.f32.mrb[0].mxu0
      %1869 = vmatprep.mubr.bf16.mxu0 %v1439
      %1870 = vmatmul.mubr.bf16.gmra.mrb[0].mxu0 %v1438
      %v1871 = vpop.f32.mrb[0].mxu0
      %v1872 = vadd.f32 %v1784, %v1871
      %v1873 = vpop.f32.mrb[0].mxu0
      %v1874 = vpop.f32.mrb[0].mxu0
      %v1875 = vadd.f32 %v1787, %v1874
      %v1876 = vpop.f32.mrb[0].mxu0
      %1877 = vmatprep.mubr.bf16.mxu0 %v1444
      %1878 = vmatmul.mubr.bf16.gmra.mrb[0].mxu0 %v1443
      %v1879 = vpop.f32.mrb[0].mxu0
      %v1880 = vadd.f32 %v1792, %v1879
      %v1881 = vpop.f32.mrb[0].mxu0
      %v1882 = vpop.f32.mrb[0].mxu0
      %v1883 = vadd.f32 %v1795, %v1882
      %v1884 = vpop.f32.mrb[0].mxu0
      %1885 = vmatprep.mubr.bf16.mxu0 %v1449
      %1886 = vmatmul.mubr.bf16.gmra.mrb[0].mxu0 %v1448
      %v1887 = vpop.f32.mrb[0].mxu0
      %v1888 = vadd.f32 %v1800, %v1887
      %v1889 = vpop.f32.mrb[0].mxu0
      %v1890 = vpop.f32.mrb[0].mxu0
      %v1891 = vpop.f32.mrb[0].mxu0
      %1892 = vdwg.mxu0
      %1893 = vmatprep.subr.bf16.mxu0 0
      %1894 = vmatpush1.bf16.msra.mxu0 %v1655
      %1895 = vmatprep.subr.bf16.mxu0 0
      %1896 = vmatpush1.bf16.msra.mxu0 %v1656
      %1897 = vmatprep.subr.bf16.mxu0 0
      %1898 = vmatpush1.bf16.msra.mxu0 %v1657
      %1899 = vmatprep.subr.bf16.mxu0 0
      %1900 = vmatpush1.bf16.msra.mxu0 %v1658
      %1901 = vmatprep.subr.bf16.mxu0 0
      %1902 = vmatpush1.bf16.msra.mxu0 0
      %1903 = vmatprep.subr.bf16.mxu0 0
      %1904 = vmatpush1.bf16.msra.mxu0 0
      %1905 = vmatprep.subr.bf16.mxu0 0
      %1906 = vmatpush1.bf16.msra.mxu0 0
      %1907 = vmatprep.subr.bf16.mxu0 0
      %1908 = vmatpush1.bf16.msra.mxu0 0
      %1909 = vmatprep.subr.bf16.mxu0 0
      %1910 = vmatpush1.bf16.msra.mxu0 0
      %1911 = vmatprep.subr.bf16.mxu0 0
      %1912 = vmatpush1.bf16.msra.mxu0 0
      %1913 = vmatprep.subr.bf16.mxu0 0
      %1914 = vmatpush1.bf16.msra.mxu0 0
      %1915 = vmatprep.subr.bf16.mxu0 0
      %1916 = vmatpush1.bf16.msra.mxu0 0
      %1917 = vmatprep.subr.bf16.mxu0 0
      %1918 = vmatpush1.bf16.msra.mxu0 0
      %1919 = vmatprep.subr.bf16.mxu0 0
      %1920 = vmatpush1.bf16.msra.mxu0 0
      %1921 = vmatprep.subr.bf16.mxu0 0
      %1922 = vmatpush1.bf16.msra.mxu0 0
      %1923 = vmatprep.subr.bf16.mxu0 0
      %1924 = vmatpush1.bf16.msra.mxu0 0
      %1925 = vmatprep.mubr.bf16.mxu0 0
      %1926 = vmatmul.mubr.bf16.gmra.mrb[0].mxu0 %v1697
      %v1927 = vpop.f32.mrb[0].mxu0
      %v1928 = vadd.f32 %v1840, %v1927
      %v1929 = vpop.f32.mrb[0].mxu0
      %v1930 = vpop.f32.mrb[0].mxu0
      %v1931 = vadd.f32 %v1843, %v1930
      %v1932 = vpop.f32.mrb[0].mxu0
      %1933 = vmatprep.mubr.bf16.mxu0 0
      %1934 = vmatmul.mubr.bf16.gmra.mrb[0].mxu0 %v1700
      %v1935 = vpop.f32.mrb[0].mxu0
      %v1936 = vadd.f32 %v1848, %v1935
      %v1937 = vpop.f32.mrb[0].mxu0
      %v1938 = vpop.f32.mrb[0].mxu0
      %v1939 = vadd.f32 %v1851, %v1938
      %v1940 = vpop.f32.mrb[0].mxu0
      %1941 = vmatprep.mubr.bf16.mxu0 0
      %1942 = vmatmul.mubr.bf16.gmra.mrb[0].mxu0 %v1703
      %v1943 = vpop.f32.mrb[0].mxu0
      %v1944 = vadd.f32 %v1856, %v1943
      %v1945 = vpop.f32.mrb[0].mxu0
      %v1946 = vpop.f32.mrb[0].mxu0
      %v1947 = vadd.f32 %v1859, %v1946
      %v1948 = vpop.f32.mrb[0].mxu0
      %1949 = vmatprep.mubr.bf16.mxu0 0
      %1950 = vmatmul.mubr.bf16.gmra.mrb[0].mxu0 %v1706
      %v1951 = vpop.f32.mrb[0].mxu0
      %v1952 = vadd.f32 %v1864, %v1951
      %v1953 = vpop.f32.mrb[0].mxu0
      %v1954 = vpop.f32.mrb[0].mxu0
      %v1955 = vadd.f32 %v1867, %v1954
      %v1956 = vpop.f32.mrb[0].mxu0
      %1957 = vmatprep.mubr.bf16.mxu0 0
      %1958 = vmatmul.mubr.bf16.gmra.mrb[0].mxu0 %v1709
      %v1959 = vpop.f32.mrb[0].mxu0
      %v1960 = vadd.f32 %v1872, %v1959
      %v1961 = vpop.f32.mrb[0].mxu0
      %v1962 = vpop.f32.mrb[0].mxu0
      %v1963 = vadd.f32 %v1875, %v1962
      %v1964 = vpop.f32.mrb[0].mxu0
      %1965 = vmatprep.mubr.bf16.mxu0 0
      %1966 = vmatmul.mubr.bf16.gmra.mrb[0].mxu0 %v1712
      %v1967 = vpop.f32.mrb[0].mxu0
      %v1968 = vadd.f32 %v1880, %v1967
      %v1969 = vpop.f32.mrb[0].mxu0
      %v1970 = vpop.f32.mrb[0].mxu0
      %v1971 = vadd.f32 %v1883, %v1970
      %v1972 = vpop.f32.mrb[0].mxu0
      %1973 = vmatprep.mubr.bf16.mxu0 0
      %1974 = vmatmul.mubr.bf16.gmra.mrb[0].mxu0 %v1715
      %v1975 = vpop.f32.mrb[0].mxu0
      %v1976 = vadd.f32 %v1888, %v1975
      %v1977 = vpop.f32.mrb[0].mxu0
      %v1978 = vpop.f32.mrb[0].mxu0
      %v1979 = vpop.f32.mrb[0].mxu0
      %1980 = vdwg.mxu0
      %v1981 = vmax.f32 %v1928, 0.0
      %v1982 = vmax.f32 %v1931, 0.0
      %v1983 = vmax.f32 %v1936, 0.0
      %v1984 = vmax.f32 %v1939, 0.0
      %v1985 = vmax.f32 %v1944, 0.0
      %v1986 = vmax.f32 %v1947, 0.0
      %v1987 = vmax.f32 %v1952, 0.0
      %v1988 = vmax.f32 %v1955, 0.0
      %v1989 = vmax.f32 %v1960, 0.0
      %v1990 = vmax.f32 %v1963, 0.0
      %v1991 = vmax.f32 %v1968, 0.0
      %v1992 = vmax.f32 %v1971, 0.0
      %v1993 = vmax.f32 %v1976, 0.0
      %1994 = vst [vmem:[%s170] sm:$0xff] %v1981
      %1995 = vst [vmem:[%s170 + $0x8] sm:$0xff] %v1982
      %1996 = vst [vmem:[%s170 + $0x10] sm:$0xff] %v1983
      %1997 = vst [vmem:[%s170 + $0x18] sm:$0xff] %v1984
      %1998 = vst [vmem:[%s170 + $0x20] sm:$0xff] %v1985
      %1999 = vst [vmem:[%s170 + $0x28] sm:$0xff] %v1986
      %2000 = vst [vmem:[%s170 + $0x30] sm:$0xff] %v1987
      %2001 = vst [vmem:[%s170 + $0x38] sm:$0xff] %v1988
      %2002 = vst [vmem:[%s170 + $0x40] sm:$0xff] %v1989
      %2003 = vst [vmem:[%s170 + $0x48] sm:$0xff] %v1990
      %2004 = vst [vmem:[%s170 + $0x50] sm:$0xff] %v1991
      %2005 = vst [vmem:[%s170 + $0x58] sm:$0xff] %v1992
      %2006 = vst [vmem:[%s170 + $0x60] sm:$0xf] %v1993
      %p2007 = scmp.lt.s32.totalorder %s14, 1
      %s2008 = scalar_select %p2007, %s14, 1
      %s2009 = smul.addr %s2008, 13
      %s2010 = smul.addr %s2009, 8
      %s2011 = scalar_lea.vmem %s3, %s2010
      // Predicated region
      $region33: #{lte_forward.10} parent=31 // pred_check
        %p2012 = pneg %p100
      $region34: #{lte_forward.10} parent=31 // pred_check_branch
        %2014 = sbr.rel (%p2012) target = $region36
      $region35: #{lte_forward.10} parent=31 // pred_region
        _
      $region36: #{lte_forward.10} parent=31 // pred_fallthru
        _
    $region32: #{lte_forward.10} parent=5 // pred_fallthru
      _
    %p2015 = scmp.le.s32.totalorder 2, %s9
    // Predicated region
    $region37: #{lte_forward.10} parent=5 // pred_check
      %p2016 = pneg %p2015
    $region38: #{lte_forward.10} parent=5 // pred_check_branch
      %2018 = sbr.rel (%p2016) target = $region40
    $region39: #{lte_forward.10} parent=5 // pred_region
      %s2019 = ssub.s32 %s9, 2
      // Predicated region
      $region41: #{lte_forward.10} parent=39 // pred_check
        %p2020 = pneg %p106
      $region42: #{lte_forward.10} parent=39 // pred_check_branch
        %2022 = sbr.rel (%p2020) target = $region44
      $region43: #{lte_forward.10} parent=39 // pred_region
        %p2023 = scmp.lt.s32.totalorder %s15, 1
        %s2024 = scalar_select %p2023, %s15, 1
        %s2025 = smul.addr %s2024, 13
        %s2026 = smul.addr %s2025, 8
        %s2027 = scalar_lea.vmem %s3, %s2026
      $region44: #{lte_forward.10} parent=39 // pred_fallthru
        _
    $region40: #{lte_forward.10} parent=5 // pred_fallthru
      _
  $region6: #{lte_forward.10} parent=0 // loop_footer
    %s13 = sadd.s32 1, %s9
  $region7: #{lte_forward.10} parent=0 // loop_footer_branch
    %8 = sbr.rel target = $region3
  $region8: #{lte_forward.10} parent=0 // loop_exit
    _

// kernel: lte_forward.12
$region0: #{lte_forward.12}
  #allocation0 [shape = 'u32[]', space=smem, size = 0x4, offset = 0x4, fixed_abs, tag = 'smem constant byte address 0x4 - core index']
  #allocation1 [shape = 'u32[144,128]{1,0:T(1,128)}', space=vmem, size = 0x12000, scoped, tag = 'internal scratch']
  %s0 = inlined_call_operand.vmem [shape: f32[2,4,4,128], index: 0, kind: input, shape index: {}]
  %s1 = inlined_call_operand.vmem [shape: f32[2,4,4,128], index: 1, kind: input, shape index: {}]
  %s2 = inlined_call_operand.vmem [shape: f32[2,4,4,128], index: 2, kind: input, shape index: {}]
  %s3 = inlined_call_operand.vmem [shape: f32[2,4,4,128], index: 3, kind: input, shape index: {}]
  %s4 = inlined_call_operand.vmem [shape: f32[2,4,4,128], index: 4, kind: output, shape index: {}]
  %s5 = sld [smem:[#allocation0]]
  $region49: #{lte_forward.12} parent=0
    _
  %s7 = ssub.s32 1, %s5
  %s8 = scalar_select 0, %s7, %s5
  loop: start=0, step=1, limit=4
  $region2: #{lte_forward.12} parent=0 // loop_pre_header
    _
  $region3: #{lte_forward.12} parent=0 // loop_header
    %s10 = sphi 0, %s14
    %p11 = scmp.ge.s32.totalorder %s10, 4
    %s20 = sphi 0, %s22
    %s23 = sphi 0, %s20
    %s24 = sphi 0, %s23
    %s40 = sphi 0, %s24
    %s46 = sphi 0, %s48
    %s49 = sphi 0, %s46
    %s50 = sphi 0, %s49
    %s66 = sphi 0, %s50
    %s72 = sphi 0, %s74
    %s75 = sphi 0, %s72
    %s76 = sphi 0, %s75
    %s92 = sphi 0, %s76
    %s98 = sphi 0, %s100
    %s101 = sphi 0, %s98
    %s102 = sphi 0, %s101
    %s118 = sphi 0, %s102
    %s124 = sphi 0, %s126
    %s127 = sphi 0, %s124
    %s128 = sphi 0, %s127
    %s144 = sphi 0, %s128
  $region4: #{lte_forward.12} parent=0 // loop_header_branch
    %13 = sbr.rel (%p11) target = $region8
  $region5: #{lte_forward.12} parent=0 // loop_body
    %s15 = ssub.s32 %s10, 1
    %s16 = ssub.s32 %s10, 2
    %s17 = sadd.s32 %s10, 1
    %s18 = ssub.s32 %s10, %s17
    %p19 = scmp.eq.s32.totalorder %s18, 0
    %s21 = sadd.s32 %s20, 1
    %s22 = scalar_select %p19, %s20, %s21
    %p25 = pneg %p19
    %p26 = scmp.eq.s32.totalorder %s10, 1
    %p27 = por %p25, %p26
    %p28 = scmp.ne.s32.totalorder %s20, %s23
    %p29 = scmp.eq.s32.totalorder %s10, 0
    %p30 = por %p28, %p29
    %p31 = scmp.ne.s32.totalorder %s20, %s23
    %p32 = scmp.eq.s32.totalorder %s15, 1
    %p33 = por %p31, %p32
    %p34 = scmp.ne.s32.totalorder %s23, %s24
    %p35 = scmp.eq.s32.totalorder %s15, 0
    %p36 = por %p34, %p35
    %p37 = scmp.ne.s32.totalorder %s23, %s24
    %p38 = scmp.eq.s32.totalorder %s16, 1
    %p39 = por %p37, %p38
    %p41 = scmp.ne.s32.totalorder %s24, %s40
    %p42 = scmp.eq.s32.totalorder %s16, 0
    %p43 = por %p41, %p42
    %s44 = ssub.s32 %s10, %s17
    %p45 = scmp.eq.s32.totalorder %s44, 0
    %s47 = sadd.s32 %s46, 1
    %s48 = scalar_select %p45, %s46, %s47
    %p51 = pneg %p45
    %p52 = scmp.eq.s32.totalorder %s10, 1
    %p53 = por %p51, %p52
    %p54 = scmp.ne.s32.totalorder %s46, %s49
    %p55 = scmp.eq.s32.totalorder %s10, 0
    %p56 = por %p54, %p55
    %p57 = scmp.ne.s32.totalorder %s46, %s49
    %p58 = scmp.eq.s32.totalorder %s15, 1
    %p59 = por %p57, %p58
    %p60 = scmp.ne.s32.totalorder %s49, %s50
    %p61 = scmp.eq.s32.totalorder %s15, 0
    %p62 = por %p60, %p61
    %p63 = scmp.ne.s32.totalorder %s49, %s50
    %p64 = scmp.eq.s32.totalorder %s16, 1
    %p65 = por %p63, %p64
    %p67 = scmp.ne.s32.totalorder %s50, %s66
    %p68 = scmp.eq.s32.totalorder %s16, 0
    %p69 = por %p67, %p68
    %s70 = ssub.s32 %s10, %s17
    %p71 = scmp.eq.s32.totalorder %s70, 0
    %s73 = sadd.s32 %s72, 1
    %s74 = scalar_select %p71, %s72, %s73
    %p77 = pneg %p71
    %p78 = scmp.eq.s32.totalorder %s10, 1
    %p79 = por %p77, %p78
    %p80 = scmp.ne.s32.totalorder %s72, %s75
    %p81 = scmp.eq.s32.totalorder %s10, 0
    %p82 = por %p80, %p81
    %p83 = scmp.ne.s32.totalorder %s72, %s75
    %p84 = scmp.eq.s32.totalorder %s15, 1
    %p85 = por %p83, %p84
    %p86 = scmp.ne.s32.totalorder %s75, %s76
    %p87 = scmp.eq.s32.totalorder %s15, 0
    %p88 = por %p86, %p87
    %p89 = scmp.ne.s32.totalorder %s75, %s76
    %p90 = scmp.eq.s32.totalorder %s16, 1
    %p91 = por %p89, %p90
    %p93 = scmp.ne.s32.totalorder %s76, %s92
    %p94 = scmp.eq.s32.totalorder %s16, 0
    %p95 = por %p93, %p94
    %s96 = ssub.s32 %s10, %s17
    %p97 = scmp.eq.s32.totalorder %s96, 0
    %s99 = sadd.s32 %s98, 1
    %s100 = scalar_select %p97, %s98, %s99
    %p103 = pneg %p97
    %p104 = scmp.eq.s32.totalorder %s10, 1
    %p105 = por %p103, %p104
    %p106 = scmp.ne.s32.totalorder %s98, %s101
    %p107 = scmp.eq.s32.totalorder %s10, 0
    %p108 = por %p106, %p107
    %p109 = scmp.ne.s32.totalorder %s98, %s101
    %p110 = scmp.eq.s32.totalorder %s15, 1
    %p111 = por %p109, %p110
    %p112 = scmp.ne.s32.totalorder %s101, %s102
    %p113 = scmp.eq.s32.totalorder %s15, 0
    %p114 = por %p112, %p113
    %p115 = scmp.ne.s32.totalorder %s101, %s102
    %p116 = scmp.eq.s32.totalorder %s16, 1
    %p117 = por %p115, %p116
    %p119 = scmp.ne.s32.totalorder %s102, %s118
    %p120 = scmp.eq.s32.totalorder %s16, 0
    %p121 = por %p119, %p120
    %s122 = ssub.s32 %s10, %s17
    %p123 = scmp.eq.s32.totalorder %s122, 0
    %s125 = sadd.s32 %s124, 1
    %s126 = scalar_select %p123, %s124, %s125
    %p129 = pneg %p123
    %p130 = scmp.eq.s32.totalorder %s10, 1
    %p131 = por %p129, %p130
    %p132 = scmp.ne.s32.totalorder %s124, %s127
    %p133 = scmp.eq.s32.totalorder %s10, 0
    %p134 = por %p132, %p133
    %p135 = scmp.ne.s32.totalorder %s124, %s127
    %p136 = scmp.eq.s32.totalorder %s15, 1
    %p137 = por %p135, %p136
    %p138 = scmp.ne.s32.totalorder %s127, %s128
    %p139 = scmp.eq.s32.totalorder %s15, 0
    %p140 = por %p138, %p139
    %p141 = scmp.ne.s32.totalorder %s127, %s128
    %p142 = scmp.eq.s32.totalorder %s16, 1
    %p143 = por %p141, %p142
    %p145 = scmp.ne.s32.totalorder %s128, %s144
    %p146 = scmp.eq.s32.totalorder %s16, 0
    %p147 = por %p145, %p146
    %p148 = scmp.le.s32.totalorder 1, %s10
    %p149 = scmp.lt.s32.totalorder %s10, 3
    %p150 = pnand %p148, %p149
    %p151 = pneg %p150
    // Predicated region
    $region9: #{lte_forward.12} parent=5 // pred_check
      _
    $region10: #{lte_forward.12} parent=5 // pred_check_branch
      %153 = sbr.rel (%p150) target = $region12
    $region11: #{lte_forward.12} parent=5 // pred_region
      %s154 = ssub.s32 %s10, 1
    $region12: #{lte_forward.12} parent=5 // pred_fallthru
      _
    %p155 = scmp.lt.s32.totalorder %s10, 2
    // Predicated region
    $region13: #{lte_forward.12} parent=5 // pred_check
      %p156 = pneg %p155
    $region14: #{lte_forward.12} parent=5 // pred_check_branch
      %158 = sbr.rel (%p156) target = $region16
    $region15: #{lte_forward.12} parent=5 // pred_region
      // Predicated region
      $region17: #{lte_forward.12} parent=15 // pred_check
        %p159 = pneg %p30
      $region18: #{lte_forward.12} parent=15 // pred_check_branch
        %161 = sbr.rel (%p159) target = $region20
      $region19: #{lte_forward.12} parent=15 // pred_region
        %p162 = scmp.lt.s32.totalorder %s10, 1
        %s163 = scalar_select %p162, %s10, 1
        %s164 = smul.addr %s163, 4
        %s165 = smul.addr %s164, 4
        %s166 = scalar_lea.vmem %s0, %s165
      $region20: #{lte_forward.12} parent=15 // pred_fallthru
        _
      // Predicated region
      $region21: #{lte_forward.12} parent=15 // pred_check
        %p167 = pneg %p56
      $region22: #{lte_forward.12} parent=15 // pred_check_branch
        %169 = sbr.rel (%p167) target = $region24
      $region23: #{lte_forward.12} parent=15 // pred_region
        %p170 = scmp.lt.s32.totalorder %s10, 1
        %s171 = scalar_select %p170, %s10, 1
        %s172 = smul.addr %s171, 4
        %s173 = smul.addr %s172, 4
        %s174 = scalar_lea.vmem %s1, %s173
      $region24: #{lte_forward.12} parent=15 // pred_fallthru
        _
      // Predicated region
      $region25: #{lte_forward.12} parent=15 // pred_check
        %p175 = pneg %p82
      $region26: #{lte_forward.12} parent=15 // pred_check_branch
        %177 = sbr.rel (%p175) target = $region28
      $region27: #{lte_forward.12} parent=15 // pred_region
        %p178 = scmp.lt.s32.totalorder %s10, 1
        %s179 = scalar_select %p178, %s10, 1
        %s180 = smul.addr %s179, 4
        %s181 = smul.addr %s180, 4
        %s182 = scalar_lea.vmem %s2, %s181
      $region28: #{lte_forward.12} parent=15 // pred_fallthru
        _
      // Predicated region
      $region29: #{lte_forward.12} parent=15 // pred_check
        %p183 = pneg %p108
      $region30: #{lte_forward.12} parent=15 // pred_check_branch
        %185 = sbr.rel (%p183) target = $region32
      $region31: #{lte_forward.12} parent=15 // pred_region
        %p186 = scmp.lt.s32.totalorder %s10, 1
        %s187 = scalar_select %p186, %s10, 1
        %s188 = smul.addr %s187, 4
        %s189 = smul.addr %s188, 4
        %s190 = scalar_lea.vmem %s3, %s189
      $region32: #{lte_forward.12} parent=15 // pred_fallthru
        _
    $region16: #{lte_forward.12} parent=5 // pred_fallthru
      _
    %p191 = scmp.le.s32.totalorder 1, %s10
    %p192 = scmp.lt.s32.totalorder %s10, 3
    %p193 = pnand %p191, %p192
    %p194 = pneg %p193
    // Predicated region
    $region33: #{lte_forward.12} parent=5 // pred_check
      _
    $region34: #{lte_forward.12} parent=5 // pred_check_branch
      %196 = sbr.rel (%p193) target = $region36
    $region35: #{lte_forward.12} parent=5 // pred_region
      %s197 = ssub.s32 %s10, 1
      %p198 = scmp.lt.s32.totalorder %s15, 1
      %s199 = scalar_select %p198, %s15, 1
      %s200 = smul.addr %s199, 4
      %s201 = smul.addr %s200, 4
      %s202 = scalar_lea.vmem %s0, %s201
      %p203 = pneg %p36
      %p204 = pneg %p33
      %p205 = scmp.lt.s32.totalorder %s15, 1
      %s206 = scalar_select %p205, %s15, 1
      %s207 = smul.addr %s206, 4
      %s208 = smul.addr %s207, 4
      %s209 = scalar_lea.vmem %s1, %s208
      %p210 = pneg %p62
      %p211 = pneg %p59
      %p212 = scmp.lt.s32.totalorder %s15, 1
      %s213 = scalar_select %p212, %s15, 1
      %s214 = smul.addr %s213, 4
      %s215 = smul.addr %s214, 4
      %s216 = scalar_lea.vmem %s2, %s215
      %p217 = pneg %p88
      %p218 = pneg %p85
      %p219 = scmp.lt.s32.totalorder %s15, 1
      %s220 = scalar_select %p219, %s15, 1
      %s221 = smul.addr %s220, 4
      %s222 = smul.addr %s221, 4
      %s223 = scalar_lea.vmem %s3, %s222
      %p224 = pneg %p114
      %p225 = pneg %p111
      %p226 = pneg %p140
      %p227 = pneg %p137
      %p228 = scmp.lt.s32.totalorder %s15, 1
      %s229 = scalar_select %p228, %s15, 1
      %s230 = smul.addr %s229, 4
      %s231 = smul.addr %s230, 4
      %s232 = scalar_lea.vmem %s4, %s231
      %p233 = scmp.lt.s32.totalorder %s15, 1
      %s234 = scalar_select %p233, %s15, 1
      %s235 = smul.addr %s234, 4
      %s236 = smul.addr %s235, 4
      %s237 = scalar_lea.vmem %s0, %s236
      %p238 = scmp.lt.s32.totalorder %s15, 1
      %s239 = scalar_select %p238, %s15, 1
      %s240 = smul.addr %s239, 4
      %s241 = smul.addr %s240, 4
      %s242 = scalar_lea.vmem %s1, %s241
      %p243 = scmp.lt.s32.totalorder %s15, 1
      %s244 = scalar_select %p243, %s15, 1
      %s245 = smul.addr %s244, 4
      %s246 = smul.addr %s245, 4
      %s247 = scalar_lea.vmem %s2, %s246
      %p248 = scmp.lt.s32.totalorder %s15, 1
      %s249 = scalar_select %p248, %s15, 1
      %s250 = smul.addr %s249, 4
      %s251 = smul.addr %s250, 4
      %s252 = scalar_lea.vmem %s3, %s251
      %p253 = scmp.lt.s32.totalorder %s15, 1
      %s254 = scalar_select %p253, %s15, 1
      %s255 = smul.addr %s254, 4
      %s256 = smul.addr %s255, 4
      %s257 = scalar_lea.vmem %s4, %s256
      %v258 = vld [vmem:[%s237] sm:$0xf]
      %v259 = vld [vmem:[%s237 + $0x4] sm:$0xf]
      %v260 = vld [vmem:[%s237 + $0x8] sm:$0xf]
      %v261 = vld [vmem:[%s237 + $0xc] sm:$0xf]
      %v262 = vld [vmem:[%s242] sm:$0xf]
      %v263 = vld [vmem:[%s242 + $0x4] sm:$0xf]
      %v264 = vld [vmem:[%s242 + $0x8] sm:$0xf]
      %v265 = vld [vmem:[%s242 + $0xc] sm:$0xf]
      %v266 = vmax.f32 %v258, %v262
      %v267 = vmax.f32 %v259, %v263
      %v268 = vmax.f32 %v260, %v264
      %v269 = vmax.f32 %v261, %v265
      %v270 = vld [vmem:[%s247] sm:$0xf]
      %v271 = vld [vmem:[%s247 + $0x4] sm:$0xf]
      %v272 = vld [vmem:[%s247 + $0x8] sm:$0xf]
      %v273 = vld [vmem:[%s247 + $0xc] sm:$0xf]
      %v274 = vld [vmem:[%s252] sm:$0xf]
      %v275 = vld [vmem:[%s252 + $0x4] sm:$0xf]
      %v276 = vld [vmem:[%s252 + $0x8] sm:$0xf]
      %v277 = vld [vmem:[%s252 + $0xc] sm:$0xf]
      %v278 = vmax.f32 %v270, %v274
      %v279 = vmax.f32 %v271, %v275
      %v280 = vmax.f32 %v272, %v276
      %v281 = vmax.f32 %v273, %v277
      %v282 = vmax.f32 %v266, %v278
      %v283 = vmax.f32 %v267, %v279
      %v284 = vmax.f32 %v268, %v280
      %v285 = vmax.f32 %v269, %v281
      %286 = vst [vmem:[%s257] sm:$0xf] %v282
      %287 = vst [vmem:[%s257 + $0x4] sm:$0xf] %v283
      %288 = vst [vmem:[%s257 + $0x8] sm:$0xf] %v284
      %289 = vst [vmem:[%s257 + $0xc] sm:$0xf] %v285
      %p290 = scmp.lt.s32.totalorder %s15, 1
      %s291 = scalar_select %p290, %s15, 1
      %s292 = smul.addr %s291, 4
      %s293 = smul.addr %s292, 4
      %s294 = scalar_lea.vmem %s4, %s293
      // Predicated region
      $region37: #{lte_forward.12} parent=35 // pred_check
        %p295 = pneg %p137
      $region38: #{lte_forward.12} parent=35 // pred_check_branch
        %297 = sbr.rel (%p295) target = $region40
      $region39: #{lte_forward.12} parent=35 // pred_region
        _
      $region40: #{lte_forward.12} parent=35 // pred_fallthru
        _
    $region36: #{lte_forward.12} parent=5 // pred_fallthru
      _
    %p298 = scmp.le.s32.totalorder 2, %s10
    // Predicated region
    $region41: #{lte_forward.12} parent=5 // pred_check
      %p299 = pneg %p298
    $region42: #{lte_forward.12} parent=5 // pred_check_branch
      %301 = sbr.rel (%p299) target = $region44
    $region43: #{lte_forward.12} parent=5 // pred_region
      %s302 = ssub.s32 %s10, 2
      // Predicated region
      $region45: #{lte_forward.12} parent=43 // pred_check
        %p303 = pneg %p143
      $region46: #{lte_forward.12} parent=43 // pred_check_branch
        %305 = sbr.rel (%p303) target = $region48
      $region47: #{lte_forward.12} parent=43 // pred_region
        %p306 = scmp.lt.s32.totalorder %s16, 1
        %s307 = scalar_select %p306, %s16, 1
        %s308 = smul.addr %s307, 4
        %s309 = smul.addr %s308, 4
        %s310 = scalar_lea.vmem %s4, %s309
      $region48: #{lte_forward.12} parent=43 // pred_fallthru
        _
    $region44: #{lte_forward.12} parent=5 // pred_fallthru
      _
  $region6: #{lte_forward.12} parent=0 // loop_footer
    %s14 = sadd.s32 1, %s10
  $region7: #{lte_forward.12} parent=0 // loop_footer_branch
    %9 = sbr.rel target = $region3
  $region8: #{lte_forward.12} parent=0 // loop_exit
    _

// kernel: lte_forward.8
$region0: #{lte_forward.8}
  #allocation0 [shape = 'u32[]', space=smem, size = 0x4, offset = 0x4, fixed_abs, tag = 'smem constant byte address 0x4 - core index']
  #allocation1 [shape = 'u32[144,128]{1,0:T(1,128)}', space=vmem, size = 0x12000, scoped, tag = 'internal scratch']
  #allocation2 [shape = 'bf16[324,576]{1,0:T(8,128)(2,1)}', space=vmem, size = 0x66800, scoped, tag = 'scratch operand']
  %s0 = inlined_call_operand.vmem [shape: bf16[2,362,64], index: 0, kind: input, shape index: {}]
  %s1 = inlined_call_operand.vmem [shape: bf16[576,64], index: 1, kind: input, shape index: {}]
  %s2 = inlined_call_operand.vmem [shape: f32[1,64], index: 2, kind: input, shape index: {}]
  %s3 = inlined_call_operand.vmem [shape: f32[2,324,64], index: 3, kind: output, shape index: {}]
  %s4 = sld [smem:[#allocation0]]
  $region45: #{lte_forward.8} parent=0
    _
  %s6 = ssub.s32 1, %s4
  %s7 = scalar_select 0, %s6, %s4
  loop: start=0, step=1, limit=4
  $region2: #{lte_forward.8} parent=0 // loop_pre_header
    _
  $region3: #{lte_forward.8} parent=0 // loop_header
    %s9 = sphi 0, %s13
    %p10 = scmp.ge.s32.totalorder %s9, 4
    %s19 = sphi 0, %s21
    %s22 = sphi 0, %s19
    %s23 = sphi 0, %s22
    %s39 = sphi 0, %s23
    %s43 = sphi 0, %s43
    %s45 = sphi 0, %s43
    %s46 = sphi 0, %s45
    %s60 = sphi 0, %s46
    %s64 = sphi 0, %s64
    %s66 = sphi 0, %s64
    %s67 = sphi 0, %s66
    %s81 = sphi 0, %s67
    %s87 = sphi 0, %s89
    %s90 = sphi 0, %s87
    %s91 = sphi 0, %s90
    %s107 = sphi 0, %s91
  $region4: #{lte_forward.8} parent=0 // loop_header_branch
    %12 = sbr.rel (%p10) target = $region8
  $region5: #{lte_forward.8} parent=0 // loop_body
    %s14 = ssub.s32 %s9, 1
    %s15 = ssub.s32 %s9, 2
    %s16 = sadd.s32 %s9, 1
    %s17 = ssub.s32 %s9, %s16
    %p18 = scmp.eq.s32.totalorder %s17, 0
    %s20 = sadd.s32 %s19, 1
    %s21 = scalar_select %p18, %s19, %s20
    %p24 = pneg %p18
    %p25 = scmp.eq.s32.totalorder %s9, 1
    %p26 = por %p24, %p25
    %p27 = scmp.ne.s32.totalorder %s19, %s22
    %p28 = scmp.eq.s32.totalorder %s9, 0
    %p29 = por %p27, %p28
    %p30 = scmp.ne.s32.totalorder %s19, %s22
    %p31 = scmp.eq.s32.totalorder %s14, 1
    %p32 = por %p30, %p31
    %p33 = scmp.ne.s32.totalorder %s22, %s23
    %p34 = scmp.eq.s32.totalorder %s14, 0
    %p35 = por %p33, %p34
    %p36 = scmp.ne.s32.totalorder %s22, %s23
    %p37 = scmp.eq.s32.totalorder %s15, 1
    %p38 = por %p36, %p37
    %p40 = scmp.ne.s32.totalorder %s23, %s39
    %p41 = scmp.eq.s32.totalorder %s15, 0
    %p42 = por %p40, %p41
    %s44 = sadd.s32 %s43, 1
    %p47 = scmp.eq.s32.totalorder %s9, 1
    %p48 = scmp.ne.s32.totalorder %s43, %s45
    %p49 = scmp.eq.s32.totalorder %s9, 0
    %p50 = por %p48, %p49
    %p51 = scmp.ne.s32.totalorder %s43, %s45
    %p52 = scmp.eq.s32.totalorder %s14, 1
    %p53 = por %p51, %p52
    %p54 = scmp.ne.s32.totalorder %s45, %s46
    %p55 = scmp.eq.s32.totalorder %s14, 0
    %p56 = por %p54, %p55
    %p57 = scmp.ne.s32.totalorder %s45, %s46
    %p58 = scmp.eq.s32.totalorder %s15, 1
    %p59 = por %p57, %p58
    %p61 = scmp.ne.s32.totalorder %s46, %s60
    %p62 = scmp.eq.s32.totalorder %s15, 0
    %p63 = por %p61, %p62
    %s65 = sadd.s32 %s64, 1
    %p68 = scmp.eq.s32.totalorder %s9, 1
    %p69 = scmp.ne.s32.totalorder %s64, %s66
    %p70 = scmp.eq.s32.totalorder %s9, 0
    %p71 = por %p69, %p70
    %p72 = scmp.ne.s32.totalorder %s64, %s66
    %p73 = scmp.eq.s32.totalorder %s14, 1
    %p74 = por %p72, %p73
    %p75 = scmp.ne.s32.totalorder %s66, %s67
    %p76 = scmp.eq.s32.totalorder %s14, 0
    %p77 = por %p75, %p76
    %p78 = scmp.ne.s32.totalorder %s66, %s67
    %p79 = scmp.eq.s32.totalorder %s15, 1
    %p80 = por %p78, %p79
    %p82 = scmp.ne.s32.totalorder %s67, %s81
    %p83 = scmp.eq.s32.totalorder %s15, 0
    %p84 = por %p82, %p83
    %s85 = ssub.s32 %s9, %s16
    %p86 = scmp.eq.s32.totalorder %s85, 0
    %s88 = sadd.s32 %s87, 1
    %s89 = scalar_select %p86, %s87, %s88
    %p92 = pneg %p86
    %p93 = scmp.eq.s32.totalorder %s9, 1
    %p94 = por %p92, %p93
    %p95 = scmp.ne.s32.totalorder %s87, %s90
    %p96 = scmp.eq.s32.totalorder %s9, 0
    %p97 = por %p95, %p96
    %p98 = scmp.ne.s32.totalorder %s87, %s90
    %p99 = scmp.eq.s32.totalorder %s14, 1
    %p100 = por %p98, %p99
    %p101 = scmp.ne.s32.totalorder %s90, %s91
    %p102 = scmp.eq.s32.totalorder %s14, 0
    %p103 = por %p101, %p102
    %p104 = scmp.ne.s32.totalorder %s90, %s91
    %p105 = scmp.eq.s32.totalorder %s15, 1
    %p106 = por %p104, %p105
    %p108 = scmp.ne.s32.totalorder %s91, %s107
    %p109 = scmp.eq.s32.totalorder %s15, 0
    %p110 = por %p108, %p109
    %p111 = scmp.le.s32.totalorder 1, %s9
    %p112 = scmp.lt.s32.totalorder %s9, 3
    %p113 = pnand %p111, %p112
    %p114 = pneg %p113
    // Predicated region
    $region9: #{lte_forward.8} parent=5 // pred_check
      _
    $region10: #{lte_forward.8} parent=5 // pred_check_branch
      %116 = sbr.rel (%p113) target = $region12
    $region11: #{lte_forward.8} parent=5 // pred_region
      %s117 = ssub.s32 %s9, 1
      // Predicated region
      $region13: #{lte_forward.8} parent=11 // pred_check
        %p118 = pneg %p56
      $region14: #{lte_forward.8} parent=11 // pred_check_branch
        %120 = sbr.rel (%p118) target = $region16
      $region15: #{lte_forward.8} parent=11 // pred_region
        _
      $region16: #{lte_forward.8} parent=11 // pred_fallthru
        _
      // Predicated region
      $region17: #{lte_forward.8} parent=11 // pred_check
        %p121 = pneg %p77
      $region18: #{lte_forward.8} parent=11 // pred_check_branch
        %123 = sbr.rel (%p121) target = $region20
      $region19: #{lte_forward.8} parent=11 // pred_region
        _
      $region20: #{lte_forward.8} parent=11 // pred_fallthru
        _
    $region12: #{lte_forward.8} parent=5 // pred_fallthru
      _
    %p124 = scmp.lt.s32.totalorder %s9, 2
    // Predicated region
    $region21: #{lte_forward.8} parent=5 // pred_check
      %p125 = pneg %p124
    $region22: #{lte_forward.8} parent=5 // pred_check_branch
      %127 = sbr.rel (%p125) target = $region24
    $region23: #{lte_forward.8} parent=5 // pred_region
      // Predicated region
      $region25: #{lte_forward.8} parent=23 // pred_check
        %p128 = pneg %p29
      $region26: #{lte_forward.8} parent=23 // pred_check_branch
        %130 = sbr.rel (%p128) target = $region28
      $region27: #{lte_forward.8} parent=23 // pred_region
        %p131 = scmp.lt.s32.totalorder %s9, 1
        %s132 = scalar_select %p131, %s9, 1
        %s133 = smul.addr %s132, 46
        %s134 = smul.addr %s133, 4
        %s135 = scalar_lea.vmem %s0, %s134
      $region28: #{lte_forward.8} parent=23 // pred_fallthru
        _
    $region24: #{lte_forward.8} parent=5 // pred_fallthru
      _
    %p136 = scmp.le.s32.totalorder 1, %s9
    %p137 = scmp.lt.s32.totalorder %s9, 3
    %p138 = pnand %p136, %p137
    %p139 = pneg %p138
    // Predicated region
    $region29: #{lte_forward.8} parent=5 // pred_check
      _
    $region30: #{lte_forward.8} parent=5 // pred_check_branch
      %141 = sbr.rel (%p138) target = $region32
    $region31: #{lte_forward.8} parent=5 // pred_region
      %s142 = ssub.s32 %s9, 1
      %p143 = scmp.lt.s32.totalorder %s14, 1
      %s144 = scalar_select %p143, %s14, 1
      %s145 = smul.addr %s144, 46
      %s146 = smul.addr %s145, 4
      %s147 = scalar_lea.vmem %s0, %s146
      %p148 = pneg %p35
      %p149 = pneg %p32
      %p150 = pneg %p56
      %p151 = pneg %p53
      %p152 = pneg %p77
      %p153 = pneg %p74
      %p154 = pneg %p103
      %p155 = pneg %p100
      %p156 = scmp.lt.s32.totalorder %s14, 1
      %s157 = scalar_select %p156, %s14, 1
      %s158 = smul.addr %s157, 41
      %s159 = smul.addr %s158, 8
      %s160 = scalar_lea.vmem %s3, %s159
      %p161 = scmp.lt.s32.totalorder %s14, 1
      %s162 = scalar_select %p161, %s14, 1
      %s163 = smul.addr %s162, 46
      %s164 = smul.addr %s163, 4
      %s165 = scalar_lea.vmem %s0, %s164
      %p166 = scmp.lt.s32.totalorder %s14, 1
      %s167 = scalar_select %p166, %s14, 1
      %s168 = smul.addr %s167, 41
      %s169 = smul.addr %s168, 8
      %s170 = scalar_lea.vmem %s3, %s169
      %v172 = vld [vmem:[%s165] sm:$0xf]
      %v173 = vld [vmem:[%s165 + $0x4] sm:$0xf]
      %v174 = vld [vmem:[%s165 + $0x8] sm:$0xf]
      %v175 = vld [vmem:[%s165 + $0xc] sm:$0xf]
      %v176 = vld [vmem:[%s165 + $0x10] sm:$0xf]
      %v177 = vld [vmem:[%s165 + $0x14] sm:$0xf]
      %v178 = vld [vmem:[%s165 + $0x18] sm:$0xf]
      %v179 = vld [vmem:[%s165 + $0x1c] sm:$0xf]
      %v180 = vld [vmem:[%s165 + $0x20] sm:$0xf]
      %v181 = vld [vmem:[%s165 + $0x24] sm:$0xf]
      %v182 = vld [vmem:[%s165 + $0x28] sm:$0xf]
      %v183 = vld [vmem:[%s165 + $0x2c] sm:$0xf]
      %v184 = vld [vmem:[%s165 + $0x30] sm:$0xf]
      %v185 = vld [vmem:[%s165 + $0x34] sm:$0xf]
      %v186 = vld [vmem:[%s165 + $0x38] sm:$0xf]
      %v187 = vld [vmem:[%s165 + $0x3c] sm:$0xf]
      %v188 = vld [vmem:[%s165 + $0x40] sm:$0xf]
      %v189 = vld [vmem:[%s165 + $0x44] sm:$0xf]
      %v190 = vld [vmem:[%s165 + $0x48] sm:$0xf]
      %v191 = vld [vmem:[%s165 + $0x4c] sm:$0xf]
      %v192 = vld [vmem:[%s165 + $0x50] sm:$0xf]
      %v193 = vld [vmem:[%s165 + $0x54] sm:$0xf]
      %v194 = vld [vmem:[%s165 + $0x58] sm:$0xf]
      %v195 = vld [vmem:[%s165 + $0x5c] sm:$0xf]
      %v196 = vld [vmem:[%s165 + $0x60] sm:$0xf]
      %v197 = vld [vmem:[%s165 + $0x64] sm:$0xf]
      %v198 = vld [vmem:[%s165 + $0x68] sm:$0xf]
      %v199 = vld [vmem:[%s165 + $0x6c] sm:$0xf]
      %v200 = vld [vmem:[%s165 + $0x70] sm:$0xf]
      %v201 = vld [vmem:[%s165 + $0x74] sm:$0xf]
      %v202 = vld [vmem:[%s165 + $0x78] sm:$0xf]
      %v203 = vld [vmem:[%s165 + $0x7c] sm:$0xf]
      %v204 = vld [vmem:[%s165 + $0x80] sm:$0xf]
      %v205 = vld [vmem:[%s165 + $0x84] sm:$0xf]
      %v206 = vld [vmem:[%s165 + $0x88] sm:$0xf]
      %v207 = vld [vmem:[%s165 + $0x8c] sm:$0xf]
      %v208 = vld [vmem:[%s165 + $0x90] sm:$0xf]
      %v209 = vld [vmem:[%s165 + $0x94] sm:$0xf]
      %v210 = vld [vmem:[%s165 + $0x98] sm:$0xf]
      %v211 = vld [vmem:[%s165 + $0x9c] sm:$0xf]
      %v212 = vld [vmem:[%s165 + $0xa0] sm:$0xf]
      %v213 = vld [vmem:[%s165 + $0xa4] sm:$0xf]
      %v214 = vld [vmem:[%s165 + $0xa8] sm:$0xf]
      %v215 = vld [vmem:[%s165 + $0xac] sm:$0xf]
      %v216 = vld [vmem:[%s165 + $0xb0] sm:$0xf]
      %v217 = vld [vmem:[%s165 + $0xb4] sm:$0x1]
      %v218 = vunpack.c.l.bf16 %v172
      %v219 = vunpack.c.l.bf16 %v173
      %v220 = vunpack.c.l.bf16 %v174
      %v221 = vunpack.c.l.bf16 %v175
      %v222 = vunpack.c.l.bf16 %v176
      %v223 = vunpack.c.l.bf16 %v177
      %v224 = vunpack.c.l.bf16 %v178
      %v225 = vunpack.c.l.bf16 %v179
      %v226 = vunpack.c.l.bf16 %v180
      %v227 = vunpack.c.l.bf16 %v181
      %v228 = vunpack.c.l.bf16 %v182
      %v229 = vunpack.c.l.bf16 %v183
      %v230 = vunpack.c.l.bf16 %v184
      %v231 = vunpack.c.l.bf16 %v185
      %v232 = vunpack.c.l.bf16 %v186
      %v233 = vunpack.c.l.bf16 %v187
      %v234 = vunpack.c.l.bf16 %v188
      %v235 = vunpack.c.l.bf16 %v189
      %v236 = vunpack.c.l.bf16 %v190
      %v237 = vunpack.c.l.bf16 %v191
      %v238 = vunpack.c.l.bf16 %v192
      %v239 = vunpack.c.l.bf16 %v193
      %v240 = vunpack.c.l.bf16 %v194
      %v241 = vunpack.c.l.bf16 %v195
      %v242 = vunpack.c.l.bf16 %v196
      %v243 = vunpack.c.l.bf16 %v197
      %v244 = vunpack.c.l.bf16 %v198
      %v245 = vunpack.c.l.bf16 %v199
      %v246 = vunpack.c.l.bf16 %v200
      %v247 = vunpack.c.l.bf16 %v201
      %v248 = vunpack.c.l.bf16 %v202
      %v249 = vunpack.c.l.bf16 %v203
      %v250 = vunpack.c.l.bf16 %v204
      %v251 = vunpack.c.l.bf16 %v205
      %v252 = vunpack.c.l.bf16 %v206
      %v253 = vunpack.c.l.bf16 %v207
      %v254 = vunpack.c.l.bf16 %v208
      %v255 = vunpack.c.l.bf16 %v209
      %v256 = vunpack.c.l.bf16 %v210
      %v257 = vunpack.c.l.bf16 %v211
      %v258 = vunpack.c.l.bf16 %v212
      %v259 = vunpack.c.l.bf16 %v213
      %v260 = vunpack.c.l.bf16 %v214
      %v261 = vunpack.c.l.bf16 %v215
      %v262 = vunpack.c.l.bf16 %v216
      %v263 = vunpack.c.l.bf16 %v217
      %v264 = vpack.c.bf16 %v219, %v218
      %v265 = vpack.c.bf16 %v221, %v220
      %v266 = vpack.c.bf16 %v223, %v222
      %v267 = vpack.c.bf16 %v225, %v224
      %v268 = vpack.c.bf16 %v227, %v226
      %v269 = vpack.c.bf16 %v229, %v228
      %v270 = vpack.c.bf16 %v231, %v230
      %v271 = vpack.c.bf16 %v233, %v232
      %v272 = vpack.c.bf16 %v235, %v234
      %v273 = vpack.c.bf16 %v237, %v236
      %v274 = vpack.c.bf16 %v239, %v238
      %v275 = vpack.c.bf16 %v241, %v240
      %v276 = vpack.c.bf16 %v243, %v242
      %v277 = vpack.c.bf16 %v245, %v244
      %v278 = vpack.c.bf16 %v247, %v246
      %v279 = vpack.c.bf16 %v249, %v248
      %v280 = vpack.c.bf16 %v251, %v250
      %v281 = vpack.c.bf16 %v253, %v252
      %v282 = vpack.c.bf16 %v255, %v254
      %v283 = vpack.c.bf16 %v257, %v256
      %v284 = vpack.c.bf16 %v258, %v258
      %v306 = vunpack.c.l.b16 %v264
      %v307 = vunpack.c.h.b16 %v264
      %v308 = vunpack.c.l.b16 %v265
      %v309 = vunpack.c.h.b16 %v265
      %v310 = vunpack.c.l.b16 %v266
      %v311 = vunpack.c.h.b16 %v266
      %v312 = vunpack.c.l.b16 %v267
      %v313 = vunpack.c.h.b16 %v267
      %v314 = vunpack.c.l.b16 %v268
      %v315 = vunpack.c.h.b16 %v268
      %v316 = vunpack.c.l.b16 %v269
      %v317 = vunpack.c.h.b16 %v269
      %v318 = vunpack.c.l.b16 %v270
      %v319 = vunpack.c.h.b16 %v270
      %v320 = vunpack.c.l.b16 %v271
      %v321 = vunpack.c.h.b16 %v271
      %v322 = vunpack.c.l.b16 %v272
      %v323 = vunpack.c.h.b16 %v272
      %v324 = vunpack.c.l.b16 %v273
      %v325 = vunpack.c.h.b16 %v273
      %v326 = vunpack.c.l.b16 %v274
      %v327 = vunpack.c.h.b16 %v274
      %v328 = vunpack.c.l.b16 %v275
      %v329 = vunpack.c.h.b16 %v275
      %v330 = vunpack.c.l.b16 %v276
      %v331 = vunpack.c.h.b16 %v276
      %v332 = vunpack.c.l.b16 %v277
      %v333 = vunpack.c.h.b16 %v277
      %v334 = vunpack.c.l.b16 %v278
      %v335 = vunpack.c.h.b16 %v278
      %v336 = vunpack.c.l.b16 %v279
      %v337 = vunpack.c.h.b16 %v279
      %v338 = vunpack.c.l.b16 %v280
      %v339 = vunpack.c.h.b16 %v280
      %v340 = vunpack.c.l.b16 %v281
      %v341 = vunpack.c.h.b16 %v281
      %v342 = vunpack.c.l.b16 %v282
      %v343 = vunpack.c.h.b16 %v282
      %v344 = vunpack.c.l.b16 %v283
      %v345 = vunpack.c.h.b16 %v283
      %v346 = vunpack.c.l.b16 %v284
      %v347 = vpack.c.b16 %v306, %v306
      %v348 = vpack.c.b16 %v307, %v307
      %v349 = vpack.c.b16 %v308, %v308
      %v350 = vpack.c.b16 %v309, %v309
      %v351 = vpack.c.b16 %v310, %v310
      %v352 = vpack.c.b16 %v311, %v311
      %v353 = vpack.c.b16 %v312, %v312
      %v354 = vpack.c.b16 %v313, %v313
      %v355 = vpack.c.b16 %v314, %v314
      %v356 = vpack.c.b16 %v315, %v315
      %v357 = vpack.c.b16 %v316, %v316
      %v358 = vpack.c.b16 %v317, %v317
      %v359 = vpack.c.b16 %v318, %v318
      %v360 = vpack.c.b16 %v319, %v319
      %v361 = vpack.c.b16 %v320, %v320
      %v362 = vpack.c.b16 %v321, %v321
      %v363 = vpack.c.b16 %v322, %v322
      %v364 = vpack.c.b16 %v323, %v323
      %v365 = vpack.c.b16 %v324, %v324
      %v366 = vpack.c.b16 %v325, %v325
      %v367 = vpack.c.b16 %v326, %v326
      %v368 = vpack.c.b16 %v327, %v327
      %v369 = vpack.c.b16 %v328, %v328
      %v370 = vpack.c.b16 %v329, %v329
      %v371 = vpack.c.b16 %v330, %v330
      %v372 = vpack.c.b16 %v331, %v331
      %v373 = vpack.c.b16 %v332, %v332
      %v374 = vpack.c.b16 %v333, %v333
      %v375 = vpack.c.b16 %v334, %v334
      %v376 = vpack.c.b16 %v335, %v335
      %v377 = vpack.c.b16 %v336, %v336
      %v378 = vpack.c.b16 %v337, %v337
      %v379 = vpack.c.b16 %v338, %v338
      %v380 = vpack.c.b16 %v339, %v339
      %v381 = vpack.c.b16 %v340, %v340
      %v382 = vpack.c.b16 %v341, %v341
      %v383 = vpack.c.b16 %v342, %v342
      %v384 = vpack.c.b16 %v343, %v343
      %v385 = vpack.c.b16 %v344, %v344
      %v386 = vpack.c.b16 %v345, %v345
      %v387 = vpack.c.b16 %v346, %v346
      %vm429 = vcmask 519168
      %430 = vst.msk [vmem:[#allocation2] sm:$0xf] %vm429, %v347
      %431 = vst.msk [vmem:[#allocation2 + $0x14] sm:$0xf] %vm429, %v348
      %432 = vst.msk [vmem:[#allocation2 + $0x28] sm:$0xf] %vm429, %v349
      %433 = vst.msk [vmem:[#allocation2 + $0x3c] sm:$0xf] %vm429, %v350
      %434 = vst.msk [vmem:[#allocation2 + $0x50] sm:$0xf] %vm429, %v351
      %435 = vst.msk [vmem:[#allocation2 + $0x64] sm:$0xf] %vm429, %v352
      %436 = vst.msk [vmem:[#allocation2 + $0x78] sm:$0xf] %vm429, %v353
      %437 = vst.msk [vmem:[#allocation2 + $0x8c] sm:$0xf] %vm429, %v354
      %438 = vst.msk [vmem:[#allocation2 + $0xa0] sm:$0xf] %vm429, %v355
      %439 = vst.msk [vmem:[#allocation2 + $0xb4] sm:$0xf] %vm429, %v356
      %440 = vst.msk [vmem:[#allocation2 + $0xc8] sm:$0xf] %vm429, %v357
      %441 = vst.msk [vmem:[#allocation2 + $0xdc] sm:$0xf] %vm429, %v358
      %442 = vst.msk [vmem:[#allocation2 + $0xf0] sm:$0xf] %vm429, %v359
      %443 = vst.msk [vmem:[#allocation2 + $0x104] sm:$0xf] %vm429, %v360
      %444 = vst.msk [vmem:[#allocation2 + $0x118] sm:$0xf] %vm429, %v361
      %445 = vst.msk [vmem:[#allocation2 + $0x12c] sm:$0xf] %vm429, %v362
      %446 = vst.msk [vmem:[#allocation2 + $0x140] sm:$0xf] %vm429, %v363
      %447 = vst.msk [vmem:[#allocation2 + $0x154] sm:$0xf] %vm429, %v364
      %448 = vst.msk [vmem:[#allocation2 + $0x168] sm:$0xf] %vm429, %v365
      %449 = vst.msk [vmem:[#allocation2 + $0x17c] sm:$0xf] %vm429, %v366
      %450 = vst.msk [vmem:[#allocation2 + $0x190] sm:$0xf] %vm429, %v367
      %451 = vst.msk [vmem:[#allocation2 + $0x1a4] sm:$0xf] %vm429, %v368
      %452 = vst.msk [vmem:[#allocation2 + $0x1b8] sm:$0xf] %vm429, %v369
      %453 = vst.msk [vmem:[#allocation2 + $0x1cc] sm:$0xf] %vm429, %v370
      %454 = vst.msk [vmem:[#allocation2 + $0x1e0] sm:$0xf] %vm429, %v371
      %455 = vst.msk [vmem:[#allocation2 + $0x1f4] sm:$0xf] %vm429, %v372
      %456 = vst.msk [vmem:[#allocation2 + $0x208] sm:$0xf] %vm429, %v373
      %457 = vst.msk [vmem:[#allocation2 + $0x21c] sm:$0xf] %vm429, %v374
      %458 = vst.msk [vmem:[#allocation2 + $0x230] sm:$0xf] %vm429, %v375
      %459 = vst.msk [vmem:[#allocation2 + $0x244] sm:$0xf] %vm429, %v376
      %460 = vst.msk [vmem:[#allocation2 + $0x258] sm:$0xf] %vm429, %v377
      %461 = vst.msk [vmem:[#allocation2 + $0x26c] sm:$0xf] %vm429, %v378
      %462 = vst.msk [vmem:[#allocation2 + $0x280] sm:$0xf] %vm429, %v379
      %463 = vst.msk [vmem:[#allocation2 + $0x294] sm:$0xf] %vm429, %v380
      %464 = vst.msk [vmem:[#allocation2 + $0x2a8] sm:$0xf] %vm429, %v381
      %465 = vst.msk [vmem:[#allocation2 + $0x2bc] sm:$0xf] %vm429, %v382
      %466 = vst.msk [vmem:[#allocation2 + $0x2d0] sm:$0xf] %vm429, %v383
      %467 = vst.msk [vmem:[#allocation2 + $0x2e4] sm:$0xf] %vm429, %v384
      %468 = vst.msk [vmem:[#allocation2 + $0x2f8] sm:$0xf] %vm429, %v385
      %469 = vst.msk [vmem:[#allocation2 + $0x30c] sm:$0xf] %vm429, %v386
      %vm470 = vcmask 517120
      %471 = vst.msk [vmem:[#allocation2 + $0x320] sm:$0x3] %vm470, %v387
      %vm472 = vsmask.f32 3328
      %vm473 = vsmask.f32 7440
      %vm474 = vmor %vm472, %vm473
      %v476 = vshrl.u32 %v347, 16
      %v478 = vrot.slane %v476, 4
      %v479 = vshll.u32 %v347, 16
      %v481 = vrot.slane %v479, 5
      %v482 = vor.u32 %v478, %v481
      %v483 = vrot.slane %v482, 4
      %v485 = vshll.u32 %v348, 16
      %v487 = vrot.slane %v485, 5
      %v488 = vsel %vm474, %v483, %v487
      %v489 = vshrl.u32 %v348, 16
      %v491 = vrot.slane %v489, 4
      %v492 = vor.u32 %v491, %v487
      %v493 = vrot.slane %v492, 4
      %v495 = vshll.u32 %v349, 16
      %v497 = vrot.slane %v495, 5
      %v498 = vsel %vm474, %v493, %v497
      %v499 = vshrl.u32 %v349, 16
      %v501 = vrot.slane %v499, 4
      %v502 = vor.u32 %v501, %v497
      %v503 = vrot.slane %v502, 4
      %v505 = vshll.u32 %v350, 16
      %v507 = vrot.slane %v505, 5
      %v508 = vsel %vm474, %v503, %v507
      %v509 = vshrl.u32 %v350, 16
      %v511 = vrot.slane %v509, 4
      %v512 = vor.u32 %v511, %v507
      %v513 = vrot.slane %v512, 4
      %v515 = vshll.u32 %v351, 16
      %v517 = vrot.slane %v515, 5
      %v518 = vsel %vm474, %v513, %v517
      %v519 = vshrl.u32 %v351, 16
      %v521 = vrot.slane %v519, 4
      %v522 = vor.u32 %v521, %v517
      %v523 = vrot.slane %v522, 4
      %v525 = vshll.u32 %v352, 16
      %v527 = vrot.slane %v525, 5
      %v528 = vsel %vm474, %v523, %v527
      %v529 = vshrl.u32 %v352, 16
      %v531 = vrot.slane %v529, 4
      %v532 = vor.u32 %v531, %v527
      %v533 = vrot.slane %v532, 4
      %v535 = vshll.u32 %v353, 16
      %v537 = vrot.slane %v535, 5
      %v538 = vsel %vm474, %v533, %v537
      %v539 = vshrl.u32 %v353, 16
      %v541 = vrot.slane %v539, 4
      %v542 = vor.u32 %v541, %v537
      %v543 = vrot.slane %v542, 4
      %v545 = vshll.u32 %v354, 16
      %v547 = vrot.slane %v545, 5
      %v548 = vsel %vm474, %v543, %v547
      %v549 = vshrl.u32 %v354, 16
      %v551 = vrot.slane %v549, 4
      %v552 = vor.u32 %v551, %v547
      %v553 = vrot.slane %v552, 4
      %v555 = vshll.u32 %v355, 16
      %v557 = vrot.slane %v555, 5
      %v558 = vsel %vm474, %v553, %v557
      %v559 = vshrl.u32 %v355, 16
      %v561 = vrot.slane %v559, 4
      %v562 = vor.u32 %v561, %v557
      %v563 = vrot.slane %v562, 4
      %v565 = vshll.u32 %v356, 16
      %v567 = vrot.slane %v565, 5
      %v568 = vsel %vm474, %v563, %v567
      %v569 = vshrl.u32 %v356, 16
      %v571 = vrot.slane %v569, 4
      %v572 = vor.u32 %v571, %v567
      %v573 = vrot.slane %v572, 4
      %v575 = vshll.u32 %v357, 16
      %v577 = vrot.slane %v575, 5
      %v578 = vsel %vm474, %v573, %v577
      %v579 = vshrl.u32 %v357, 16
      %v581 = vrot.slane %v579, 4
      %v582 = vor.u32 %v581, %v577
      %v583 = vrot.slane %v582, 4
      %v585 = vshll.u32 %v358, 16
      %v587 = vrot.slane %v585, 5
      %v588 = vsel %vm474, %v583, %v587
      %v589 = vshrl.u32 %v358, 16
      %v591 = vrot.slane %v589, 4
      %v592 = vor.u32 %v591, %v587
      %v593 = vrot.slane %v592, 4
      %v595 = vshll.u32 %v359, 16
      %v597 = vrot.slane %v595, 5
      %v598 = vsel %vm474, %v593, %v597
      %v599 = vshrl.u32 %v359, 16
      %v601 = vrot.slane %v599, 4
      %v602 = vor.u32 %v601, %v597
      %v603 = vrot.slane %v602, 4
      %v605 = vshll.u32 %v360, 16
      %v607 = vrot.slane %v605, 5
      %v608 = vsel %vm474, %v603, %v607
      %v609 = vshrl.u32 %v360, 16
      %v611 = vrot.slane %v609, 4
      %v612 = vor.u32 %v611, %v607
      %v613 = vrot.slane %v612, 4
      %v615 = vshll.u32 %v361, 16
      %v617 = vrot.slane %v615, 5
      %v618 = vsel %vm474, %v613, %v617
      %v619 = vshrl.u32 %v361, 16
      %v621 = vrot.slane %v619, 4
      %v622 = vor.u32 %v621, %v617
      %v623 = vrot.slane %v622, 4
      %v625 = vshll.u32 %v362, 16
      %v627 = vrot.slane %v625, 5
      %v628 = vsel %vm474, %v623, %v627
      %v629 = vshrl.u32 %v362, 16
      %v631 = vrot.slane %v629, 4
      %v632 = vor.u32 %v631, %v627
      %v633 = vrot.slane %v632, 4
      %v635 = vshll.u32 %v363, 16
      %v637 = vrot.slane %v635, 5
      %v638 = vsel %vm474, %v633, %v637
      %v639 = vshrl.u32 %v363, 16
      %v641 = vrot.slane %v639, 4
      %v642 = vor.u32 %v641, %v637
      %v643 = vrot.slane %v642, 4
      %v645 = vshll.u32 %v364, 16
      %v647 = vrot.slane %v645, 5
      %v648 = vsel %vm474, %v643, %v647
      %v649 = vshrl.u32 %v364, 16
      %v651 = vrot.slane %v649, 4
      %v652 = vor.u32 %v651, %v647
      %v653 = vrot.slane %v652, 4
      %v655 = vshll.u32 %v365, 16
      %v657 = vrot.slane %v655, 5
      %v658 = vsel %vm474, %v653, %v657
      %v659 = vshrl.u32 %v365, 16
      %v661 = vrot.slane %v659, 4
      %v662 = vor.u32 %v661, %v657
      %v663 = vrot.slane %v662, 4
      %v665 = vshll.u32 %v366, 16
      %v667 = vrot.slane %v665, 5
      %v668 = vsel %vm474, %v663, %v667
      %v669 = vshrl.u32 %v366, 16
      %v671 = vrot.slane %v669, 4
      %v672 = vor.u32 %v671, %v667
      %v673 = vrot.slane %v672, 4
      %v675 = vshll.u32 %v367, 16
      %v677 = vrot.slane %v675, 5
      %v678 = vsel %vm474, %v673, %v677
      %v679 = vshrl.u32 %v367, 16
      %v681 = vrot.slane %v679, 4
      %v682 = vor.u32 %v681, %v677
      %v683 = vrot.slane %v682, 4
      %v685 = vshll.u32 %v368, 16
      %v687 = vrot.slane %v685, 5
      %v688 = vsel %vm474, %v683, %v687
      %v689 = vshrl.u32 %v368, 16
      %v691 = vrot.slane %v689, 4
      %v692 = vor.u32 %v691, %v687
      %v693 = vrot.slane %v692, 4
      %v695 = vshll.u32 %v369, 16
      %v697 = vrot.slane %v695, 5
      %v698 = vsel %vm474, %v693, %v697
      %v699 = vshrl.u32 %v369, 16
      %v701 = vrot.slane %v699, 4
      %v702 = vor.u32 %v701, %v697
      %v703 = vrot.slane %v702, 4
      %v705 = vshll.u32 %v370, 16
      %v707 = vrot.slane %v705, 5
      %v708 = vsel %vm474, %v703, %v707
      %v709 = vshrl.u32 %v370, 16
      %v711 = vrot.slane %v709, 4
      %v712 = vor.u32 %v711, %v707
      %v713 = vrot.slane %v712, 4
      %v715 = vshll.u32 %v371, 16
      %v717 = vrot.slane %v715, 5
      %v718 = vsel %vm474, %v713, %v717
      %v719 = vshrl.u32 %v371, 16
      %v721 = vrot.slane %v719, 4
      %v722 = vor.u32 %v721, %v717
      %v723 = vrot.slane %v722, 4
      %v725 = vshll.u32 %v372, 16
      %v727 = vrot.slane %v725, 5
      %v728 = vsel %vm474, %v723, %v727
      %v729 = vshrl.u32 %v372, 16
      %v731 = vrot.slane %v729, 4
      %v732 = vor.u32 %v731, %v727
      %v733 = vrot.slane %v732, 4
      %v735 = vshll.u32 %v373, 16
      %v737 = vrot.slane %v735, 5
      %v738 = vsel %vm474, %v733, %v737
      %v739 = vshrl.u32 %v373, 16
      %v741 = vrot.slane %v739, 4
      %v742 = vor.u32 %v741, %v737
      %v743 = vrot.slane %v742, 4
      %v745 = vshll.u32 %v374, 16
      %v747 = vrot.slane %v745, 5
      %v748 = vsel %vm474, %v743, %v747
      %v749 = vshrl.u32 %v374, 16
      %v751 = vrot.slane %v749, 4
      %v752 = vor.u32 %v751, %v747
      %v753 = vrot.slane %v752, 4
      %v755 = vshll.u32 %v375, 16
      %v757 = vrot.slane %v755, 5
      %v758 = vsel %vm474, %v753, %v757
      %v759 = vshrl.u32 %v375, 16
      %v761 = vrot.slane %v759, 4
      %v762 = vor.u32 %v761, %v757
      %v763 = vrot.slane %v762, 4
      %v765 = vshll.u32 %v376, 16
      %v767 = vrot.slane %v765, 5
      %v768 = vsel %vm474, %v763, %v767
      %v769 = vshrl.u32 %v376, 16
      %v771 = vrot.slane %v769, 4
      %v772 = vor.u32 %v771, %v767
      %v773 = vrot.slane %v772, 4
      %v775 = vshll.u32 %v377, 16
      %v777 = vrot.slane %v775, 5
      %v778 = vsel %vm474, %v773, %v777
      %v779 = vshrl.u32 %v377, 16
      %v781 = vrot.slane %v779, 4
      %v782 = vor.u32 %v781, %v777
      %v783 = vrot.slane %v782, 4
      %v785 = vshll.u32 %v378, 16
      %v787 = vrot.slane %v785, 5
      %v788 = vsel %vm474, %v783, %v787
      %v789 = vshrl.u32 %v378, 16
      %v791 = vrot.slane %v789, 4
      %v792 = vor.u32 %v791, %v787
      %v793 = vrot.slane %v792, 4
      %v795 = vshll.u32 %v379, 16
      %v797 = vrot.slane %v795, 5
      %v798 = vsel %vm474, %v793, %v797
      %v799 = vshrl.u32 %v379, 16
      %v801 = vrot.slane %v799, 4
      %v802 = vor.u32 %v801, %v797
      %v803 = vrot.slane %v802, 4
      %v805 = vshll.u32 %v380, 16
      %v807 = vrot.slane %v805, 5
      %v808 = vsel %vm474, %v803, %v807
      %v809 = vshrl.u32 %v380, 16
      %v811 = vrot.slane %v809, 4
      %v812 = vor.u32 %v811, %v807
      %v813 = vrot.slane %v812, 4
      %v815 = vshll.u32 %v381, 16
      %v817 = vrot.slane %v815, 5
      %v818 = vsel %vm474, %v813, %v817
      %v819 = vshrl.u32 %v381, 16
      %v821 = vrot.slane %v819, 4
      %v822 = vor.u32 %v821, %v817
      %v823 = vrot.slane %v822, 4
      %v825 = vshll.u32 %v382, 16
      %v827 = vrot.slane %v825, 5
      %v828 = vsel %vm474, %v823, %v827
      %v829 = vshrl.u32 %v382, 16
      %v831 = vrot.slane %v829, 4
      %v832 = vor.u32 %v831, %v827
      %v833 = vrot.slane %v832, 4
      %v835 = vshll.u32 %v383, 16
      %v837 = vrot.slane %v835, 5
      %v838 = vsel %vm474, %v833, %v837
      %v839 = vshrl.u32 %v383, 16
      %v841 = vrot.slane %v839, 4
      %v842 = vor.u32 %v841, %v837
      %v843 = vrot.slane %v842, 4
      %v845 = vshll.u32 %v384, 16
      %v847 = vrot.slane %v845, 5
      %v848 = vsel %vm474, %v843, %v847
      %v849 = vshrl.u32 %v384, 16
      %v851 = vrot.slane %v849, 4
      %v852 = vor.u32 %v851, %v847
      %v853 = vrot.slane %v852, 4
      %v855 = vshll.u32 %v385, 16
      %v857 = vrot.slane %v855, 5
      %v858 = vsel %vm474, %v853, %v857
      %v859 = vshrl.u32 %v385, 16
      %v861 = vrot.slane %v859, 4
      %v862 = vor.u32 %v861, %v857
      %v863 = vrot.slane %v862, 4
      %v865 = vshll.u32 %v386, 16
      %v867 = vrot.slane %v865, 5
      %v868 = vsel %vm474, %v863, %v867
      %v869 = vshrl.u32 %v386, 16
      %v871 = vrot.slane %v869, 4
      %v872 = vor.u32 %v871, %v867
      %v873 = vrot.slane %v872, 4
      %v875 = vshll.u32 %v387, 16
      %v877 = vrot.slane %v875, 5
      %v878 = vsel %vm474, %v873, %v877
      %v879 = vshrl.u32 %v387, 16
      %v881 = vrot.slane %v879, 4
      %v882 = vor.u32 %v881, %v877
      %v883 = vrot.slane %v882, 4
      %884 = vrot.lane.b32.xlu0 %v488, 64
      %v885 = vpop.permute.xlu0 %884
      %886 = vrot.lane.b32.xlu0 %v498, 64
      %v887 = vpop.permute.xlu0 %886
      %888 = vrot.lane.b32.xlu0 %v508, 64
      %v889 = vpop.permute.xlu0 %888
      %890 = vrot.lane.b32.xlu0 %v518, 64
      %v891 = vpop.permute.xlu0 %890
      %892 = vrot.lane.b32.xlu0 %v528, 64
      %v893 = vpop.permute.xlu0 %892
      %894 = vrot.lane.b32.xlu0 %v538, 64
      %v895 = vpop.permute.xlu0 %894
      %896 = vrot.lane.b32.xlu0 %v548, 64
      %v897 = vpop.permute.xlu0 %896
      %898 = vrot.lane.b32.xlu0 %v558, 64
      %v899 = vpop.permute.xlu0 %898
      %900 = vrot.lane.b32.xlu0 %v568, 64
      %v901 = vpop.permute.xlu0 %900
      %902 = vrot.lane.b32.xlu0 %v578, 64
      %v903 = vpop.permute.xlu0 %902
      %904 = vrot.lane.b32.xlu0 %v588, 64
      %v905 = vpop.permute.xlu0 %904
      %906 = vrot.lane.b32.xlu0 %v598, 64
      %v907 = vpop.permute.xlu0 %906
      %908 = vrot.lane.b32.xlu0 %v608, 64
      %v909 = vpop.permute.xlu0 %908
      %910 = vrot.lane.b32.xlu0 %v618, 64
      %v911 = vpop.permute.xlu0 %910
      %912 = vrot.lane.b32.xlu0 %v628, 64
      %v913 = vpop.permute.xlu0 %912
      %914 = vrot.lane.b32.xlu0 %v638, 64
      %v915 = vpop.permute.xlu0 %914
      %916 = vrot.lane.b32.xlu0 %v648, 64
      %v917 = vpop.permute.xlu0 %916
      %918 = vrot.lane.b32.xlu0 %v658, 64
      %v919 = vpop.permute.xlu0 %918
      %920 = vrot.lane.b32.xlu0 %v668, 64
      %v921 = vpop.permute.xlu0 %920
      %922 = vrot.lane.b32.xlu0 %v678, 64
      %v923 = vpop.permute.xlu0 %922
      %924 = vrot.lane.b32.xlu0 %v688, 64
      %v925 = vpop.permute.xlu0 %924
      %926 = vrot.lane.b32.xlu0 %v698, 64
      %v927 = vpop.permute.xlu0 %926
      %928 = vrot.lane.b32.xlu0 %v708, 64
      %v929 = vpop.permute.xlu0 %928
      %930 = vrot.lane.b32.xlu0 %v718, 64
      %v931 = vpop.permute.xlu0 %930
      %932 = vrot.lane.b32.xlu0 %v728, 64
      %v933 = vpop.permute.xlu0 %932
      %934 = vrot.lane.b32.xlu0 %v738, 64
      %v935 = vpop.permute.xlu0 %934
      %936 = vrot.lane.b32.xlu0 %v748, 64
      %v937 = vpop.permute.xlu0 %936
      %938 = vrot.lane.b32.xlu0 %v758, 64
      %v939 = vpop.permute.xlu0 %938
      %940 = vrot.lane.b32.xlu0 %v768, 64
      %v941 = vpop.permute.xlu0 %940
      %942 = vrot.lane.b32.xlu0 %v778, 64
      %v943 = vpop.permute.xlu0 %942
      %944 = vrot.lane.b32.xlu0 %v788, 64
      %v945 = vpop.permute.xlu0 %944
      %946 = vrot.lane.b32.xlu0 %v798, 64
      %v947 = vpop.permute.xlu0 %946
      %948 = vrot.lane.b32.xlu0 %v808, 64
      %v949 = vpop.permute.xlu0 %948
      %950 = vrot.lane.b32.xlu0 %v818, 64
      %v951 = vpop.permute.xlu0 %950
      %952 = vrot.lane.b32.xlu0 %v828, 64
      %v953 = vpop.permute.xlu0 %952
      %954 = vrot.lane.b32.xlu0 %v838, 64
      %v955 = vpop.permute.xlu0 %954
      %956 = vrot.lane.b32.xlu0 %v848, 64
      %v957 = vpop.permute.xlu0 %956
      %958 = vrot.lane.b32.xlu0 %v858, 64
      %v959 = vpop.permute.xlu0 %958
      %960 = vrot.lane.b32.xlu0 %v868, 64
      %v961 = vpop.permute.xlu0 %960
      %962 = vrot.lane.b32.xlu0 %v878, 64
      %v963 = vpop.permute.xlu0 %962
      %964 = vrot.lane.b32.xlu0 %v883, 64
      %v965 = vpop.permute.xlu0 %964
      %vm1007 = vcmask 1043968
      %1008 = vst.msk [vmem:[#allocation2] sm:$0xf] %vm1007, %v885
      %1009 = vst.msk [vmem:[#allocation2 + $0x14] sm:$0xf] %vm1007, %v887
      %1010 = vst.msk [vmem:[#allocation2 + $0x28] sm:$0xf] %vm1007, %v889
      %1011 = vst.msk [vmem:[#allocation2 + $0x3c] sm:$0xf] %vm1007, %v891
      %1012 = vst.msk [vmem:[#allocation2 + $0x50] sm:$0xf] %vm1007, %v893
      %1013 = vst.msk [vmem:[#allocation2 + $0x64] sm:$0xf] %vm1007, %v895
      %1014 = vst.msk [vmem:[#allocation2 + $0x78] sm:$0xf] %vm1007, %v897
      %1015 = vst.msk [vmem:[#allocation2 + $0x8c] sm:$0xf] %vm1007, %v899
      %1016 = vst.msk [vmem:[#allocation2 + $0xa0] sm:$0xf] %vm1007, %v901
      %1017 = vst.msk [vmem:[#allocation2 + $0xb4] sm:$0xf] %vm1007, %v903
      %1018 = vst.msk [vmem:[#allocation2 + $0xc8] sm:$0xf] %vm1007, %v905
      %1019 = vst.msk [vmem:[#allocation2 + $0xdc] sm:$0xf] %vm1007, %v907
      %1020 = vst.msk [vmem:[#allocation2 + $0xf0] sm:$0xf] %vm1007, %v909
      %1021 = vst.msk [vmem:[#allocation2 + $0x104] sm:$0xf] %vm1007, %v911
      %1022 = vst.msk [vmem:[#allocation2 + $0x118] sm:$0xf] %vm1007, %v913
      %1023 = vst.msk [vmem:[#allocation2 + $0x12c] sm:$0xf] %vm1007, %v915
      %1024 = vst.msk [vmem:[#allocation2 + $0x140] sm:$0xf] %vm1007, %v917
      %1025 = vst.msk [vmem:[#allocation2 + $0x154] sm:$0xf] %vm1007, %v919
      %1026 = vst.msk [vmem:[#allocation2 + $0x168] sm:$0xf] %vm1007, %v921
      %1027 = vst.msk [vmem:[#allocation2 + $0x17c] sm:$0xf] %vm1007, %v923
      %1028 = vst.msk [vmem:[#allocation2 + $0x190] sm:$0xf] %vm1007, %v925
      %1029 = vst.msk [vmem:[#allocation2 + $0x1a4] sm:$0xf] %vm1007, %v927
      %1030 = vst.msk [vmem:[#allocation2 + $0x1b8] sm:$0xf] %vm1007, %v929
      %1031 = vst.msk [vmem:[#allocation2 + $0x1cc] sm:$0xf] %vm1007, %v931
      %1032 = vst.msk [vmem:[#allocation2 + $0x1e0] sm:$0xf] %vm1007, %v933
      %1033 = vst.msk [vmem:[#allocation2 + $0x1f4] sm:$0xf] %vm1007, %v935
      %1034 = vst.msk [vmem:[#allocation2 + $0x208] sm:$0xf] %vm1007, %v937
      %1035 = vst.msk [vmem:[#allocation2 + $0x21c] sm:$0xf] %vm1007, %v939
      %1036 = vst.msk [vmem:[#allocation2 + $0x230] sm:$0xf] %vm1007, %v941
      %1037 = vst.msk [vmem:[#allocation2 + $0x244] sm:$0xf] %vm1007, %v943
      %1038 = vst.msk [vmem:[#allocation2 + $0x258] sm:$0xf] %vm1007, %v945
      %1039 = vst.msk [vmem:[#allocation2 + $0x26c] sm:$0xf] %vm1007, %v947
      %1040 = vst.msk [vmem:[#allocation2 + $0x280] sm:$0xf] %vm1007, %v949
      %1041 = vst.msk [vmem:[#allocation2 + $0x294] sm:$0xf] %vm1007, %v951
      %1042 = vst.msk [vmem:[#allocation2 + $0x2a8] sm:$0xf] %vm1007, %v953
      %1043 = vst.msk [vmem:[#allocation2 + $0x2bc] sm:$0xf] %vm1007, %v955
      %1044 = vst.msk [vmem:[#allocation2 + $0x2d0] sm:$0xf] %vm1007, %v957
      %1045 = vst.msk [vmem:[#allocation2 + $0x2e4] sm:$0xf] %vm1007, %v959
      %1046 = vst.msk [vmem:[#allocation2 + $0x2f8] sm:$0xf] %vm1007, %v961
      %1047 = vst.msk [vmem:[#allocation2 + $0x30c] sm:$0xf] %vm1007, %v963
      %vm1048 = vcmask 1041920
      %1049 = vst.msk [vmem:[#allocation2 + $0x320] sm:$0x3] %vm1048, %v965
      %vm1050 = vcmask 1042432
      %vm1051 = vcmask 1046532
      %vm1052 = vmor %vm1050, %vm1051
      %v1053 = vrot.slane %v347, 5
      %v1054 = vrot.slane %v1053, 4
      %v1055 = vrot.slane %v348, 5
      %v1056 = vsel %vm1052, %v1054, %v1055
      %v1057 = vrot.slane %v1055, 4
      %v1058 = vrot.slane %v349, 5
      %v1059 = vsel %vm1052, %v1057, %v1058
      %v1060 = vrot.slane %v1058, 4
      %v1061 = vrot.slane %v350, 5
      %v1062 = vsel %vm1052, %v1060, %v1061
      %v1063 = vrot.slane %v1061, 4
      %v1064 = vrot.slane %v351, 5
      %v1065 = vsel %vm1052, %v1063, %v1064
      %v1066 = vrot.slane %v1064, 4
      %v1067 = vrot.slane %v352, 5
      %v1068 = vsel %vm1052, %v1066, %v1067
      %v1069 = vrot.slane %v1067, 4
      %v1070 = vrot.slane %v353, 5
      %v1071 = vsel %vm1052, %v1069, %v1070
      %v1072 = vrot.slane %v1070, 4
      %v1073 = vrot.slane %v354, 5
      %v1074 = vsel %vm1052, %v1072, %v1073
      %v1075 = vrot.slane %v1073, 4
      %v1076 = vrot.slane %v355, 5
      %v1077 = vsel %vm1052, %v1075, %v1076
      %v1078 = vrot.slane %v1076, 4
      %v1079 = vrot.slane %v356, 5
      %v1080 = vsel %vm1052, %v1078, %v1079
      %v1081 = vrot.slane %v1079, 4
      %v1082 = vrot.slane %v357, 5
      %v1083 = vsel %vm1052, %v1081, %v1082
      %v1084 = vrot.slane %v1082, 4
      %v1085 = vrot.slane %v358, 5
      %v1086 = vsel %vm1052, %v1084, %v1085
      %v1087 = vrot.slane %v1085, 4
      %v1088 = vrot.slane %v359, 5
      %v1089 = vsel %vm1052, %v1087, %v1088
      %v1090 = vrot.slane %v1088, 4
      %v1091 = vrot.slane %v360, 5
      %v1092 = vsel %vm1052, %v1090, %v1091
      %v1093 = vrot.slane %v1091, 4
      %v1094 = vrot.slane %v361, 5
      %v1095 = vsel %vm1052, %v1093, %v1094
      %v1096 = vrot.slane %v1094, 4
      %v1097 = vrot.slane %v362, 5
      %v1098 = vsel %vm1052, %v1096, %v1097
      %v1099 = vrot.slane %v1097, 4
      %v1100 = vrot.slane %v363, 5
      %v1101 = vsel %vm1052, %v1099, %v1100
      %v1102 = vrot.slane %v1100, 4
      %v1103 = vrot.slane %v364, 5
      %v1104 = vsel %vm1052, %v1102, %v1103
      %v1105 = vrot.slane %v1103, 4
      %v1106 = vrot.slane %v365, 5
      %v1107 = vsel %vm1052, %v1105, %v1106
      %v1108 = vrot.slane %v1106, 4
      %v1109 = vrot.slane %v366, 5
      %v1110 = vsel %vm1052, %v1108, %v1109
      %v1111 = vrot.slane %v1109, 4
      %v1112 = vrot.slane %v367, 5
      %v1113 = vsel %vm1052, %v1111, %v1112
      %v1114 = vrot.slane %v1112, 4
      %v1115 = vrot.slane %v368, 5
      %v1116 = vsel %vm1052, %v1114, %v1115
      %v1117 = vrot.slane %v1115, 4
      %v1118 = vrot.slane %v369, 5
      %v1119 = vsel %vm1052, %v1117, %v1118
      %v1120 = vrot.slane %v1118, 4
      %v1121 = vrot.slane %v370, 5
      %v1122 = vsel %vm1052, %v1120, %v1121
      %v1123 = vrot.slane %v1121, 4
      %v1124 = vrot.slane %v371, 5
      %v1125 = vsel %vm1052, %v1123, %v1124
      %v1126 = vrot.slane %v1124, 4
      %v1127 = vrot.slane %v372, 5
      %v1128 = vsel %vm1052, %v1126, %v1127
      %v1129 = vrot.slane %v1127, 4
      %v1130 = vrot.slane %v373, 5
      %v1131 = vsel %vm1052, %v1129, %v1130
      %v1132 = vrot.slane %v1130, 4
      %v1133 = vrot.slane %v374, 5
      %v1134 = vsel %vm1052, %v1132, %v1133
      %v1135 = vrot.slane %v1133, 4
      %v1136 = vrot.slane %v375, 5
      %v1137 = vsel %vm1052, %v1135, %v1136
      %v1138 = vrot.slane %v1136, 4
      %v1139 = vrot.slane %v376, 5
      %v1140 = vsel %vm1052, %v1138, %v1139
      %v1141 = vrot.slane %v1139, 4
      %v1142 = vrot.slane %v377, 5
      %v1143 = vsel %vm1052, %v1141, %v1142
      %v1144 = vrot.slane %v1142, 4
      %v1145 = vrot.slane %v378, 5
      %v1146 = vsel %vm1052, %v1144, %v1145
      %v1147 = vrot.slane %v1145, 4
      %v1148 = vrot.slane %v379, 5
      %v1149 = vsel %vm1052, %v1147, %v1148
      %v1150 = vrot.slane %v1148, 4
      %v1151 = vrot.slane %v380, 5
      %v1152 = vsel %vm1052, %v1150, %v1151
      %v1153 = vrot.slane %v1151, 4
      %v1154 = vrot.slane %v381, 5
      %v1155 = vsel %vm1052, %v1153, %v1154
      %v1156 = vrot.slane %v1154, 4
      %v1157 = vrot.slane %v382, 5
      %v1158 = vsel %vm1052, %v1156, %v1157
      %v1159 = vrot.slane %v1157, 4
      %v1160 = vrot.slane %v383, 5
      %v1161 = vsel %vm1052, %v1159, %v1160
      %v1162 = vrot.slane %v1160, 4
      %v1163 = vrot.slane %v384, 5
      %v1164 = vsel %vm1052, %v1162, %v1163
      %v1165 = vrot.slane %v1163, 4
      %v1166 = vrot.slane %v385, 5
      %v1167 = vsel %vm1052, %v1165, %v1166
      %v1168 = vrot.slane %v1166, 4
      %v1169 = vrot.slane %v386, 5
      %v1170 = vsel %vm1052, %v1168, %v1169
      %v1171 = vrot.slane %v1169, 4
      %v1172 = vrot.slane %v387, 5
      %v1173 = vsel %vm1052, %v1171, %v1172
      %v1174 = vrot.slane %v1172, 4
      %1216 = vst.msk [vmem:[#allocation2 + $0x4] sm:$0xf] %vm429, %v1056
      %1217 = vst.msk [vmem:[#allocation2 + $0x18] sm:$0xf] %vm429, %v1059
      %1218 = vst.msk [vmem:[#allocation2 + $0x2c] sm:$0xf] %vm429, %v1062
      %1219 = vst.msk [vmem:[#allocation2 + $0x40] sm:$0xf] %vm429, %v1065
      %1220 = vst.msk [vmem:[#allocation2 + $0x54] sm:$0xf] %vm429, %v1068
      %1221 = vst.msk [vmem:[#allocation2 + $0x68] sm:$0xf] %vm429, %v1071
      %1222 = vst.msk [vmem:[#allocation2 + $0x7c] sm:$0xf] %vm429, %v1074
      %1223 = vst.msk [vmem:[#allocation2 + $0x90] sm:$0xf] %vm429, %v1077
      %1224 = vst.msk [vmem:[#allocation2 + $0xa4] sm:$0xf] %vm429, %v1080
      %1225 = vst.msk [vmem:[#allocation2 + $0xb8] sm:$0xf] %vm429, %v1083
      %1226 = vst.msk [vmem:[#allocation2 + $0xcc] sm:$0xf] %vm429, %v1086
      %1227 = vst.msk [vmem:[#allocation2 + $0xe0] sm:$0xf] %vm429, %v1089
      %1228 = vst.msk [vmem:[#allocation2 + $0xf4] sm:$0xf] %vm429, %v1092
      %1229 = vst.msk [vmem:[#allocation2 + $0x108] sm:$0xf] %vm429, %v1095
      %1230 = vst.msk [vmem:[#allocation2 + $0x11c] sm:$0xf] %vm429, %v1098
      %1231 = vst.msk [vmem:[#allocation2 + $0x130] sm:$0xf] %vm429, %v1101
      %1232 = vst.msk [vmem:[#allocation2 + $0x144] sm:$0xf] %vm429, %v1104
      %1233 = vst.msk [vmem:[#allocation2 + $0x158] sm:$0xf] %vm429, %v1107
      %1234 = vst.msk [vmem:[#allocation2 + $0x16c] sm:$0xf] %vm429, %v1110
      %1235 = vst.msk [vmem:[#allocation2 + $0x180] sm:$0xf] %vm429, %v1113
      %1236 = vst.msk [vmem:[#allocation2 + $0x194] sm:$0xf] %vm429, %v1116
      %1237 = vst.msk [vmem:[#allocation2 + $0x1a8] sm:$0xf] %vm429, %v1119
      %1238 = vst.msk [vmem:[#allocation2 + $0x1bc] sm:$0xf] %vm429, %v1122
      %1239 = vst.msk [vmem:[#allocation2 + $0x1d0] sm:$0xf] %vm429, %v1125
      %1240 = vst.msk [vmem:[#allocation2 + $0x1e4] sm:$0xf] %vm429, %v1128
      %1241 = vst.msk [vmem:[#allocation2 + $0x1f8] sm:$0xf] %vm429, %v1131
      %1242 = vst.msk [vmem:[#allocation2 + $0x20c] sm:$0xf] %vm429, %v1134
      %1243 = vst.msk [vmem:[#allocation2 + $0x220] sm:$0xf] %vm429, %v1137
      %1244 = vst.msk [vmem:[#allocation2 + $0x234] sm:$0xf] %vm429, %v1140
      %1245 = vst.msk [vmem:[#allocation2 + $0x248] sm:$0xf] %vm429, %v1143
      %1246 = vst.msk [vmem:[#allocation2 + $0x25c] sm:$0xf] %vm429, %v1146
      %1247 = vst.msk [vmem:[#allocation2 + $0x270] sm:$0xf] %vm429, %v1149
      %1248 = vst.msk [vmem:[#allocation2 + $0x284] sm:$0xf] %vm429, %v1152
      %1249 = vst.msk [vmem:[#allocation2 + $0x298] sm:$0xf] %vm429, %v1155
      %1250 = vst.msk [vmem:[#allocation2 + $0x2ac] sm:$0xf] %vm429, %v1158
      %1251 = vst.msk [vmem:[#allocation2 + $0x2c0] sm:$0xf] %vm429, %v1161
      %1252 = vst.msk [vmem:[#allocation2 + $0x2d4] sm:$0xf] %vm429, %v1164
      %1253 = vst.msk [vmem:[#allocation2 + $0x2e8] sm:$0xf] %vm429, %v1167
      %1254 = vst.msk [vmem:[#allocation2 + $0x2fc] sm:$0xf] %vm429, %v1170
      %1255 = vst.msk [vmem:[#allocation2 + $0x310] sm:$0xf] %vm429, %v1173
      %1256 = vst.msk [vmem:[#allocation2 + $0x324] sm:$0x3] %vm470, %v1174
      %v1257 = vpack.c.bf16 %v259, %v258
      %v1258 = vpack.c.bf16 %v260, %v260
      %v1261 = vunpack.c.l.b16 %v1257
      %v1262 = vunpack.c.h.b16 %v1257
      %v1263 = vunpack.c.l.b16 %v1258
      %v1264 = vpack.c.b16 %v1261, %v1261
      %v1265 = vpack.c.b16 %v1262, %v1262
      %v1266 = vpack.c.b16 %v1263, %v1263
      %v1267 = vrot.slane %v1264, 5
      %v1268 = vsel %vm1052, %v1171, %v1267
      %v1269 = vrot.slane %v1267, 4
      %v1270 = vrot.slane %v1265, 5
      %v1271 = vsel %vm1052, %v1269, %v1270
      %v1272 = vrot.slane %v1270, 4
      %v1273 = vrot.slane %v1266, 5
      %v1274 = vsel %vm1052, %v1272, %v1273
      %v1275 = vrot.slane %v1273, 4
      %1276 = vrot.lane.b32.xlu0 %v1062, 64
      %v1277 = vpop.permute.xlu0 %1276
      %1278 = vrot.lane.b32.xlu0 %v1065, 64
      %v1279 = vpop.permute.xlu0 %1278
      %1280 = vrot.lane.b32.xlu0 %v1068, 64
      %v1281 = vpop.permute.xlu0 %1280
      %1282 = vrot.lane.b32.xlu0 %v1071, 64
      %v1283 = vpop.permute.xlu0 %1282
      %1284 = vrot.lane.b32.xlu0 %v1074, 64
      %v1285 = vpop.permute.xlu0 %1284
      %1286 = vrot.lane.b32.xlu0 %v1077, 64
      %v1287 = vpop.permute.xlu0 %1286
      %1288 = vrot.lane.b32.xlu0 %v1080, 64
      %v1289 = vpop.permute.xlu0 %1288
      %1290 = vrot.lane.b32.xlu0 %v1083, 64
      %v1291 = vpop.permute.xlu0 %1290
      %1292 = vrot.lane.b32.xlu0 %v1086, 64
      %v1293 = vpop.permute.xlu0 %1292
      %1294 = vrot.lane.b32.xlu0 %v1089, 64
      %v1295 = vpop.permute.xlu0 %1294
      %1296 = vrot.lane.b32.xlu0 %v1092, 64
      %v1297 = vpop.permute.xlu0 %1296
      %1298 = vrot.lane.b32.xlu0 %v1095, 64
      %v1299 = vpop.permute.xlu0 %1298
      %1300 = vrot.lane.b32.xlu0 %v1098, 64
      %v1301 = vpop.permute.xlu0 %1300
      %1302 = vrot.lane.b32.xlu0 %v1101, 64
      %v1303 = vpop.permute.xlu0 %1302
      %1304 = vrot.lane.b32.xlu0 %v1104, 64
      %v1305 = vpop.permute.xlu0 %1304
      %1306 = vrot.lane.b32.xlu0 %v1107, 64
      %v1307 = vpop.permute.xlu0 %1306
      %1308 = vrot.lane.b32.xlu0 %v1110, 64
      %v1309 = vpop.permute.xlu0 %1308
      %1310 = vrot.lane.b32.xlu0 %v1113, 64
      %v1311 = vpop.permute.xlu0 %1310
      %1312 = vrot.lane.b32.xlu0 %v1116, 64
      %v1313 = vpop.permute.xlu0 %1312
      %1314 = vrot.lane.b32.xlu0 %v1119, 64
      %v1315 = vpop.permute.xlu0 %1314
      %1316 = vrot.lane.b32.xlu0 %v1122, 64
      %v1317 = vpop.permute.xlu0 %1316
      %1318 = vrot.lane.b32.xlu0 %v1125, 64
      %v1319 = vpop.permute.xlu0 %1318
      %1320 = vrot.lane.b32.xlu0 %v1128, 64
      %v1321 = vpop.permute.xlu0 %1320
      %1322 = vrot.lane.b32.xlu0 %v1131, 64
      %v1323 = vpop.permute.xlu0 %1322
      %1324 = vrot.lane.b32.xlu0 %v1134, 64
      %v1325 = vpop.permute.xlu0 %1324
      %1326 = vrot.lane.b32.xlu0 %v1137, 64
      %v1327 = vpop.permute.xlu0 %1326
      %1328 = vrot.lane.b32.xlu0 %v1140, 64
      %v1329 = vpop.permute.xlu0 %1328
      %1330 = vrot.lane.b32.xlu0 %v1143, 64
      %v1331 = vpop.permute.xlu0 %1330
      %1332 = vrot.lane.b32.xlu0 %v1146, 64
      %v1333 = vpop.permute.xlu0 %1332
      %1334 = vrot.lane.b32.xlu0 %v1149, 64
      %v1335 = vpop.permute.xlu0 %1334
      %1336 = vrot.lane.b32.xlu0 %v1152, 64
      %v1337 = vpop.permute.xlu0 %1336
      %1338 = vrot.lane.b32.xlu0 %v1155, 64
      %v1339 = vpop.permute.xlu0 %1338
      %1340 = vrot.lane.b32.xlu0 %v1158, 64
      %v1341 = vpop.permute.xlu0 %1340
      %1342 = vrot.lane.b32.xlu0 %v1161, 64
      %v1343 = vpop.permute.xlu0 %1342
      %1344 = vrot.lane.b32.xlu0 %v1164, 64
      %v1345 = vpop.permute.xlu0 %1344
      %1346 = vrot.lane.b32.xlu0 %v1167, 64
      %v1347 = vpop.permute.xlu0 %1346
      %1348 = vrot.lane.b32.xlu0 %v1170, 64
      %v1349 = vpop.permute.xlu0 %1348
      %1350 = vrot.lane.b32.xlu0 %v1268, 64
      %v1351 = vpop.permute.xlu0 %1350
      %1352 = vrot.lane.b32.xlu0 %v1271, 64
      %v1353 = vpop.permute.xlu0 %1352
      %1354 = vrot.lane.b32.xlu0 %v1274, 64
      %v1355 = vpop.permute.xlu0 %1354
      %1356 = vrot.lane.b32.xlu0 %v1275, 64
      %v1357 = vpop.permute.xlu0 %1356
      %1399 = vst.msk [vmem:[#allocation2 + $0x4] sm:$0xf] %vm1007, %v1277
      %1400 = vst.msk [vmem:[#allocation2 + $0x18] sm:$0xf] %vm1007, %v1279
      %1401 = vst.msk [vmem:[#allocation2 + $0x2c] sm:$0xf] %vm1007, %v1281
      %1402 = vst.msk [vmem:[#allocation2 + $0x40] sm:$0xf] %vm1007, %v1283
      %1403 = vst.msk [vmem:[#allocation2 + $0x54] sm:$0xf] %vm1007, %v1285
      %1404 = vst.msk [vmem:[#allocation2 + $0x68] sm:$0xf] %vm1007, %v1287
      %1405 = vst.msk [vmem:[#allocation2 + $0x7c] sm:$0xf] %vm1007, %v1289
      %1406 = vst.msk [vmem:[#allocation2 + $0x90] sm:$0xf] %vm1007, %v1291
      %1407 = vst.msk [vmem:[#allocation2 + $0xa4] sm:$0xf] %vm1007, %v1293
      %1408 = vst.msk [vmem:[#allocation2 + $0xb8] sm:$0xf] %vm1007, %v1295
      %1409 = vst.msk [vmem:[#allocation2 + $0xcc] sm:$0xf] %vm1007, %v1297
      %1410 = vst.msk [vmem:[#allocation2 + $0xe0] sm:$0xf] %vm1007, %v1299
      %1411 = vst.msk [vmem:[#allocation2 + $0xf4] sm:$0xf] %vm1007, %v1301
      %1412 = vst.msk [vmem:[#allocation2 + $0x108] sm:$0xf] %vm1007, %v1303
      %1413 = vst.msk [vmem:[#allocation2 + $0x11c] sm:$0xf] %vm1007, %v1305
      %1414 = vst.msk [vmem:[#allocation2 + $0x130] sm:$0xf] %vm1007, %v1307
      %1415 = vst.msk [vmem:[#allocation2 + $0x144] sm:$0xf] %vm1007, %v1309
      %1416 = vst.msk [vmem:[#allocation2 + $0x158] sm:$0xf] %vm1007, %v1311
      %1417 = vst.msk [vmem:[#allocation2 + $0x16c] sm:$0xf] %vm1007, %v1313
      %1418 = vst.msk [vmem:[#allocation2 + $0x180] sm:$0xf] %vm1007, %v1315
      %1419 = vst.msk [vmem:[#allocation2 + $0x194] sm:$0xf] %vm1007, %v1317
      %1420 = vst.msk [vmem:[#allocation2 + $0x1a8] sm:$0xf] %vm1007, %v1319
      %1421 = vst.msk [vmem:[#allocation2 + $0x1bc] sm:$0xf] %vm1007, %v1321
      %1422 = vst.msk [vmem:[#allocation2 + $0x1d0] sm:$0xf] %vm1007, %v1323
      %1423 = vst.msk [vmem:[#allocation2 + $0x1e4] sm:$0xf] %vm1007, %v1325
      %1424 = vst.msk [vmem:[#allocation2 + $0x1f8] sm:$0xf] %vm1007, %v1327
      %1425 = vst.msk [vmem:[#allocation2 + $0x20c] sm:$0xf] %vm1007, %v1329
      %1426 = vst.msk [vmem:[#allocation2 + $0x220] sm:$0xf] %vm1007, %v1331
      %1427 = vst.msk [vmem:[#allocation2 + $0x234] sm:$0xf] %vm1007, %v1333
      %1428 = vst.msk [vmem:[#allocation2 + $0x248] sm:$0xf] %vm1007, %v1335
      %1429 = vst.msk [vmem:[#allocation2 + $0x25c] sm:$0xf] %vm1007, %v1337
      %1430 = vst.msk [vmem:[#allocation2 + $0x270] sm:$0xf] %vm1007, %v1339
      %1431 = vst.msk [vmem:[#allocation2 + $0x284] sm:$0xf] %vm1007, %v1341
      %1432 = vst.msk [vmem:[#allocation2 + $0x298] sm:$0xf] %vm1007, %v1343
      %1433 = vst.msk [vmem:[#allocation2 + $0x2ac] sm:$0xf] %vm1007, %v1345
      %1434 = vst.msk [vmem:[#allocation2 + $0x2c0] sm:$0xf] %vm1007, %v1347
      %1435 = vst.msk [vmem:[#allocation2 + $0x2d4] sm:$0xf] %vm1007, %v1349
      %1436 = vst.msk [vmem:[#allocation2 + $0x2e8] sm:$0xf] %vm1007, %v1351
      %1437 = vst.msk [vmem:[#allocation2 + $0x2fc] sm:$0xf] %vm1007, %v1353
      %1438 = vst.msk [vmem:[#allocation2 + $0x310] sm:$0xf] %vm1007, %v1355
      %1439 = vst.msk [vmem:[#allocation2 + $0x324] sm:$0x3] %vm1048, %v1357
      %vm1440 = vsmask.f32 2304
      %vm1441 = vsmask.f32 6416
      %vm1442 = vmor %vm1440, %vm1441
      %v1443 = vrot.slane %v499, 5
      %v1444 = vrot.slane %v495, 6
      %v1445 = vor.u32 %v1443, %v1444
      %v1446 = vrot.slane %v1445, 4
      %v1447 = vrot.slane %v509, 5
      %v1448 = vrot.slane %v505, 6
      %v1449 = vor.u32 %v1447, %v1448
      %v1450 = vsel %vm1442, %v1446, %v1449
      %v1451 = vrot.slane %v1449, 4
      %v1452 = vrot.slane %v519, 5
      %v1453 = vrot.slane %v515, 6
      %v1454 = vor.u32 %v1452, %v1453
      %v1455 = vsel %vm1442, %v1451, %v1454
      %v1456 = vrot.slane %v1454, 4
      %v1457 = vrot.slane %v529, 5
      %v1458 = vrot.slane %v525, 6
      %v1459 = vor.u32 %v1457, %v1458
      %v1460 = vsel %vm1442, %v1456, %v1459
      %v1461 = vrot.slane %v1459, 4
      %v1462 = vrot.slane %v539, 5
      %v1463 = vrot.slane %v535, 6
      %v1464 = vor.u32 %v1462, %v1463
      %v1465 = vsel %vm1442, %v1461, %v1464
      %v1466 = vrot.slane %v1464, 4
      %v1467 = vrot.slane %v549, 5
      %v1468 = vrot.slane %v545, 6
      %v1469 = vor.u32 %v1467, %v1468
      %v1470 = vsel %vm1442, %v1466, %v1469
      %v1471 = vrot.slane %v1469, 4
      %v1472 = vrot.slane %v559, 5
      %v1473 = vrot.slane %v555, 6
      %v1474 = vor.u32 %v1472, %v1473
      %v1475 = vsel %vm1442, %v1471, %v1474
      %v1476 = vrot.slane %v1474, 4
      %v1477 = vrot.slane %v569, 5
      %v1478 = vrot.slane %v565, 6
      %v1479 = vor.u32 %v1477, %v1478
      %v1480 = vsel %vm1442, %v1476, %v1479
      %v1481 = vrot.slane %v1479, 4
      %v1482 = vrot.slane %v579, 5
      %v1483 = vrot.slane %v575, 6
      %v1484 = vor.u32 %v1482, %v1483
      %v1485 = vsel %vm1442, %v1481, %v1484
      %v1486 = vrot.slane %v1484, 4
      %v1487 = vrot.slane %v589, 5
      %v1488 = vrot.slane %v585, 6
      %v1489 = vor.u32 %v1487, %v1488
      %v1490 = vsel %vm1442, %v1486, %v1489
      %v1491 = vrot.slane %v1489, 4
      %v1492 = vrot.slane %v599, 5
      %v1493 = vrot.slane %v595, 6
      %v1494 = vor.u32 %v1492, %v1493
      %v1495 = vsel %vm1442, %v1491, %v1494
      %v1496 = vrot.slane %v1494, 4
      %v1497 = vrot.slane %v609, 5
      %v1498 = vrot.slane %v605, 6
      %v1499 = vor.u32 %v1497, %v1498
      %v1500 = vsel %vm1442, %v1496, %v1499
      %v1501 = vrot.slane %v1499, 4
      %v1502 = vrot.slane %v619, 5
      %v1503 = vrot.slane %v615, 6
      %v1504 = vor.u32 %v1502, %v1503
      %v1505 = vsel %vm1442, %v1501, %v1504
      %v1506 = vrot.slane %v1504, 4
      %v1507 = vrot.slane %v629, 5
      %v1508 = vrot.slane %v625, 6
      %v1509 = vor.u32 %v1507, %v1508
      %v1510 = vsel %vm1442, %v1506, %v1509
      %v1511 = vrot.slane %v1509, 4
      %v1512 = vrot.slane %v639, 5
      %v1513 = vrot.slane %v635, 6
      %v1514 = vor.u32 %v1512, %v1513
      %v1515 = vsel %vm1442, %v1511, %v1514
      %v1516 = vrot.slane %v1514, 4
      %v1517 = vrot.slane %v649, 5
      %v1518 = vrot.slane %v645, 6
      %v1519 = vor.u32 %v1517, %v1518
      %v1520 = vsel %vm1442, %v1516, %v1519
      %v1521 = vrot.slane %v1519, 4
      %v1522 = vrot.slane %v659, 5
      %v1523 = vrot.slane %v655, 6
      %v1524 = vor.u32 %v1522, %v1523
      %v1525 = vsel %vm1442, %v1521, %v1524
      %v1526 = vrot.slane %v1524, 4
      %v1527 = vrot.slane %v669, 5
      %v1528 = vrot.slane %v665, 6
      %v1529 = vor.u32 %v1527, %v1528
      %v1530 = vsel %vm1442, %v1526, %v1529
      %v1531 = vrot.slane %v1529, 4
      %v1532 = vrot.slane %v679, 5
      %v1533 = vrot.slane %v675, 6
      %v1534 = vor.u32 %v1532, %v1533
      %v1535 = vsel %vm1442, %v1531, %v1534
      %v1536 = vrot.slane %v1534, 4
      %v1537 = vrot.slane %v689, 5
      %v1538 = vrot.slane %v685, 6
      %v1539 = vor.u32 %v1537, %v1538
      %v1540 = vsel %vm1442, %v1536, %v1539
      %v1541 = vrot.slane %v1539, 4
      %v1542 = vrot.slane %v699, 5
      %v1543 = vrot.slane %v695, 6
      %v1544 = vor.u32 %v1542, %v1543
      %v1545 = vsel %vm1442, %v1541, %v1544
      %v1546 = vrot.slane %v1544, 4
      %v1547 = vrot.slane %v709, 5
      %v1548 = vrot.slane %v705, 6
      %v1549 = vor.u32 %v1547, %v1548
      %v1550 = vsel %vm1442, %v1546, %v1549
      %v1551 = vrot.slane %v1549, 4
      %v1552 = vrot.slane %v719, 5
      %v1553 = vrot.slane %v715, 6
      %v1554 = vor.u32 %v1552, %v1553
      %v1555 = vsel %vm1442, %v1551, %v1554
      %v1556 = vrot.slane %v1554, 4
      %v1557 = vrot.slane %v729, 5
      %v1558 = vrot.slane %v725, 6
      %v1559 = vor.u32 %v1557, %v1558
      %v1560 = vsel %vm1442, %v1556, %v1559
      %v1561 = vrot.slane %v1559, 4
      %v1562 = vrot.slane %v739, 5
      %v1563 = vrot.slane %v735, 6
      %v1564 = vor.u32 %v1562, %v1563
      %v1565 = vsel %vm1442, %v1561, %v1564
      %v1566 = vrot.slane %v1564, 4
      %v1567 = vrot.slane %v749, 5
      %v1568 = vrot.slane %v745, 6
      %v1569 = vor.u32 %v1567, %v1568
      %v1570 = vsel %vm1442, %v1566, %v1569
      %v1571 = vrot.slane %v1569, 4
      %v1572 = vrot.slane %v759, 5
      %v1573 = vrot.slane %v755, 6
      %v1574 = vor.u32 %v1572, %v1573
      %v1575 = vsel %vm1442, %v1571, %v1574
      %v1576 = vrot.slane %v1574, 4
      %v1577 = vrot.slane %v769, 5
      %v1578 = vrot.slane %v765, 6
      %v1579 = vor.u32 %v1577, %v1578
      %v1580 = vsel %vm1442, %v1576, %v1579
      %v1581 = vrot.slane %v1579, 4
      %v1582 = vrot.slane %v779, 5
      %v1583 = vrot.slane %v775, 6
      %v1584 = vor.u32 %v1582, %v1583
      %v1585 = vsel %vm1442, %v1581, %v1584
      %v1586 = vrot.slane %v1584, 4
      %v1587 = vrot.slane %v789, 5
      %v1588 = vrot.slane %v785, 6
      %v1589 = vor.u32 %v1587, %v1588
      %v1590 = vsel %vm1442, %v1586, %v1589
      %v1591 = vrot.slane %v1589, 4
      %v1592 = vrot.slane %v799, 5
      %v1593 = vrot.slane %v795, 6
      %v1594 = vor.u32 %v1592, %v1593
      %v1595 = vsel %vm1442, %v1591, %v1594
      %v1596 = vrot.slane %v1594, 4
      %v1597 = vrot.slane %v809, 5
      %v1598 = vrot.slane %v805, 6
      %v1599 = vor.u32 %v1597, %v1598
      %v1600 = vsel %vm1442, %v1596, %v1599
      %v1601 = vrot.slane %v1599, 4
      %v1602 = vrot.slane %v819, 5
      %v1603 = vrot.slane %v815, 6
      %v1604 = vor.u32 %v1602, %v1603
      %v1605 = vsel %vm1442, %v1601, %v1604
      %v1606 = vrot.slane %v1604, 4
      %v1607 = vrot.slane %v829, 5
      %v1608 = vrot.slane %v825, 6
      %v1609 = vor.u32 %v1607, %v1608
      %v1610 = vsel %vm1442, %v1606, %v1609
      %v1611 = vrot.slane %v1609, 4
      %v1612 = vrot.slane %v839, 5
      %v1613 = vrot.slane %v835, 6
      %v1614 = vor.u32 %v1612, %v1613
      %v1615 = vsel %vm1442, %v1611, %v1614
      %v1616 = vrot.slane %v1614, 4
      %v1617 = vrot.slane %v849, 5
      %v1618 = vrot.slane %v845, 6
      %v1619 = vor.u32 %v1617, %v1618
      %v1620 = vsel %vm1442, %v1616, %v1619
      %v1621 = vrot.slane %v1619, 4
      %v1622 = vrot.slane %v859, 5
      %v1623 = vrot.slane %v855, 6
      %v1624 = vor.u32 %v1622, %v1623
      %v1625 = vsel %vm1442, %v1621, %v1624
      %v1626 = vrot.slane %v1624, 4
      %v1627 = vrot.slane %v869, 5
      %v1628 = vrot.slane %v865, 6
      %v1629 = vor.u32 %v1627, %v1628
      %v1630 = vsel %vm1442, %v1626, %v1629
      %v1631 = vrot.slane %v1629, 4
      %v1633 = vshrl.u32 %v1264, 16
      %v1635 = vrot.slane %v1633, 5
      %v1636 = vshll.u32 %v1264, 16
      %v1638 = vrot.slane %v1636, 6
      %v1639 = vor.u32 %v1635, %v1638
      %v1640 = vsel %vm1442, %v1631, %v1639
      %v1641 = vrot.slane %v1639, 4
      %v1643 = vshrl.u32 %v1265, 16
      %v1645 = vrot.slane %v1643, 5
      %v1646 = vshll.u32 %v1265, 16
      %v1648 = vrot.slane %v1646, 6
      %v1649 = vor.u32 %v1645, %v1648
      %v1650 = vsel %vm1442, %v1641, %v1649
      %v1651 = vrot.slane %v1649, 4
      %v1653 = vshrl.u32 %v1266, 16
      %v1655 = vrot.slane %v1653, 5
      %v1656 = vshll.u32 %v1266, 16
      %v1658 = vrot.slane %v1656, 6
      %v1659 = vor.u32 %v1655, %v1658
      %v1660 = vsel %vm1442, %v1651, %v1659
      %v1661 = vrot.slane %v1659, 4
      %1703 = vst.msk [vmem:[#allocation2 + $0x8] sm:$0xf] %vm429, %v1450
      %1704 = vst.msk [vmem:[#allocation2 + $0x1c] sm:$0xf] %vm429, %v1455
      %1705 = vst.msk [vmem:[#allocation2 + $0x30] sm:$0xf] %vm429, %v1460
      %1706 = vst.msk [vmem:[#allocation2 + $0x44] sm:$0xf] %vm429, %v1465
      %1707 = vst.msk [vmem:[#allocation2 + $0x58] sm:$0xf] %vm429, %v1470
      %1708 = vst.msk [vmem:[#allocation2 + $0x6c] sm:$0xf] %vm429, %v1475
      %1709 = vst.msk [vmem:[#allocation2 + $0x80] sm:$0xf] %vm429, %v1480
      %1710 = vst.msk [vmem:[#allocation2 + $0x94] sm:$0xf] %vm429, %v1485
      %1711 = vst.msk [vmem:[#allocation2 + $0xa8] sm:$0xf] %vm429, %v1490
      %1712 = vst.msk [vmem:[#allocation2 + $0xbc] sm:$0xf] %vm429, %v1495
      %1713 = vst.msk [vmem:[#allocation2 + $0xd0] sm:$0xf] %vm429, %v1500
      %1714 = vst.msk [vmem:[#allocation2 + $0xe4] sm:$0xf] %vm429, %v1505
      %1715 = vst.msk [vmem:[#allocation2 + $0xf8] sm:$0xf] %vm429, %v1510
      %1716 = vst.msk [vmem:[#allocation2 + $0x10c] sm:$0xf] %vm429, %v1515
      %1717 = vst.msk [vmem:[#allocation2 + $0x120] sm:$0xf] %vm429, %v1520
      %1718 = vst.msk [vmem:[#allocation2 + $0x134] sm:$0xf] %vm429, %v1525
      %1719 = vst.msk [vmem:[#allocation2 + $0x148] sm:$0xf] %vm429, %v1530
      %1720 = vst.msk [vmem:[#allocation2 + $0x15c] sm:$0xf] %vm429, %v1535
      %1721 = vst.msk [vmem:[#allocation2 + $0x170] sm:$0xf] %vm429, %v1540
      %1722 = vst.msk [vmem:[#allocation2 + $0x184] sm:$0xf] %vm429, %v1545
      %1723 = vst.msk [vmem:[#allocation2 + $0x198] sm:$0xf] %vm429, %v1550
      %1724 = vst.msk [vmem:[#allocation2 + $0x1ac] sm:$0xf] %vm429, %v1555
      %1725 = vst.msk [vmem:[#allocation2 + $0x1c0] sm:$0xf] %vm429, %v1560
      %1726 = vst.msk [vmem:[#allocation2 + $0x1d4] sm:$0xf] %vm429, %v1565
      %1727 = vst.msk [vmem:[#allocation2 + $0x1e8] sm:$0xf] %vm429, %v1570
      %1728 = vst.msk [vmem:[#allocation2 + $0x1fc] sm:$0xf] %vm429, %v1575
      %1729 = vst.msk [vmem:[#allocation2 + $0x210] sm:$0xf] %vm429, %v1580
      %1730 = vst.msk [vmem:[#allocation2 + $0x224] sm:$0xf] %vm429, %v1585
      %1731 = vst.msk [vmem:[#allocation2 + $0x238] sm:$0xf] %vm429, %v1590
      %1732 = vst.msk [vmem:[#allocation2 + $0x24c] sm:$0xf] %vm429, %v1595
      %1733 = vst.msk [vmem:[#allocation2 + $0x260] sm:$0xf] %vm429, %v1600
      %1734 = vst.msk [vmem:[#allocation2 + $0x274] sm:$0xf] %vm429, %v1605
      %1735 = vst.msk [vmem:[#allocation2 + $0x288] sm:$0xf] %vm429, %v1610
      %1736 = vst.msk [vmem:[#allocation2 + $0x29c] sm:$0xf] %vm429, %v1615
      %1737 = vst.msk [vmem:[#allocation2 + $0x2b0] sm:$0xf] %vm429, %v1620
      %1738 = vst.msk [vmem:[#allocation2 + $0x2c4] sm:$0xf] %vm429, %v1625
      %1739 = vst.msk [vmem:[#allocation2 + $0x2d8] sm:$0xf] %vm429, %v1630
      %1740 = vst.msk [vmem:[#allocation2 + $0x2ec] sm:$0xf] %vm429, %v1640
      %1741 = vst.msk [vmem:[#allocation2 + $0x300] sm:$0xf] %vm429, %v1650
      %1742 = vst.msk [vmem:[#allocation2 + $0x314] sm:$0xf] %vm429, %v1660
      %1743 = vst.msk [vmem:[#allocation2 + $0x328] sm:$0x3] %vm470, %v1661
      %vm1744 = vcmask 1041408
      %vm1745 = vcmask 1045508
      %vm1746 = vmor %vm1744, %vm1745
      %v1747 = vrot.slane %v349, 6
      %v1748 = vrot.slane %v1747, 4
      %v1749 = vrot.slane %v350, 6
      %v1750 = vsel %vm1746, %v1748, %v1749
      %v1751 = vrot.slane %v1749, 4
      %v1752 = vrot.slane %v351, 6
      %v1753 = vsel %vm1746, %v1751, %v1752
      %v1754 = vrot.slane %v1752, 4
      %v1755 = vrot.slane %v352, 6
      %v1756 = vsel %vm1746, %v1754, %v1755
      %v1757 = vrot.slane %v1755, 4
      %v1758 = vrot.slane %v353, 6
      %v1759 = vsel %vm1746, %v1757, %v1758
      %v1760 = vrot.slane %v1758, 4
      %v1761 = vrot.slane %v354, 6
      %v1762 = vsel %vm1746, %v1760, %v1761
      %v1763 = vrot.slane %v1761, 4
      %v1764 = vrot.slane %v355, 6
      %v1765 = vsel %vm1746, %v1763, %v1764
      %v1766 = vrot.slane %v1764, 4
      %v1767 = vrot.slane %v356, 6
      %v1768 = vsel %vm1746, %v1766, %v1767
      %v1769 = vrot.slane %v1767, 4
      %v1770 = vrot.slane %v357, 6
      %v1771 = vsel %vm1746, %v1769, %v1770
      %v1772 = vrot.slane %v1770, 4
      %v1773 = vrot.slane %v358, 6
      %v1774 = vsel %vm1746, %v1772, %v1773
      %v1775 = vrot.slane %v1773, 4
      %v1776 = vrot.slane %v359, 6
      %v1777 = vsel %vm1746, %v1775, %v1776
      %v1778 = vrot.slane %v1776, 4
      %v1779 = vrot.slane %v360, 6
      %v1780 = vsel %vm1746, %v1778, %v1779
      %v1781 = vrot.slane %v1779, 4
      %v1782 = vrot.slane %v361, 6
      %v1783 = vsel %vm1746, %v1781, %v1782
      %v1784 = vrot.slane %v1782, 4
      %v1785 = vrot.slane %v362, 6
      %v1786 = vsel %vm1746, %v1784, %v1785
      %v1787 = vrot.slane %v1785, 4
      %v1788 = vrot.slane %v363, 6
      %v1789 = vsel %vm1746, %v1787, %v1788
      %v1790 = vrot.slane %v1788, 4
      %v1791 = vrot.slane %v364, 6
      %v1792 = vsel %vm1746, %v1790, %v1791
      %v1793 = vrot.slane %v1791, 4
      %v1794 = vrot.slane %v365, 6
      %v1795 = vsel %vm1746, %v1793, %v1794
      %v1796 = vrot.slane %v1794, 4
      %v1797 = vrot.slane %v366, 6
      %v1798 = vsel %vm1746, %v1796, %v1797
      %v1799 = vrot.slane %v1797, 4
      %v1800 = vrot.slane %v367, 6
      %v1801 = vsel %vm1746, %v1799, %v1800
      %v1802 = vrot.slane %v1800, 4
      %v1803 = vrot.slane %v368, 6
      %v1804 = vsel %vm1746, %v1802, %v1803
      %v1805 = vrot.slane %v1803, 4
      %v1806 = vrot.slane %v369, 6
      %v1807 = vsel %vm1746, %v1805, %v1806
      %v1808 = vrot.slane %v1806, 4
      %v1809 = vrot.slane %v370, 6
      %v1810 = vsel %vm1746, %v1808, %v1809
      %v1811 = vrot.slane %v1809, 4
      %v1812 = vrot.slane %v371, 6
      %v1813 = vsel %vm1746, %v1811, %v1812
      %v1814 = vrot.slane %v1812, 4
      %v1815 = vrot.slane %v372, 6
      %v1816 = vsel %vm1746, %v1814, %v1815
      %v1817 = vrot.slane %v1815, 4
      %v1818 = vrot.slane %v373, 6
      %v1819 = vsel %vm1746, %v1817, %v1818
      %v1820 = vrot.slane %v1818, 4
      %v1821 = vrot.slane %v374, 6
      %v1822 = vsel %vm1746, %v1820, %v1821
      %v1823 = vrot.slane %v1821, 4
      %v1824 = vrot.slane %v375, 6
      %v1825 = vsel %vm1746, %v1823, %v1824
      %v1826 = vrot.slane %v1824, 4
      %v1827 = vrot.slane %v376, 6
      %v1828 = vsel %vm1746, %v1826, %v1827
      %v1829 = vrot.slane %v1827, 4
      %v1830 = vrot.slane %v377, 6
      %v1831 = vsel %vm1746, %v1829, %v1830
      %v1832 = vrot.slane %v1830, 4
      %v1833 = vrot.slane %v378, 6
      %v1834 = vsel %vm1746, %v1832, %v1833
      %v1835 = vrot.slane %v1833, 4
      %v1836 = vrot.slane %v379, 6
      %v1837 = vsel %vm1746, %v1835, %v1836
      %v1838 = vrot.slane %v1836, 4
      %v1839 = vrot.slane %v380, 6
      %v1840 = vsel %vm1746, %v1838, %v1839
      %v1841 = vrot.slane %v1839, 4
      %v1842 = vrot.slane %v381, 6
      %v1843 = vsel %vm1746, %v1841, %v1842
      %v1844 = vrot.slane %v1842, 4
      %v1845 = vrot.slane %v382, 6
      %v1846 = vsel %vm1746, %v1844, %v1845
      %v1847 = vrot.slane %v1845, 4
      %v1848 = vrot.slane %v383, 6
      %v1849 = vsel %vm1746, %v1847, %v1848
      %v1850 = vrot.slane %v1848, 4
      %v1851 = vrot.slane %v384, 6
      %v1852 = vsel %vm1746, %v1850, %v1851
      %v1853 = vrot.slane %v1851, 4
      %v1854 = vrot.slane %v385, 6
      %v1855 = vsel %vm1746, %v1853, %v1854
      %v1856 = vrot.slane %v1854, 4
      %v1857 = vrot.slane %v386, 6
      %v1858 = vsel %vm1746, %v1856, %v1857
      %v1859 = vrot.slane %v1857, 4
      %v1860 = vrot.slane %v1264, 6
      %v1861 = vsel %vm1746, %v1859, %v1860
      %v1862 = vrot.slane %v1860, 4
      %v1863 = vrot.slane %v1265, 6
      %v1864 = vsel %vm1746, %v1862, %v1863
      %v1865 = vrot.slane %v1863, 4
      %v1866 = vrot.slane %v1266, 6
      %v1867 = vsel %vm1746, %v1865, %v1866
      %v1868 = vrot.slane %v1866, 4
      %1869 = vrot.lane.b32.xlu0 %v1750, 64
      %v1870 = vpop.permute.xlu0 %1869
      %1871 = vrot.lane.b32.xlu0 %v1753, 64
      %v1872 = vpop.permute.xlu0 %1871
      %1873 = vrot.lane.b32.xlu0 %v1756, 64
      %v1874 = vpop.permute.xlu0 %1873
      %1875 = vrot.lane.b32.xlu0 %v1759, 64
      %v1876 = vpop.permute.xlu0 %1875
      %1877 = vrot.lane.b32.xlu0 %v1762, 64
      %v1878 = vpop.permute.xlu0 %1877
      %1879 = vrot.lane.b32.xlu0 %v1765, 64
      %v1880 = vpop.permute.xlu0 %1879
      %1881 = vrot.lane.b32.xlu0 %v1768, 64
      %v1882 = vpop.permute.xlu0 %1881
      %1883 = vrot.lane.b32.xlu0 %v1771, 64
      %v1884 = vpop.permute.xlu0 %1883
      %1885 = vrot.lane.b32.xlu0 %v1774, 64
      %v1886 = vpop.permute.xlu0 %1885
      %1887 = vrot.lane.b32.xlu0 %v1777, 64
      %v1888 = vpop.permute.xlu0 %1887
      %1889 = vrot.lane.b32.xlu0 %v1780, 64
      %v1890 = vpop.permute.xlu0 %1889
      %1891 = vrot.lane.b32.xlu0 %v1783, 64
      %v1892 = vpop.permute.xlu0 %1891
      %1893 = vrot.lane.b32.xlu0 %v1786, 64
      %v1894 = vpop.permute.xlu0 %1893
      %1895 = vrot.lane.b32.xlu0 %v1789, 64
      %v1896 = vpop.permute.xlu0 %1895
      %1897 = vrot.lane.b32.xlu0 %v1792, 64
      %v1898 = vpop.permute.xlu0 %1897
      %1899 = vrot.lane.b32.xlu0 %v1795, 64
      %v1900 = vpop.permute.xlu0 %1899
      %1901 = vrot.lane.b32.xlu0 %v1798, 64
      %v1902 = vpop.permute.xlu0 %1901
      %1903 = vrot.lane.b32.xlu0 %v1801, 64
      %v1904 = vpop.permute.xlu0 %1903
      %1905 = vrot.lane.b32.xlu0 %v1804, 64
      %v1906 = vpop.permute.xlu0 %1905
      %1907 = vrot.lane.b32.xlu0 %v1807, 64
      %v1908 = vpop.permute.xlu0 %1907
      %1909 = vrot.lane.b32.xlu0 %v1810, 64
      %v1910 = vpop.permute.xlu0 %1909
      %1911 = vrot.lane.b32.xlu0 %v1813, 64
      %v1912 = vpop.permute.xlu0 %1911
      %1913 = vrot.lane.b32.xlu0 %v1816, 64
      %v1914 = vpop.permute.xlu0 %1913
      %1915 = vrot.lane.b32.xlu0 %v1819, 64
      %v1916 = vpop.permute.xlu0 %1915
      %1917 = vrot.lane.b32.xlu0 %v1822, 64
      %v1918 = vpop.permute.xlu0 %1917
      %1919 = vrot.lane.b32.xlu0 %v1825, 64
      %v1920 = vpop.permute.xlu0 %1919
      %1921 = vrot.lane.b32.xlu0 %v1828, 64
      %v1922 = vpop.permute.xlu0 %1921
      %1923 = vrot.lane.b32.xlu0 %v1831, 64
      %v1924 = vpop.permute.xlu0 %1923
      %1925 = vrot.lane.b32.xlu0 %v1834, 64
      %v1926 = vpop.permute.xlu0 %1925
      %1927 = vrot.lane.b32.xlu0 %v1837, 64
      %v1928 = vpop.permute.xlu0 %1927
      %1929 = vrot.lane.b32.xlu0 %v1840, 64
      %v1930 = vpop.permute.xlu0 %1929
      %1931 = vrot.lane.b32.xlu0 %v1843, 64
      %v1932 = vpop.permute.xlu0 %1931
      %1933 = vrot.lane.b32.xlu0 %v1846, 64
      %v1934 = vpop.permute.xlu0 %1933
      %1935 = vrot.lane.b32.xlu0 %v1849, 64
      %v1936 = vpop.permute.xlu0 %1935
      %1937 = vrot.lane.b32.xlu0 %v1852, 64
      %v1938 = vpop.permute.xlu0 %1937
      %1939 = vrot.lane.b32.xlu0 %v1855, 64
      %v1940 = vpop.permute.xlu0 %1939
      %1941 = vrot.lane.b32.xlu0 %v1858, 64
      %v1942 = vpop.permute.xlu0 %1941
      %1943 = vrot.lane.b32.xlu0 %v1861, 64
      %v1944 = vpop.permute.xlu0 %1943
      %1945 = vrot.lane.b32.xlu0 %v1864, 64
      %v1946 = vpop.permute.xlu0 %1945
      %1947 = vrot.lane.b32.xlu0 %v1867, 64
      %v1948 = vpop.permute.xlu0 %1947
      %1949 = vrot.lane.b32.xlu0 %v1868, 64
      %v1950 = vpop.permute.xlu0 %1949
      %1992 = vst.msk [vmem:[#allocation2 + $0x8] sm:$0xf] %vm1007, %v1870
      %1993 = vst.msk [vmem:[#allocation2 + $0x1c] sm:$0xf] %vm1007, %v1872
      %1994 = vst.msk [vmem:[#allocation2 + $0x30] sm:$0xf] %vm1007, %v1874
      %1995 = vst.msk [vmem:[#allocation2 + $0x44] sm:$0xf] %vm1007, %v1876
      %1996 = vst.msk [vmem:[#allocation2 + $0x58] sm:$0xf] %vm1007, %v1878
      %1997 = vst.msk [vmem:[#allocation2 + $0x6c] sm:$0xf] %vm1007, %v1880
      %1998 = vst.msk [vmem:[#allocation2 + $0x80] sm:$0xf] %vm1007, %v1882
      %1999 = vst.msk [vmem:[#allocation2 + $0x94] sm:$0xf] %vm1007, %v1884
      %2000 = vst.msk [vmem:[#allocation2 + $0xa8] sm:$0xf] %vm1007, %v1886
      %2001 = vst.msk [vmem:[#allocation2 + $0xbc] sm:$0xf] %vm1007, %v1888
      %2002 = vst.msk [vmem:[#allocation2 + $0xd0] sm:$0xf] %vm1007, %v1890
      %2003 = vst.msk [vmem:[#allocation2 + $0xe4] sm:$0xf] %vm1007, %v1892
      %2004 = vst.msk [vmem:[#allocation2 + $0xf8] sm:$0xf] %vm1007, %v1894
      %2005 = vst.msk [vmem:[#allocation2 + $0x10c] sm:$0xf] %vm1007, %v1896
      %2006 = vst.msk [vmem:[#allocation2 + $0x120] sm:$0xf] %vm1007, %v1898
      %2007 = vst.msk [vmem:[#allocation2 + $0x134] sm:$0xf] %vm1007, %v1900
      %2008 = vst.msk [vmem:[#allocation2 + $0x148] sm:$0xf] %vm1007, %v1902
      %2009 = vst.msk [vmem:[#allocation2 + $0x15c] sm:$0xf] %vm1007, %v1904
      %2010 = vst.msk [vmem:[#allocation2 + $0x170] sm:$0xf] %vm1007, %v1906
      %2011 = vst.msk [vmem:[#allocation2 + $0x184] sm:$0xf] %vm1007, %v1908
      %2012 = vst.msk [vmem:[#allocation2 + $0x198] sm:$0xf] %vm1007, %v1910
      %2013 = vst.msk [vmem:[#allocation2 + $0x1ac] sm:$0xf] %vm1007, %v1912
      %2014 = vst.msk [vmem:[#allocation2 + $0x1c0] sm:$0xf] %vm1007, %v1914
      %2015 = vst.msk [vmem:[#allocation2 + $0x1d4] sm:$0xf] %vm1007, %v1916
      %2016 = vst.msk [vmem:[#allocation2 + $0x1e8] sm:$0xf] %vm1007, %v1918
      %2017 = vst.msk [vmem:[#allocation2 + $0x1fc] sm:$0xf] %vm1007, %v1920
      %2018 = vst.msk [vmem:[#allocation2 + $0x210] sm:$0xf] %vm1007, %v1922
      %2019 = vst.msk [vmem:[#allocation2 + $0x224] sm:$0xf] %vm1007, %v1924
      %2020 = vst.msk [vmem:[#allocation2 + $0x238] sm:$0xf] %vm1007, %v1926
      %2021 = vst.msk [vmem:[#allocation2 + $0x24c] sm:$0xf] %vm1007, %v1928
      %2022 = vst.msk [vmem:[#allocation2 + $0x260] sm:$0xf] %vm1007, %v1930
      %2023 = vst.msk [vmem:[#allocation2 + $0x274] sm:$0xf] %vm1007, %v1932
      %2024 = vst.msk [vmem:[#allocation2 + $0x288] sm:$0xf] %vm1007, %v1934
      %2025 = vst.msk [vmem:[#allocation2 + $0x29c] sm:$0xf] %vm1007, %v1936
      %2026 = vst.msk [vmem:[#allocation2 + $0x2b0] sm:$0xf] %vm1007, %v1938
      %2027 = vst.msk [vmem:[#allocation2 + $0x2c4] sm:$0xf] %vm1007, %v1940
      %2028 = vst.msk [vmem:[#allocation2 + $0x2d8] sm:$0xf] %vm1007, %v1942
      %2029 = vst.msk [vmem:[#allocation2 + $0x2ec] sm:$0xf] %vm1007, %v1944
      %2030 = vst.msk [vmem:[#allocation2 + $0x300] sm:$0xf] %vm1007, %v1946
      %2031 = vst.msk [vmem:[#allocation2 + $0x314] sm:$0xf] %vm1007, %v1948
      %2032 = vst.msk [vmem:[#allocation2 + $0x328] sm:$0x3] %vm1048, %v1950
      %v2033 = vpack.c.bf16 %v261, %v260
      %v2034 = vpack.c.bf16 %v262, %v262
      %v2037 = vunpack.c.l.b16 %v2033
      %v2038 = vunpack.c.h.b16 %v2033
      %v2039 = vunpack.c.l.b16 %v2034
      %v2040 = vpack.c.b16 %v2037, %v2037
      %v2041 = vpack.c.b16 %v2038, %v2038
      %v2042 = vpack.c.b16 %v2039, %v2039
      %v2043 = vrot.slane %v2040, 6
      %v2044 = vsel %vm1746, %v1865, %v2043
      %v2045 = vrot.slane %v2043, 4
      %v2046 = vrot.slane %v2041, 6
      %v2047 = vsel %vm1746, %v2045, %v2046
      %v2048 = vrot.slane %v2046, 4
      %v2049 = vrot.slane %v2042, 6
      %v2050 = vsel %vm1746, %v2048, %v2049
      %v2051 = vrot.slane %v2049, 4
      %2093 = vst.msk [vmem:[#allocation2 + $0xc] sm:$0xf] %vm429, %v1756
      %2094 = vst.msk [vmem:[#allocation2 + $0x20] sm:$0xf] %vm429, %v1759
      %2095 = vst.msk [vmem:[#allocation2 + $0x34] sm:$0xf] %vm429, %v1762
      %2096 = vst.msk [vmem:[#allocation2 + $0x48] sm:$0xf] %vm429, %v1765
      %2097 = vst.msk [vmem:[#allocation2 + $0x5c] sm:$0xf] %vm429, %v1768
      %2098 = vst.msk [vmem:[#allocation2 + $0x70] sm:$0xf] %vm429, %v1771
      %2099 = vst.msk [vmem:[#allocation2 + $0x84] sm:$0xf] %vm429, %v1774
      %2100 = vst.msk [vmem:[#allocation2 + $0x98] sm:$0xf] %vm429, %v1777
      %2101 = vst.msk [vmem:[#allocation2 + $0xac] sm:$0xf] %vm429, %v1780
      %2102 = vst.msk [vmem:[#allocation2 + $0xc0] sm:$0xf] %vm429, %v1783
      %2103 = vst.msk [vmem:[#allocation2 + $0xd4] sm:$0xf] %vm429, %v1786
      %2104 = vst.msk [vmem:[#allocation2 + $0xe8] sm:$0xf] %vm429, %v1789
      %2105 = vst.msk [vmem:[#allocation2 + $0xfc] sm:$0xf] %vm429, %v1792
      %2106 = vst.msk [vmem:[#allocation2 + $0x110] sm:$0xf] %vm429, %v1795
      %2107 = vst.msk [vmem:[#allocation2 + $0x124] sm:$0xf] %vm429, %v1798
      %2108 = vst.msk [vmem:[#allocation2 + $0x138] sm:$0xf] %vm429, %v1801
      %2109 = vst.msk [vmem:[#allocation2 + $0x14c] sm:$0xf] %vm429, %v1804
      %2110 = vst.msk [vmem:[#allocation2 + $0x160] sm:$0xf] %vm429, %v1807
      %2111 = vst.msk [vmem:[#allocation2 + $0x174] sm:$0xf] %vm429, %v1810
      %2112 = vst.msk [vmem:[#allocation2 + $0x188] sm:$0xf] %vm429, %v1813
      %2113 = vst.msk [vmem:[#allocation2 + $0x19c] sm:$0xf] %vm429, %v1816
      %2114 = vst.msk [vmem:[#allocation2 + $0x1b0] sm:$0xf] %vm429, %v1819
      %2115 = vst.msk [vmem:[#allocation2 + $0x1c4] sm:$0xf] %vm429, %v1822
      %2116 = vst.msk [vmem:[#allocation2 + $0x1d8] sm:$0xf] %vm429, %v1825
      %2117 = vst.msk [vmem:[#allocation2 + $0x1ec] sm:$0xf] %vm429, %v1828
      %2118 = vst.msk [vmem:[#allocation2 + $0x200] sm:$0xf] %vm429, %v1831
      %2119 = vst.msk [vmem:[#allocation2 + $0x214] sm:$0xf] %vm429, %v1834
      %2120 = vst.msk [vmem:[#allocation2 + $0x228] sm:$0xf] %vm429, %v1837
      %2121 = vst.msk [vmem:[#allocation2 + $0x23c] sm:$0xf] %vm429, %v1840
      %2122 = vst.msk [vmem:[#allocation2 + $0x250] sm:$0xf] %vm429, %v1843
      %2123 = vst.msk [vmem:[#allocation2 + $0x264] sm:$0xf] %vm429, %v1846
      %2124 = vst.msk [vmem:[#allocation2 + $0x278] sm:$0xf] %vm429, %v1849
      %2125 = vst.msk [vmem:[#allocation2 + $0x28c] sm:$0xf] %vm429, %v1852
      %2126 = vst.msk [vmem:[#allocation2 + $0x2a0] sm:$0xf] %vm429, %v1855
      %2127 = vst.msk [vmem:[#allocation2 + $0x2b4] sm:$0xf] %vm429, %v1858
      %2128 = vst.msk [vmem:[#allocation2 + $0x2c8] sm:$0xf] %vm429, %v1861
      %2129 = vst.msk [vmem:[#allocation2 + $0x2dc] sm:$0xf] %vm429, %v1864
      %2130 = vst.msk [vmem:[#allocation2 + $0x2f0] sm:$0xf] %vm429, %v2044
      %2131 = vst.msk [vmem:[#allocation2 + $0x304] sm:$0xf] %vm429, %v2047
      %2132 = vst.msk [vmem:[#allocation2 + $0x318] sm:$0xf] %vm429, %v2050
      %2133 = vst.msk [vmem:[#allocation2 + $0x32c] sm:$0x3] %vm470, %v2051
      %v2134 = vpack.c.bf16 %v263, %v262
      %v2136 = vunpack.c.l.b16 %v2134
      %v2137 = vunpack.c.h.b16 %v2134
      %v2138 = vpack.c.b16 %v2136, %v2136
      %v2139 = vpack.c.b16 %v2137, %v2137
      %vm2140 = vsmask.f32 1280
      %vm2141 = vsmask.f32 5392
      %vm2142 = vmor %vm2140, %vm2141
      %v2143 = vrot.slane %v519, 6
      %v2144 = vrot.slane %v515, 7
      %v2145 = vor.u32 %v2143, %v2144
      %v2146 = vrot.slane %v2145, 4
      %v2147 = vrot.slane %v529, 6
      %v2148 = vrot.slane %v525, 7
      %v2149 = vor.u32 %v2147, %v2148
      %v2150 = vsel %vm2142, %v2146, %v2149
      %v2151 = vrot.slane %v2149, 4
      %v2152 = vrot.slane %v539, 6
      %v2153 = vrot.slane %v535, 7
      %v2154 = vor.u32 %v2152, %v2153
      %v2155 = vsel %vm2142, %v2151, %v2154
      %v2156 = vrot.slane %v2154, 4
      %v2157 = vrot.slane %v549, 6
      %v2158 = vrot.slane %v545, 7
      %v2159 = vor.u32 %v2157, %v2158
      %v2160 = vsel %vm2142, %v2156, %v2159
      %v2161 = vrot.slane %v2159, 4
      %v2162 = vrot.slane %v559, 6
      %v2163 = vrot.slane %v555, 7
      %v2164 = vor.u32 %v2162, %v2163
      %v2165 = vsel %vm2142, %v2161, %v2164
      %v2166 = vrot.slane %v2164, 4
      %v2167 = vrot.slane %v569, 6
      %v2168 = vrot.slane %v565, 7
      %v2169 = vor.u32 %v2167, %v2168
      %v2170 = vsel %vm2142, %v2166, %v2169
      %v2171 = vrot.slane %v2169, 4
      %v2172 = vrot.slane %v579, 6
      %v2173 = vrot.slane %v575, 7
      %v2174 = vor.u32 %v2172, %v2173
      %v2175 = vsel %vm2142, %v2171, %v2174
      %v2176 = vrot.slane %v2174, 4
      %v2177 = vrot.slane %v589, 6
      %v2178 = vrot.slane %v585, 7
      %v2179 = vor.u32 %v2177, %v2178
      %v2180 = vsel %vm2142, %v2176, %v2179
      %v2181 = vrot.slane %v2179, 4
      %v2182 = vrot.slane %v599, 6
      %v2183 = vrot.slane %v595, 7
      %v2184 = vor.u32 %v2182, %v2183
      %v2185 = vsel %vm2142, %v2181, %v2184
      %v2186 = vrot.slane %v2184, 4
      %v2187 = vrot.slane %v609, 6
      %v2188 = vrot.slane %v605, 7
      %v2189 = vor.u32 %v2187, %v2188
      %v2190 = vsel %vm2142, %v2186, %v2189
      %v2191 = vrot.slane %v2189, 4
      %v2192 = vrot.slane %v619, 6
      %v2193 = vrot.slane %v615, 7
      %v2194 = vor.u32 %v2192, %v2193
      %v2195 = vsel %vm2142, %v2191, %v2194
      %v2196 = vrot.slane %v2194, 4
      %v2197 = vrot.slane %v629, 6
      %v2198 = vrot.slane %v625, 7
      %v2199 = vor.u32 %v2197, %v2198
      %v2200 = vsel %vm2142, %v2196, %v2199
      %v2201 = vrot.slane %v2199, 4
      %v2202 = vrot.slane %v639, 6
      %v2203 = vrot.slane %v635, 7
      %v2204 = vor.u32 %v2202, %v2203
      %v2205 = vsel %vm2142, %v2201, %v2204
      %v2206 = vrot.slane %v2204, 4
      %v2207 = vrot.slane %v649, 6
      %v2208 = vrot.slane %v645, 7
      %v2209 = vor.u32 %v2207, %v2208
      %v2210 = vsel %vm2142, %v2206, %v2209
      %v2211 = vrot.slane %v2209, 4
      %v2212 = vrot.slane %v659, 6
      %v2213 = vrot.slane %v655, 7
      %v2214 = vor.u32 %v2212, %v2213
      %v2215 = vsel %vm2142, %v2211, %v2214
      %v2216 = vrot.slane %v2214, 4
      %v2217 = vrot.slane %v669, 6
      %v2218 = vrot.slane %v665, 7
      %v2219 = vor.u32 %v2217, %v2218
      %v2220 = vsel %vm2142, %v2216, %v2219
      %v2221 = vrot.slane %v2219, 4
      %v2222 = vrot.slane %v679, 6
      %v2223 = vrot.slane %v675, 7
      %v2224 = vor.u32 %v2222, %v2223
      %v2225 = vsel %vm2142, %v2221, %v2224
      %v2226 = vrot.slane %v2224, 4
      %v2227 = vrot.slane %v689, 6
      %v2228 = vrot.slane %v685, 7
      %v2229 = vor.u32 %v2227, %v2228
      %v2230 = vsel %vm2142, %v2226, %v2229
      %v2231 = vrot.slane %v2229, 4
      %v2232 = vrot.slane %v699, 6
      %v2233 = vrot.slane %v695, 7
      %v2234 = vor.u32 %v2232, %v2233
      %v2235 = vsel %vm2142, %v2231, %v2234
      %v2236 = vrot.slane %v2234, 4
      %v2237 = vrot.slane %v709, 6
      %v2238 = vrot.slane %v705, 7
      %v2239 = vor.u32 %v2237, %v2238
      %v2240 = vsel %vm2142, %v2236, %v2239
      %v2241 = vrot.slane %v2239, 4
      %v2242 = vrot.slane %v719, 6
      %v2243 = vrot.slane %v715, 7
      %v2244 = vor.u32 %v2242, %v2243
      %v2245 = vsel %vm2142, %v2241, %v2244
      %v2246 = vrot.slane %v2244, 4
      %v2247 = vrot.slane %v729, 6
      %v2248 = vrot.slane %v725, 7
      %v2249 = vor.u32 %v2247, %v2248
      %v2250 = vsel %vm2142, %v2246, %v2249
      %v2251 = vrot.slane %v2249, 4
      %v2252 = vrot.slane %v739, 6
      %v2253 = vrot.slane %v735, 7
      %v2254 = vor.u32 %v2252, %v2253
      %v2255 = vsel %vm2142, %v2251, %v2254
      %v2256 = vrot.slane %v2254, 4
      %v2257 = vrot.slane %v749, 6
      %v2258 = vrot.slane %v745, 7
      %v2259 = vor.u32 %v2257, %v2258
      %v2260 = vsel %vm2142, %v2256, %v2259
      %v2261 = vrot.slane %v2259, 4
      %v2262 = vrot.slane %v759, 6
      %v2263 = vrot.slane %v755, 7
      %v2264 = vor.u32 %v2262, %v2263
      %v2265 = vsel %vm2142, %v2261, %v2264
      %v2266 = vrot.slane %v2264, 4
      %v2267 = vrot.slane %v769, 6
      %v2268 = vrot.slane %v765, 7
      %v2269 = vor.u32 %v2267, %v2268
      %v2270 = vsel %vm2142, %v2266, %v2269
      %v2271 = vrot.slane %v2269, 4
      %v2272 = vrot.slane %v779, 6
      %v2273 = vrot.slane %v775, 7
      %v2274 = vor.u32 %v2272, %v2273
      %v2275 = vsel %vm2142, %v2271, %v2274
      %v2276 = vrot.slane %v2274, 4
      %v2277 = vrot.slane %v789, 6
      %v2278 = vrot.slane %v785, 7
      %v2279 = vor.u32 %v2277, %v2278
      %v2280 = vsel %vm2142, %v2276, %v2279
      %v2281 = vrot.slane %v2279, 4
      %v2282 = vrot.slane %v799, 6
      %v2283 = vrot.slane %v795, 7
      %v2284 = vor.u32 %v2282, %v2283
      %v2285 = vsel %vm2142, %v2281, %v2284
      %v2286 = vrot.slane %v2284, 4
      %v2287 = vrot.slane %v809, 6
      %v2288 = vrot.slane %v805, 7
      %v2289 = vor.u32 %v2287, %v2288
      %v2290 = vsel %vm2142, %v2286, %v2289
      %v2291 = vrot.slane %v2289, 4
      %v2292 = vrot.slane %v819, 6
      %v2293 = vrot.slane %v815, 7
      %v2294 = vor.u32 %v2292, %v2293
      %v2295 = vsel %vm2142, %v2291, %v2294
      %v2296 = vrot.slane %v2294, 4
      %v2297 = vrot.slane %v829, 6
      %v2298 = vrot.slane %v825, 7
      %v2299 = vor.u32 %v2297, %v2298
      %v2300 = vsel %vm2142, %v2296, %v2299
      %v2301 = vrot.slane %v2299, 4
      %v2302 = vrot.slane %v839, 6
      %v2303 = vrot.slane %v835, 7
      %v2304 = vor.u32 %v2302, %v2303
      %v2305 = vsel %vm2142, %v2301, %v2304
      %v2306 = vrot.slane %v2304, 4
      %v2307 = vrot.slane %v849, 6
      %v2308 = vrot.slane %v845, 7
      %v2309 = vor.u32 %v2307, %v2308
      %v2310 = vsel %vm2142, %v2306, %v2309
      %v2311 = vrot.slane %v2309, 4
      %v2312 = vrot.slane %v859, 6
      %v2313 = vrot.slane %v855, 7
      %v2314 = vor.u32 %v2312, %v2313
      %v2315 = vsel %vm2142, %v2311, %v2314
      %v2316 = vrot.slane %v2314, 4
      %v2317 = vrot.slane %v869, 6
      %v2318 = vrot.slane %v865, 7
      %v2319 = vor.u32 %v2317, %v2318
      %v2320 = vsel %vm2142, %v2316, %v2319
      %v2321 = vrot.slane %v2319, 4
      %v2322 = vrot.slane %v1633, 6
      %v2323 = vrot.slane %v1636, 7
      %v2324 = vor.u32 %v2322, %v2323
      %v2325 = vsel %vm2142, %v2321, %v2324
      %v2326 = vrot.slane %v2324, 4
      %v2327 = vrot.slane %v1643, 6
      %v2328 = vrot.slane %v1646, 7
      %v2329 = vor.u32 %v2327, %v2328
      %v2330 = vsel %vm2142, %v2326, %v2329
      %v2331 = vrot.slane %v2329, 4
      %v2333 = vshrl.u32 %v2040, 16
      %v2335 = vrot.slane %v2333, 6
      %v2336 = vshll.u32 %v2040, 16
      %v2338 = vrot.slane %v2336, 7
      %v2339 = vor.u32 %v2335, %v2338
      %v2340 = vsel %vm2142, %v2331, %v2339
      %v2341 = vrot.slane %v2339, 4
      %v2343 = vshrl.u32 %v2041, 16
      %v2345 = vrot.slane %v2343, 6
      %v2346 = vshll.u32 %v2041, 16
      %v2348 = vrot.slane %v2346, 7
      %v2349 = vor.u32 %v2345, %v2348
      %v2350 = vsel %vm2142, %v2341, %v2349
      %v2351 = vrot.slane %v2349, 4
      %v2353 = vshrl.u32 %v2138, 16
      %v2355 = vrot.slane %v2353, 6
      %v2356 = vshll.u32 %v2138, 16
      %v2358 = vrot.slane %v2356, 7
      %v2359 = vor.u32 %v2355, %v2358
      %v2360 = vsel %vm2142, %v2351, %v2359
      %v2361 = vrot.slane %v2359, 4
      %v2363 = vshll.u32 %v2139, 16
      %v2365 = vrot.slane %v2363, 7
      %v2366 = vsel %vm2142, %v2361, %v2365
      %2367 = vrot.lane.b32.xlu0 %v2150, 64
      %v2368 = vpop.permute.xlu0 %2367
      %2369 = vrot.lane.b32.xlu0 %v2155, 64
      %v2370 = vpop.permute.xlu0 %2369
      %2371 = vrot.lane.b32.xlu0 %v2160, 64
      %v2372 = vpop.permute.xlu0 %2371
      %2373 = vrot.lane.b32.xlu0 %v2165, 64
      %v2374 = vpop.permute.xlu0 %2373
      %2375 = vrot.lane.b32.xlu0 %v2170, 64
      %v2376 = vpop.permute.xlu0 %2375
      %2377 = vrot.lane.b32.xlu0 %v2175, 64
      %v2378 = vpop.permute.xlu0 %2377
      %2379 = vrot.lane.b32.xlu0 %v2180, 64
      %v2380 = vpop.permute.xlu0 %2379
      %2381 = vrot.lane.b32.xlu0 %v2185, 64
      %v2382 = vpop.permute.xlu0 %2381
      %2383 = vrot.lane.b32.xlu0 %v2190, 64
      %v2384 = vpop.permute.xlu0 %2383
      %2385 = vrot.lane.b32.xlu0 %v2195, 64
      %v2386 = vpop.permute.xlu0 %2385
      %2387 = vrot.lane.b32.xlu0 %v2200, 64
      %v2388 = vpop.permute.xlu0 %2387
      %2389 = vrot.lane.b32.xlu0 %v2205, 64
      %v2390 = vpop.permute.xlu0 %2389
      %2391 = vrot.lane.b32.xlu0 %v2210, 64
      %v2392 = vpop.permute.xlu0 %2391
      %2393 = vrot.lane.b32.xlu0 %v2215, 64
      %v2394 = vpop.permute.xlu0 %2393
      %2395 = vrot.lane.b32.xlu0 %v2220, 64
      %v2396 = vpop.permute.xlu0 %2395
      %2397 = vrot.lane.b32.xlu0 %v2225, 64
      %v2398 = vpop.permute.xlu0 %2397
      %2399 = vrot.lane.b32.xlu0 %v2230, 64
      %v2400 = vpop.permute.xlu0 %2399
      %2401 = vrot.lane.b32.xlu0 %v2235, 64
      %v2402 = vpop.permute.xlu0 %2401
      %2403 = vrot.lane.b32.xlu0 %v2240, 64
      %v2404 = vpop.permute.xlu0 %2403
      %2405 = vrot.lane.b32.xlu0 %v2245, 64
      %v2406 = vpop.permute.xlu0 %2405
      %2407 = vrot.lane.b32.xlu0 %v2250, 64
      %v2408 = vpop.permute.xlu0 %2407
      %2409 = vrot.lane.b32.xlu0 %v2255, 64
      %v2410 = vpop.permute.xlu0 %2409
      %2411 = vrot.lane.b32.xlu0 %v2260, 64
      %v2412 = vpop.permute.xlu0 %2411
      %2413 = vrot.lane.b32.xlu0 %v2265, 64
      %v2414 = vpop.permute.xlu0 %2413
      %2415 = vrot.lane.b32.xlu0 %v2270, 64
      %v2416 = vpop.permute.xlu0 %2415
      %2417 = vrot.lane.b32.xlu0 %v2275, 64
      %v2418 = vpop.permute.xlu0 %2417
      %2419 = vrot.lane.b32.xlu0 %v2280, 64
      %v2420 = vpop.permute.xlu0 %2419
      %2421 = vrot.lane.b32.xlu0 %v2285, 64
      %v2422 = vpop.permute.xlu0 %2421
      %2423 = vrot.lane.b32.xlu0 %v2290, 64
      %v2424 = vpop.permute.xlu0 %2423
      %2425 = vrot.lane.b32.xlu0 %v2295, 64
      %v2426 = vpop.permute.xlu0 %2425
      %2427 = vrot.lane.b32.xlu0 %v2300, 64
      %v2428 = vpop.permute.xlu0 %2427
      %2429 = vrot.lane.b32.xlu0 %v2305, 64
      %v2430 = vpop.permute.xlu0 %2429
      %2431 = vrot.lane.b32.xlu0 %v2310, 64
      %v2432 = vpop.permute.xlu0 %2431
      %2433 = vrot.lane.b32.xlu0 %v2315, 64
      %v2434 = vpop.permute.xlu0 %2433
      %2435 = vrot.lane.b32.xlu0 %v2320, 64
      %v2436 = vpop.permute.xlu0 %2435
      %2437 = vrot.lane.b32.xlu0 %v2325, 64
      %v2438 = vpop.permute.xlu0 %2437
      %2439 = vrot.lane.b32.xlu0 %v2330, 64
      %v2440 = vpop.permute.xlu0 %2439
      %2441 = vrot.lane.b32.xlu0 %v2340, 64
      %v2442 = vpop.permute.xlu0 %2441
      %2443 = vrot.lane.b32.xlu0 %v2350, 64
      %v2444 = vpop.permute.xlu0 %2443
      %2445 = vrot.lane.b32.xlu0 %v2360, 64
      %v2446 = vpop.permute.xlu0 %2445
      %2447 = vrot.lane.b32.xlu0 %v2366, 64
      %v2448 = vpop.permute.xlu0 %2447
      %2490 = vst.msk [vmem:[#allocation2 + $0xc] sm:$0xf] %vm1007, %v2368
      %2491 = vst.msk [vmem:[#allocation2 + $0x20] sm:$0xf] %vm1007, %v2370
      %2492 = vst.msk [vmem:[#allocation2 + $0x34] sm:$0xf] %vm1007, %v2372
      %2493 = vst.msk [vmem:[#allocation2 + $0x48] sm:$0xf] %vm1007, %v2374
      %2494 = vst.msk [vmem:[#allocation2 + $0x5c] sm:$0xf] %vm1007, %v2376
      %2495 = vst.msk [vmem:[#allocation2 + $0x70] sm:$0xf] %vm1007, %v2378
      %2496 = vst.msk [vmem:[#allocation2 + $0x84] sm:$0xf] %vm1007, %v2380
      %2497 = vst.msk [vmem:[#allocation2 + $0x98] sm:$0xf] %vm1007, %v2382
      %2498 = vst.msk [vmem:[#allocation2 + $0xac] sm:$0xf] %vm1007, %v2384
      %2499 = vst.msk [vmem:[#allocation2 + $0xc0] sm:$0xf] %vm1007, %v2386
      %2500 = vst.msk [vmem:[#allocation2 + $0xd4] sm:$0xf] %vm1007, %v2388
      %2501 = vst.msk [vmem:[#allocation2 + $0xe8] sm:$0xf] %vm1007, %v2390
      %2502 = vst.msk [vmem:[#allocation2 + $0xfc] sm:$0xf] %vm1007, %v2392
      %2503 = vst.msk [vmem:[#allocation2 + $0x110] sm:$0xf] %vm1007, %v2394
      %2504 = vst.msk [vmem:[#allocation2 + $0x124] sm:$0xf] %vm1007, %v2396
      %2505 = vst.msk [vmem:[#allocation2 + $0x138] sm:$0xf] %vm1007, %v2398
      %2506 = vst.msk [vmem:[#allocation2 + $0x14c] sm:$0xf] %vm1007, %v2400
      %2507 = vst.msk [vmem:[#allocation2 + $0x160] sm:$0xf] %vm1007, %v2402
      %2508 = vst.msk [vmem:[#allocation2 + $0x174] sm:$0xf] %vm1007, %v2404
      %2509 = vst.msk [vmem:[#allocation2 + $0x188] sm:$0xf] %vm1007, %v2406
      %2510 = vst.msk [vmem:[#allocation2 + $0x19c] sm:$0xf] %vm1007, %v2408
      %2511 = vst.msk [vmem:[#allocation2 + $0x1b0] sm:$0xf] %vm1007, %v2410
      %2512 = vst.msk [vmem:[#allocation2 + $0x1c4] sm:$0xf] %vm1007, %v2412
      %2513 = vst.msk [vmem:[#allocation2 + $0x1d8] sm:$0xf] %vm1007, %v2414
      %2514 = vst.msk [vmem:[#allocation2 + $0x1ec] sm:$0xf] %vm1007, %v2416
      %2515 = vst.msk [vmem:[#allocation2 + $0x200] sm:$0xf] %vm1007, %v2418
      %2516 = vst.msk [vmem:[#allocation2 + $0x214] sm:$0xf] %vm1007, %v2420
      %2517 = vst.msk [vmem:[#allocation2 + $0x228] sm:$0xf] %vm1007, %v2422
      %2518 = vst.msk [vmem:[#allocation2 + $0x23c] sm:$0xf] %vm1007, %v2424
      %2519 = vst.msk [vmem:[#allocation2 + $0x250] sm:$0xf] %vm1007, %v2426
      %2520 = vst.msk [vmem:[#allocation2 + $0x264] sm:$0xf] %vm1007, %v2428
      %2521 = vst.msk [vmem:[#allocation2 + $0x278] sm:$0xf] %vm1007, %v2430
      %2522 = vst.msk [vmem:[#allocation2 + $0x28c] sm:$0xf] %vm1007, %v2432
      %2523 = vst.msk [vmem:[#allocation2 + $0x2a0] sm:$0xf] %vm1007, %v2434
      %2524 = vst.msk [vmem:[#allocation2 + $0x2b4] sm:$0xf] %vm1007, %v2436
      %2525 = vst.msk [vmem:[#allocation2 + $0x2c8] sm:$0xf] %vm1007, %v2438
      %2526 = vst.msk [vmem:[#allocation2 + $0x2dc] sm:$0xf] %vm1007, %v2440
      %2527 = vst.msk [vmem:[#allocation2 + $0x2f0] sm:$0xf] %vm1007, %v2442
      %2528 = vst.msk [vmem:[#allocation2 + $0x304] sm:$0xf] %vm1007, %v2444
      %2529 = vst.msk [vmem:[#allocation2 + $0x318] sm:$0xf] %vm1007, %v2446
      %2530 = vst.msk [vmem:[#allocation2 + $0x32c] sm:$0x3] %vm1048, %v2448
      %vm2531 = vcmask 1040384
      %vm2532 = vcmask 1044484
      %vm2533 = vmor %vm2531, %vm2532
      %v2534 = vrot.slane %v351, 7
      %v2535 = vrot.slane %v2534, 4
      %v2536 = vrot.slane %v352, 7
      %v2537 = vsel %vm2533, %v2535, %v2536
      %v2538 = vrot.slane %v2536, 4
      %v2539 = vrot.slane %v353, 7
      %v2540 = vsel %vm2533, %v2538, %v2539
      %v2541 = vrot.slane %v2539, 4
      %v2542 = vrot.slane %v354, 7
      %v2543 = vsel %vm2533, %v2541, %v2542
      %v2544 = vrot.slane %v2542, 4
      %v2545 = vrot.slane %v355, 7
      %v2546 = vsel %vm2533, %v2544, %v2545
      %v2547 = vrot.slane %v2545, 4
      %v2548 = vrot.slane %v356, 7
      %v2549 = vsel %vm2533, %v2547, %v2548
      %v2550 = vrot.slane %v2548, 4
      %v2551 = vrot.slane %v357, 7
      %v2552 = vsel %vm2533, %v2550, %v2551
      %v2553 = vrot.slane %v2551, 4
      %v2554 = vrot.slane %v358, 7
      %v2555 = vsel %vm2533, %v2553, %v2554
      %v2556 = vrot.slane %v2554, 4
      %v2557 = vrot.slane %v359, 7
      %v2558 = vsel %vm2533, %v2556, %v2557
      %v2559 = vrot.slane %v2557, 4
      %v2560 = vrot.slane %v360, 7
      %v2561 = vsel %vm2533, %v2559, %v2560
      %v2562 = vrot.slane %v2560, 4
      %v2563 = vrot.slane %v361, 7
      %v2564 = vsel %vm2533, %v2562, %v2563
      %v2565 = vrot.slane %v2563, 4
      %v2566 = vrot.slane %v362, 7
      %v2567 = vsel %vm2533, %v2565, %v2566
      %v2568 = vrot.slane %v2566, 4
      %v2569 = vrot.slane %v363, 7
      %v2570 = vsel %vm2533, %v2568, %v2569
      %v2571 = vrot.slane %v2569, 4
      %v2572 = vrot.slane %v364, 7
      %v2573 = vsel %vm2533, %v2571, %v2572
      %v2574 = vrot.slane %v2572, 4
      %v2575 = vrot.slane %v365, 7
      %v2576 = vsel %vm2533, %v2574, %v2575
      %v2577 = vrot.slane %v2575, 4
      %v2578 = vrot.slane %v366, 7
      %v2579 = vsel %vm2533, %v2577, %v2578
      %v2580 = vrot.slane %v2578, 4
      %v2581 = vrot.slane %v367, 7
      %v2582 = vsel %vm2533, %v2580, %v2581
      %v2583 = vrot.slane %v2581, 4
      %v2584 = vrot.slane %v368, 7
      %v2585 = vsel %vm2533, %v2583, %v2584
      %v2586 = vrot.slane %v2584, 4
      %v2587 = vrot.slane %v369, 7
      %v2588 = vsel %vm2533, %v2586, %v2587
      %v2589 = vrot.slane %v2587, 4
      %v2590 = vrot.slane %v370, 7
      %v2591 = vsel %vm2533, %v2589, %v2590
      %v2592 = vrot.slane %v2590, 4
      %v2593 = vrot.slane %v371, 7
      %v2594 = vsel %vm2533, %v2592, %v2593
      %v2595 = vrot.slane %v2593, 4
      %v2596 = vrot.slane %v372, 7
      %v2597 = vsel %vm2533, %v2595, %v2596
      %v2598 = vrot.slane %v2596, 4
      %v2599 = vrot.slane %v373, 7
      %v2600 = vsel %vm2533, %v2598, %v2599
      %v2601 = vrot.slane %v2599, 4
      %v2602 = vrot.slane %v374, 7
      %v2603 = vsel %vm2533, %v2601, %v2602
      %v2604 = vrot.slane %v2602, 4
      %v2605 = vrot.slane %v375, 7
      %v2606 = vsel %vm2533, %v2604, %v2605
      %v2607 = vrot.slane %v2605, 4
      %v2608 = vrot.slane %v376, 7
      %v2609 = vsel %vm2533, %v2607, %v2608
      %v2610 = vrot.slane %v2608, 4
      %v2611 = vrot.slane %v377, 7
      %v2612 = vsel %vm2533, %v2610, %v2611
      %v2613 = vrot.slane %v2611, 4
      %v2614 = vrot.slane %v378, 7
      %v2615 = vsel %vm2533, %v2613, %v2614
      %v2616 = vrot.slane %v2614, 4
      %v2617 = vrot.slane %v379, 7
      %v2618 = vsel %vm2533, %v2616, %v2617
      %v2619 = vrot.slane %v2617, 4
      %v2620 = vrot.slane %v380, 7
      %v2621 = vsel %vm2533, %v2619, %v2620
      %v2622 = vrot.slane %v2620, 4
      %v2623 = vrot.slane %v381, 7
      %v2624 = vsel %vm2533, %v2622, %v2623
      %v2625 = vrot.slane %v2623, 4
      %v2626 = vrot.slane %v382, 7
      %v2627 = vsel %vm2533, %v2625, %v2626
      %v2628 = vrot.slane %v2626, 4
      %v2629 = vrot.slane %v383, 7
      %v2630 = vsel %vm2533, %v2628, %v2629
      %v2631 = vrot.slane %v2629, 4
      %v2632 = vrot.slane %v384, 7
      %v2633 = vsel %vm2533, %v2631, %v2632
      %v2634 = vrot.slane %v2632, 4
      %v2635 = vrot.slane %v385, 7
      %v2636 = vsel %vm2533, %v2634, %v2635
      %v2637 = vrot.slane %v2635, 4
      %v2638 = vrot.slane %v386, 7
      %v2639 = vsel %vm2533, %v2637, %v2638
      %v2640 = vrot.slane %v2638, 4
      %v2641 = vrot.slane %v1264, 7
      %v2642 = vsel %vm2533, %v2640, %v2641
      %v2643 = vrot.slane %v2641, 4
      %v2644 = vrot.slane %v1265, 7
      %v2645 = vsel %vm2533, %v2643, %v2644
      %v2646 = vrot.slane %v2644, 4
      %v2647 = vrot.slane %v2040, 7
      %v2648 = vsel %vm2533, %v2646, %v2647
      %v2649 = vrot.slane %v2647, 4
      %v2650 = vrot.slane %v2041, 7
      %v2651 = vsel %vm2533, %v2649, %v2650
      %v2652 = vrot.slane %v2650, 4
      %v2653 = vrot.slane %v2138, 7
      %v2654 = vsel %vm2533, %v2652, %v2653
      %v2655 = vrot.slane %v2653, 4
      %v2656 = vrot.slane %v2139, 7
      %v2657 = vsel %vm2533, %v2655, %v2656
      %2699 = vst.msk [vmem:[#allocation2 + $0x10] sm:$0xf] %vm429, %v2537
      %2700 = vst.msk [vmem:[#allocation2 + $0x24] sm:$0xf] %vm429, %v2540
      %2701 = vst.msk [vmem:[#allocation2 + $0x38] sm:$0xf] %vm429, %v2543
      %2702 = vst.msk [vmem:[#allocation2 + $0x4c] sm:$0xf] %vm429, %v2546
      %2703 = vst.msk [vmem:[#allocation2 + $0x60] sm:$0xf] %vm429, %v2549
      %2704 = vst.msk [vmem:[#allocation2 + $0x74] sm:$0xf] %vm429, %v2552
      %2705 = vst.msk [vmem:[#allocation2 + $0x88] sm:$0xf] %vm429, %v2555
      %2706 = vst.msk [vmem:[#allocation2 + $0x9c] sm:$0xf] %vm429, %v2558
      %2707 = vst.msk [vmem:[#allocation2 + $0xb0] sm:$0xf] %vm429, %v2561
      %2708 = vst.msk [vmem:[#allocation2 + $0xc4] sm:$0xf] %vm429, %v2564
      %2709 = vst.msk [vmem:[#allocation2 + $0xd8] sm:$0xf] %vm429, %v2567
      %2710 = vst.msk [vmem:[#allocation2 + $0xec] sm:$0xf] %vm429, %v2570
      %2711 = vst.msk [vmem:[#allocation2 + $0x100] sm:$0xf] %vm429, %v2573
      %2712 = vst.msk [vmem:[#allocation2 + $0x114] sm:$0xf] %vm429, %v2576
      %2713 = vst.msk [vmem:[#allocation2 + $0x128] sm:$0xf] %vm429, %v2579
      %2714 = vst.msk [vmem:[#allocation2 + $0x13c] sm:$0xf] %vm429, %v2582
      %2715 = vst.msk [vmem:[#allocation2 + $0x150] sm:$0xf] %vm429, %v2585
      %2716 = vst.msk [vmem:[#allocation2 + $0x164] sm:$0xf] %vm429, %v2588
      %2717 = vst.msk [vmem:[#allocation2 + $0x178] sm:$0xf] %vm429, %v2591
      %2718 = vst.msk [vmem:[#allocation2 + $0x18c] sm:$0xf] %vm429, %v2594
      %2719 = vst.msk [vmem:[#allocation2 + $0x1a0] sm:$0xf] %vm429, %v2597
      %2720 = vst.msk [vmem:[#allocation2 + $0x1b4] sm:$0xf] %vm429, %v2600
      %2721 = vst.msk [vmem:[#allocation2 + $0x1c8] sm:$0xf] %vm429, %v2603
      %2722 = vst.msk [vmem:[#allocation2 + $0x1dc] sm:$0xf] %vm429, %v2606
      %2723 = vst.msk [vmem:[#allocation2 + $0x1f0] sm:$0xf] %vm429, %v2609
      %2724 = vst.msk [vmem:[#allocation2 + $0x204] sm:$0xf] %vm429, %v2612
      %2725 = vst.msk [vmem:[#allocation2 + $0x218] sm:$0xf] %vm429, %v2615
      %2726 = vst.msk [vmem:[#allocation2 + $0x22c] sm:$0xf] %vm429, %v2618
      %2727 = vst.msk [vmem:[#allocation2 + $0x240] sm:$0xf] %vm429, %v2621
      %2728 = vst.msk [vmem:[#allocation2 + $0x254] sm:$0xf] %vm429, %v2624
      %2729 = vst.msk [vmem:[#allocation2 + $0x268] sm:$0xf] %vm429, %v2627
      %2730 = vst.msk [vmem:[#allocation2 + $0x27c] sm:$0xf] %vm429, %v2630
      %2731 = vst.msk [vmem:[#allocation2 + $0x290] sm:$0xf] %vm429, %v2633
      %2732 = vst.msk [vmem:[#allocation2 + $0x2a4] sm:$0xf] %vm429, %v2636
      %2733 = vst.msk [vmem:[#allocation2 + $0x2b8] sm:$0xf] %vm429, %v2639
      %2734 = vst.msk [vmem:[#allocation2 + $0x2cc] sm:$0xf] %vm429, %v2642
      %2735 = vst.msk [vmem:[#allocation2 + $0x2e0] sm:$0xf] %vm429, %v2645
      %2736 = vst.msk [vmem:[#allocation2 + $0x2f4] sm:$0xf] %vm429, %v2648
      %2737 = vst.msk [vmem:[#allocation2 + $0x308] sm:$0xf] %vm429, %v2651
      %2738 = vst.msk [vmem:[#allocation2 + $0x31c] sm:$0xf] %vm429, %v2654
      %2739 = vst.msk [vmem:[#allocation2 + $0x330] sm:$0x3] %vm470, %v2657
      %v2740 = vld [vmem:[#allocation2] sm:$0xff]
      %v2741 = vld [vmem:[#allocation2 + $0x8] sm:$0xff]
      %v2742 = vld [vmem:[#allocation2 + $0x10] sm:$0xf]
      %v2743 = vld [vmem:[#allocation2 + $0x14] sm:$0xff]
      %v2744 = vld [vmem:[#allocation2 + $0x1c] sm:$0xff]
      %v2745 = vld [vmem:[#allocation2 + $0x24] sm:$0xf]
      %v2746 = vld [vmem:[#allocation2 + $0x28] sm:$0xff]
      %v2747 = vld [vmem:[#allocation2 + $0x30] sm:$0xff]
      %v2748 = vld [vmem:[#allocation2 + $0x38] sm:$0xf]
      %v2749 = vld [vmem:[#allocation2 + $0x3c] sm:$0xff]
      %v2750 = vld [vmem:[#allocation2 + $0x44] sm:$0xff]
      %v2751 = vld [vmem:[#allocation2 + $0x4c] sm:$0xf]
      %v2752 = vld [vmem:[#allocation2 + $0x50] sm:$0xff]
      %v2753 = vld [vmem:[#allocation2 + $0x58] sm:$0xff]
      %v2754 = vld [vmem:[#allocation2 + $0x60] sm:$0xf]
      %v2755 = vld [vmem:[#allocation2 + $0x64] sm:$0xff]
      %v2756 = vld [vmem:[#allocation2 + $0x6c] sm:$0xff]
      %v2757 = vld [vmem:[#allocation2 + $0x74] sm:$0xf]
      %v2758 = vld [vmem:[#allocation2 + $0x78] sm:$0xff]
      %v2759 = vld [vmem:[#allocation2 + $0x80] sm:$0xff]
      %v2760 = vld [vmem:[#allocation2 + $0x88] sm:$0xf]
      %v2761 = vld [vmem:[#allocation2 + $0x8c] sm:$0xff]
      %v2762 = vld [vmem:[#allocation2 + $0x94] sm:$0xff]
      %v2763 = vld [vmem:[#allocation2 + $0x9c] sm:$0xf]
      %v2764 = vld [vmem:[#allocation2 + $0xa0] sm:$0xff]
      %v2765 = vld [vmem:[#allocation2 + $0xa8] sm:$0xff]
      %v2766 = vld [vmem:[#allocation2 + $0xb0] sm:$0xf]
      %v2767 = vld [vmem:[#allocation2 + $0xb4] sm:$0xff]
      %v2768 = vld [vmem:[#allocation2 + $0xbc] sm:$0xff]
      %v2769 = vld [vmem:[#allocation2 + $0xc4] sm:$0xf]
      %v2770 = vld [vmem:[#allocation2 + $0xc8] sm:$0xff]
      %v2771 = vld [vmem:[#allocation2 + $0xd0] sm:$0xff]
      %v2772 = vld [vmem:[#allocation2 + $0xd8] sm:$0xf]
      %v2773 = vld [vmem:[#allocation2 + $0xdc] sm:$0xff]
      %v2774 = vld [vmem:[#allocation2 + $0xe4] sm:$0xff]
      %v2775 = vld [vmem:[#allocation2 + $0xec] sm:$0xf]
      %v2776 = vld [vmem:[#allocation2 + $0xf0] sm:$0xff]
      %v2777 = vld [vmem:[#allocation2 + $0xf8] sm:$0xff]
      %v2778 = vld [vmem:[#allocation2 + $0x100] sm:$0xf]
      %v2779 = vld [vmem:[#allocation2 + $0x104] sm:$0xff]
      %v2780 = vld [vmem:[#allocation2 + $0x10c] sm:$0xff]
      %v2781 = vld [vmem:[#allocation2 + $0x114] sm:$0xf]
      %v2782 = vld [vmem:[#allocation2 + $0x118] sm:$0xff]
      %v2783 = vld [vmem:[#allocation2 + $0x120] sm:$0xff]
      %v2784 = vld [vmem:[#allocation2 + $0x128] sm:$0xf]
      %v2785 = vld [vmem:[#allocation2 + $0x12c] sm:$0xff]
      %v2786 = vld [vmem:[#allocation2 + $0x134] sm:$0xff]
      %v2787 = vld [vmem:[#allocation2 + $0x13c] sm:$0xf]
      %v2788 = vld [vmem:[#allocation2 + $0x140] sm:$0xff]
      %v2789 = vld [vmem:[#allocation2 + $0x148] sm:$0xff]
      %v2790 = vld [vmem:[#allocation2 + $0x150] sm:$0xf]
      %v2791 = vld [vmem:[#allocation2 + $0x154] sm:$0xff]
      %v2792 = vld [vmem:[#allocation2 + $0x15c] sm:$0xff]
      %v2793 = vld [vmem:[#allocation2 + $0x164] sm:$0xf]
      %v2794 = vld [vmem:[#allocation2 + $0x168] sm:$0xff]
      %v2795 = vld [vmem:[#allocation2 + $0x170] sm:$0xff]
      %v2796 = vld [vmem:[#allocation2 + $0x178] sm:$0xf]
      %v2797 = vld [vmem:[#allocation2 + $0x17c] sm:$0xff]
      %v2798 = vld [vmem:[#allocation2 + $0x184] sm:$0xff]
      %v2799 = vld [vmem:[#allocation2 + $0x18c] sm:$0xf]
      %v2800 = vld [vmem:[#allocation2 + $0x190] sm:$0xff]
      %v2801 = vld [vmem:[#allocation2 + $0x198] sm:$0xff]
      %v2802 = vld [vmem:[#allocation2 + $0x1a0] sm:$0xf]
      %v2803 = vld [vmem:[#allocation2 + $0x1a4] sm:$0xff]
      %v2804 = vld [vmem:[#allocation2 + $0x1ac] sm:$0xff]
      %v2805 = vld [vmem:[#allocation2 + $0x1b4] sm:$0xf]
      %v2806 = vld [vmem:[#allocation2 + $0x1b8] sm:$0xff]
      %v2807 = vld [vmem:[#allocation2 + $0x1c0] sm:$0xff]
      %v2808 = vld [vmem:[#allocation2 + $0x1c8] sm:$0xf]
      %v2809 = vld [vmem:[#allocation2 + $0x1cc] sm:$0xff]
      %v2810 = vld [vmem:[#allocation2 + $0x1d4] sm:$0xff]
      %v2811 = vld [vmem:[#allocation2 + $0x1dc] sm:$0xf]
      %v2812 = vld [vmem:[#allocation2 + $0x1e0] sm:$0xff]
      %v2813 = vld [vmem:[#allocation2 + $0x1e8] sm:$0xff]
      %v2814 = vld [vmem:[#allocation2 + $0x1f0] sm:$0xf]
      %v2815 = vld [vmem:[#allocation2 + $0x1f4] sm:$0xff]
      %v2816 = vld [vmem:[#allocation2 + $0x1fc] sm:$0xff]
      %v2817 = vld [vmem:[#allocation2 + $0x204] sm:$0xf]
      %v2818 = vld [vmem:[#allocation2 + $0x208] sm:$0xff]
      %v2819 = vld [vmem:[#allocation2 + $0x210] sm:$0xff]
      %v2820 = vld [vmem:[#allocation2 + $0x218] sm:$0xf]
      %v2821 = vld [vmem:[#allocation2 + $0x21c] sm:$0xff]
      %v2822 = vld [vmem:[#allocation2 + $0x224] sm:$0xff]
      %v2823 = vld [vmem:[#allocation2 + $0x22c] sm:$0xf]
      %v2824 = vld [vmem:[#allocation2 + $0x230] sm:$0xff]
      %v2825 = vld [vmem:[#allocation2 + $0x238] sm:$0xff]
      %v2826 = vld [vmem:[#allocation2 + $0x240] sm:$0xf]
      %v2827 = vld [vmem:[#allocation2 + $0x244] sm:$0xff]
      %v2828 = vld [vmem:[#allocation2 + $0x24c] sm:$0xff]
      %v2829 = vld [vmem:[#allocation2 + $0x254] sm:$0xf]
      %v2830 = vld [vmem:[#allocation2 + $0x258] sm:$0xff]
      %v2831 = vld [vmem:[#allocation2 + $0x260] sm:$0xff]
      %v2832 = vld [vmem:[#allocation2 + $0x268] sm:$0xf]
      %v2833 = vld [vmem:[#allocation2 + $0x26c] sm:$0xff]
      %v2834 = vld [vmem:[#allocation2 + $0x274] sm:$0xff]
      %v2835 = vld [vmem:[#allocation2 + $0x27c] sm:$0xf]
      %v2836 = vld [vmem:[#allocation2 + $0x280] sm:$0xff]
      %v2837 = vld [vmem:[#allocation2 + $0x288] sm:$0xff]
      %v2838 = vld [vmem:[#allocation2 + $0x290] sm:$0xf]
      %v2839 = vld [vmem:[#allocation2 + $0x294] sm:$0xff]
      %v2840 = vld [vmem:[#allocation2 + $0x29c] sm:$0xff]
      %v2841 = vld [vmem:[#allocation2 + $0x2a4] sm:$0xf]
      %v2842 = vld [vmem:[#allocation2 + $0x2a8] sm:$0xff]
      %v2843 = vld [vmem:[#allocation2 + $0x2b0] sm:$0xff]
      %v2844 = vld [vmem:[#allocation2 + $0x2b8] sm:$0xf]
      %v2845 = vld [vmem:[#allocation2 + $0x2bc] sm:$0xff]
      %v2846 = vld [vmem:[#allocation2 + $0x2c4] sm:$0xff]
      %v2847 = vld [vmem:[#allocation2 + $0x2cc] sm:$0xf]
      %v2848 = vld [vmem:[#allocation2 + $0x2d0] sm:$0xff]
      %v2849 = vld [vmem:[#allocation2 + $0x2d8] sm:$0xff]
      %v2850 = vld [vmem:[#allocation2 + $0x2e0] sm:$0xf]
      %v2851 = vld [vmem:[#allocation2 + $0x2e4] sm:$0xff]
      %v2852 = vld [vmem:[#allocation2 + $0x2ec] sm:$0xff]
      %v2853 = vld [vmem:[#allocation2 + $0x2f4] sm:$0xf]
      %v2854 = vld [vmem:[#allocation2 + $0x2f8] sm:$0xff]
      %v2855 = vld [vmem:[#allocation2 + $0x300] sm:$0xff]
      %v2856 = vld [vmem:[#allocation2 + $0x308] sm:$0xf]
      %v2857 = vld [vmem:[#allocation2 + $0x30c] sm:$0xff]
      %v2858 = vld [vmem:[#allocation2 + $0x314] sm:$0xff]
      %v2859 = vld [vmem:[#allocation2 + $0x31c] sm:$0xf]
      %v2860 = vld [vmem:[#allocation2 + $0x320] sm:$0x33]
      %v2861 = vld [vmem:[#allocation2 + $0x328] sm:$0x33]
      %v2862 = vld [vmem:[#allocation2 + $0x330] sm:$0x3]
      %v2863 = vld [vmem:[%s1] sm:$0xf]
      %v2864 = vld [vmem:[%s1 + $0x4] sm:$0xf]
      %v2865 = vld [vmem:[%s1 + $0x8] sm:$0xf]
      %v2866 = vld [vmem:[%s1 + $0xc] sm:$0xf]
      %v2867 = vld [vmem:[%s1 + $0x10] sm:$0xf]
      %v2868 = vld [vmem:[%s1 + $0x14] sm:$0xf]
      %v2869 = vld [vmem:[%s1 + $0x18] sm:$0xf]
      %v2870 = vld [vmem:[%s1 + $0x1c] sm:$0xf]
      %v2871 = vld [vmem:[%s1 + $0x20] sm:$0xf]
      %v2872 = vld [vmem:[%s1 + $0x24] sm:$0xf]
      %v2873 = vld [vmem:[%s1 + $0x28] sm:$0xf]
      %v2874 = vld [vmem:[%s1 + $0x2c] sm:$0xf]
      %v2875 = vld [vmem:[%s1 + $0x30] sm:$0xf]
      %v2876 = vld [vmem:[%s1 + $0x34] sm:$0xf]
      %v2877 = vld [vmem:[%s1 + $0x38] sm:$0xf]
      %v2878 = vld [vmem:[%s1 + $0x3c] sm:$0xf]
      %v2879 = vld [vmem:[%s1 + $0x40] sm:$0xf]
      %v2880 = vld [vmem:[%s1 + $0x44] sm:$0xf]
      %v2881 = vld [vmem:[%s1 + $0x48] sm:$0xf]
      %v2882 = vld [vmem:[%s1 + $0x4c] sm:$0xf]
      %v2883 = vld [vmem:[%s1 + $0x50] sm:$0xf]
      %v2884 = vld [vmem:[%s1 + $0x54] sm:$0xf]
      %v2885 = vld [vmem:[%s1 + $0x58] sm:$0xf]
      %v2886 = vld [vmem:[%s1 + $0x5c] sm:$0xf]
      %v2887 = vld [vmem:[%s1 + $0x60] sm:$0xf]
      %v2888 = vld [vmem:[%s1 + $0x64] sm:$0xf]
      %v2889 = vld [vmem:[%s1 + $0x68] sm:$0xf]
      %v2890 = vld [vmem:[%s1 + $0x6c] sm:$0xf]
      %v2891 = vld [vmem:[%s1 + $0x70] sm:$0xf]
      %v2892 = vld [vmem:[%s1 + $0x74] sm:$0xf]
      %v2893 = vld [vmem:[%s1 + $0x78] sm:$0xf]
      %v2894 = vld [vmem:[%s1 + $0x7c] sm:$0xf]
      %v2895 = vld [vmem:[%s1 + $0x80] sm:$0xf]
      %v2896 = vld [vmem:[%s1 + $0x84] sm:$0xf]
      %v2897 = vld [vmem:[%s1 + $0x88] sm:$0xf]
      %v2898 = vld [vmem:[%s1 + $0x8c] sm:$0xf]
      %v2899 = vld [vmem:[%s1 + $0x90] sm:$0xf]
      %v2900 = vld [vmem:[%s1 + $0x94] sm:$0xf]
      %v2901 = vld [vmem:[%s1 + $0x98] sm:$0xf]
      %v2902 = vld [vmem:[%s1 + $0x9c] sm:$0xf]
      %v2903 = vld [vmem:[%s1 + $0xa0] sm:$0xf]
      %v2904 = vld [vmem:[%s1 + $0xa4] sm:$0xf]
      %v2905 = vld [vmem:[%s1 + $0xa8] sm:$0xf]
      %v2906 = vld [vmem:[%s1 + $0xac] sm:$0xf]
      %v2907 = vld [vmem:[%s1 + $0xb0] sm:$0xf]
      %v2908 = vld [vmem:[%s1 + $0xb4] sm:$0xf]
      %v2909 = vld [vmem:[%s1 + $0xb8] sm:$0xf]
      %v2910 = vld [vmem:[%s1 + $0xbc] sm:$0xf]
      %v2911 = vld [vmem:[%s1 + $0xc0] sm:$0xf]
      %v2912 = vld [vmem:[%s1 + $0xc4] sm:$0xf]
      %v2913 = vld [vmem:[%s1 + $0xc8] sm:$0xf]
      %v2914 = vld [vmem:[%s1 + $0xcc] sm:$0xf]
      %v2915 = vld [vmem:[%s1 + $0xd0] sm:$0xf]
      %v2916 = vld [vmem:[%s1 + $0xd4] sm:$0xf]
      %v2917 = vld [vmem:[%s1 + $0xd8] sm:$0xf]
      %v2918 = vld [vmem:[%s1 + $0xdc] sm:$0xf]
      %v2919 = vld [vmem:[%s1 + $0xe0] sm:$0xf]
      %v2920 = vld [vmem:[%s1 + $0xe4] sm:$0xf]
      %v2921 = vld [vmem:[%s1 + $0xe8] sm:$0xf]
      %v2922 = vld [vmem:[%s1 + $0xec] sm:$0xf]
      %v2923 = vld [vmem:[%s1 + $0xf0] sm:$0xf]
      %v2924 = vld [vmem:[%s1 + $0xf4] sm:$0xf]
      %v2925 = vld [vmem:[%s1 + $0xf8] sm:$0xf]
      %v2926 = vld [vmem:[%s1 + $0xfc] sm:$0xf]
      %v2927 = vld [vmem:[%s1 + $0x100] sm:$0xf]
      %v2928 = vld [vmem:[%s1 + $0x104] sm:$0xf]
      %v2929 = vld [vmem:[%s1 + $0x108] sm:$0xf]
      %v2930 = vld [vmem:[%s1 + $0x10c] sm:$0xf]
      %v2931 = vld [vmem:[%s1 + $0x110] sm:$0xf]
      %v2932 = vld [vmem:[%s1 + $0x114] sm:$0xf]
      %v2933 = vld [vmem:[%s1 + $0x118] sm:$0xf]
      %v2934 = vld [vmem:[%s1 + $0x11c] sm:$0xf]
      %v2935 = vld [vmem:[%s2] sm:$0x1]
      %v2937 = vlaneseq
      %v2938 = vshrl.u32 %v2937, 7
      %v2939 = vsub.s32 0, %v2938
      %v2940 = vrot.slane %v2935, %v2939
      %v3065 = vunpack.c.l.b16 %v2740
      %v3066 = vunpack.c.h.b16 %v2740
      %v3067 = vunpack.c.l.b16 %v2741
      %v3068 = vunpack.c.h.b16 %v2741
      %v3069 = vunpack.c.l.b16 %v2742
      %v3070 = vunpack.c.l.b16 %v2743
      %v3071 = vunpack.c.h.b16 %v2743
      %v3072 = vunpack.c.l.b16 %v2744
      %v3073 = vunpack.c.h.b16 %v2744
      %v3074 = vunpack.c.l.b16 %v2745
      %v3075 = vunpack.c.l.b16 %v2746
      %v3076 = vunpack.c.h.b16 %v2746
      %v3077 = vunpack.c.l.b16 %v2747
      %v3078 = vunpack.c.h.b16 %v2747
      %v3079 = vunpack.c.l.b16 %v2748
      %v3080 = vunpack.c.l.b16 %v2749
      %v3081 = vunpack.c.h.b16 %v2749
      %v3082 = vunpack.c.l.b16 %v2750
      %v3083 = vunpack.c.h.b16 %v2750
      %v3084 = vunpack.c.l.b16 %v2751
      %v3085 = vunpack.c.l.b16 %v2752
      %v3086 = vunpack.c.h.b16 %v2752
      %v3087 = vunpack.c.l.b16 %v2753
      %v3088 = vunpack.c.h.b16 %v2753
      %v3089 = vunpack.c.l.b16 %v2754
      %v3090 = vunpack.c.l.b16 %v2755
      %v3091 = vunpack.c.h.b16 %v2755
      %v3092 = vunpack.c.l.b16 %v2756
      %v3093 = vunpack.c.h.b16 %v2756
      %v3094 = vunpack.c.l.b16 %v2757
      %v3095 = vunpack.c.l.b16 %v2758
      %v3096 = vunpack.c.h.b16 %v2758
      %v3097 = vunpack.c.l.b16 %v2759
      %v3098 = vunpack.c.h.b16 %v2759
      %v3099 = vunpack.c.l.b16 %v2760
      %v3100 = vunpack.c.l.b16 %v2761
      %v3101 = vunpack.c.h.b16 %v2761
      %v3102 = vunpack.c.l.b16 %v2762
      %v3103 = vunpack.c.h.b16 %v2762
      %v3104 = vunpack.c.l.b16 %v2763
      %v3105 = vunpack.c.l.b16 %v2764
      %v3106 = vunpack.c.h.b16 %v2764
      %v3107 = vunpack.c.l.b16 %v2765
      %v3108 = vunpack.c.h.b16 %v2765
      %v3109 = vunpack.c.l.b16 %v2766
      %v3110 = vunpack.c.l.b16 %v2767
      %v3111 = vunpack.c.h.b16 %v2767
      %v3112 = vunpack.c.l.b16 %v2768
      %v3113 = vunpack.c.h.b16 %v2768
      %v3114 = vunpack.c.l.b16 %v2769
      %v3115 = vunpack.c.l.b16 %v2770
      %v3116 = vunpack.c.h.b16 %v2770
      %v3117 = vunpack.c.l.b16 %v2771
      %v3118 = vunpack.c.h.b16 %v2771
      %v3119 = vunpack.c.l.b16 %v2772
      %v3120 = vunpack.c.l.b16 %v2773
      %v3121 = vunpack.c.h.b16 %v2773
      %v3122 = vunpack.c.l.b16 %v2774
      %v3123 = vunpack.c.h.b16 %v2774
      %v3124 = vunpack.c.l.b16 %v2775
      %v3125 = vunpack.c.l.b16 %v2776
      %v3126 = vunpack.c.h.b16 %v2776
      %v3127 = vunpack.c.l.b16 %v2777
      %v3128 = vunpack.c.h.b16 %v2777
      %v3129 = vunpack.c.l.b16 %v2778
      %v3130 = vunpack.c.l.b16 %v2779
      %v3131 = vunpack.c.h.b16 %v2779
      %v3132 = vunpack.c.l.b16 %v2780
      %v3133 = vunpack.c.h.b16 %v2780
      %v3134 = vunpack.c.l.b16 %v2781
      %v3135 = vunpack.c.l.b16 %v2782
      %v3136 = vunpack.c.h.b16 %v2782
      %v3137 = vunpack.c.l.b16 %v2783
      %v3138 = vunpack.c.h.b16 %v2783
      %v3139 = vunpack.c.l.b16 %v2784
      %v3140 = vunpack.c.l.b16 %v2785
      %v3141 = vunpack.c.h.b16 %v2785
      %v3142 = vunpack.c.l.b16 %v2786
      %v3143 = vunpack.c.h.b16 %v2786
      %v3144 = vunpack.c.l.b16 %v2787
      %v3145 = vunpack.c.l.b16 %v2788
      %v3146 = vunpack.c.h.b16 %v2788
      %v3147 = vunpack.c.l.b16 %v2789
      %v3148 = vunpack.c.h.b16 %v2789
      %v3149 = vunpack.c.l.b16 %v2790
      %v3150 = vunpack.c.l.b16 %v2791
      %v3151 = vunpack.c.h.b16 %v2791
      %v3152 = vunpack.c.l.b16 %v2792
      %v3153 = vunpack.c.h.b16 %v2792
      %v3154 = vunpack.c.l.b16 %v2793
      %v3155 = vunpack.c.l.b16 %v2794
      %v3156 = vunpack.c.h.b16 %v2794
      %v3157 = vunpack.c.l.b16 %v2795
      %v3158 = vunpack.c.h.b16 %v2795
      %v3159 = vunpack.c.l.b16 %v2796
      %v3160 = vunpack.c.l.b16 %v2797
      %v3161 = vunpack.c.h.b16 %v2797
      %v3162 = vunpack.c.l.b16 %v2798
      %v3163 = vunpack.c.h.b16 %v2798
      %v3164 = vunpack.c.l.b16 %v2799
      %v3165 = vunpack.c.l.b16 %v2800
      %v3166 = vunpack.c.h.b16 %v2800
      %v3167 = vunpack.c.l.b16 %v2801
      %v3168 = vunpack.c.h.b16 %v2801
      %v3169 = vunpack.c.l.b16 %v2802
      %v3170 = vunpack.c.l.b16 %v2803
      %v3171 = vunpack.c.h.b16 %v2803
      %v3172 = vunpack.c.l.b16 %v2804
      %v3173 = vunpack.c.h.b16 %v2804
      %v3174 = vunpack.c.l.b16 %v2805
      %v3175 = vunpack.c.l.b16 %v2806
      %v3176 = vunpack.c.h.b16 %v2806
      %v3177 = vunpack.c.l.b16 %v2807
      %v3178 = vunpack.c.h.b16 %v2807
      %v3179 = vunpack.c.l.b16 %v2808
      %v3180 = vunpack.c.l.b16 %v2809
      %v3181 = vunpack.c.h.b16 %v2809
      %v3182 = vunpack.c.l.b16 %v2810
      %v3183 = vunpack.c.h.b16 %v2810
      %v3184 = vunpack.c.l.b16 %v2811
      %v3185 = vunpack.c.l.b16 %v2812
      %v3186 = vunpack.c.h.b16 %v2812
      %v3187 = vunpack.c.l.b16 %v2813
      %v3188 = vunpack.c.h.b16 %v2813
      %v3189 = vunpack.c.l.b16 %v2814
      %v3190 = vunpack.c.l.b16 %v2815
      %v3191 = vunpack.c.h.b16 %v2815
      %v3192 = vunpack.c.l.b16 %v2816
      %v3193 = vunpack.c.h.b16 %v2816
      %v3194 = vunpack.c.l.b16 %v2817
      %v3195 = vunpack.c.l.b16 %v2818
      %v3196 = vunpack.c.h.b16 %v2818
      %v3197 = vunpack.c.l.b16 %v2819
      %v3198 = vunpack.c.h.b16 %v2819
      %v3199 = vunpack.c.l.b16 %v2820
      %v3200 = vunpack.c.l.b16 %v2821
      %v3201 = vunpack.c.h.b16 %v2821
      %v3202 = vunpack.c.l.b16 %v2822
      %v3203 = vunpack.c.h.b16 %v2822
      %v3204 = vunpack.c.l.b16 %v2823
      %v3205 = vunpack.c.l.b16 %v2824
      %v3206 = vunpack.c.h.b16 %v2824
      %v3207 = vunpack.c.l.b16 %v2825
      %v3208 = vunpack.c.h.b16 %v2825
      %v3209 = vunpack.c.l.b16 %v2826
      %v3210 = vunpack.c.l.b16 %v2827
      %v3211 = vunpack.c.h.b16 %v2827
      %v3212 = vunpack.c.l.b16 %v2828
      %v3213 = vunpack.c.h.b16 %v2828
      %v3214 = vunpack.c.l.b16 %v2829
      %v3215 = vunpack.c.l.b16 %v2830
      %v3216 = vunpack.c.h.b16 %v2830
      %v3217 = vunpack.c.l.b16 %v2831
      %v3218 = vunpack.c.h.b16 %v2831
      %v3219 = vunpack.c.l.b16 %v2832
      %v3220 = vunpack.c.l.b16 %v2833
      %v3221 = vunpack.c.h.b16 %v2833
      %v3222 = vunpack.c.l.b16 %v2834
      %v3223 = vunpack.c.h.b16 %v2834
      %v3224 = vunpack.c.l.b16 %v2835
      %v3225 = vunpack.c.l.b16 %v2836
      %v3226 = vunpack.c.h.b16 %v2836
      %v3227 = vunpack.c.l.b16 %v2837
      %v3228 = vunpack.c.h.b16 %v2837
      %v3229 = vunpack.c.l.b16 %v2838
      %v3230 = vunpack.c.l.b16 %v2839
      %v3231 = vunpack.c.h.b16 %v2839
      %v3232 = vunpack.c.l.b16 %v2840
      %v3233 = vunpack.c.h.b16 %v2840
      %v3234 = vunpack.c.l.b16 %v2841
      %v3235 = vunpack.c.l.b16 %v2842
      %v3236 = vunpack.c.h.b16 %v2842
      %v3237 = vunpack.c.l.b16 %v2843
      %v3238 = vunpack.c.h.b16 %v2843
      %v3239 = vunpack.c.l.b16 %v2844
      %v3240 = vunpack.c.l.b16 %v2845
      %v3241 = vunpack.c.h.b16 %v2845
      %v3242 = vunpack.c.l.b16 %v2846
      %v3243 = vunpack.c.h.b16 %v2846
      %v3244 = vunpack.c.l.b16 %v2847
      %v3245 = vunpack.c.l.b16 %v2848
      %v3246 = vunpack.c.h.b16 %v2848
      %v3247 = vunpack.c.l.b16 %v2849
      %v3248 = vunpack.c.h.b16 %v2849
      %v3249 = vunpack.c.l.b16 %v2850
      %v3250 = vunpack.c.l.b16 %v2851
      %v3251 = vunpack.c.h.b16 %v2851
      %v3252 = vunpack.c.l.b16 %v2852
      %v3253 = vunpack.c.h.b16 %v2852
      %v3254 = vunpack.c.l.b16 %v2853
      %v3255 = vunpack.c.l.b16 %v2854
      %v3256 = vunpack.c.h.b16 %v2854
      %v3257 = vunpack.c.l.b16 %v2855
      %v3258 = vunpack.c.h.b16 %v2855
      %v3259 = vunpack.c.l.b16 %v2856
      %v3260 = vunpack.c.l.b16 %v2857
      %v3261 = vunpack.c.h.b16 %v2857
      %v3262 = vunpack.c.l.b16 %v2858
      %v3263 = vunpack.c.h.b16 %v2858
      %v3264 = vunpack.c.l.b16 %v2859
      %v3265 = vunpack.c.l.b16 %v2860
      %v3266 = vunpack.c.h.b16 %v2860
      %v3267 = vunpack.c.l.b16 %v2861
      %v3268 = vunpack.c.h.b16 %v2861
      %v3269 = vunpack.c.l.b16 %v2862
      %v3270 = vpack.c.b16 %v3070, %v3065
      %v3271 = vpack.c.b16 %v3071, %v3066
      %v3272 = vpack.c.b16 %v3072, %v3067
      %v3273 = vpack.c.b16 %v3073, %v3068
      %v3274 = vpack.c.b16 %v3074, %v3069
      %v3275 = vpack.c.b16 %v3080, %v3075
      %v3276 = vpack.c.b16 %v3081, %v3076
      %v3277 = vpack.c.b16 %v3082, %v3077
      %v3278 = vpack.c.b16 %v3083, %v3078
      %v3279 = vpack.c.b16 %v3084, %v3079
      %v3280 = vpack.c.b16 %v3090, %v3085
      %v3281 = vpack.c.b16 %v3091, %v3086
      %v3282 = vpack.c.b16 %v3092, %v3087
      %v3283 = vpack.c.b16 %v3093, %v3088
      %v3284 = vpack.c.b16 %v3094, %v3089
      %v3285 = vpack.c.b16 %v3100, %v3095
      %v3286 = vpack.c.b16 %v3101, %v3096
      %v3287 = vpack.c.b16 %v3102, %v3097
      %v3288 = vpack.c.b16 %v3103, %v3098
      %v3289 = vpack.c.b16 %v3104, %v3099
      %v3290 = vpack.c.b16 %v3110, %v3105
      %v3291 = vpack.c.b16 %v3111, %v3106
      %v3292 = vpack.c.b16 %v3112, %v3107
      %v3293 = vpack.c.b16 %v3113, %v3108
      %v3294 = vpack.c.b16 %v3114, %v3109
      %v3295 = vpack.c.b16 %v3120, %v3115
      %v3296 = vpack.c.b16 %v3121, %v3116
      %v3297 = vpack.c.b16 %v3122, %v3117
      %v3298 = vpack.c.b16 %v3123, %v3118
      %v3299 = vpack.c.b16 %v3124, %v3119
      %v3300 = vpack.c.b16 %v3130, %v3125
      %v3301 = vpack.c.b16 %v3131, %v3126
      %v3302 = vpack.c.b16 %v3132, %v3127
      %v3303 = vpack.c.b16 %v3133, %v3128
      %v3304 = vpack.c.b16 %v3134, %v3129
      %v3305 = vpack.c.b16 %v3140, %v3135
      %v3306 = vpack.c.b16 %v3141, %v3136
      %v3307 = vpack.c.b16 %v3142, %v3137
      %v3308 = vpack.c.b16 %v3143, %v3138
      %v3309 = vpack.c.b16 %v3144, %v3139
      %v3310 = vpack.c.b16 %v3150, %v3145
      %v3311 = vpack.c.b16 %v3151, %v3146
      %v3312 = vpack.c.b16 %v3152, %v3147
      %v3313 = vpack.c.b16 %v3153, %v3148
      %v3314 = vpack.c.b16 %v3154, %v3149
      %v3315 = vpack.c.b16 %v3160, %v3155
      %v3316 = vpack.c.b16 %v3161, %v3156
      %v3317 = vpack.c.b16 %v3162, %v3157
      %v3318 = vpack.c.b16 %v3163, %v3158
      %v3319 = vpack.c.b16 %v3164, %v3159
      %v3320 = vpack.c.b16 %v3170, %v3165
      %v3321 = vpack.c.b16 %v3171, %v3166
      %v3322 = vpack.c.b16 %v3172, %v3167
      %v3323 = vpack.c.b16 %v3173, %v3168
      %v3324 = vpack.c.b16 %v3174, %v3169
      %v3325 = vpack.c.b16 %v3180, %v3175
      %v3326 = vpack.c.b16 %v3181, %v3176
      %v3327 = vpack.c.b16 %v3182, %v3177
      %v3328 = vpack.c.b16 %v3183, %v3178
      %v3329 = vpack.c.b16 %v3184, %v3179
      %v3330 = vpack.c.b16 %v3190, %v3185
      %v3331 = vpack.c.b16 %v3191, %v3186
      %v3332 = vpack.c.b16 %v3192, %v3187
      %v3333 = vpack.c.b16 %v3193, %v3188
      %v3334 = vpack.c.b16 %v3194, %v3189
      %v3335 = vpack.c.b16 %v3200, %v3195
      %v3336 = vpack.c.b16 %v3201, %v3196
      %v3337 = vpack.c.b16 %v3202, %v3197
      %v3338 = vpack.c.b16 %v3203, %v3198
      %v3339 = vpack.c.b16 %v3204, %v3199
      %v3340 = vpack.c.b16 %v3210, %v3205
      %v3341 = vpack.c.b16 %v3211, %v3206
      %v3342 = vpack.c.b16 %v3212, %v3207
      %v3343 = vpack.c.b16 %v3213, %v3208
      %v3344 = vpack.c.b16 %v3214, %v3209
      %v3345 = vpack.c.b16 %v3220, %v3215
      %v3346 = vpack.c.b16 %v3221, %v3216
      %v3347 = vpack.c.b16 %v3222, %v3217
      %v3348 = vpack.c.b16 %v3223, %v3218
      %v3349 = vpack.c.b16 %v3224, %v3219
      %v3350 = vpack.c.b16 %v3230, %v3225
      %v3351 = vpack.c.b16 %v3231, %v3226
      %v3352 = vpack.c.b16 %v3232, %v3227
      %v3353 = vpack.c.b16 %v3233, %v3228
      %v3354 = vpack.c.b16 %v3234, %v3229
      %v3355 = vpack.c.b16 %v3240, %v3235
      %v3356 = vpack.c.b16 %v3241, %v3236
      %v3357 = vpack.c.b16 %v3242, %v3237
      %v3358 = vpack.c.b16 %v3243, %v3238
      %v3359 = vpack.c.b16 %v3244, %v3239
      %v3360 = vpack.c.b16 %v3250, %v3245
      %v3361 = vpack.c.b16 %v3251, %v3246
      %v3362 = vpack.c.b16 %v3252, %v3247
      %v3363 = vpack.c.b16 %v3253, %v3248
      %v3364 = vpack.c.b16 %v3254, %v3249
      %v3365 = vpack.c.b16 %v3260, %v3255
      %v3366 = vpack.c.b16 %v3261, %v3256
      %v3367 = vpack.c.b16 %v3262, %v3257
      %v3368 = vpack.c.b16 %v3263, %v3258
      %v3369 = vpack.c.b16 %v3264, %v3259
      %v3370 = vpack.c.b16 %v3265, %v3265
      %v3371 = vpack.c.b16 %v3266, %v3266
      %v3372 = vpack.c.b16 %v3267, %v3267
      %v3373 = vpack.c.b16 %v3268, %v3268
      %v3374 = vpack.c.b16 %v3269, %v3269
      %v3531 = vunpack.c.l.b16 %v2863
      %v3532 = vunpack.c.l.b16 %v2864
      %v3533 = vunpack.c.l.b16 %v2865
      %v3534 = vunpack.c.l.b16 %v2866
      %v3535 = vunpack.c.l.b16 %v2867
      %v3536 = vunpack.c.l.b16 %v2868
      %v3537 = vunpack.c.l.b16 %v2869
      %v3538 = vunpack.c.l.b16 %v2870
      %v3539 = vunpack.c.l.b16 %v2871
      %v3540 = vunpack.c.l.b16 %v2872
      %v3541 = vunpack.c.l.b16 %v2873
      %v3542 = vunpack.c.l.b16 %v2874
      %v3543 = vunpack.c.l.b16 %v2875
      %v3544 = vunpack.c.l.b16 %v2876
      %v3545 = vunpack.c.l.b16 %v2877
      %v3546 = vunpack.c.l.b16 %v2878
      %v3547 = vunpack.c.l.b16 %v2879
      %v3548 = vunpack.c.l.b16 %v2880
      %v3549 = vunpack.c.l.b16 %v2881
      %v3550 = vunpack.c.l.b16 %v2882
      %v3551 = vunpack.c.l.b16 %v2883
      %v3552 = vunpack.c.l.b16 %v2884
      %v3553 = vunpack.c.l.b16 %v2885
      %v3554 = vunpack.c.l.b16 %v2886
      %v3555 = vunpack.c.l.b16 %v2887
      %v3556 = vunpack.c.l.b16 %v2888
      %v3557 = vunpack.c.l.b16 %v2889
      %v3558 = vunpack.c.l.b16 %v2890
      %v3559 = vunpack.c.l.b16 %v2891
      %v3560 = vunpack.c.l.b16 %v2892
      %v3561 = vunpack.c.l.b16 %v2893
      %v3562 = vunpack.c.l.b16 %v2894
      %v3563 = vunpack.c.l.b16 %v2895
      %v3564 = vunpack.c.l.b16 %v2896
      %v3565 = vunpack.c.l.b16 %v2897
      %v3566 = vunpack.c.l.b16 %v2898
      %v3567 = vunpack.c.l.b16 %v2899
      %v3568 = vunpack.c.l.b16 %v2900
      %v3569 = vunpack.c.l.b16 %v2901
      %v3570 = vunpack.c.l.b16 %v2902
      %v3571 = vunpack.c.l.b16 %v2903
      %v3572 = vunpack.c.l.b16 %v2904
      %v3573 = vunpack.c.l.b16 %v2905
      %v3574 = vunpack.c.l.b16 %v2906
      %v3575 = vunpack.c.l.b16 %v2907
      %v3576 = vunpack.c.l.b16 %v2908
      %v3577 = vunpack.c.l.b16 %v2909
      %v3578 = vunpack.c.l.b16 %v2910
      %v3579 = vunpack.c.l.b16 %v2911
      %v3580 = vunpack.c.l.b16 %v2912
      %v3581 = vunpack.c.l.b16 %v2913
      %v3582 = vunpack.c.l.b16 %v2914
      %v3583 = vunpack.c.l.b16 %v2915
      %v3584 = vunpack.c.l.b16 %v2916
      %v3585 = vunpack.c.l.b16 %v2917
      %v3586 = vunpack.c.l.b16 %v2918
      %v3587 = vunpack.c.l.b16 %v2919
      %v3588 = vunpack.c.l.b16 %v2920
      %v3589 = vunpack.c.l.b16 %v2921
      %v3590 = vunpack.c.l.b16 %v2922
      %v3591 = vunpack.c.l.b16 %v2923
      %v3592 = vunpack.c.l.b16 %v2924
      %v3593 = vunpack.c.l.b16 %v2925
      %v3594 = vunpack.c.l.b16 %v2926
      %v3595 = vunpack.c.l.b16 %v2927
      %v3596 = vunpack.c.l.b16 %v2928
      %v3597 = vunpack.c.l.b16 %v2929
      %v3598 = vunpack.c.l.b16 %v2930
      %v3599 = vunpack.c.l.b16 %v2931
      %v3600 = vunpack.c.l.b16 %v2932
      %v3601 = vunpack.c.l.b16 %v2933
      %v3602 = vunpack.c.l.b16 %v2934
      %v3603 = vpack.c.b16 %v3532, %v3531
      %v3604 = vpack.c.b16 %v3534, %v3533
      %v3605 = vpack.c.b16 %v3536, %v3535
      %v3606 = vpack.c.b16 %v3538, %v3537
      %v3607 = vpack.c.b16 %v3540, %v3539
      %v3608 = vpack.c.b16 %v3542, %v3541
      %v3609 = vpack.c.b16 %v3544, %v3543
      %v3610 = vpack.c.b16 %v3546, %v3545
      %v3611 = vpack.c.b16 %v3548, %v3547
      %v3612 = vpack.c.b16 %v3550, %v3549
      %v3613 = vpack.c.b16 %v3552, %v3551
      %v3614 = vpack.c.b16 %v3554, %v3553
      %v3615 = vpack.c.b16 %v3556, %v3555
      %v3616 = vpack.c.b16 %v3558, %v3557
      %v3617 = vpack.c.b16 %v3560, %v3559
      %v3618 = vpack.c.b16 %v3562, %v3561
      %v3619 = vpack.c.b16 %v3564, %v3563
      %v3620 = vpack.c.b16 %v3566, %v3565
      %v3621 = vpack.c.b16 %v3568, %v3567
      %v3622 = vpack.c.b16 %v3570, %v3569
      %v3623 = vpack.c.b16 %v3572, %v3571
      %v3624 = vpack.c.b16 %v3574, %v3573
      %v3625 = vpack.c.b16 %v3576, %v3575
      %v3626 = vpack.c.b16 %v3578, %v3577
      %v3627 = vpack.c.b16 %v3580, %v3579
      %v3628 = vpack.c.b16 %v3582, %v3581
      %v3629 = vpack.c.b16 %v3584, %v3583
      %v3630 = vpack.c.b16 %v3586, %v3585
      %v3631 = vpack.c.b16 %v3588, %v3587
      %v3632 = vpack.c.b16 %v3590, %v3589
      %v3633 = vpack.c.b16 %v3592, %v3591
      %v3634 = vpack.c.b16 %v3594, %v3593
      %v3635 = vpack.c.b16 %v3596, %v3595
      %v3636 = vpack.c.b16 %v3598, %v3597
      %v3637 = vpack.c.b16 %v3600, %v3599
      %v3638 = vpack.c.b16 %v3602, %v3601
      %vm3675 = vcmask 523264
      %v3677 = vsel %vm3675, %v3274, 0
      %v3680 = vsel %vm3675, %v3279, 0
      %v3683 = vsel %vm3675, %v3284, 0
      %v3686 = vsel %vm3675, %v3289, 0
      %v3689 = vsel %vm3675, %v3294, 0
      %v3692 = vsel %vm3675, %v3299, 0
      %v3695 = vsel %vm3675, %v3304, 0
      %v3698 = vsel %vm3675, %v3309, 0
      %v3701 = vsel %vm3675, %v3314, 0
      %v3704 = vsel %vm3675, %v3319, 0
      %v3707 = vsel %vm3675, %v3324, 0
      %v3710 = vsel %vm3675, %v3329, 0
      %v3713 = vsel %vm3675, %v3334, 0
      %v3716 = vsel %vm3675, %v3339, 0
      %v3719 = vsel %vm3675, %v3344, 0
      %v3722 = vsel %vm3675, %v3349, 0
      %v3725 = vsel %vm3675, %v3354, 0
      %v3728 = vsel %vm3675, %v3359, 0
      %v3731 = vsel %vm3675, %v3364, 0
      %v3734 = vsel %vm3675, %v3369, 0
      %v3737 = vsel %vm3675, %v3374, 0
      %3739 = vmatprep.subr.bf16.mxu0 0
      %3740 = vmatpush1.bf16.msra.mxu0 %v3603
      %3741 = vmatprep.subr.bf16.mxu0 0
      %3742 = vmatpush1.bf16.msra.mxu0 %v3604
      %3743 = vmatprep.subr.bf16.mxu0 0
      %3744 = vmatpush1.bf16.msra.mxu0 %v3605
      %3745 = vmatprep.subr.bf16.mxu0 0
      %3746 = vmatpush1.bf16.msra.mxu0 %v3606
      %3747 = vmatprep.subr.bf16.mxu0 0
      %3748 = vmatpush1.bf16.msra.mxu0 %v3607
      %3749 = vmatprep.subr.bf16.mxu0 0
      %3750 = vmatpush1.bf16.msra.mxu0 %v3608
      %3751 = vmatprep.subr.bf16.mxu0 0
      %3752 = vmatpush1.bf16.msra.mxu0 %v3609
      %3753 = vmatprep.subr.bf16.mxu0 0
      %3754 = vmatpush1.bf16.msra.mxu0 %v3610
      %3755 = vmatprep.subr.bf16.mxu0 0
      %3756 = vmatpush1.bf16.msra.mxu0 %v3611
      %3757 = vmatprep.subr.bf16.mxu0 0
      %3758 = vmatpush1.bf16.msra.mxu0 %v3612
      %3759 = vmatprep.subr.bf16.mxu0 0
      %3760 = vmatpush1.bf16.msra.mxu0 %v3613
      %3761 = vmatprep.subr.bf16.mxu0 0
      %3762 = vmatpush1.bf16.msra.mxu0 %v3614
      %3763 = vmatprep.subr.bf16.mxu0 0
      %3764 = vmatpush1.bf16.msra.mxu0 %v3615
      %3765 = vmatprep.subr.bf16.mxu0 0
      %3766 = vmatpush1.bf16.msra.mxu0 %v3616
      %3767 = vmatprep.subr.bf16.mxu0 0
      %3768 = vmatpush1.bf16.msra.mxu0 %v3617
      %3769 = vmatprep.subr.bf16.mxu0 0
      %3770 = vmatpush1.bf16.msra.mxu0 %v3618
      %3771 = vmatprep.mubr.bf16.mxu0 %v3271
      %3772 = vmatmul.mubr.bf16.gmra.mrb[0].mxu0 %v3270
      %v3773 = vpop.f32.mrb[0].mxu0
      %v3774 = vadd.f32 %v2940, %v3773
      %v3775 = vpop.f32.mrb[0].mxu0
      %v3776 = vpop.f32.mrb[0].mxu0
      %v3777 = vadd.f32 %v2940, %v3776
      %v3778 = vpop.f32.mrb[0].mxu0
      %3779 = vmatprep.mubr.bf16.mxu0 %v3276
      %3780 = vmatmul.mubr.bf16.gmra.mrb[0].mxu0 %v3275
      %v3781 = vpop.f32.mrb[0].mxu0
      %v3782 = vadd.f32 %v2940, %v3781
      %v3783 = vpop.f32.mrb[0].mxu0
      %v3784 = vpop.f32.mrb[0].mxu0
      %v3785 = vadd.f32 %v2940, %v3784
      %v3786 = vpop.f32.mrb[0].mxu0
      %3787 = vmatprep.mubr.bf16.mxu0 %v3281
      %3788 = vmatmul.mubr.bf16.gmra.mrb[0].mxu0 %v3280
      %v3789 = vpop.f32.mrb[0].mxu0
      %v3790 = vadd.f32 %v2940, %v3789
      %v3791 = vpop.f32.mrb[0].mxu0
      %v3792 = vpop.f32.mrb[0].mxu0
      %v3793 = vadd.f32 %v2940, %v3792
      %v3794 = vpop.f32.mrb[0].mxu0
      %3795 = vmatprep.mubr.bf16.mxu0 %v3286
      %3796 = vmatmul.mubr.bf16.gmra.mrb[0].mxu0 %v3285
      %v3797 = vpop.f32.mrb[0].mxu0
      %v3798 = vadd.f32 %v2940, %v3797
      %v3799 = vpop.f32.mrb[0].mxu0
      %v3800 = vpop.f32.mrb[0].mxu0
      %v3801 = vadd.f32 %v2940, %v3800
      %v3802 = vpop.f32.mrb[0].mxu0
      %3803 = vmatprep.mubr.bf16.mxu0 %v3291
      %3804 = vmatmul.mubr.bf16.gmra.mrb[0].mxu0 %v3290
      %v3805 = vpop.f32.mrb[0].mxu0
      %v3806 = vadd.f32 %v2940, %v3805
      %v3807 = vpop.f32.mrb[0].mxu0
      %v3808 = vpop.f32.mrb[0].mxu0
      %v3809 = vadd.f32 %v2940, %v3808
      %v3810 = vpop.f32.mrb[0].mxu0
      %3811 = vmatprep.mubr.bf16.mxu0 %v3296
      %3812 = vmatmul.mubr.bf16.gmra.mrb[0].mxu0 %v3295
      %v3813 = vpop.f32.mrb[0].mxu0
      %v3814 = vadd.f32 %v2940, %v3813
      %v3815 = vpop.f32.mrb[0].mxu0
      %v3816 = vpop.f32.mrb[0].mxu0
      %v3817 = vadd.f32 %v2940, %v3816
      %v3818 = vpop.f32.mrb[0].mxu0
      %3819 = vmatprep.mubr.bf16.mxu0 %v3301
      %3820 = vmatmul.mubr.bf16.gmra.mrb[0].mxu0 %v3300
      %v3821 = vpop.f32.mrb[0].mxu0
      %v3822 = vadd.f32 %v2940, %v3821
      %v3823 = vpop.f32.mrb[0].mxu0
      %v3824 = vpop.f32.mrb[0].mxu0
      %v3825 = vadd.f32 %v2940, %v3824
      %v3826 = vpop.f32.mrb[0].mxu0
      %3827 = vmatprep.mubr.bf16.mxu0 %v3306
      %3828 = vmatmul.mubr.bf16.gmra.mrb[0].mxu0 %v3305
      %v3829 = vpop.f32.mrb[0].mxu0
      %v3830 = vadd.f32 %v2940, %v3829
      %v3831 = vpop.f32.mrb[0].mxu0
      %v3832 = vpop.f32.mrb[0].mxu0
      %v3833 = vadd.f32 %v2940, %v3832
      %v3834 = vpop.f32.mrb[0].mxu0
      %3835 = vmatprep.mubr.bf16.mxu0 %v3311
      %3836 = vmatmul.mubr.bf16.gmra.mrb[0].mxu0 %v3310
      %v3837 = vpop.f32.mrb[0].mxu0
      %v3838 = vadd.f32 %v2940, %v3837
      %v3839 = vpop.f32.mrb[0].mxu0
      %v3840 = vpop.f32.mrb[0].mxu0
      %v3841 = vadd.f32 %v2940, %v3840
      %v3842 = vpop.f32.mrb[0].mxu0
      %3843 = vmatprep.mubr.bf16.mxu0 %v3316
      %3844 = vmatmul.mubr.bf16.gmra.mrb[0].mxu0 %v3315
      %v3845 = vpop.f32.mrb[0].mxu0
      %v3846 = vadd.f32 %v2940, %v3845
      %v3847 = vpop.f32.mrb[0].mxu0
      %v3848 = vpop.f32.mrb[0].mxu0
      %v3849 = vadd.f32 %v2940, %v3848
      %v3850 = vpop.f32.mrb[0].mxu0
      %3851 = vmatprep.mubr.bf16.mxu0 %v3321
      %3852 = vmatmul.mubr.bf16.gmra.mrb[0].mxu0 %v3320
      %v3853 = vpop.f32.mrb[0].mxu0
      %v3854 = vadd.f32 %v2940, %v3853
      %v3855 = vpop.f32.mrb[0].mxu0
      %v3856 = vpop.f32.mrb[0].mxu0
      %v3857 = vadd.f32 %v2940, %v3856
      %v3858 = vpop.f32.mrb[0].mxu0
      %3859 = vmatprep.mubr.bf16.mxu0 %v3326
      %3860 = vmatmul.mubr.bf16.gmra.mrb[0].mxu0 %v3325
      %v3861 = vpop.f32.mrb[0].mxu0
      %v3862 = vadd.f32 %v2940, %v3861
      %v3863 = vpop.f32.mrb[0].mxu0
      %v3864 = vpop.f32.mrb[0].mxu0
      %v3865 = vadd.f32 %v2940, %v3864
      %v3866 = vpop.f32.mrb[0].mxu0
      %3867 = vmatprep.mubr.bf16.mxu0 %v3331
      %3868 = vmatmul.mubr.bf16.gmra.mrb[0].mxu0 %v3330
      %v3869 = vpop.f32.mrb[0].mxu0
      %v3870 = vadd.f32 %v2940, %v3869
      %v3871 = vpop.f32.mrb[0].mxu0
      %v3872 = vpop.f32.mrb[0].mxu0
      %v3873 = vadd.f32 %v2940, %v3872
      %v3874 = vpop.f32.mrb[0].mxu0
      %3875 = vmatprep.mubr.bf16.mxu0 %v3336
      %3876 = vmatmul.mubr.bf16.gmra.mrb[0].mxu0 %v3335
      %v3877 = vpop.f32.mrb[0].mxu0
      %v3878 = vadd.f32 %v2940, %v3877
      %v3879 = vpop.f32.mrb[0].mxu0
      %v3880 = vpop.f32.mrb[0].mxu0
      %v3881 = vadd.f32 %v2940, %v3880
      %v3882 = vpop.f32.mrb[0].mxu0
      %3883 = vmatprep.mubr.bf16.mxu0 %v3341
      %3884 = vmatmul.mubr.bf16.gmra.mrb[0].mxu0 %v3340
      %v3885 = vpop.f32.mrb[0].mxu0
      %v3886 = vadd.f32 %v2940, %v3885
      %v3887 = vpop.f32.mrb[0].mxu0
      %v3888 = vpop.f32.mrb[0].mxu0
      %v3889 = vadd.f32 %v2940, %v3888
      %v3890 = vpop.f32.mrb[0].mxu0
      %3891 = vmatprep.mubr.bf16.mxu0 %v3346
      %3892 = vmatmul.mubr.bf16.gmra.mrb[0].mxu0 %v3345
      %v3893 = vpop.f32.mrb[0].mxu0
      %v3894 = vadd.f32 %v2940, %v3893
      %v3895 = vpop.f32.mrb[0].mxu0
      %v3896 = vpop.f32.mrb[0].mxu0
      %v3897 = vadd.f32 %v2940, %v3896
      %v3898 = vpop.f32.mrb[0].mxu0
      %3899 = vmatprep.mubr.bf16.mxu0 %v3351
      %3900 = vmatmul.mubr.bf16.gmra.mrb[0].mxu0 %v3350
      %v3901 = vpop.f32.mrb[0].mxu0
      %v3902 = vadd.f32 %v2940, %v3901
      %v3903 = vpop.f32.mrb[0].mxu0
      %v3904 = vpop.f32.mrb[0].mxu0
      %v3905 = vadd.f32 %v2940, %v3904
      %v3906 = vpop.f32.mrb[0].mxu0
      %3907 = vmatprep.mubr.bf16.mxu0 %v3356
      %3908 = vmatmul.mubr.bf16.gmra.mrb[0].mxu0 %v3355
      %v3909 = vpop.f32.mrb[0].mxu0
      %v3910 = vadd.f32 %v2940, %v3909
      %v3911 = vpop.f32.mrb[0].mxu0
      %v3912 = vpop.f32.mrb[0].mxu0
      %v3913 = vadd.f32 %v2940, %v3912
      %v3914 = vpop.f32.mrb[0].mxu0
      %3915 = vmatprep.mubr.bf16.mxu0 %v3361
      %3916 = vmatmul.mubr.bf16.gmra.mrb[0].mxu0 %v3360
      %v3917 = vpop.f32.mrb[0].mxu0
      %v3918 = vadd.f32 %v2940, %v3917
      %v3919 = vpop.f32.mrb[0].mxu0
      %v3920 = vpop.f32.mrb[0].mxu0
      %v3921 = vadd.f32 %v2940, %v3920
      %v3922 = vpop.f32.mrb[0].mxu0
      %3923 = vmatprep.mubr.bf16.mxu0 %v3366
      %3924 = vmatmul.mubr.bf16.gmra.mrb[0].mxu0 %v3365
      %v3925 = vpop.f32.mrb[0].mxu0
      %v3926 = vadd.f32 %v2940, %v3925
      %v3927 = vpop.f32.mrb[0].mxu0
      %v3928 = vpop.f32.mrb[0].mxu0
      %v3929 = vadd.f32 %v2940, %v3928
      %v3930 = vpop.f32.mrb[0].mxu0
      %3931 = vmatprep.mubr.bf16.mxu0 %v3371
      %3932 = vmatmul.mubr.bf16.gmra.mrb[0].mxu0 %v3370
      %v3933 = vpop.f32.mrb[0].mxu0
      %v3934 = vadd.f32 %v2940, %v3933
      %v3935 = vpop.f32.mrb[0].mxu0
      %v3936 = vpop.f32.mrb[0].mxu0
      %v3937 = vpop.f32.mrb[0].mxu0
      %3938 = vdwg.mxu0
      %3939 = vmatprep.subr.bf16.mxu0 0
      %3940 = vmatpush1.bf16.msra.mxu0 %v3619
      %3941 = vmatprep.subr.bf16.mxu0 0
      %3942 = vmatpush1.bf16.msra.mxu0 %v3620
      %3943 = vmatprep.subr.bf16.mxu0 0
      %3944 = vmatpush1.bf16.msra.mxu0 %v3621
      %3945 = vmatprep.subr.bf16.mxu0 0
      %3946 = vmatpush1.bf16.msra.mxu0 %v3622
      %3947 = vmatprep.subr.bf16.mxu0 0
      %3948 = vmatpush1.bf16.msra.mxu0 %v3623
      %3949 = vmatprep.subr.bf16.mxu0 0
      %3950 = vmatpush1.bf16.msra.mxu0 %v3624
      %3951 = vmatprep.subr.bf16.mxu0 0
      %3952 = vmatpush1.bf16.msra.mxu0 %v3625
      %3953 = vmatprep.subr.bf16.mxu0 0
      %3954 = vmatpush1.bf16.msra.mxu0 %v3626
      %3955 = vmatprep.subr.bf16.mxu0 0
      %3956 = vmatpush1.bf16.msra.mxu0 %v3627
      %3957 = vmatprep.subr.bf16.mxu0 0
      %3958 = vmatpush1.bf16.msra.mxu0 %v3628
      %3959 = vmatprep.subr.bf16.mxu0 0
      %3960 = vmatpush1.bf16.msra.mxu0 %v3629
      %3961 = vmatprep.subr.bf16.mxu0 0
      %3962 = vmatpush1.bf16.msra.mxu0 %v3630
      %3963 = vmatprep.subr.bf16.mxu0 0
      %3964 = vmatpush1.bf16.msra.mxu0 %v3631
      %3965 = vmatprep.subr.bf16.mxu0 0
      %3966 = vmatpush1.bf16.msra.mxu0 %v3632
      %3967 = vmatprep.subr.bf16.mxu0 0
      %3968 = vmatpush1.bf16.msra.mxu0 %v3633
      %3969 = vmatprep.subr.bf16.mxu0 0
      %3970 = vmatpush1.bf16.msra.mxu0 %v3634
      %3971 = vmatprep.mubr.bf16.mxu0 %v3273
      %3972 = vmatmul.mubr.bf16.gmra.mrb[0].mxu0 %v3272
      %v3973 = vpop.f32.mrb[0].mxu0
      %v3974 = vadd.f32 %v3774, %v3973
      %v3975 = vpop.f32.mrb[0].mxu0
      %v3976 = vpop.f32.mrb[0].mxu0
      %v3977 = vadd.f32 %v3777, %v3976
      %v3978 = vpop.f32.mrb[0].mxu0
      %3979 = vmatprep.mubr.bf16.mxu0 %v3278
      %3980 = vmatmul.mubr.bf16.gmra.mrb[0].mxu0 %v3277
      %v3981 = vpop.f32.mrb[0].mxu0
      %v3982 = vadd.f32 %v3782, %v3981
      %v3983 = vpop.f32.mrb[0].mxu0
      %v3984 = vpop.f32.mrb[0].mxu0
      %v3985 = vadd.f32 %v3785, %v3984
      %v3986 = vpop.f32.mrb[0].mxu0
      %3987 = vmatprep.mubr.bf16.mxu0 %v3283
      %3988 = vmatmul.mubr.bf16.gmra.mrb[0].mxu0 %v3282
      %v3989 = vpop.f32.mrb[0].mxu0
      %v3990 = vadd.f32 %v3790, %v3989
      %v3991 = vpop.f32.mrb[0].mxu0
      %v3992 = vpop.f32.mrb[0].mxu0
      %v3993 = vadd.f32 %v3793, %v3992
      %v3994 = vpop.f32.mrb[0].mxu0
      %3995 = vmatprep.mubr.bf16.mxu0 %v3288
      %3996 = vmatmul.mubr.bf16.gmra.mrb[0].mxu0 %v3287
      %v3997 = vpop.f32.mrb[0].mxu0
      %v3998 = vadd.f32 %v3798, %v3997
      %v3999 = vpop.f32.mrb[0].mxu0
      %v4000 = vpop.f32.mrb[0].mxu0
      %v4001 = vadd.f32 %v3801, %v4000
      %v4002 = vpop.f32.mrb[0].mxu0
      %4003 = vmatprep.mubr.bf16.mxu0 %v3293
      %4004 = vmatmul.mubr.bf16.gmra.mrb[0].mxu0 %v3292
      %v4005 = vpop.f32.mrb[0].mxu0
      %v4006 = vadd.f32 %v3806, %v4005
      %v4007 = vpop.f32.mrb[0].mxu0
      %v4008 = vpop.f32.mrb[0].mxu0
      %v4009 = vadd.f32 %v3809, %v4008
      %v4010 = vpop.f32.mrb[0].mxu0
      %4011 = vmatprep.mubr.bf16.mxu0 %v3298
      %4012 = vmatmul.mubr.bf16.gmra.mrb[0].mxu0 %v3297
      %v4013 = vpop.f32.mrb[0].mxu0
      %v4014 = vadd.f32 %v3814, %v4013
      %v4015 = vpop.f32.mrb[0].mxu0
      %v4016 = vpop.f32.mrb[0].mxu0
      %v4017 = vadd.f32 %v3817, %v4016
      %v4018 = vpop.f32.mrb[0].mxu0
      %4019 = vmatprep.mubr.bf16.mxu0 %v3303
      %4020 = vmatmul.mubr.bf16.gmra.mrb[0].mxu0 %v3302
      %v4021 = vpop.f32.mrb[0].mxu0
      %v4022 = vadd.f32 %v3822, %v4021
      %v4023 = vpop.f32.mrb[0].mxu0
      %v4024 = vpop.f32.mrb[0].mxu0
      %v4025 = vadd.f32 %v3825, %v4024
      %v4026 = vpop.f32.mrb[0].mxu0
      %4027 = vmatprep.mubr.bf16.mxu0 %v3308
      %4028 = vmatmul.mubr.bf16.gmra.mrb[0].mxu0 %v3307
      %v4029 = vpop.f32.mrb[0].mxu0
      %v4030 = vadd.f32 %v3830, %v4029
      %v4031 = vpop.f32.mrb[0].mxu0
      %v4032 = vpop.f32.mrb[0].mxu0
      %v4033 = vadd.f32 %v3833, %v4032
      %v4034 = vpop.f32.mrb[0].mxu0
      %4035 = vmatprep.mubr.bf16.mxu0 %v3313
      %4036 = vmatmul.mubr.bf16.gmra.mrb[0].mxu0 %v3312
      %v4037 = vpop.f32.mrb[0].mxu0
      %v4038 = vadd.f32 %v3838, %v4037
      %v4039 = vpop.f32.mrb[0].mxu0
      %v4040 = vpop.f32.mrb[0].mxu0
      %v4041 = vadd.f32 %v3841, %v4040
      %v4042 = vpop.f32.mrb[0].mxu0
      %4043 = vmatprep.mubr.bf16.mxu0 %v3318
      %4044 = vmatmul.mubr.bf16.gmra.mrb[0].mxu0 %v3317
      %v4045 = vpop.f32.mrb[0].mxu0
      %v4046 = vadd.f32 %v3846, %v4045
      %v4047 = vpop.f32.mrb[0].mxu0
      %v4048 = vpop.f32.mrb[0].mxu0
      %v4049 = vadd.f32 %v3849, %v4048
      %v4050 = vpop.f32.mrb[0].mxu0
      %4051 = vmatprep.mubr.bf16.mxu0 %v3323
      %4052 = vmatmul.mubr.bf16.gmra.mrb[0].mxu0 %v3322
      %v4053 = vpop.f32.mrb[0].mxu0
      %v4054 = vadd.f32 %v3854, %v4053
      %v4055 = vpop.f32.mrb[0].mxu0
      %v4056 = vpop.f32.mrb[0].mxu0
      %v4057 = vadd.f32 %v3857, %v4056
      %v4058 = vpop.f32.mrb[0].mxu0
      %4059 = vmatprep.mubr.bf16.mxu0 %v3328
      %4060 = vmatmul.mubr.bf16.gmra.mrb[0].mxu0 %v3327
      %v4061 = vpop.f32.mrb[0].mxu0
      %v4062 = vadd.f32 %v3862, %v4061
      %v4063 = vpop.f32.mrb[0].mxu0
      %v4064 = vpop.f32.mrb[0].mxu0
      %v4065 = vadd.f32 %v3865, %v4064
      %v4066 = vpop.f32.mrb[0].mxu0
      %4067 = vmatprep.mubr.bf16.mxu0 %v3333
      %4068 = vmatmul.mubr.bf16.gmra.mrb[0].mxu0 %v3332
      %v4069 = vpop.f32.mrb[0].mxu0
      %v4070 = vadd.f32 %v3870, %v4069
      %v4071 = vpop.f32.mrb[0].mxu0
      %v4072 = vpop.f32.mrb[0].mxu0
      %v4073 = vadd.f32 %v3873, %v4072
      %v4074 = vpop.f32.mrb[0].mxu0
      %4075 = vmatprep.mubr.bf16.mxu0 %v3338
      %4076 = vmatmul.mubr.bf16.gmra.mrb[0].mxu0 %v3337
      %v4077 = vpop.f32.mrb[0].mxu0
      %v4078 = vadd.f32 %v3878, %v4077
      %v4079 = vpop.f32.mrb[0].mxu0
      %v4080 = vpop.f32.mrb[0].mxu0
      %v4081 = vadd.f32 %v3881, %v4080
      %v4082 = vpop.f32.mrb[0].mxu0
      %4083 = vmatprep.mubr.bf16.mxu0 %v3343
      %4084 = vmatmul.mubr.bf16.gmra.mrb[0].mxu0 %v3342
      %v4085 = vpop.f32.mrb[0].mxu0
      %v4086 = vadd.f32 %v3886, %v4085
      %v4087 = vpop.f32.mrb[0].mxu0
      %v4088 = vpop.f32.mrb[0].mxu0
      %v4089 = vadd.f32 %v3889, %v4088
      %v4090 = vpop.f32.mrb[0].mxu0
      %4091 = vmatprep.mubr.bf16.mxu0 %v3348
      %4092 = vmatmul.mubr.bf16.gmra.mrb[0].mxu0 %v3347
      %v4093 = vpop.f32.mrb[0].mxu0
      %v4094 = vadd.f32 %v3894, %v4093
      %v4095 = vpop.f32.mrb[0].mxu0
      %v4096 = vpop.f32.mrb[0].mxu0
      %v4097 = vadd.f32 %v3897, %v4096
      %v4098 = vpop.f32.mrb[0].mxu0
      %4099 = vmatprep.mubr.bf16.mxu0 %v3353
      %4100 = vmatmul.mubr.bf16.gmra.mrb[0].mxu0 %v3352
      %v4101 = vpop.f32.mrb[0].mxu0
      %v4102 = vadd.f32 %v3902, %v4101
      %v4103 = vpop.f32.mrb[0].mxu0
      %v4104 = vpop.f32.mrb[0].mxu0
      %v4105 = vadd.f32 %v3905, %v4104
      %v4106 = vpop.f32.mrb[0].mxu0
      %4107 = vmatprep.mubr.bf16.mxu0 %v3358
      %4108 = vmatmul.mubr.bf16.gmra.mrb[0].mxu0 %v3357
      %v4109 = vpop.f32.mrb[0].mxu0
      %v4110 = vadd.f32 %v3910, %v4109
      %v4111 = vpop.f32.mrb[0].mxu0
      %v4112 = vpop.f32.mrb[0].mxu0
      %v4113 = vadd.f32 %v3913, %v4112
      %v4114 = vpop.f32.mrb[0].mxu0
      %4115 = vmatprep.mubr.bf16.mxu0 %v3363
      %4116 = vmatmul.mubr.bf16.gmra.mrb[0].mxu0 %v3362
      %v4117 = vpop.f32.mrb[0].mxu0
      %v4118 = vadd.f32 %v3918, %v4117
      %v4119 = vpop.f32.mrb[0].mxu0
      %v4120 = vpop.f32.mrb[0].mxu0
      %v4121 = vadd.f32 %v3921, %v4120
      %v4122 = vpop.f32.mrb[0].mxu0
      %4123 = vmatprep.mubr.bf16.mxu0 %v3368
      %4124 = vmatmul.mubr.bf16.gmra.mrb[0].mxu0 %v3367
      %v4125 = vpop.f32.mrb[0].mxu0
      %v4126 = vadd.f32 %v3926, %v4125
      %v4127 = vpop.f32.mrb[0].mxu0
      %v4128 = vpop.f32.mrb[0].mxu0
      %v4129 = vadd.f32 %v3929, %v4128
      %v4130 = vpop.f32.mrb[0].mxu0
      %4131 = vmatprep.mubr.bf16.mxu0 %v3373
      %4132 = vmatmul.mubr.bf16.gmra.mrb[0].mxu0 %v3372
      %v4133 = vpop.f32.mrb[0].mxu0
      %v4134 = vadd.f32 %v3934, %v4133
      %v4135 = vpop.f32.mrb[0].mxu0
      %v4136 = vpop.f32.mrb[0].mxu0
      %v4137 = vpop.f32.mrb[0].mxu0
      %4138 = vdwg.mxu0
      %4139 = vmatprep.subr.bf16.mxu0 0
      %4140 = vmatpush1.bf16.msra.mxu0 %v3635
      %4141 = vmatprep.subr.bf16.mxu0 0
      %4142 = vmatpush1.bf16.msra.mxu0 %v3636
      %4143 = vmatprep.subr.bf16.mxu0 0
      %4144 = vmatpush1.bf16.msra.mxu0 %v3637
      %4145 = vmatprep.subr.bf16.mxu0 0
      %4146 = vmatpush1.bf16.msra.mxu0 %v3638
      %4147 = vmatprep.subr.bf16.mxu0 0
      %4148 = vmatpush1.bf16.msra.mxu0 0
      %4149 = vmatprep.subr.bf16.mxu0 0
      %4150 = vmatpush1.bf16.msra.mxu0 0
      %4151 = vmatprep.subr.bf16.mxu0 0
      %4152 = vmatpush1.bf16.msra.mxu0 0
      %4153 = vmatprep.subr.bf16.mxu0 0
      %4154 = vmatpush1.bf16.msra.mxu0 0
      %4155 = vmatprep.subr.bf16.mxu0 0
      %4156 = vmatpush1.bf16.msra.mxu0 0
      %4157 = vmatprep.subr.bf16.mxu0 0
      %4158 = vmatpush1.bf16.msra.mxu0 0
      %4159 = vmatprep.subr.bf16.mxu0 0
      %4160 = vmatpush1.bf16.msra.mxu0 0
      %4161 = vmatprep.subr.bf16.mxu0 0
      %4162 = vmatpush1.bf16.msra.mxu0 0
      %4163 = vmatprep.subr.bf16.mxu0 0
      %4164 = vmatpush1.bf16.msra.mxu0 0
      %4165 = vmatprep.subr.bf16.mxu0 0
      %4166 = vmatpush1.bf16.msra.mxu0 0
      %4167 = vmatprep.subr.bf16.mxu0 0
      %4168 = vmatpush1.bf16.msra.mxu0 0
      %4169 = vmatprep.subr.bf16.mxu0 0
      %4170 = vmatpush1.bf16.msra.mxu0 0
      %4171 = vmatprep.mubr.bf16.mxu0 0
      %4172 = vmatmul.mubr.bf16.gmra.mrb[0].mxu0 %v3677
      %v4173 = vpop.f32.mrb[0].mxu0
      %v4174 = vadd.f32 %v3974, %v4173
      %v4175 = vpop.f32.mrb[0].mxu0
      %v4176 = vpop.f32.mrb[0].mxu0
      %v4177 = vadd.f32 %v3977, %v4176
      %v4178 = vpop.f32.mrb[0].mxu0
      %4179 = vmatprep.mubr.bf16.mxu0 0
      %4180 = vmatmul.mubr.bf16.gmra.mrb[0].mxu0 %v3680
      %v4181 = vpop.f32.mrb[0].mxu0
      %v4182 = vadd.f32 %v3982, %v4181
      %v4183 = vpop.f32.mrb[0].mxu0
      %v4184 = vpop.f32.mrb[0].mxu0
      %v4185 = vadd.f32 %v3985, %v4184
      %v4186 = vpop.f32.mrb[0].mxu0
      %4187 = vmatprep.mubr.bf16.mxu0 0
      %4188 = vmatmul.mubr.bf16.gmra.mrb[0].mxu0 %v3683
      %v4189 = vpop.f32.mrb[0].mxu0
      %v4190 = vadd.f32 %v3990, %v4189
      %v4191 = vpop.f32.mrb[0].mxu0
      %v4192 = vpop.f32.mrb[0].mxu0
      %v4193 = vadd.f32 %v3993, %v4192
      %v4194 = vpop.f32.mrb[0].mxu0
      %4195 = vmatprep.mubr.bf16.mxu0 0
      %4196 = vmatmul.mubr.bf16.gmra.mrb[0].mxu0 %v3686
      %v4197 = vpop.f32.mrb[0].mxu0
      %v4198 = vadd.f32 %v3998, %v4197
      %v4199 = vpop.f32.mrb[0].mxu0
      %v4200 = vpop.f32.mrb[0].mxu0
      %v4201 = vadd.f32 %v4001, %v4200
      %v4202 = vpop.f32.mrb[0].mxu0
      %4203 = vmatprep.mubr.bf16.mxu0 0
      %4204 = vmatmul.mubr.bf16.gmra.mrb[0].mxu0 %v3689
      %v4205 = vpop.f32.mrb[0].mxu0
      %v4206 = vadd.f32 %v4006, %v4205
      %v4207 = vpop.f32.mrb[0].mxu0
      %v4208 = vpop.f32.mrb[0].mxu0
      %v4209 = vadd.f32 %v4009, %v4208
      %v4210 = vpop.f32.mrb[0].mxu0
      %4211 = vmatprep.mubr.bf16.mxu0 0
      %4212 = vmatmul.mubr.bf16.gmra.mrb[0].mxu0 %v3692
      %v4213 = vpop.f32.mrb[0].mxu0
      %v4214 = vadd.f32 %v4014, %v4213
      %v4215 = vpop.f32.mrb[0].mxu0
      %v4216 = vpop.f32.mrb[0].mxu0
      %v4217 = vadd.f32 %v4017, %v4216
      %v4218 = vpop.f32.mrb[0].mxu0
      %4219 = vmatprep.mubr.bf16.mxu0 0
      %4220 = vmatmul.mubr.bf16.gmra.mrb[0].mxu0 %v3695
      %v4221 = vpop.f32.mrb[0].mxu0
      %v4222 = vadd.f32 %v4022, %v4221
      %v4223 = vpop.f32.mrb[0].mxu0
      %v4224 = vpop.f32.mrb[0].mxu0
      %v4225 = vadd.f32 %v4025, %v4224
      %v4226 = vpop.f32.mrb[0].mxu0
      %4227 = vmatprep.mubr.bf16.mxu0 0
      %4228 = vmatmul.mubr.bf16.gmra.mrb[0].mxu0 %v3698
      %v4229 = vpop.f32.mrb[0].mxu0
      %v4230 = vadd.f32 %v4030, %v4229
      %v4231 = vpop.f32.mrb[0].mxu0
      %v4232 = vpop.f32.mrb[0].mxu0
      %v4233 = vadd.f32 %v4033, %v4232
      %v4234 = vpop.f32.mrb[0].mxu0
      %4235 = vmatprep.mubr.bf16.mxu0 0
      %4236 = vmatmul.mubr.bf16.gmra.mrb[0].mxu0 %v3701
      %v4237 = vpop.f32.mrb[0].mxu0
      %v4238 = vadd.f32 %v4038, %v4237
      %v4239 = vpop.f32.mrb[0].mxu0
      %v4240 = vpop.f32.mrb[0].mxu0
      %v4241 = vadd.f32 %v4041, %v4240
      %v4242 = vpop.f32.mrb[0].mxu0
      %4243 = vmatprep.mubr.bf16.mxu0 0
      %4244 = vmatmul.mubr.bf16.gmra.mrb[0].mxu0 %v3704
      %v4245 = vpop.f32.mrb[0].mxu0
      %v4246 = vadd.f32 %v4046, %v4245
      %v4247 = vpop.f32.mrb[0].mxu0
      %v4248 = vpop.f32.mrb[0].mxu0
      %v4249 = vadd.f32 %v4049, %v4248
      %v4250 = vpop.f32.mrb[0].mxu0
      %4251 = vmatprep.mubr.bf16.mxu0 0
      %4252 = vmatmul.mubr.bf16.gmra.mrb[0].mxu0 %v3707
      %v4253 = vpop.f32.mrb[0].mxu0
      %v4254 = vadd.f32 %v4054, %v4253
      %v4255 = vpop.f32.mrb[0].mxu0
      %v4256 = vpop.f32.mrb[0].mxu0
      %v4257 = vadd.f32 %v4057, %v4256
      %v4258 = vpop.f32.mrb[0].mxu0
      %4259 = vmatprep.mubr.bf16.mxu0 0
      %4260 = vmatmul.mubr.bf16.gmra.mrb[0].mxu0 %v3710
      %v4261 = vpop.f32.mrb[0].mxu0
      %v4262 = vadd.f32 %v4062, %v4261
      %v4263 = vpop.f32.mrb[0].mxu0
      %v4264 = vpop.f32.mrb[0].mxu0
      %v4265 = vadd.f32 %v4065, %v4264
      %v4266 = vpop.f32.mrb[0].mxu0
      %4267 = vmatprep.mubr.bf16.mxu0 0
      %4268 = vmatmul.mubr.bf16.gmra.mrb[0].mxu0 %v3713
      %v4269 = vpop.f32.mrb[0].mxu0
      %v4270 = vadd.f32 %v4070, %v4269
      %v4271 = vpop.f32.mrb[0].mxu0
      %v4272 = vpop.f32.mrb[0].mxu0
      %v4273 = vadd.f32 %v4073, %v4272
      %v4274 = vpop.f32.mrb[0].mxu0
      %4275 = vmatprep.mubr.bf16.mxu0 0
      %4276 = vmatmul.mubr.bf16.gmra.mrb[0].mxu0 %v3716
      %v4277 = vpop.f32.mrb[0].mxu0
      %v4278 = vadd.f32 %v4078, %v4277
      %v4279 = vpop.f32.mrb[0].mxu0
      %v4280 = vpop.f32.mrb[0].mxu0
      %v4281 = vadd.f32 %v4081, %v4280
      %v4282 = vpop.f32.mrb[0].mxu0
      %4283 = vmatprep.mubr.bf16.mxu0 0
      %4284 = vmatmul.mubr.bf16.gmra.mrb[0].mxu0 %v3719
      %v4285 = vpop.f32.mrb[0].mxu0
      %v4286 = vadd.f32 %v4086, %v4285
      %v4287 = vpop.f32.mrb[0].mxu0
      %v4288 = vpop.f32.mrb[0].mxu0
      %v4289 = vadd.f32 %v4089, %v4288
      %v4290 = vpop.f32.mrb[0].mxu0
      %4291 = vmatprep.mubr.bf16.mxu0 0
      %4292 = vmatmul.mubr.bf16.gmra.mrb[0].mxu0 %v3722
      %v4293 = vpop.f32.mrb[0].mxu0
      %v4294 = vadd.f32 %v4094, %v4293
      %v4295 = vpop.f32.mrb[0].mxu0
      %v4296 = vpop.f32.mrb[0].mxu0
      %v4297 = vadd.f32 %v4097, %v4296
      %v4298 = vpop.f32.mrb[0].mxu0
      %4299 = vmatprep.mubr.bf16.mxu0 0
      %4300 = vmatmul.mubr.bf16.gmra.mrb[0].mxu0 %v3725
      %v4301 = vpop.f32.mrb[0].mxu0
      %v4302 = vadd.f32 %v4102, %v4301
      %v4303 = vpop.f32.mrb[0].mxu0
      %v4304 = vpop.f32.mrb[0].mxu0
      %v4305 = vadd.f32 %v4105, %v4304
      %v4306 = vpop.f32.mrb[0].mxu0
      %4307 = vmatprep.mubr.bf16.mxu0 0
      %4308 = vmatmul.mubr.bf16.gmra.mrb[0].mxu0 %v3728
      %v4309 = vpop.f32.mrb[0].mxu0
      %v4310 = vadd.f32 %v4110, %v4309
      %v4311 = vpop.f32.mrb[0].mxu0
      %v4312 = vpop.f32.mrb[0].mxu0
      %v4313 = vadd.f32 %v4113, %v4312
      %v4314 = vpop.f32.mrb[0].mxu0
      %4315 = vmatprep.mubr.bf16.mxu0 0
      %4316 = vmatmul.mubr.bf16.gmra.mrb[0].mxu0 %v3731
      %v4317 = vpop.f32.mrb[0].mxu0
      %v4318 = vadd.f32 %v4118, %v4317
      %v4319 = vpop.f32.mrb[0].mxu0
      %v4320 = vpop.f32.mrb[0].mxu0
      %v4321 = vadd.f32 %v4121, %v4320
      %v4322 = vpop.f32.mrb[0].mxu0
      %4323 = vmatprep.mubr.bf16.mxu0 0
      %4324 = vmatmul.mubr.bf16.gmra.mrb[0].mxu0 %v3734
      %v4325 = vpop.f32.mrb[0].mxu0
      %v4326 = vadd.f32 %v4126, %v4325
      %v4327 = vpop.f32.mrb[0].mxu0
      %v4328 = vpop.f32.mrb[0].mxu0
      %v4329 = vadd.f32 %v4129, %v4328
      %v4330 = vpop.f32.mrb[0].mxu0
      %4331 = vmatprep.mubr.bf16.mxu0 0
      %4332 = vmatmul.mubr.bf16.gmra.mrb[0].mxu0 %v3737
      %v4333 = vpop.f32.mrb[0].mxu0
      %v4334 = vadd.f32 %v4134, %v4333
      %v4335 = vpop.f32.mrb[0].mxu0
      %v4336 = vpop.f32.mrb[0].mxu0
      %v4337 = vpop.f32.mrb[0].mxu0
      %4338 = vdwg.mxu0
      %v4339 = vmax.f32 %v4174, 0.0
      %v4340 = vmax.f32 %v4177, 0.0
      %v4341 = vmax.f32 %v4182, 0.0
      %v4342 = vmax.f32 %v4185, 0.0
      %v4343 = vmax.f32 %v4190, 0.0
      %v4344 = vmax.f32 %v4193, 0.0
      %v4345 = vmax.f32 %v4198, 0.0
      %v4346 = vmax.f32 %v4201, 0.0
      %v4347 = vmax.f32 %v4206, 0.0
      %v4348 = vmax.f32 %v4209, 0.0
      %v4349 = vmax.f32 %v4214, 0.0
      %v4350 = vmax.f32 %v4217, 0.0
      %v4351 = vmax.f32 %v4222, 0.0
      %v4352 = vmax.f32 %v4225, 0.0
      %v4353 = vmax.f32 %v4230, 0.0
      %v4354 = vmax.f32 %v4233, 0.0
      %v4355 = vmax.f32 %v4238, 0.0
      %v4356 = vmax.f32 %v4241, 0.0
      %v4357 = vmax.f32 %v4246, 0.0
      %v4358 = vmax.f32 %v4249, 0.0
      %v4359 = vmax.f32 %v4254, 0.0
      %v4360 = vmax.f32 %v4257, 0.0
      %v4361 = vmax.f32 %v4262, 0.0
      %v4362 = vmax.f32 %v4265, 0.0
      %v4363 = vmax.f32 %v4270, 0.0
      %v4364 = vmax.f32 %v4273, 0.0
      %v4365 = vmax.f32 %v4278, 0.0
      %v4366 = vmax.f32 %v4281, 0.0
      %v4367 = vmax.f32 %v4286, 0.0
      %v4368 = vmax.f32 %v4289, 0.0
      %v4369 = vmax.f32 %v4294, 0.0
      %v4370 = vmax.f32 %v4297, 0.0
      %v4371 = vmax.f32 %v4302, 0.0
      %v4372 = vmax.f32 %v4305, 0.0
      %v4373 = vmax.f32 %v4310, 0.0
      %v4374 = vmax.f32 %v4313, 0.0
      %v4375 = vmax.f32 %v4318, 0.0
      %v4376 = vmax.f32 %v4321, 0.0
      %v4377 = vmax.f32 %v4326, 0.0
      %v4378 = vmax.f32 %v4329, 0.0
      %v4379 = vmax.f32 %v4334, 0.0
      %4380 = vst.msk [vmem:[%s170] sm:$0xff] %vm3675, %v4339
      %4381 = vst.msk [vmem:[%s170 + $0x8] sm:$0xff] %vm3675, %v4340
      %4382 = vst.msk [vmem:[%s170 + $0x10] sm:$0xff] %vm3675, %v4341
      %4383 = vst.msk [vmem:[%s170 + $0x18] sm:$0xff] %vm3675, %v4342
      %4384 = vst.msk [vmem:[%s170 + $0x20] sm:$0xff] %vm3675, %v4343
      %4385 = vst.msk [vmem:[%s170 + $0x28] sm:$0xff] %vm3675, %v4344
      %4386 = vst.msk [vmem:[%s170 + $0x30] sm:$0xff] %vm3675, %v4345
      %4387 = vst.msk [vmem:[%s170 + $0x38] sm:$0xff] %vm3675, %v4346
      %4388 = vst.msk [vmem:[%s170 + $0x40] sm:$0xff] %vm3675, %v4347
      %4389 = vst.msk [vmem:[%s170 + $0x48] sm:$0xff] %vm3675, %v4348
      %4390 = vst.msk [vmem:[%s170 + $0x50] sm:$0xff] %vm3675, %v4349
      %4391 = vst.msk [vmem:[%s170 + $0x58] sm:$0xff] %vm3675, %v4350
      %4392 = vst.msk [vmem:[%s170 + $0x60] sm:$0xff] %vm3675, %v4351
      %4393 = vst.msk [vmem:[%s170 + $0x68] sm:$0xff] %vm3675, %v4352
      %4394 = vst.msk [vmem:[%s170 + $0x70] sm:$0xff] %vm3675, %v4353
      %4395 = vst.msk [vmem:[%s170 + $0x78] sm:$0xff] %vm3675, %v4354
      %4396 = vst.msk [vmem:[%s170 + $0x80] sm:$0xff] %vm3675, %v4355
      %4397 = vst.msk [vmem:[%s170 + $0x88] sm:$0xff] %vm3675, %v4356
      %4398 = vst.msk [vmem:[%s170 + $0x90] sm:$0xff] %vm3675, %v4357
      %4399 = vst.msk [vmem:[%s170 + $0x98] sm:$0xff] %vm3675, %v4358
      %4400 = vst.msk [vmem:[%s170 + $0xa0] sm:$0xff] %vm3675, %v4359
      %4401 = vst.msk [vmem:[%s170 + $0xa8] sm:$0xff] %vm3675, %v4360
      %4402 = vst.msk [vmem:[%s170 + $0xb0] sm:$0xff] %vm3675, %v4361
      %4403 = vst.msk [vmem:[%s170 + $0xb8] sm:$0xff] %vm3675, %v4362
      %4404 = vst.msk [vmem:[%s170 + $0xc0] sm:$0xff] %vm3675, %v4363
      %4405 = vst.msk [vmem:[%s170 + $0xc8] sm:$0xff] %vm3675, %v4364
      %4406 = vst.msk [vmem:[%s170 + $0xd0] sm:$0xff] %vm3675, %v4365
      %4407 = vst.msk [vmem:[%s170 + $0xd8] sm:$0xff] %vm3675, %v4366
      %4408 = vst.msk [vmem:[%s170 + $0xe0] sm:$0xff] %vm3675, %v4367
      %4409 = vst.msk [vmem:[%s170 + $0xe8] sm:$0xff] %vm3675, %v4368
      %4410 = vst.msk [vmem:[%s170 + $0xf0] sm:$0xff] %vm3675, %v4369
      %4411 = vst.msk [vmem:[%s170 + $0xf8] sm:$0xff] %vm3675, %v4370
      %4412 = vst.msk [vmem:[%s170 + $0x100] sm:$0xff] %vm3675, %v4371
      %4413 = vst.msk [vmem:[%s170 + $0x108] sm:$0xff] %vm3675, %v4372
      %4414 = vst.msk [vmem:[%s170 + $0x110] sm:$0xff] %vm3675, %v4373
      %4415 = vst.msk [vmem:[%s170 + $0x118] sm:$0xff] %vm3675, %v4374
      %4416 = vst.msk [vmem:[%s170 + $0x120] sm:$0xff] %vm3675, %v4375
      %4417 = vst.msk [vmem:[%s170 + $0x128] sm:$0xff] %vm3675, %v4376
      %4418 = vst.msk [vmem:[%s170 + $0x130] sm:$0xff] %vm3675, %v4377
      %4419 = vst.msk [vmem:[%s170 + $0x138] sm:$0xff] %vm3675, %v4378
      %4420 = vst.msk [vmem:[%s170 + $0x140] sm:$0xf] %vm429, %v4379
      %p4421 = scmp.lt.s32.totalorder %s14, 1
      %s4422 = scalar_select %p4421, %s14, 1
      %s4423 = smul.addr %s4422, 41
      %s4424 = smul.addr %s4423, 8
      %s4425 = scalar_lea.vmem %s3, %s4424
      // Predicated region
      $region33: #{lte_forward.8} parent=31 // pred_check
        %p4426 = pneg %p100
      $region34: #{lte_forward.8} parent=31 // pred_check_branch
        %4428 = sbr.rel (%p4426) target = $region36
      $region35: #{lte_forward.8} parent=31 // pred_region
        _
      $region36: #{lte_forward.8} parent=31 // pred_fallthru
        _
    $region32: #{lte_forward.8} parent=5 // pred_fallthru
      _
    %p4429 = scmp.le.s32.totalorder 2, %s9
    // Predicated region
    $region37: #{lte_forward.8} parent=5 // pred_check
      %p4430 = pneg %p4429
    $region38: #{lte_forward.8} parent=5 // pred_check_branch
      %4432 = sbr.rel (%p4430) target = $region40
    $region39: #{lte_forward.8} parent=5 // pred_region
      %s4433 = ssub.s32 %s9, 2
      // Predicated region
      $region41: #{lte_forward.8} parent=39 // pred_check
        %p4434 = pneg %p106
      $region42: #{lte_forward.8} parent=39 // pred_check_branch
        %4436 = sbr.rel (%p4434) target = $region44
      $region43: #{lte_forward.8} parent=39 // pred_region
        %p4437 = scmp.lt.s32.totalorder %s15, 1
        %s4438 = scalar_select %p4437, %s15, 1
        %s4439 = smul.addr %s4438, 41
        %s4440 = smul.addr %s4439, 8
        %s4441 = scalar_lea.vmem %s3, %s4440
      $region44: #{lte_forward.8} parent=39 // pred_fallthru
        _
    $region40: #{lte_forward.8} parent=5 // pred_fallthru
      _
  $region6: #{lte_forward.8} parent=0 // loop_footer
    %s13 = sadd.s32 1, %s9
  $region7: #{lte_forward.8} parent=0 // loop_footer_branch
    %8 = sbr.rel target = $region3
  $region8: #{lte_forward.8} parent=0 // loop_exit
    _

// kernel: lte_forward.11
$region0: #{lte_forward.11}
  #allocation0 [shape = 'u32[]', space=smem, size = 0x4, offset = 0x4, fixed_abs, tag = 'smem constant byte address 0x4 - core index']
  #allocation1 [shape = 'u32[144,128]{1,0:T(1,128)}', space=vmem, size = 0x12000, scoped, tag = 'internal scratch']
  #allocation2 [shape = 'bf16[100,1152]{1,0:T(8,128)(2,1)}', space=vmem, size = 0x3a800, scoped, tag = 'scratch operand']
  %s0 = inlined_call_operand.vmem [shape: bf16[2,122,128], index: 0, kind: input, shape index: {}]
  %s1 = inlined_call_operand.vmem [shape: bf16[1152,128], index: 1, kind: input, shape index: {}]
  %s2 = inlined_call_operand.vmem [shape: f32[1,128], index: 2, kind: input, shape index: {}]
  %s3 = inlined_call_operand.vmem [shape: f32[2,100,128], index: 3, kind: output, shape index: {}]
  %s4 = sld [smem:[#allocation0]]
  $region45: #{lte_forward.11} parent=0
    _
  %s6 = ssub.s32 1, %s4
  %s7 = scalar_select 0, %s6, %s4
  loop: start=0, step=1, limit=4
  $region2: #{lte_forward.11} parent=0 // loop_pre_header
    _
  $region3: #{lte_forward.11} parent=0 // loop_header
    %s9 = sphi 0, %s13
    %p10 = scmp.ge.s32.totalorder %s9, 4
    %s19 = sphi 0, %s21
    %s22 = sphi 0, %s19
    %s23 = sphi 0, %s22
    %s39 = sphi 0, %s23
    %s43 = sphi 0, %s43
    %s45 = sphi 0, %s43
    %s46 = sphi 0, %s45
    %s60 = sphi 0, %s46
    %s64 = sphi 0, %s64
    %s66 = sphi 0, %s64
    %s67 = sphi 0, %s66
    %s81 = sphi 0, %s67
    %s87 = sphi 0, %s89
    %s90 = sphi 0, %s87
    %s91 = sphi 0, %s90
    %s107 = sphi 0, %s91
  $region4: #{lte_forward.11} parent=0 // loop_header_branch
    %12 = sbr.rel (%p10) target = $region8
  $region5: #{lte_forward.11} parent=0 // loop_body
    %s14 = ssub.s32 %s9, 1
    %s15 = ssub.s32 %s9, 2
    %s16 = sadd.s32 %s9, 1
    %s17 = ssub.s32 %s9, %s16
    %p18 = scmp.eq.s32.totalorder %s17, 0
    %s20 = sadd.s32 %s19, 1
    %s21 = scalar_select %p18, %s19, %s20
    %p24 = pneg %p18
    %p25 = scmp.eq.s32.totalorder %s9, 1
    %p26 = por %p24, %p25
    %p27 = scmp.ne.s32.totalorder %s19, %s22
    %p28 = scmp.eq.s32.totalorder %s9, 0
    %p29 = por %p27, %p28
    %p30 = scmp.ne.s32.totalorder %s19, %s22
    %p31 = scmp.eq.s32.totalorder %s14, 1
    %p32 = por %p30, %p31
    %p33 = scmp.ne.s32.totalorder %s22, %s23
    %p34 = scmp.eq.s32.totalorder %s14, 0
    %p35 = por %p33, %p34
    %p36 = scmp.ne.s32.totalorder %s22, %s23
    %p37 = scmp.eq.s32.totalorder %s15, 1
    %p38 = por %p36, %p37
    %p40 = scmp.ne.s32.totalorder %s23, %s39
    %p41 = scmp.eq.s32.totalorder %s15, 0
    %p42 = por %p40, %p41
    %s44 = sadd.s32 %s43, 1
    %p47 = scmp.eq.s32.totalorder %s9, 1
    %p48 = scmp.ne.s32.totalorder %s43, %s45
    %p49 = scmp.eq.s32.totalorder %s9, 0
    %p50 = por %p48, %p49
    %p51 = scmp.ne.s32.totalorder %s43, %s45
    %p52 = scmp.eq.s32.totalorder %s14, 1
    %p53 = por %p51, %p52
    %p54 = scmp.ne.s32.totalorder %s45, %s46
    %p55 = scmp.eq.s32.totalorder %s14, 0
    %p56 = por %p54, %p55
    %p57 = scmp.ne.s32.totalorder %s45, %s46
    %p58 = scmp.eq.s32.totalorder %s15, 1
    %p59 = por %p57, %p58
    %p61 = scmp.ne.s32.totalorder %s46, %s60
    %p62 = scmp.eq.s32.totalorder %s15, 0
    %p63 = por %p61, %p62
    %s65 = sadd.s32 %s64, 1
    %p68 = scmp.eq.s32.totalorder %s9, 1
    %p69 = scmp.ne.s32.totalorder %s64, %s66
    %p70 = scmp.eq.s32.totalorder %s9, 0
    %p71 = por %p69, %p70
    %p72 = scmp.ne.s32.totalorder %s64, %s66
    %p73 = scmp.eq.s32.totalorder %s14, 1
    %p74 = por %p72, %p73
    %p75 = scmp.ne.s32.totalorder %s66, %s67
    %p76 = scmp.eq.s32.totalorder %s14, 0
    %p77 = por %p75, %p76
    %p78 = scmp.ne.s32.totalorder %s66, %s67
    %p79 = scmp.eq.s32.totalorder %s15, 1
    %p80 = por %p78, %p79
    %p82 = scmp.ne.s32.totalorder %s67, %s81
    %p83 = scmp.eq.s32.totalorder %s15, 0
    %p84 = por %p82, %p83
    %s85 = ssub.s32 %s9, %s16
    %p86 = scmp.eq.s32.totalorder %s85, 0
    %s88 = sadd.s32 %s87, 1
    %s89 = scalar_select %p86, %s87, %s88
    %p92 = pneg %p86
    %p93 = scmp.eq.s32.totalorder %s9, 1
    %p94 = por %p92, %p93
    %p95 = scmp.ne.s32.totalorder %s87, %s90
    %p96 = scmp.eq.s32.totalorder %s9, 0
    %p97 = por %p95, %p96
    %p98 = scmp.ne.s32.totalorder %s87, %s90
    %p99 = scmp.eq.s32.totalorder %s14, 1
    %p100 = por %p98, %p99
    %p101 = scmp.ne.s32.totalorder %s90, %s91
    %p102 = scmp.eq.s32.totalorder %s14, 0
    %p103 = por %p101, %p102
    %p104 = scmp.ne.s32.totalorder %s90, %s91
    %p105 = scmp.eq.s32.totalorder %s15, 1
    %p106 = por %p104, %p105
    %p108 = scmp.ne.s32.totalorder %s91, %s107
    %p109 = scmp.eq.s32.totalorder %s15, 0
    %p110 = por %p108, %p109
    %p111 = scmp.le.s32.totalorder 1, %s9
    %p112 = scmp.lt.s32.totalorder %s9, 3
    %p113 = pnand %p111, %p112
    %p114 = pneg %p113
    // Predicated region
    $region9: #{lte_forward.11} parent=5 // pred_check
      _
    $region10: #{lte_forward.11} parent=5 // pred_check_branch
      %116 = sbr.rel (%p113) target = $region12
    $region11: #{lte_forward.11} parent=5 // pred_region
      %s117 = ssub.s32 %s9, 1
      // Predicated region
      $region13: #{lte_forward.11} parent=11 // pred_check
        %p118 = pneg %p56
      $region14: #{lte_forward.11} parent=11 // pred_check_branch
        %120 = sbr.rel (%p118) target = $region16
      $region15: #{lte_forward.11} parent=11 // pred_region
        _
      $region16: #{lte_forward.11} parent=11 // pred_fallthru
        _
      // Predicated region
      $region17: #{lte_forward.11} parent=11 // pred_check
        %p121 = pneg %p77
      $region18: #{lte_forward.11} parent=11 // pred_check_branch
        %123 = sbr.rel (%p121) target = $region20
      $region19: #{lte_forward.11} parent=11 // pred_region
        _
      $region20: #{lte_forward.11} parent=11 // pred_fallthru
        _
    $region12: #{lte_forward.11} parent=5 // pred_fallthru
      _
    %p124 = scmp.lt.s32.totalorder %s9, 2
    // Predicated region
    $region21: #{lte_forward.11} parent=5 // pred_check
      %p125 = pneg %p124
    $region22: #{lte_forward.11} parent=5 // pred_check_branch
      %127 = sbr.rel (%p125) target = $region24
    $region23: #{lte_forward.11} parent=5 // pred_region
      // Predicated region
      $region25: #{lte_forward.11} parent=23 // pred_check
        %p128 = pneg %p29
      $region26: #{lte_forward.11} parent=23 // pred_check_branch
        %130 = sbr.rel (%p128) target = $region28
      $region27: #{lte_forward.11} parent=23 // pred_region
        %p131 = scmp.lt.s32.totalorder %s9, 1
        %s132 = scalar_select %p131, %s9, 1
        %s133 = smul.addr %s132, 16
        %s134 = smul.addr %s133, 4
        %s135 = scalar_lea.vmem %s0, %s134
      $region28: #{lte_forward.11} parent=23 // pred_fallthru
        _
    $region24: #{lte_forward.11} parent=5 // pred_fallthru
      _
    %p136 = scmp.le.s32.totalorder 1, %s9
    %p137 = scmp.lt.s32.totalorder %s9, 3
    %p138 = pnand %p136, %p137
    %p139 = pneg %p138
    // Predicated region
    $region29: #{lte_forward.11} parent=5 // pred_check
      _
    $region30: #{lte_forward.11} parent=5 // pred_check_branch
      %141 = sbr.rel (%p138) target = $region32
    $region31: #{lte_forward.11} parent=5 // pred_region
      %s142 = ssub.s32 %s9, 1
      %p143 = scmp.lt.s32.totalorder %s14, 1
      %s144 = scalar_select %p143, %s14, 1
      %s145 = smul.addr %s144, 16
      %s146 = smul.addr %s145, 4
      %s147 = scalar_lea.vmem %s0, %s146
      %p148 = pneg %p35
      %p149 = pneg %p32
      %p150 = pneg %p56
      %p151 = pneg %p53
      %p152 = pneg %p77
      %p153 = pneg %p74
      %p154 = pneg %p103
      %p155 = pneg %p100
      %p156 = scmp.lt.s32.totalorder %s14, 1
      %s157 = scalar_select %p156, %s14, 1
      %s158 = smul.addr %s157, 13
      %s159 = smul.addr %s158, 8
      %s160 = scalar_lea.vmem %s3, %s159
      %p161 = scmp.lt.s32.totalorder %s14, 1
      %s162 = scalar_select %p161, %s14, 1
      %s163 = smul.addr %s162, 16
      %s164 = smul.addr %s163, 4
      %s165 = scalar_lea.vmem %s0, %s164
      %p166 = scmp.lt.s32.totalorder %s14, 1
      %s167 = scalar_select %p166, %s14, 1
      %s168 = smul.addr %s167, 13
      %s169 = smul.addr %s168, 8
      %s170 = scalar_lea.vmem %s3, %s169
      %v172 = vld [vmem:[%s165] sm:$0xf]
      %v173 = vld [vmem:[%s165 + $0x4] sm:$0xf]
      %v174 = vld [vmem:[%s165 + $0x8] sm:$0xf]
      %v175 = vld [vmem:[%s165 + $0xc] sm:$0xf]
      %v176 = vld [vmem:[%s165 + $0x10] sm:$0xf]
      %v177 = vld [vmem:[%s165 + $0x14] sm:$0xf]
      %v178 = vld [vmem:[%s165 + $0x18] sm:$0xf]
      %v179 = vld [vmem:[%s165 + $0x1c] sm:$0xf]
      %v180 = vld [vmem:[%s165 + $0x20] sm:$0xf]
      %v181 = vld [vmem:[%s165 + $0x24] sm:$0xf]
      %v182 = vld [vmem:[%s165 + $0x28] sm:$0xf]
      %v183 = vld [vmem:[%s165 + $0x2c] sm:$0xf]
      %v184 = vld [vmem:[%s165 + $0x30] sm:$0xf]
      %v185 = vld [vmem:[%s165 + $0x34] sm:$0xf]
      %v186 = vld [vmem:[%s165 + $0x38] sm:$0xf]
      %v187 = vld [vmem:[%s165 + $0x3c] sm:$0x1]
      %v188 = vunpack.c.l.bf16 %v172
      %v189 = vunpack.c.l.bf16 %v173
      %v190 = vunpack.c.l.bf16 %v174
      %v191 = vunpack.c.l.bf16 %v175
      %v192 = vunpack.c.l.bf16 %v176
      %v193 = vunpack.c.l.bf16 %v177
      %v194 = vunpack.c.l.bf16 %v178
      %v195 = vunpack.c.l.bf16 %v179
      %v196 = vunpack.c.l.bf16 %v180
      %v197 = vunpack.c.l.bf16 %v181
      %v198 = vunpack.c.l.bf16 %v182
      %v199 = vunpack.c.l.bf16 %v183
      %v200 = vunpack.c.l.bf16 %v184
      %v201 = vunpack.c.l.bf16 %v185
      %v202 = vunpack.c.l.bf16 %v186
      %v203 = vunpack.c.l.bf16 %v187
      %v204 = vpack.c.bf16 %v189, %v188
      %v205 = vpack.c.bf16 %v191, %v190
      %v206 = vpack.c.bf16 %v193, %v192
      %v207 = vpack.c.bf16 %v195, %v194
      %v208 = vpack.c.bf16 %v197, %v196
      %v209 = vpack.c.bf16 %v199, %v198
      %v210 = vpack.c.bf16 %v200, %v200
      %v218 = vunpack.c.l.b16 %v204
      %v219 = vunpack.c.h.b16 %v204
      %v220 = vunpack.c.l.b16 %v205
      %v221 = vunpack.c.h.b16 %v205
      %v222 = vunpack.c.l.b16 %v206
      %v223 = vunpack.c.h.b16 %v206
      %v224 = vunpack.c.l.b16 %v207
      %v225 = vunpack.c.h.b16 %v207
      %v226 = vunpack.c.l.b16 %v208
      %v227 = vunpack.c.h.b16 %v208
      %v228 = vunpack.c.l.b16 %v209
      %v229 = vunpack.c.h.b16 %v209
      %v230 = vunpack.c.l.b16 %v210
      %v231 = vpack.c.b16 %v218, %v218
      %v232 = vpack.c.b16 %v219, %v219
      %v233 = vpack.c.b16 %v220, %v220
      %v234 = vpack.c.b16 %v221, %v221
      %v235 = vpack.c.b16 %v222, %v222
      %v236 = vpack.c.b16 %v223, %v223
      %v237 = vpack.c.b16 %v224, %v224
      %v238 = vpack.c.b16 %v225, %v225
      %v239 = vpack.c.b16 %v226, %v226
      %v240 = vpack.c.b16 %v227, %v227
      %v241 = vpack.c.b16 %v228, %v228
      %v242 = vpack.c.b16 %v229, %v229
      %v243 = vpack.c.b16 %v230, %v230
      %257 = vst [vmem:[#allocation2] sm:$0xf] %v231
      %258 = vst [vmem:[#allocation2 + $0x24] sm:$0xf] %v232
      %259 = vst [vmem:[#allocation2 + $0x48] sm:$0xf] %v233
      %260 = vst [vmem:[#allocation2 + $0x6c] sm:$0xf] %v234
      %261 = vst [vmem:[#allocation2 + $0x90] sm:$0xf] %v235
      %262 = vst [vmem:[#allocation2 + $0xb4] sm:$0xf] %v236
      %263 = vst [vmem:[#allocation2 + $0xd8] sm:$0xf] %v237
      %264 = vst [vmem:[#allocation2 + $0xfc] sm:$0xf] %v238
      %265 = vst [vmem:[#allocation2 + $0x120] sm:$0xf] %v239
      %266 = vst [vmem:[#allocation2 + $0x144] sm:$0xf] %v240
      %267 = vst [vmem:[#allocation2 + $0x168] sm:$0xf] %v241
      %268 = vst [vmem:[#allocation2 + $0x18c] sm:$0xf] %v242
      %269 = vst [vmem:[#allocation2 + $0x1b0] sm:$0x3] %v243
      %vm270 = vsmask.f32 3328
      %vm271 = vsmask.f32 7440
      %vm272 = vmor %vm270, %vm271
      %v274 = vshrl.u32 %v231, 16
      %v276 = vrot.slane %v274, 4
      %v277 = vshll.u32 %v231, 16
      %v279 = vrot.slane %v277, 5
      %v280 = vor.u32 %v276, %v279
      %v281 = vrot.slane %v280, 4
      %v283 = vshll.u32 %v232, 16
      %v285 = vrot.slane %v283, 5
      %v286 = vsel %vm272, %v281, %v285
      %v287 = vshrl.u32 %v232, 16
      %v289 = vrot.slane %v287, 4
      %v290 = vor.u32 %v289, %v285
      %v291 = vrot.slane %v290, 4
      %v293 = vshll.u32 %v233, 16
      %v295 = vrot.slane %v293, 5
      %v296 = vsel %vm272, %v291, %v295
      %v297 = vshrl.u32 %v233, 16
      %v299 = vrot.slane %v297, 4
      %v300 = vor.u32 %v299, %v295
      %v301 = vrot.slane %v300, 4
      %v303 = vshll.u32 %v234, 16
      %v305 = vrot.slane %v303, 5
      %v306 = vsel %vm272, %v301, %v305
      %v307 = vshrl.u32 %v234, 16
      %v309 = vrot.slane %v307, 4
      %v310 = vor.u32 %v309, %v305
      %v311 = vrot.slane %v310, 4
      %v313 = vshll.u32 %v235, 16
      %v315 = vrot.slane %v313, 5
      %v316 = vsel %vm272, %v311, %v315
      %v317 = vshrl.u32 %v235, 16
      %v319 = vrot.slane %v317, 4
      %v320 = vor.u32 %v319, %v315
      %v321 = vrot.slane %v320, 4
      %v323 = vshll.u32 %v236, 16
      %v325 = vrot.slane %v323, 5
      %v326 = vsel %vm272, %v321, %v325
      %v327 = vshrl.u32 %v236, 16
      %v329 = vrot.slane %v327, 4
      %v330 = vor.u32 %v329, %v325
      %v331 = vrot.slane %v330, 4
      %v333 = vshll.u32 %v237, 16
      %v335 = vrot.slane %v333, 5
      %v336 = vsel %vm272, %v331, %v335
      %v337 = vshrl.u32 %v237, 16
      %v339 = vrot.slane %v337, 4
      %v340 = vor.u32 %v339, %v335
      %v341 = vrot.slane %v340, 4
      %v343 = vshll.u32 %v238, 16
      %v345 = vrot.slane %v343, 5
      %v346 = vsel %vm272, %v341, %v345
      %v347 = vshrl.u32 %v238, 16
      %v349 = vrot.slane %v347, 4
      %v350 = vor.u32 %v349, %v345
      %v351 = vrot.slane %v350, 4
      %v353 = vshll.u32 %v239, 16
      %v355 = vrot.slane %v353, 5
      %v356 = vsel %vm272, %v351, %v355
      %v357 = vshrl.u32 %v239, 16
      %v359 = vrot.slane %v357, 4
      %v360 = vor.u32 %v359, %v355
      %v361 = vrot.slane %v360, 4
      %v363 = vshll.u32 %v240, 16
      %v365 = vrot.slane %v363, 5
      %v366 = vsel %vm272, %v361, %v365
      %v367 = vshrl.u32 %v240, 16
      %v369 = vrot.slane %v367, 4
      %v370 = vor.u32 %v369, %v365
      %v371 = vrot.slane %v370, 4
      %v373 = vshll.u32 %v241, 16
      %v375 = vrot.slane %v373, 5
      %v376 = vsel %vm272, %v371, %v375
      %v377 = vshrl.u32 %v241, 16
      %v379 = vrot.slane %v377, 4
      %v380 = vor.u32 %v379, %v375
      %v381 = vrot.slane %v380, 4
      %v383 = vshll.u32 %v242, 16
      %v385 = vrot.slane %v383, 5
      %v386 = vsel %vm272, %v381, %v385
      %v387 = vshrl.u32 %v242, 16
      %v389 = vrot.slane %v387, 4
      %v390 = vor.u32 %v389, %v385
      %v391 = vrot.slane %v390, 4
      %v393 = vshll.u32 %v243, 16
      %v395 = vrot.slane %v393, 5
      %v396 = vsel %vm272, %v391, %v395
      %v397 = vshrl.u32 %v243, 16
      %v399 = vrot.slane %v397, 4
      %v400 = vor.u32 %v399, %v395
      %v401 = vrot.slane %v400, 4
      %415 = vst [vmem:[#allocation2 + $0x4] sm:$0xf] %v286
      %416 = vst [vmem:[#allocation2 + $0x28] sm:$0xf] %v296
      %417 = vst [vmem:[#allocation2 + $0x4c] sm:$0xf] %v306
      %418 = vst [vmem:[#allocation2 + $0x70] sm:$0xf] %v316
      %419 = vst [vmem:[#allocation2 + $0x94] sm:$0xf] %v326
      %420 = vst [vmem:[#allocation2 + $0xb8] sm:$0xf] %v336
      %421 = vst [vmem:[#allocation2 + $0xdc] sm:$0xf] %v346
      %422 = vst [vmem:[#allocation2 + $0x100] sm:$0xf] %v356
      %423 = vst [vmem:[#allocation2 + $0x124] sm:$0xf] %v366
      %424 = vst [vmem:[#allocation2 + $0x148] sm:$0xf] %v376
      %425 = vst [vmem:[#allocation2 + $0x16c] sm:$0xf] %v386
      %426 = vst [vmem:[#allocation2 + $0x190] sm:$0xf] %v396
      %427 = vst [vmem:[#allocation2 + $0x1b4] sm:$0x3] %v401
      %vm428 = vcmask 1042432
      %vm429 = vcmask 1046532
      %vm430 = vmor %vm428, %vm429
      %v431 = vrot.slane %v231, 5
      %v432 = vrot.slane %v431, 4
      %v433 = vrot.slane %v232, 5
      %v434 = vsel %vm430, %v432, %v433
      %v435 = vrot.slane %v433, 4
      %v436 = vrot.slane %v233, 5
      %v437 = vsel %vm430, %v435, %v436
      %v438 = vrot.slane %v436, 4
      %v439 = vrot.slane %v234, 5
      %v440 = vsel %vm430, %v438, %v439
      %v441 = vrot.slane %v439, 4
      %v442 = vrot.slane %v235, 5
      %v443 = vsel %vm430, %v441, %v442
      %v444 = vrot.slane %v442, 4
      %v445 = vrot.slane %v236, 5
      %v446 = vsel %vm430, %v444, %v445
      %v447 = vrot.slane %v445, 4
      %v448 = vrot.slane %v237, 5
      %v449 = vsel %vm430, %v447, %v448
      %v450 = vrot.slane %v448, 4
      %v451 = vrot.slane %v238, 5
      %v452 = vsel %vm430, %v450, %v451
      %v453 = vrot.slane %v451, 4
      %v454 = vrot.slane %v239, 5
      %v455 = vsel %vm430, %v453, %v454
      %v456 = vrot.slane %v454, 4
      %v457 = vrot.slane %v240, 5
      %v458 = vsel %vm430, %v456, %v457
      %v459 = vrot.slane %v457, 4
      %v460 = vrot.slane %v241, 5
      %v461 = vsel %vm430, %v459, %v460
      %v462 = vrot.slane %v460, 4
      %v463 = vrot.slane %v242, 5
      %v464 = vsel %vm430, %v462, %v463
      %v465 = vrot.slane %v463, 4
      %v466 = vrot.slane %v243, 5
      %v467 = vsel %vm430, %v465, %v466
      %v468 = vrot.slane %v466, 4
      %482 = vst [vmem:[#allocation2 + $0x8] sm:$0xf] %v434
      %483 = vst [vmem:[#allocation2 + $0x2c] sm:$0xf] %v437
      %484 = vst [vmem:[#allocation2 + $0x50] sm:$0xf] %v440
      %485 = vst [vmem:[#allocation2 + $0x74] sm:$0xf] %v443
      %486 = vst [vmem:[#allocation2 + $0x98] sm:$0xf] %v446
      %487 = vst [vmem:[#allocation2 + $0xbc] sm:$0xf] %v449
      %488 = vst [vmem:[#allocation2 + $0xe0] sm:$0xf] %v452
      %489 = vst [vmem:[#allocation2 + $0x104] sm:$0xf] %v455
      %490 = vst [vmem:[#allocation2 + $0x128] sm:$0xf] %v458
      %491 = vst [vmem:[#allocation2 + $0x14c] sm:$0xf] %v461
      %492 = vst [vmem:[#allocation2 + $0x170] sm:$0xf] %v464
      %493 = vst [vmem:[#allocation2 + $0x194] sm:$0xf] %v467
      %494 = vst [vmem:[#allocation2 + $0x1b8] sm:$0x3] %v468
      %v495 = vpack.c.bf16 %v190, %v189
      %v496 = vpack.c.bf16 %v192, %v191
      %v497 = vpack.c.bf16 %v194, %v193
      %v498 = vpack.c.bf16 %v196, %v195
      %v499 = vpack.c.bf16 %v198, %v197
      %v500 = vpack.c.bf16 %v200, %v199
      %v501 = vpack.c.bf16 %v201, %v201
      %v509 = vunpack.c.l.b16 %v495
      %v510 = vunpack.c.h.b16 %v495
      %v511 = vunpack.c.l.b16 %v496
      %v512 = vunpack.c.h.b16 %v496
      %v513 = vunpack.c.l.b16 %v497
      %v514 = vunpack.c.h.b16 %v497
      %v515 = vunpack.c.l.b16 %v498
      %v516 = vunpack.c.h.b16 %v498
      %v517 = vunpack.c.l.b16 %v499
      %v518 = vunpack.c.h.b16 %v499
      %v519 = vunpack.c.l.b16 %v500
      %v520 = vunpack.c.h.b16 %v500
      %v521 = vunpack.c.l.b16 %v501
      %v522 = vpack.c.b16 %v509, %v509
      %v523 = vpack.c.b16 %v510, %v510
      %v524 = vpack.c.b16 %v511, %v511
      %v525 = vpack.c.b16 %v512, %v512
      %v526 = vpack.c.b16 %v513, %v513
      %v527 = vpack.c.b16 %v514, %v514
      %v528 = vpack.c.b16 %v515, %v515
      %v529 = vpack.c.b16 %v516, %v516
      %v530 = vpack.c.b16 %v517, %v517
      %v531 = vpack.c.b16 %v518, %v518
      %v532 = vpack.c.b16 %v519, %v519
      %v533 = vpack.c.b16 %v520, %v520
      %v534 = vpack.c.b16 %v521, %v521
      %v535 = vrot.slane %v522, 5
      %v536 = vrot.slane %v535, 4
      %v537 = vrot.slane %v523, 5
      %v538 = vsel %vm430, %v536, %v537
      %v539 = vrot.slane %v537, 4
      %v540 = vrot.slane %v524, 5
      %v541 = vsel %vm430, %v539, %v540
      %v542 = vrot.slane %v540, 4
      %v543 = vrot.slane %v525, 5
      %v544 = vsel %vm430, %v542, %v543
      %v545 = vrot.slane %v543, 4
      %v546 = vrot.slane %v526, 5
      %v547 = vsel %vm430, %v545, %v546
      %v548 = vrot.slane %v546, 4
      %v549 = vrot.slane %v527, 5
      %v550 = vsel %vm430, %v548, %v549
      %v551 = vrot.slane %v549, 4
      %v552 = vrot.slane %v528, 5
      %v553 = vsel %vm430, %v551, %v552
      %v554 = vrot.slane %v552, 4
      %v555 = vrot.slane %v529, 5
      %v556 = vsel %vm430, %v554, %v555
      %v557 = vrot.slane %v555, 4
      %v558 = vrot.slane %v530, 5
      %v559 = vsel %vm430, %v557, %v558
      %v560 = vrot.slane %v558, 4
      %v561 = vrot.slane %v531, 5
      %v562 = vsel %vm430, %v560, %v561
      %v563 = vrot.slane %v561, 4
      %v564 = vrot.slane %v532, 5
      %v565 = vsel %vm430, %v563, %v564
      %v566 = vrot.slane %v564, 4
      %v567 = vrot.slane %v533, 5
      %v568 = vsel %vm430, %v566, %v567
      %v569 = vrot.slane %v567, 4
      %v570 = vrot.slane %v534, 5
      %v571 = vsel %vm430, %v569, %v570
      %v572 = vrot.slane %v570, 4
      %586 = vst [vmem:[#allocation2 + $0xc] sm:$0xf] %v538
      %587 = vst [vmem:[#allocation2 + $0x30] sm:$0xf] %v541
      %588 = vst [vmem:[#allocation2 + $0x54] sm:$0xf] %v544
      %589 = vst [vmem:[#allocation2 + $0x78] sm:$0xf] %v547
      %590 = vst [vmem:[#allocation2 + $0x9c] sm:$0xf] %v550
      %591 = vst [vmem:[#allocation2 + $0xc0] sm:$0xf] %v553
      %592 = vst [vmem:[#allocation2 + $0xe4] sm:$0xf] %v556
      %593 = vst [vmem:[#allocation2 + $0x108] sm:$0xf] %v559
      %594 = vst [vmem:[#allocation2 + $0x12c] sm:$0xf] %v562
      %595 = vst [vmem:[#allocation2 + $0x150] sm:$0xf] %v565
      %596 = vst [vmem:[#allocation2 + $0x174] sm:$0xf] %v568
      %597 = vst [vmem:[#allocation2 + $0x198] sm:$0xf] %v571
      %598 = vst [vmem:[#allocation2 + $0x1bc] sm:$0x3] %v572
      %vm599 = vsmask.f32 2304
      %vm600 = vsmask.f32 6416
      %vm601 = vmor %vm599, %vm600
      %v603 = vshrl.u32 %v522, 16
      %v605 = vrot.slane %v603, 5
      %v606 = vshll.u32 %v522, 16
      %v608 = vrot.slane %v606, 6
      %v609 = vor.u32 %v605, %v608
      %v610 = vrot.slane %v609, 4
      %v612 = vshrl.u32 %v523, 16
      %v614 = vrot.slane %v612, 5
      %v615 = vshll.u32 %v523, 16
      %v617 = vrot.slane %v615, 6
      %v618 = vor.u32 %v614, %v617
      %v619 = vsel %vm601, %v610, %v618
      %v620 = vrot.slane %v618, 4
      %v622 = vshrl.u32 %v524, 16
      %v624 = vrot.slane %v622, 5
      %v625 = vshll.u32 %v524, 16
      %v627 = vrot.slane %v625, 6
      %v628 = vor.u32 %v624, %v627
      %v629 = vsel %vm601, %v620, %v628
      %v630 = vrot.slane %v628, 4
      %v632 = vshrl.u32 %v525, 16
      %v634 = vrot.slane %v632, 5
      %v635 = vshll.u32 %v525, 16
      %v637 = vrot.slane %v635, 6
      %v638 = vor.u32 %v634, %v637
      %v639 = vsel %vm601, %v630, %v638
      %v640 = vrot.slane %v638, 4
      %v642 = vshrl.u32 %v526, 16
      %v644 = vrot.slane %v642, 5
      %v645 = vshll.u32 %v526, 16
      %v647 = vrot.slane %v645, 6
      %v648 = vor.u32 %v644, %v647
      %v649 = vsel %vm601, %v640, %v648
      %v650 = vrot.slane %v648, 4
      %v652 = vshrl.u32 %v527, 16
      %v654 = vrot.slane %v652, 5
      %v655 = vshll.u32 %v527, 16
      %v657 = vrot.slane %v655, 6
      %v658 = vor.u32 %v654, %v657
      %v659 = vsel %vm601, %v650, %v658
      %v660 = vrot.slane %v658, 4
      %v662 = vshrl.u32 %v528, 16
      %v664 = vrot.slane %v662, 5
      %v665 = vshll.u32 %v528, 16
      %v667 = vrot.slane %v665, 6
      %v668 = vor.u32 %v664, %v667
      %v669 = vsel %vm601, %v660, %v668
      %v670 = vrot.slane %v668, 4
      %v672 = vshrl.u32 %v529, 16
      %v674 = vrot.slane %v672, 5
      %v675 = vshll.u32 %v529, 16
      %v677 = vrot.slane %v675, 6
      %v678 = vor.u32 %v674, %v677
      %v679 = vsel %vm601, %v670, %v678
      %v680 = vrot.slane %v678, 4
      %v682 = vshrl.u32 %v530, 16
      %v684 = vrot.slane %v682, 5
      %v685 = vshll.u32 %v530, 16
      %v687 = vrot.slane %v685, 6
      %v688 = vor.u32 %v684, %v687
      %v689 = vsel %vm601, %v680, %v688
      %v690 = vrot.slane %v688, 4
      %v692 = vshrl.u32 %v531, 16
      %v694 = vrot.slane %v692, 5
      %v695 = vshll.u32 %v531, 16
      %v697 = vrot.slane %v695, 6
      %v698 = vor.u32 %v694, %v697
      %v699 = vsel %vm601, %v690, %v698
      %v700 = vrot.slane %v698, 4
      %v702 = vshrl.u32 %v532, 16
      %v704 = vrot.slane %v702, 5
      %v705 = vshll.u32 %v532, 16
      %v707 = vrot.slane %v705, 6
      %v708 = vor.u32 %v704, %v707
      %v709 = vsel %vm601, %v700, %v708
      %v710 = vrot.slane %v708, 4
      %v712 = vshrl.u32 %v533, 16
      %v714 = vrot.slane %v712, 5
      %v715 = vshll.u32 %v533, 16
      %v717 = vrot.slane %v715, 6
      %v718 = vor.u32 %v714, %v717
      %v719 = vsel %vm601, %v710, %v718
      %v720 = vrot.slane %v718, 4
      %v722 = vshrl.u32 %v534, 16
      %v724 = vrot.slane %v722, 5
      %v725 = vshll.u32 %v534, 16
      %v727 = vrot.slane %v725, 6
      %v728 = vor.u32 %v724, %v727
      %v729 = vsel %vm601, %v720, %v728
      %v730 = vrot.slane %v728, 4
      %744 = vst [vmem:[#allocation2 + $0x10] sm:$0xf] %v619
      %745 = vst [vmem:[#allocation2 + $0x34] sm:$0xf] %v629
      %746 = vst [vmem:[#allocation2 + $0x58] sm:$0xf] %v639
      %747 = vst [vmem:[#allocation2 + $0x7c] sm:$0xf] %v649
      %748 = vst [vmem:[#allocation2 + $0xa0] sm:$0xf] %v659
      %749 = vst [vmem:[#allocation2 + $0xc4] sm:$0xf] %v669
      %750 = vst [vmem:[#allocation2 + $0xe8] sm:$0xf] %v679
      %751 = vst [vmem:[#allocation2 + $0x10c] sm:$0xf] %v689
      %752 = vst [vmem:[#allocation2 + $0x130] sm:$0xf] %v699
      %753 = vst [vmem:[#allocation2 + $0x154] sm:$0xf] %v709
      %754 = vst [vmem:[#allocation2 + $0x178] sm:$0xf] %v719
      %755 = vst [vmem:[#allocation2 + $0x19c] sm:$0xf] %v729
      %756 = vst [vmem:[#allocation2 + $0x1c0] sm:$0x3] %v730
      %vm757 = vcmask 1041408
      %vm758 = vcmask 1045508
      %vm759 = vmor %vm757, %vm758
      %v760 = vrot.slane %v522, 6
      %v761 = vrot.slane %v760, 4
      %v762 = vrot.slane %v523, 6
      %v763 = vsel %vm759, %v761, %v762
      %v764 = vrot.slane %v762, 4
      %v765 = vrot.slane %v524, 6
      %v766 = vsel %vm759, %v764, %v765
      %v767 = vrot.slane %v765, 4
      %v768 = vrot.slane %v525, 6
      %v769 = vsel %vm759, %v767, %v768
      %v770 = vrot.slane %v768, 4
      %v771 = vrot.slane %v526, 6
      %v772 = vsel %vm759, %v770, %v771
      %v773 = vrot.slane %v771, 4
      %v774 = vrot.slane %v527, 6
      %v775 = vsel %vm759, %v773, %v774
      %v776 = vrot.slane %v774, 4
      %v777 = vrot.slane %v528, 6
      %v778 = vsel %vm759, %v776, %v777
      %v779 = vrot.slane %v777, 4
      %v780 = vrot.slane %v529, 6
      %v781 = vsel %vm759, %v779, %v780
      %v782 = vrot.slane %v780, 4
      %v783 = vrot.slane %v530, 6
      %v784 = vsel %vm759, %v782, %v783
      %v785 = vrot.slane %v783, 4
      %v786 = vrot.slane %v531, 6
      %v787 = vsel %vm759, %v785, %v786
      %v788 = vrot.slane %v786, 4
      %v789 = vrot.slane %v532, 6
      %v790 = vsel %vm759, %v788, %v789
      %v791 = vrot.slane %v789, 4
      %v792 = vrot.slane %v533, 6
      %v793 = vsel %vm759, %v791, %v792
      %v794 = vrot.slane %v792, 4
      %v795 = vrot.slane %v534, 6
      %v796 = vsel %vm759, %v794, %v795
      %v797 = vrot.slane %v795, 4
      %811 = vst [vmem:[#allocation2 + $0x14] sm:$0xf] %v763
      %812 = vst [vmem:[#allocation2 + $0x38] sm:$0xf] %v766
      %813 = vst [vmem:[#allocation2 + $0x5c] sm:$0xf] %v769
      %814 = vst [vmem:[#allocation2 + $0x80] sm:$0xf] %v772
      %815 = vst [vmem:[#allocation2 + $0xa4] sm:$0xf] %v775
      %816 = vst [vmem:[#allocation2 + $0xc8] sm:$0xf] %v778
      %817 = vst [vmem:[#allocation2 + $0xec] sm:$0xf] %v781
      %818 = vst [vmem:[#allocation2 + $0x110] sm:$0xf] %v784
      %819 = vst [vmem:[#allocation2 + $0x134] sm:$0xf] %v787
      %820 = vst [vmem:[#allocation2 + $0x158] sm:$0xf] %v790
      %821 = vst [vmem:[#allocation2 + $0x17c] sm:$0xf] %v793
      %822 = vst [vmem:[#allocation2 + $0x1a0] sm:$0xf] %v796
      %823 = vst [vmem:[#allocation2 + $0x1c4] sm:$0x3] %v797
      %v824 = vpack.c.bf16 %v201, %v200
      %v825 = vpack.c.bf16 %v202, %v202
      %v828 = vunpack.c.l.b16 %v824
      %v829 = vunpack.c.h.b16 %v824
      %v830 = vunpack.c.l.b16 %v825
      %v831 = vpack.c.b16 %v828, %v828
      %v832 = vpack.c.b16 %v829, %v829
      %v833 = vpack.c.b16 %v830, %v830
      %v834 = vrot.slane %v233, 6
      %v835 = vrot.slane %v834, 4
      %v836 = vrot.slane %v234, 6
      %v837 = vsel %vm759, %v835, %v836
      %v838 = vrot.slane %v836, 4
      %v839 = vrot.slane %v235, 6
      %v840 = vsel %vm759, %v838, %v839
      %v841 = vrot.slane %v839, 4
      %v842 = vrot.slane %v236, 6
      %v843 = vsel %vm759, %v841, %v842
      %v844 = vrot.slane %v842, 4
      %v845 = vrot.slane %v237, 6
      %v846 = vsel %vm759, %v844, %v845
      %v847 = vrot.slane %v845, 4
      %v848 = vrot.slane %v238, 6
      %v849 = vsel %vm759, %v847, %v848
      %v850 = vrot.slane %v848, 4
      %v851 = vrot.slane %v239, 6
      %v852 = vsel %vm759, %v850, %v851
      %v853 = vrot.slane %v851, 4
      %v854 = vrot.slane %v240, 6
      %v855 = vsel %vm759, %v853, %v854
      %v856 = vrot.slane %v854, 4
      %v857 = vrot.slane %v241, 6
      %v858 = vsel %vm759, %v856, %v857
      %v859 = vrot.slane %v857, 4
      %v860 = vrot.slane %v242, 6
      %v861 = vsel %vm759, %v859, %v860
      %v862 = vrot.slane %v860, 4
      %v863 = vrot.slane %v831, 6
      %v864 = vsel %vm759, %v862, %v863
      %v865 = vrot.slane %v863, 4
      %v866 = vrot.slane %v832, 6
      %v867 = vsel %vm759, %v865, %v866
      %v868 = vrot.slane %v866, 4
      %v869 = vrot.slane %v833, 6
      %v870 = vsel %vm759, %v868, %v869
      %v871 = vrot.slane %v869, 4
      %885 = vst [vmem:[#allocation2 + $0x18] sm:$0xf] %v837
      %886 = vst [vmem:[#allocation2 + $0x3c] sm:$0xf] %v840
      %887 = vst [vmem:[#allocation2 + $0x60] sm:$0xf] %v843
      %888 = vst [vmem:[#allocation2 + $0x84] sm:$0xf] %v846
      %889 = vst [vmem:[#allocation2 + $0xa8] sm:$0xf] %v849
      %890 = vst [vmem:[#allocation2 + $0xcc] sm:$0xf] %v852
      %891 = vst [vmem:[#allocation2 + $0xf0] sm:$0xf] %v855
      %892 = vst [vmem:[#allocation2 + $0x114] sm:$0xf] %v858
      %893 = vst [vmem:[#allocation2 + $0x138] sm:$0xf] %v861
      %894 = vst [vmem:[#allocation2 + $0x15c] sm:$0xf] %v864
      %895 = vst [vmem:[#allocation2 + $0x180] sm:$0xf] %v867
      %896 = vst [vmem:[#allocation2 + $0x1a4] sm:$0xf] %v870
      %897 = vst [vmem:[#allocation2 + $0x1c8] sm:$0x3] %v871
      %v898 = vpack.c.bf16 %v203, %v202
      %v900 = vunpack.c.l.b16 %v898
      %v901 = vunpack.c.h.b16 %v898
      %v902 = vpack.c.b16 %v900, %v900
      %v903 = vpack.c.b16 %v901, %v901
      %vm904 = vsmask.f32 1280
      %vm905 = vsmask.f32 5392
      %vm906 = vmor %vm904, %vm905
      %v907 = vrot.slane %v297, 6
      %v908 = vrot.slane %v293, 7
      %v909 = vor.u32 %v907, %v908
      %v910 = vrot.slane %v909, 4
      %v911 = vrot.slane %v307, 6
      %v912 = vrot.slane %v303, 7
      %v913 = vor.u32 %v911, %v912
      %v914 = vsel %vm906, %v910, %v913
      %v915 = vrot.slane %v913, 4
      %v916 = vrot.slane %v317, 6
      %v917 = vrot.slane %v313, 7
      %v918 = vor.u32 %v916, %v917
      %v919 = vsel %vm906, %v915, %v918
      %v920 = vrot.slane %v918, 4
      %v921 = vrot.slane %v327, 6
      %v922 = vrot.slane %v323, 7
      %v923 = vor.u32 %v921, %v922
      %v924 = vsel %vm906, %v920, %v923
      %v925 = vrot.slane %v923, 4
      %v926 = vrot.slane %v337, 6
      %v927 = vrot.slane %v333, 7
      %v928 = vor.u32 %v926, %v927
      %v929 = vsel %vm906, %v925, %v928
      %v930 = vrot.slane %v928, 4
      %v931 = vrot.slane %v347, 6
      %v932 = vrot.slane %v343, 7
      %v933 = vor.u32 %v931, %v932
      %v934 = vsel %vm906, %v930, %v933
      %v935 = vrot.slane %v933, 4
      %v936 = vrot.slane %v357, 6
      %v937 = vrot.slane %v353, 7
      %v938 = vor.u32 %v936, %v937
      %v939 = vsel %vm906, %v935, %v938
      %v940 = vrot.slane %v938, 4
      %v941 = vrot.slane %v367, 6
      %v942 = vrot.slane %v363, 7
      %v943 = vor.u32 %v941, %v942
      %v944 = vsel %vm906, %v940, %v943
      %v945 = vrot.slane %v943, 4
      %v946 = vrot.slane %v377, 6
      %v947 = vrot.slane %v373, 7
      %v948 = vor.u32 %v946, %v947
      %v949 = vsel %vm906, %v945, %v948
      %v950 = vrot.slane %v948, 4
      %v951 = vrot.slane %v387, 6
      %v952 = vrot.slane %v383, 7
      %v953 = vor.u32 %v951, %v952
      %v954 = vsel %vm906, %v950, %v953
      %v955 = vrot.slane %v953, 4
      %v957 = vshrl.u32 %v831, 16
      %v959 = vrot.slane %v957, 6
      %v960 = vshll.u32 %v831, 16
      %v962 = vrot.slane %v960, 7
      %v963 = vor.u32 %v959, %v962
      %v964 = vsel %vm906, %v955, %v963
      %v965 = vrot.slane %v963, 4
      %v967 = vshrl.u32 %v832, 16
      %v969 = vrot.slane %v967, 6
      %v970 = vshll.u32 %v832, 16
      %v972 = vrot.slane %v970, 7
      %v973 = vor.u32 %v969, %v972
      %v974 = vsel %vm906, %v965, %v973
      %v975 = vrot.slane %v973, 4
      %v977 = vshrl.u32 %v902, 16
      %v979 = vrot.slane %v977, 6
      %v980 = vshll.u32 %v902, 16
      %v982 = vrot.slane %v980, 7
      %v983 = vor.u32 %v979, %v982
      %v984 = vsel %vm906, %v975, %v983
      %v985 = vrot.slane %v983, 4
      %v987 = vshll.u32 %v903, 16
      %v989 = vrot.slane %v987, 7
      %v990 = vsel %vm906, %v985, %v989
      %1004 = vst [vmem:[#allocation2 + $0x1c] sm:$0xf] %v914
      %1005 = vst [vmem:[#allocation2 + $0x40] sm:$0xf] %v919
      %1006 = vst [vmem:[#allocation2 + $0x64] sm:$0xf] %v924
      %1007 = vst [vmem:[#allocation2 + $0x88] sm:$0xf] %v929
      %1008 = vst [vmem:[#allocation2 + $0xac] sm:$0xf] %v934
      %1009 = vst [vmem:[#allocation2 + $0xd0] sm:$0xf] %v939
      %1010 = vst [vmem:[#allocation2 + $0xf4] sm:$0xf] %v944
      %1011 = vst [vmem:[#allocation2 + $0x118] sm:$0xf] %v949
      %1012 = vst [vmem:[#allocation2 + $0x13c] sm:$0xf] %v954
      %1013 = vst [vmem:[#allocation2 + $0x160] sm:$0xf] %v964
      %1014 = vst [vmem:[#allocation2 + $0x184] sm:$0xf] %v974
      %1015 = vst [vmem:[#allocation2 + $0x1a8] sm:$0xf] %v984
      %1016 = vst [vmem:[#allocation2 + $0x1cc] sm:$0x3] %v990
      %vm1017 = vcmask 1040384
      %vm1018 = vcmask 1044484
      %vm1019 = vmor %vm1017, %vm1018
      %v1020 = vrot.slane %v233, 7
      %v1021 = vrot.slane %v1020, 4
      %v1022 = vrot.slane %v234, 7
      %v1023 = vsel %vm1019, %v1021, %v1022
      %v1024 = vrot.slane %v1022, 4
      %v1025 = vrot.slane %v235, 7
      %v1026 = vsel %vm1019, %v1024, %v1025
      %v1027 = vrot.slane %v1025, 4
      %v1028 = vrot.slane %v236, 7
      %v1029 = vsel %vm1019, %v1027, %v1028
      %v1030 = vrot.slane %v1028, 4
      %v1031 = vrot.slane %v237, 7
      %v1032 = vsel %vm1019, %v1030, %v1031
      %v1033 = vrot.slane %v1031, 4
      %v1034 = vrot.slane %v238, 7
      %v1035 = vsel %vm1019, %v1033, %v1034
      %v1036 = vrot.slane %v1034, 4
      %v1037 = vrot.slane %v239, 7
      %v1038 = vsel %vm1019, %v1036, %v1037
      %v1039 = vrot.slane %v1037, 4
      %v1040 = vrot.slane %v240, 7
      %v1041 = vsel %vm1019, %v1039, %v1040
      %v1042 = vrot.slane %v1040, 4
      %v1043 = vrot.slane %v241, 7
      %v1044 = vsel %vm1019, %v1042, %v1043
      %v1045 = vrot.slane %v1043, 4
      %v1046 = vrot.slane %v242, 7
      %v1047 = vsel %vm1019, %v1045, %v1046
      %v1048 = vrot.slane %v1046, 4
      %v1049 = vrot.slane %v831, 7
      %v1050 = vsel %vm1019, %v1048, %v1049
      %v1051 = vrot.slane %v1049, 4
      %v1052 = vrot.slane %v832, 7
      %v1053 = vsel %vm1019, %v1051, %v1052
      %v1054 = vrot.slane %v1052, 4
      %v1055 = vrot.slane %v902, 7
      %v1056 = vsel %vm1019, %v1054, %v1055
      %v1057 = vrot.slane %v1055, 4
      %v1058 = vrot.slane %v903, 7
      %v1059 = vsel %vm1019, %v1057, %v1058
      %1073 = vst [vmem:[#allocation2 + $0x20] sm:$0xf] %v1023
      %1074 = vst [vmem:[#allocation2 + $0x44] sm:$0xf] %v1026
      %1075 = vst [vmem:[#allocation2 + $0x68] sm:$0xf] %v1029
      %1076 = vst [vmem:[#allocation2 + $0x8c] sm:$0xf] %v1032
      %1077 = vst [vmem:[#allocation2 + $0xb0] sm:$0xf] %v1035
      %1078 = vst [vmem:[#allocation2 + $0xd4] sm:$0xf] %v1038
      %1079 = vst [vmem:[#allocation2 + $0xf8] sm:$0xf] %v1041
      %1080 = vst [vmem:[#allocation2 + $0x11c] sm:$0xf] %v1044
      %1081 = vst [vmem:[#allocation2 + $0x140] sm:$0xf] %v1047
      %1082 = vst [vmem:[#allocation2 + $0x164] sm:$0xf] %v1050
      %1083 = vst [vmem:[#allocation2 + $0x188] sm:$0xf] %v1053
      %1084 = vst [vmem:[#allocation2 + $0x1ac] sm:$0xf] %v1056
      %1085 = vst [vmem:[#allocation2 + $0x1d0] sm:$0x3] %v1059
      %v1086 = vld [vmem:[#allocation2] sm:$0xff]
      %v1087 = vld [vmem:[#allocation2 + $0x8] sm:$0xff]
      %v1088 = vld [vmem:[#allocation2 + $0x10] sm:$0xff]
      %v1089 = vld [vmem:[#allocation2 + $0x18] sm:$0xff]
      %v1090 = vld [vmem:[#allocation2 + $0x20] sm:$0xf]
      %v1091 = vld [vmem:[#allocation2 + $0x24] sm:$0xff]
      %v1092 = vld [vmem:[#allocation2 + $0x2c] sm:$0xff]
      %v1093 = vld [vmem:[#allocation2 + $0x34] sm:$0xff]
      %v1094 = vld [vmem:[#allocation2 + $0x3c] sm:$0xff]
      %v1095 = vld [vmem:[#allocation2 + $0x44] sm:$0xf]
      %v1096 = vld [vmem:[#allocation2 + $0x48] sm:$0xff]
      %v1097 = vld [vmem:[#allocation2 + $0x50] sm:$0xff]
      %v1098 = vld [vmem:[#allocation2 + $0x58] sm:$0xff]
      %v1099 = vld [vmem:[#allocation2 + $0x60] sm:$0xff]
      %v1100 = vld [vmem:[#allocation2 + $0x68] sm:$0xf]
      %v1101 = vld [vmem:[#allocation2 + $0x6c] sm:$0xff]
      %v1102 = vld [vmem:[#allocation2 + $0x74] sm:$0xff]
      %v1103 = vld [vmem:[#allocation2 + $0x7c] sm:$0xff]
      %v1104 = vld [vmem:[#allocation2 + $0x84] sm:$0xff]
      %v1105 = vld [vmem:[#allocation2 + $0x8c] sm:$0xf]
      %v1106 = vld [vmem:[#allocation2 + $0x90] sm:$0xff]
      %v1107 = vld [vmem:[#allocation2 + $0x98] sm:$0xff]
      %v1108 = vld [vmem:[#allocation2 + $0xa0] sm:$0xff]
      %v1109 = vld [vmem:[#allocation2 + $0xa8] sm:$0xff]
      %v1110 = vld [vmem:[#allocation2 + $0xb0] sm:$0xf]
      %v1111 = vld [vmem:[#allocation2 + $0xb4] sm:$0xff]
      %v1112 = vld [vmem:[#allocation2 + $0xbc] sm:$0xff]
      %v1113 = vld [vmem:[#allocation2 + $0xc4] sm:$0xff]
      %v1114 = vld [vmem:[#allocation2 + $0xcc] sm:$0xff]
      %v1115 = vld [vmem:[#allocation2 + $0xd4] sm:$0xf]
      %v1116 = vld [vmem:[#allocation2 + $0xd8] sm:$0xff]
      %v1117 = vld [vmem:[#allocation2 + $0xe0] sm:$0xff]
      %v1118 = vld [vmem:[#allocation2 + $0xe8] sm:$0xff]
      %v1119 = vld [vmem:[#allocation2 + $0xf0] sm:$0xff]
      %v1120 = vld [vmem:[#allocation2 + $0xf8] sm:$0xf]
      %v1121 = vld [vmem:[#allocation2 + $0xfc] sm:$0xff]
      %v1122 = vld [vmem:[#allocation2 + $0x104] sm:$0xff]
      %v1123 = vld [vmem:[#allocation2 + $0x10c] sm:$0xff]
      %v1124 = vld [vmem:[#allocation2 + $0x114] sm:$0xff]
      %v1125 = vld [vmem:[#allocation2 + $0x11c] sm:$0xf]
      %v1126 = vld [vmem:[#allocation2 + $0x120] sm:$0xff]
      %v1127 = vld [vmem:[#allocation2 + $0x128] sm:$0xff]
      %v1128 = vld [vmem:[#allocation2 + $0x130] sm:$0xff]
      %v1129 = vld [vmem:[#allocation2 + $0x138] sm:$0xff]
      %v1130 = vld [vmem:[#allocation2 + $0x140] sm:$0xf]
      %v1131 = vld [vmem:[#allocation2 + $0x144] sm:$0xff]
      %v1132 = vld [vmem:[#allocation2 + $0x14c] sm:$0xff]
      %v1133 = vld [vmem:[#allocation2 + $0x154] sm:$0xff]
      %v1134 = vld [vmem:[#allocation2 + $0x15c] sm:$0xff]
      %v1135 = vld [vmem:[#allocation2 + $0x164] sm:$0xf]
      %v1136 = vld [vmem:[#allocation2 + $0x168] sm:$0xff]
      %v1137 = vld [vmem:[#allocation2 + $0x170] sm:$0xff]
      %v1138 = vld [vmem:[#allocation2 + $0x178] sm:$0xff]
      %v1139 = vld [vmem:[#allocation2 + $0x180] sm:$0xff]
      %v1140 = vld [vmem:[#allocation2 + $0x188] sm:$0xf]
      %v1141 = vld [vmem:[#allocation2 + $0x18c] sm:$0xff]
      %v1142 = vld [vmem:[#allocation2 + $0x194] sm:$0xff]
      %v1143 = vld [vmem:[#allocation2 + $0x19c] sm:$0xff]
      %v1144 = vld [vmem:[#allocation2 + $0x1a4] sm:$0xff]
      %v1145 = vld [vmem:[#allocation2 + $0x1ac] sm:$0xf]
      %v1146 = vld [vmem:[#allocation2 + $0x1b0] sm:$0x33]
      %v1147 = vld [vmem:[#allocation2 + $0x1b8] sm:$0x33]
      %v1148 = vld [vmem:[#allocation2 + $0x1c0] sm:$0x33]
      %v1149 = vld [vmem:[#allocation2 + $0x1c8] sm:$0x33]
      %v1150 = vld [vmem:[#allocation2 + $0x1d0] sm:$0x3]
      %v1151 = vld [vmem:[%s1] sm:$0xf]
      %v1152 = vld [vmem:[%s1 + $0x4] sm:$0xf]
      %v1153 = vld [vmem:[%s1 + $0x8] sm:$0xf]
      %v1154 = vld [vmem:[%s1 + $0xc] sm:$0xf]
      %v1155 = vld [vmem:[%s1 + $0x10] sm:$0xf]
      %v1156 = vld [vmem:[%s1 + $0x14] sm:$0xf]
      %v1157 = vld [vmem:[%s1 + $0x18] sm:$0xf]
      %v1158 = vld [vmem:[%s1 + $0x1c] sm:$0xf]
      %v1159 = vld [vmem:[%s1 + $0x20] sm:$0xf]
      %v1160 = vld [vmem:[%s1 + $0x24] sm:$0xf]
      %v1161 = vld [vmem:[%s1 + $0x28] sm:$0xf]
      %v1162 = vld [vmem:[%s1 + $0x2c] sm:$0xf]
      %v1163 = vld [vmem:[%s1 + $0x30] sm:$0xf]
      %v1164 = vld [vmem:[%s1 + $0x34] sm:$0xf]
      %v1165 = vld [vmem:[%s1 + $0x38] sm:$0xf]
      %v1166 = vld [vmem:[%s1 + $0x3c] sm:$0xf]
      %v1167 = vld [vmem:[%s1 + $0x40] sm:$0xf]
      %v1168 = vld [vmem:[%s1 + $0x44] sm:$0xf]
      %v1169 = vld [vmem:[%s1 + $0x48] sm:$0xf]
      %v1170 = vld [vmem:[%s1 + $0x4c] sm:$0xf]
      %v1171 = vld [vmem:[%s1 + $0x50] sm:$0xf]
      %v1172 = vld [vmem:[%s1 + $0x54] sm:$0xf]
      %v1173 = vld [vmem:[%s1 + $0x58] sm:$0xf]
      %v1174 = vld [vmem:[%s1 + $0x5c] sm:$0xf]
      %v1175 = vld [vmem:[%s1 + $0x60] sm:$0xf]
      %v1176 = vld [vmem:[%s1 + $0x64] sm:$0xf]
      %v1177 = vld [vmem:[%s1 + $0x68] sm:$0xf]
      %v1178 = vld [vmem:[%s1 + $0x6c] sm:$0xf]
      %v1179 = vld [vmem:[%s1 + $0x70] sm:$0xf]
      %v1180 = vld [vmem:[%s1 + $0x74] sm:$0xf]
      %v1181 = vld [vmem:[%s1 + $0x78] sm:$0xf]
      %v1182 = vld [vmem:[%s1 + $0x7c] sm:$0xf]
      %v1183 = vld [vmem:[%s1 + $0x80] sm:$0xf]
      %v1184 = vld [vmem:[%s1 + $0x84] sm:$0xf]
      %v1185 = vld [vmem:[%s1 + $0x88] sm:$0xf]
      %v1186 = vld [vmem:[%s1 + $0x8c] sm:$0xf]
      %v1187 = vld [vmem:[%s1 + $0x90] sm:$0xf]
      %v1188 = vld [vmem:[%s1 + $0x94] sm:$0xf]
      %v1189 = vld [vmem:[%s1 + $0x98] sm:$0xf]
      %v1190 = vld [vmem:[%s1 + $0x9c] sm:$0xf]
      %v1191 = vld [vmem:[%s1 + $0xa0] sm:$0xf]
      %v1192 = vld [vmem:[%s1 + $0xa4] sm:$0xf]
      %v1193 = vld [vmem:[%s1 + $0xa8] sm:$0xf]
      %v1194 = vld [vmem:[%s1 + $0xac] sm:$0xf]
      %v1195 = vld [vmem:[%s1 + $0xb0] sm:$0xf]
      %v1196 = vld [vmem:[%s1 + $0xb4] sm:$0xf]
      %v1197 = vld [vmem:[%s1 + $0xb8] sm:$0xf]
      %v1198 = vld [vmem:[%s1 + $0xbc] sm:$0xf]
      %v1199 = vld [vmem:[%s1 + $0xc0] sm:$0xf]
      %v1200 = vld [vmem:[%s1 + $0xc4] sm:$0xf]
      %v1201 = vld [vmem:[%s1 + $0xc8] sm:$0xf]
      %v1202 = vld [vmem:[%s1 + $0xcc] sm:$0xf]
      %v1203 = vld [vmem:[%s1 + $0xd0] sm:$0xf]
      %v1204 = vld [vmem:[%s1 + $0xd4] sm:$0xf]
      %v1205 = vld [vmem:[%s1 + $0xd8] sm:$0xf]
      %v1206 = vld [vmem:[%s1 + $0xdc] sm:$0xf]
      %v1207 = vld [vmem:[%s1 + $0xe0] sm:$0xf]
      %v1208 = vld [vmem:[%s1 + $0xe4] sm:$0xf]
      %v1209 = vld [vmem:[%s1 + $0xe8] sm:$0xf]
      %v1210 = vld [vmem:[%s1 + $0xec] sm:$0xf]
      %v1211 = vld [vmem:[%s1 + $0xf0] sm:$0xf]
      %v1212 = vld [vmem:[%s1 + $0xf4] sm:$0xf]
      %v1213 = vld [vmem:[%s1 + $0xf8] sm:$0xf]
      %v1214 = vld [vmem:[%s1 + $0xfc] sm:$0xf]
      %v1215 = vld [vmem:[%s1 + $0x100] sm:$0xf]
      %v1216 = vld [vmem:[%s1 + $0x104] sm:$0xf]
      %v1217 = vld [vmem:[%s1 + $0x108] sm:$0xf]
      %v1218 = vld [vmem:[%s1 + $0x10c] sm:$0xf]
      %v1219 = vld [vmem:[%s1 + $0x110] sm:$0xf]
      %v1220 = vld [vmem:[%s1 + $0x114] sm:$0xf]
      %v1221 = vld [vmem:[%s1 + $0x118] sm:$0xf]
      %v1222 = vld [vmem:[%s1 + $0x11c] sm:$0xf]
      %v1223 = vld [vmem:[%s1 + $0x120] sm:$0xf]
      %v1224 = vld [vmem:[%s1 + $0x124] sm:$0xf]
      %v1225 = vld [vmem:[%s1 + $0x128] sm:$0xf]
      %v1226 = vld [vmem:[%s1 + $0x12c] sm:$0xf]
      %v1227 = vld [vmem:[%s1 + $0x130] sm:$0xf]
      %v1228 = vld [vmem:[%s1 + $0x134] sm:$0xf]
      %v1229 = vld [vmem:[%s1 + $0x138] sm:$0xf]
      %v1230 = vld [vmem:[%s1 + $0x13c] sm:$0xf]
      %v1231 = vld [vmem:[%s1 + $0x140] sm:$0xf]
      %v1232 = vld [vmem:[%s1 + $0x144] sm:$0xf]
      %v1233 = vld [vmem:[%s1 + $0x148] sm:$0xf]
      %v1234 = vld [vmem:[%s1 + $0x14c] sm:$0xf]
      %v1235 = vld [vmem:[%s1 + $0x150] sm:$0xf]
      %v1236 = vld [vmem:[%s1 + $0x154] sm:$0xf]
      %v1237 = vld [vmem:[%s1 + $0x158] sm:$0xf]
      %v1238 = vld [vmem:[%s1 + $0x15c] sm:$0xf]
      %v1239 = vld [vmem:[%s1 + $0x160] sm:$0xf]
      %v1240 = vld [vmem:[%s1 + $0x164] sm:$0xf]
      %v1241 = vld [vmem:[%s1 + $0x168] sm:$0xf]
      %v1242 = vld [vmem:[%s1 + $0x16c] sm:$0xf]
      %v1243 = vld [vmem:[%s1 + $0x170] sm:$0xf]
      %v1244 = vld [vmem:[%s1 + $0x174] sm:$0xf]
      %v1245 = vld [vmem:[%s1 + $0x178] sm:$0xf]
      %v1246 = vld [vmem:[%s1 + $0x17c] sm:$0xf]
      %v1247 = vld [vmem:[%s1 + $0x180] sm:$0xf]
      %v1248 = vld [vmem:[%s1 + $0x184] sm:$0xf]
      %v1249 = vld [vmem:[%s1 + $0x188] sm:$0xf]
      %v1250 = vld [vmem:[%s1 + $0x18c] sm:$0xf]
      %v1251 = vld [vmem:[%s1 + $0x190] sm:$0xf]
      %v1252 = vld [vmem:[%s1 + $0x194] sm:$0xf]
      %v1253 = vld [vmem:[%s1 + $0x198] sm:$0xf]
      %v1254 = vld [vmem:[%s1 + $0x19c] sm:$0xf]
      %v1255 = vld [vmem:[%s1 + $0x1a0] sm:$0xf]
      %v1256 = vld [vmem:[%s1 + $0x1a4] sm:$0xf]
      %v1257 = vld [vmem:[%s1 + $0x1a8] sm:$0xf]
      %v1258 = vld [vmem:[%s1 + $0x1ac] sm:$0xf]
      %v1259 = vld [vmem:[%s1 + $0x1b0] sm:$0xf]
      %v1260 = vld [vmem:[%s1 + $0x1b4] sm:$0xf]
      %v1261 = vld [vmem:[%s1 + $0x1b8] sm:$0xf]
      %v1262 = vld [vmem:[%s1 + $0x1bc] sm:$0xf]
      %v1263 = vld [vmem:[%s1 + $0x1c0] sm:$0xf]
      %v1264 = vld [vmem:[%s1 + $0x1c4] sm:$0xf]
      %v1265 = vld [vmem:[%s1 + $0x1c8] sm:$0xf]
      %v1266 = vld [vmem:[%s1 + $0x1cc] sm:$0xf]
      %v1267 = vld [vmem:[%s1 + $0x1d0] sm:$0xf]
      %v1268 = vld [vmem:[%s1 + $0x1d4] sm:$0xf]
      %v1269 = vld [vmem:[%s1 + $0x1d8] sm:$0xf]
      %v1270 = vld [vmem:[%s1 + $0x1dc] sm:$0xf]
      %v1271 = vld [vmem:[%s1 + $0x1e0] sm:$0xf]
      %v1272 = vld [vmem:[%s1 + $0x1e4] sm:$0xf]
      %v1273 = vld [vmem:[%s1 + $0x1e8] sm:$0xf]
      %v1274 = vld [vmem:[%s1 + $0x1ec] sm:$0xf]
      %v1275 = vld [vmem:[%s1 + $0x1f0] sm:$0xf]
      %v1276 = vld [vmem:[%s1 + $0x1f4] sm:$0xf]
      %v1277 = vld [vmem:[%s1 + $0x1f8] sm:$0xf]
      %v1278 = vld [vmem:[%s1 + $0x1fc] sm:$0xf]
      %v1279 = vld [vmem:[%s1 + $0x200] sm:$0xf]
      %v1280 = vld [vmem:[%s1 + $0x204] sm:$0xf]
      %v1281 = vld [vmem:[%s1 + $0x208] sm:$0xf]
      %v1282 = vld [vmem:[%s1 + $0x20c] sm:$0xf]
      %v1283 = vld [vmem:[%s1 + $0x210] sm:$0xf]
      %v1284 = vld [vmem:[%s1 + $0x214] sm:$0xf]
      %v1285 = vld [vmem:[%s1 + $0x218] sm:$0xf]
      %v1286 = vld [vmem:[%s1 + $0x21c] sm:$0xf]
      %v1287 = vld [vmem:[%s1 + $0x220] sm:$0xf]
      %v1288 = vld [vmem:[%s1 + $0x224] sm:$0xf]
      %v1289 = vld [vmem:[%s1 + $0x228] sm:$0xf]
      %v1290 = vld [vmem:[%s1 + $0x22c] sm:$0xf]
      %v1291 = vld [vmem:[%s1 + $0x230] sm:$0xf]
      %v1292 = vld [vmem:[%s1 + $0x234] sm:$0xf]
      %v1293 = vld [vmem:[%s1 + $0x238] sm:$0xf]
      %v1294 = vld [vmem:[%s1 + $0x23c] sm:$0xf]
      %v1295 = vld [vmem:[%s2] sm:$0x1]
      %v1297 = vlaneseq
      %v1298 = vshrl.u32 %v1297, 7
      %v1299 = vsub.s32 0, %v1298
      %v1300 = vrot.slane %v1295, %v1299
      %v1367 = vunpack.c.l.b16 %v1086
      %v1368 = vunpack.c.h.b16 %v1086
      %v1369 = vunpack.c.l.b16 %v1087
      %v1370 = vunpack.c.h.b16 %v1087
      %v1371 = vunpack.c.l.b16 %v1088
      %v1372 = vunpack.c.h.b16 %v1088
      %v1373 = vunpack.c.l.b16 %v1089
      %v1374 = vunpack.c.h.b16 %v1089
      %v1375 = vunpack.c.l.b16 %v1090
      %v1376 = vunpack.c.l.b16 %v1091
      %v1377 = vunpack.c.h.b16 %v1091
      %v1378 = vunpack.c.l.b16 %v1092
      %v1379 = vunpack.c.h.b16 %v1092
      %v1380 = vunpack.c.l.b16 %v1093
      %v1381 = vunpack.c.h.b16 %v1093
      %v1382 = vunpack.c.l.b16 %v1094
      %v1383 = vunpack.c.h.b16 %v1094
      %v1384 = vunpack.c.l.b16 %v1095
      %v1385 = vunpack.c.l.b16 %v1096
      %v1386 = vunpack.c.h.b16 %v1096
      %v1387 = vunpack.c.l.b16 %v1097
      %v1388 = vunpack.c.h.b16 %v1097
      %v1389 = vunpack.c.l.b16 %v1098
      %v1390 = vunpack.c.h.b16 %v1098
      %v1391 = vunpack.c.l.b16 %v1099
      %v1392 = vunpack.c.h.b16 %v1099
      %v1393 = vunpack.c.l.b16 %v1100
      %v1394 = vunpack.c.l.b16 %v1101
      %v1395 = vunpack.c.h.b16 %v1101
      %v1396 = vunpack.c.l.b16 %v1102
      %v1397 = vunpack.c.h.b16 %v1102
      %v1398 = vunpack.c.l.b16 %v1103
      %v1399 = vunpack.c.h.b16 %v1103
      %v1400 = vunpack.c.l.b16 %v1104
      %v1401 = vunpack.c.h.b16 %v1104
      %v1402 = vunpack.c.l.b16 %v1105
      %v1403 = vunpack.c.l.b16 %v1106
      %v1404 = vunpack.c.h.b16 %v1106
      %v1405 = vunpack.c.l.b16 %v1107
      %v1406 = vunpack.c.h.b16 %v1107
      %v1407 = vunpack.c.l.b16 %v1108
      %v1408 = vunpack.c.h.b16 %v1108
      %v1409 = vunpack.c.l.b16 %v1109
      %v1410 = vunpack.c.h.b16 %v1109
      %v1411 = vunpack.c.l.b16 %v1110
      %v1412 = vunpack.c.l.b16 %v1111
      %v1413 = vunpack.c.h.b16 %v1111
      %v1414 = vunpack.c.l.b16 %v1112
      %v1415 = vunpack.c.h.b16 %v1112
      %v1416 = vunpack.c.l.b16 %v1113
      %v1417 = vunpack.c.h.b16 %v1113
      %v1418 = vunpack.c.l.b16 %v1114
      %v1419 = vunpack.c.h.b16 %v1114
      %v1420 = vunpack.c.l.b16 %v1115
      %v1421 = vunpack.c.l.b16 %v1116
      %v1422 = vunpack.c.h.b16 %v1116
      %v1423 = vunpack.c.l.b16 %v1117
      %v1424 = vunpack.c.h.b16 %v1117
      %v1425 = vunpack.c.l.b16 %v1118
      %v1426 = vunpack.c.h.b16 %v1118
      %v1427 = vunpack.c.l.b16 %v1119
      %v1428 = vunpack.c.h.b16 %v1119
      %v1429 = vunpack.c.l.b16 %v1120
      %v1430 = vunpack.c.l.b16 %v1121
      %v1431 = vunpack.c.h.b16 %v1121
      %v1432 = vunpack.c.l.b16 %v1122
      %v1433 = vunpack.c.h.b16 %v1122
      %v1434 = vunpack.c.l.b16 %v1123
      %v1435 = vunpack.c.h.b16 %v1123
      %v1436 = vunpack.c.l.b16 %v1124
      %v1437 = vunpack.c.h.b16 %v1124
      %v1438 = vunpack.c.l.b16 %v1125
      %v1439 = vunpack.c.l.b16 %v1126
      %v1440 = vunpack.c.h.b16 %v1126
      %v1441 = vunpack.c.l.b16 %v1127
      %v1442 = vunpack.c.h.b16 %v1127
      %v1443 = vunpack.c.l.b16 %v1128
      %v1444 = vunpack.c.h.b16 %v1128
      %v1445 = vunpack.c.l.b16 %v1129
      %v1446 = vunpack.c.h.b16 %v1129
      %v1447 = vunpack.c.l.b16 %v1130
      %v1448 = vunpack.c.l.b16 %v1131
      %v1449 = vunpack.c.h.b16 %v1131
      %v1450 = vunpack.c.l.b16 %v1132
      %v1451 = vunpack.c.h.b16 %v1132
      %v1452 = vunpack.c.l.b16 %v1133
      %v1453 = vunpack.c.h.b16 %v1133
      %v1454 = vunpack.c.l.b16 %v1134
      %v1455 = vunpack.c.h.b16 %v1134
      %v1456 = vunpack.c.l.b16 %v1135
      %v1457 = vunpack.c.l.b16 %v1136
      %v1458 = vunpack.c.h.b16 %v1136
      %v1459 = vunpack.c.l.b16 %v1137
      %v1460 = vunpack.c.h.b16 %v1137
      %v1461 = vunpack.c.l.b16 %v1138
      %v1462 = vunpack.c.h.b16 %v1138
      %v1463 = vunpack.c.l.b16 %v1139
      %v1464 = vunpack.c.h.b16 %v1139
      %v1465 = vunpack.c.l.b16 %v1140
      %v1466 = vunpack.c.l.b16 %v1141
      %v1467 = vunpack.c.h.b16 %v1141
      %v1468 = vunpack.c.l.b16 %v1142
      %v1469 = vunpack.c.h.b16 %v1142
      %v1470 = vunpack.c.l.b16 %v1143
      %v1471 = vunpack.c.h.b16 %v1143
      %v1472 = vunpack.c.l.b16 %v1144
      %v1473 = vunpack.c.h.b16 %v1144
      %v1474 = vunpack.c.l.b16 %v1145
      %v1475 = vunpack.c.l.b16 %v1146
      %v1476 = vunpack.c.h.b16 %v1146
      %v1477 = vunpack.c.l.b16 %v1147
      %v1478 = vunpack.c.h.b16 %v1147
      %v1479 = vunpack.c.l.b16 %v1148
      %v1480 = vunpack.c.h.b16 %v1148
      %v1481 = vunpack.c.l.b16 %v1149
      %v1482 = vunpack.c.h.b16 %v1149
      %v1483 = vunpack.c.l.b16 %v1150
      %v1484 = vpack.c.b16 %v1376, %v1367
      %v1485 = vpack.c.b16 %v1377, %v1368
      %v1486 = vpack.c.b16 %v1378, %v1369
      %v1487 = vpack.c.b16 %v1379, %v1370
      %v1488 = vpack.c.b16 %v1380, %v1371
      %v1489 = vpack.c.b16 %v1381, %v1372
      %v1490 = vpack.c.b16 %v1382, %v1373
      %v1491 = vpack.c.b16 %v1383, %v1374
      %v1492 = vpack.c.b16 %v1384, %v1375
      %v1493 = vpack.c.b16 %v1394, %v1385
      %v1494 = vpack.c.b16 %v1395, %v1386
      %v1495 = vpack.c.b16 %v1396, %v1387
      %v1496 = vpack.c.b16 %v1397, %v1388
      %v1497 = vpack.c.b16 %v1398, %v1389
      %v1498 = vpack.c.b16 %v1399, %v1390
      %v1499 = vpack.c.b16 %v1400, %v1391
      %v1500 = vpack.c.b16 %v1401, %v1392
      %v1501 = vpack.c.b16 %v1402, %v1393
      %v1502 = vpack.c.b16 %v1412, %v1403
      %v1503 = vpack.c.b16 %v1413, %v1404
      %v1504 = vpack.c.b16 %v1414, %v1405
      %v1505 = vpack.c.b16 %v1415, %v1406
      %v1506 = vpack.c.b16 %v1416, %v1407
      %v1507 = vpack.c.b16 %v1417, %v1408
      %v1508 = vpack.c.b16 %v1418, %v1409
      %v1509 = vpack.c.b16 %v1419, %v1410
      %v1510 = vpack.c.b16 %v1420, %v1411
      %v1511 = vpack.c.b16 %v1430, %v1421
      %v1512 = vpack.c.b16 %v1431, %v1422
      %v1513 = vpack.c.b16 %v1432, %v1423
      %v1514 = vpack.c.b16 %v1433, %v1424
      %v1515 = vpack.c.b16 %v1434, %v1425
      %v1516 = vpack.c.b16 %v1435, %v1426
      %v1517 = vpack.c.b16 %v1436, %v1427
      %v1518 = vpack.c.b16 %v1437, %v1428
      %v1519 = vpack.c.b16 %v1438, %v1429
      %v1520 = vpack.c.b16 %v1448, %v1439
      %v1521 = vpack.c.b16 %v1449, %v1440
      %v1522 = vpack.c.b16 %v1450, %v1441
      %v1523 = vpack.c.b16 %v1451, %v1442
      %v1524 = vpack.c.b16 %v1452, %v1443
      %v1525 = vpack.c.b16 %v1453, %v1444
      %v1526 = vpack.c.b16 %v1454, %v1445
      %v1527 = vpack.c.b16 %v1455, %v1446
      %v1528 = vpack.c.b16 %v1456, %v1447
      %v1529 = vpack.c.b16 %v1466, %v1457
      %v1530 = vpack.c.b16 %v1467, %v1458
      %v1531 = vpack.c.b16 %v1468, %v1459
      %v1532 = vpack.c.b16 %v1469, %v1460
      %v1533 = vpack.c.b16 %v1470, %v1461
      %v1534 = vpack.c.b16 %v1471, %v1462
      %v1535 = vpack.c.b16 %v1472, %v1463
      %v1536 = vpack.c.b16 %v1473, %v1464
      %v1537 = vpack.c.b16 %v1474, %v1465
      %v1538 = vpack.c.b16 %v1475, %v1475
      %v1539 = vpack.c.b16 %v1476, %v1476
      %v1540 = vpack.c.b16 %v1477, %v1477
      %v1541 = vpack.c.b16 %v1478, %v1478
      %v1542 = vpack.c.b16 %v1479, %v1479
      %v1543 = vpack.c.b16 %v1480, %v1480
      %v1544 = vpack.c.b16 %v1481, %v1481
      %v1545 = vpack.c.b16 %v1482, %v1482
      %v1546 = vpack.c.b16 %v1483, %v1483
      %v1754 = vunpack.c.l.b16 %v1151
      %v1755 = vunpack.c.l.b16 %v1152
      %v1756 = vunpack.c.l.b16 %v1153
      %v1757 = vunpack.c.l.b16 %v1154
      %v1758 = vunpack.c.l.b16 %v1155
      %v1759 = vunpack.c.l.b16 %v1156
      %v1760 = vunpack.c.l.b16 %v1157
      %v1761 = vunpack.c.l.b16 %v1158
      %v1762 = vunpack.c.l.b16 %v1159
      %v1763 = vunpack.c.l.b16 %v1160
      %v1764 = vunpack.c.l.b16 %v1161
      %v1765 = vunpack.c.l.b16 %v1162
      %v1766 = vunpack.c.l.b16 %v1163
      %v1767 = vunpack.c.l.b16 %v1164
      %v1768 = vunpack.c.l.b16 %v1165
      %v1769 = vunpack.c.l.b16 %v1166
      %v1770 = vunpack.c.l.b16 %v1167
      %v1771 = vunpack.c.l.b16 %v1168
      %v1772 = vunpack.c.l.b16 %v1169
      %v1773 = vunpack.c.l.b16 %v1170
      %v1774 = vunpack.c.l.b16 %v1171
      %v1775 = vunpack.c.l.b16 %v1172
      %v1776 = vunpack.c.l.b16 %v1173
      %v1777 = vunpack.c.l.b16 %v1174
      %v1778 = vunpack.c.l.b16 %v1175
      %v1779 = vunpack.c.l.b16 %v1176
      %v1780 = vunpack.c.l.b16 %v1177
      %v1781 = vunpack.c.l.b16 %v1178
      %v1782 = vunpack.c.l.b16 %v1179
      %v1783 = vunpack.c.l.b16 %v1180
      %v1784 = vunpack.c.l.b16 %v1181
      %v1785 = vunpack.c.l.b16 %v1182
      %v1786 = vunpack.c.l.b16 %v1183
      %v1787 = vunpack.c.l.b16 %v1184
      %v1788 = vunpack.c.l.b16 %v1185
      %v1789 = vunpack.c.l.b16 %v1186
      %v1790 = vunpack.c.l.b16 %v1187
      %v1791 = vunpack.c.l.b16 %v1188
      %v1792 = vunpack.c.l.b16 %v1189
      %v1793 = vunpack.c.l.b16 %v1190
      %v1794 = vunpack.c.l.b16 %v1191
      %v1795 = vunpack.c.l.b16 %v1192
      %v1796 = vunpack.c.l.b16 %v1193
      %v1797 = vunpack.c.l.b16 %v1194
      %v1798 = vunpack.c.l.b16 %v1195
      %v1799 = vunpack.c.l.b16 %v1196
      %v1800 = vunpack.c.l.b16 %v1197
      %v1801 = vunpack.c.l.b16 %v1198
      %v1802 = vunpack.c.l.b16 %v1199
      %v1803 = vunpack.c.l.b16 %v1200
      %v1804 = vunpack.c.l.b16 %v1201
      %v1805 = vunpack.c.l.b16 %v1202
      %v1806 = vunpack.c.l.b16 %v1203
      %v1807 = vunpack.c.l.b16 %v1204
      %v1808 = vunpack.c.l.b16 %v1205
      %v1809 = vunpack.c.l.b16 %v1206
      %v1810 = vunpack.c.l.b16 %v1207
      %v1811 = vunpack.c.l.b16 %v1208
      %v1812 = vunpack.c.l.b16 %v1209
      %v1813 = vunpack.c.l.b16 %v1210
      %v1814 = vunpack.c.l.b16 %v1211
      %v1815 = vunpack.c.l.b16 %v1212
      %v1816 = vunpack.c.l.b16 %v1213
      %v1817 = vunpack.c.l.b16 %v1214
      %v1818 = vunpack.c.l.b16 %v1215
      %v1819 = vunpack.c.l.b16 %v1216
      %v1820 = vunpack.c.l.b16 %v1217
      %v1821 = vunpack.c.l.b16 %v1218
      %v1822 = vunpack.c.l.b16 %v1219
      %v1823 = vunpack.c.l.b16 %v1220
      %v1824 = vunpack.c.l.b16 %v1221
      %v1825 = vunpack.c.l.b16 %v1222
      %v1826 = vunpack.c.l.b16 %v1223
      %v1827 = vunpack.c.l.b16 %v1224
      %v1828 = vunpack.c.l.b16 %v1225
      %v1829 = vunpack.c.l.b16 %v1226
      %v1830 = vunpack.c.l.b16 %v1227
      %v1831 = vunpack.c.l.b16 %v1228
      %v1832 = vunpack.c.l.b16 %v1229
      %v1833 = vunpack.c.l.b16 %v1230
      %v1834 = vunpack.c.l.b16 %v1231
      %v1835 = vunpack.c.l.b16 %v1232
      %v1836 = vunpack.c.l.b16 %v1233
      %v1837 = vunpack.c.l.b16 %v1234
      %v1838 = vunpack.c.l.b16 %v1235
      %v1839 = vunpack.c.l.b16 %v1236
      %v1840 = vunpack.c.l.b16 %v1237
      %v1841 = vunpack.c.l.b16 %v1238
      %v1842 = vunpack.c.l.b16 %v1239
      %v1843 = vunpack.c.l.b16 %v1240
      %v1844 = vunpack.c.l.b16 %v1241
      %v1845 = vunpack.c.l.b16 %v1242
      %v1846 = vunpack.c.l.b16 %v1243
      %v1847 = vunpack.c.l.b16 %v1244
      %v1848 = vunpack.c.l.b16 %v1245
      %v1849 = vunpack.c.l.b16 %v1246
      %v1850 = vunpack.c.l.b16 %v1247
      %v1851 = vunpack.c.l.b16 %v1248
      %v1852 = vunpack.c.l.b16 %v1249
      %v1853 = vunpack.c.l.b16 %v1250
      %v1854 = vunpack.c.l.b16 %v1251
      %v1855 = vunpack.c.l.b16 %v1252
      %v1856 = vunpack.c.l.b16 %v1253
      %v1857 = vunpack.c.l.b16 %v1254
      %v1858 = vunpack.c.l.b16 %v1255
      %v1859 = vunpack.c.l.b16 %v1256
      %v1860 = vunpack.c.l.b16 %v1257
      %v1861 = vunpack.c.l.b16 %v1258
      %v1862 = vunpack.c.l.b16 %v1259
      %v1863 = vunpack.c.l.b16 %v1260
      %v1864 = vunpack.c.l.b16 %v1261
      %v1865 = vunpack.c.l.b16 %v1262
      %v1866 = vunpack.c.l.b16 %v1263
      %v1867 = vunpack.c.l.b16 %v1264
      %v1868 = vunpack.c.l.b16 %v1265
      %v1869 = vunpack.c.l.b16 %v1266
      %v1870 = vunpack.c.l.b16 %v1267
      %v1871 = vunpack.c.l.b16 %v1268
      %v1872 = vunpack.c.l.b16 %v1269
      %v1873 = vunpack.c.l.b16 %v1270
      %v1874 = vunpack.c.l.b16 %v1271
      %v1875 = vunpack.c.l.b16 %v1272
      %v1876 = vunpack.c.l.b16 %v1273
      %v1877 = vunpack.c.l.b16 %v1274
      %v1878 = vunpack.c.l.b16 %v1275
      %v1879 = vunpack.c.l.b16 %v1276
      %v1880 = vunpack.c.l.b16 %v1277
      %v1881 = vunpack.c.l.b16 %v1278
      %v1882 = vunpack.c.l.b16 %v1279
      %v1883 = vunpack.c.l.b16 %v1280
      %v1884 = vunpack.c.l.b16 %v1281
      %v1885 = vunpack.c.l.b16 %v1282
      %v1886 = vunpack.c.l.b16 %v1283
      %v1887 = vunpack.c.l.b16 %v1284
      %v1888 = vunpack.c.l.b16 %v1285
      %v1889 = vunpack.c.l.b16 %v1286
      %v1890 = vunpack.c.l.b16 %v1287
      %v1891 = vunpack.c.l.b16 %v1288
      %v1892 = vunpack.c.l.b16 %v1289
      %v1893 = vunpack.c.l.b16 %v1290
      %v1894 = vunpack.c.l.b16 %v1291
      %v1895 = vunpack.c.l.b16 %v1292
      %v1896 = vunpack.c.l.b16 %v1293
      %v1897 = vunpack.c.l.b16 %v1294
      %v1898 = vpack.c.b16 %v1755, %v1754
      %v1899 = vpack.c.b16 %v1757, %v1756
      %v1900 = vpack.c.b16 %v1759, %v1758
      %v1901 = vpack.c.b16 %v1761, %v1760
      %v1902 = vpack.c.b16 %v1763, %v1762
      %v1903 = vpack.c.b16 %v1765, %v1764
      %v1904 = vpack.c.b16 %v1767, %v1766
      %v1905 = vpack.c.b16 %v1769, %v1768
      %v1906 = vpack.c.b16 %v1771, %v1770
      %v1907 = vpack.c.b16 %v1773, %v1772
      %v1908 = vpack.c.b16 %v1775, %v1774
      %v1909 = vpack.c.b16 %v1777, %v1776
      %v1910 = vpack.c.b16 %v1779, %v1778
      %v1911 = vpack.c.b16 %v1781, %v1780
      %v1912 = vpack.c.b16 %v1783, %v1782
      %v1913 = vpack.c.b16 %v1785, %v1784
      %v1914 = vpack.c.b16 %v1787, %v1786
      %v1915 = vpack.c.b16 %v1789, %v1788
      %v1916 = vpack.c.b16 %v1791, %v1790
      %v1917 = vpack.c.b16 %v1793, %v1792
      %v1918 = vpack.c.b16 %v1795, %v1794
      %v1919 = vpack.c.b16 %v1797, %v1796
      %v1920 = vpack.c.b16 %v1799, %v1798
      %v1921 = vpack.c.b16 %v1801, %v1800
      %v1922 = vpack.c.b16 %v1803, %v1802
      %v1923 = vpack.c.b16 %v1805, %v1804
      %v1924 = vpack.c.b16 %v1807, %v1806
      %v1925 = vpack.c.b16 %v1809, %v1808
      %v1926 = vpack.c.b16 %v1811, %v1810
      %v1927 = vpack.c.b16 %v1813, %v1812
      %v1928 = vpack.c.b16 %v1815, %v1814
      %v1929 = vpack.c.b16 %v1817, %v1816
      %v1930 = vpack.c.b16 %v1819, %v1818
      %v1931 = vpack.c.b16 %v1821, %v1820
      %v1932 = vpack.c.b16 %v1823, %v1822
      %v1933 = vpack.c.b16 %v1825, %v1824
      %v1934 = vpack.c.b16 %v1827, %v1826
      %v1935 = vpack.c.b16 %v1829, %v1828
      %v1936 = vpack.c.b16 %v1831, %v1830
      %v1937 = vpack.c.b16 %v1833, %v1832
      %v1938 = vpack.c.b16 %v1835, %v1834
      %v1939 = vpack.c.b16 %v1837, %v1836
      %v1940 = vpack.c.b16 %v1839, %v1838
      %v1941 = vpack.c.b16 %v1841, %v1840
      %v1942 = vpack.c.b16 %v1843, %v1842
      %v1943 = vpack.c.b16 %v1845, %v1844
      %v1944 = vpack.c.b16 %v1847, %v1846
      %v1945 = vpack.c.b16 %v1849, %v1848
      %v1946 = vpack.c.b16 %v1851, %v1850
      %v1947 = vpack.c.b16 %v1853, %v1852
      %v1948 = vpack.c.b16 %v1855, %v1854
      %v1949 = vpack.c.b16 %v1857, %v1856
      %v1950 = vpack.c.b16 %v1859, %v1858
      %v1951 = vpack.c.b16 %v1861, %v1860
      %v1952 = vpack.c.b16 %v1863, %v1862
      %v1953 = vpack.c.b16 %v1865, %v1864
      %v1954 = vpack.c.b16 %v1867, %v1866
      %v1955 = vpack.c.b16 %v1869, %v1868
      %v1956 = vpack.c.b16 %v1871, %v1870
      %v1957 = vpack.c.b16 %v1873, %v1872
      %v1958 = vpack.c.b16 %v1875, %v1874
      %v1959 = vpack.c.b16 %v1877, %v1876
      %v1960 = vpack.c.b16 %v1879, %v1878
      %v1961 = vpack.c.b16 %v1881, %v1880
      %v1962 = vpack.c.b16 %v1883, %v1882
      %v1963 = vpack.c.b16 %v1885, %v1884
      %v1964 = vpack.c.b16 %v1887, %v1886
      %v1965 = vpack.c.b16 %v1889, %v1888
      %v1966 = vpack.c.b16 %v1891, %v1890
      %v1967 = vpack.c.b16 %v1893, %v1892
      %v1968 = vpack.c.b16 %v1895, %v1894
      %v1969 = vpack.c.b16 %v1897, %v1896
      %2042 = vmatprep.subr.bf16.mxu0 0
      %2043 = vmatpush1.bf16.msra.mxu0 %v1898
      %2044 = vmatprep.subr.bf16.mxu0 0
      %2045 = vmatpush1.bf16.msra.mxu0 %v1899
      %2046 = vmatprep.subr.bf16.mxu0 0
      %2047 = vmatpush1.bf16.msra.mxu0 %v1900
      %2048 = vmatprep.subr.bf16.mxu0 0
      %2049 = vmatpush1.bf16.msra.mxu0 %v1901
      %2050 = vmatprep.subr.bf16.mxu0 0
      %2051 = vmatpush1.bf16.msra.mxu0 %v1902
      %2052 = vmatprep.subr.bf16.mxu0 0
      %2053 = vmatpush1.bf16.msra.mxu0 %v1903
      %2054 = vmatprep.subr.bf16.mxu0 0
      %2055 = vmatpush1.bf16.msra.mxu0 %v1904
      %2056 = vmatprep.subr.bf16.mxu0 0
      %2057 = vmatpush1.bf16.msra.mxu0 %v1905
      %2058 = vmatprep.subr.bf16.mxu0 0
      %2059 = vmatpush1.bf16.msra.mxu0 %v1906
      %2060 = vmatprep.subr.bf16.mxu0 0
      %2061 = vmatpush1.bf16.msra.mxu0 %v1907
      %2062 = vmatprep.subr.bf16.mxu0 0
      %2063 = vmatpush1.bf16.msra.mxu0 %v1908
      %2064 = vmatprep.subr.bf16.mxu0 0
      %2065 = vmatpush1.bf16.msra.mxu0 %v1909
      %2066 = vmatprep.subr.bf16.mxu0 0
      %2067 = vmatpush1.bf16.msra.mxu0 %v1910
      %2068 = vmatprep.subr.bf16.mxu0 0
      %2069 = vmatpush1.bf16.msra.mxu0 %v1911
      %2070 = vmatprep.subr.bf16.mxu0 0
      %2071 = vmatpush1.bf16.msra.mxu0 %v1912
      %2072 = vmatprep.subr.bf16.mxu0 0
      %2073 = vmatpush1.bf16.msra.mxu0 %v1913
      %2074 = vmatprep.mubr.bf16.mxu0 %v1485
      %2075 = vmatmul.mubr.bf16.gmra.mrb[0].mxu0 %v1484
      %v2076 = vpop.f32.mrb[0].mxu0
      %v2077 = vadd.f32 %v1300, %v2076
      %v2078 = vpop.f32.mrb[0].mxu0
      %v2079 = vpop.f32.mrb[0].mxu0
      %v2080 = vadd.f32 %v1300, %v2079
      %v2081 = vpop.f32.mrb[0].mxu0
      %2082 = vmatprep.mubr.bf16.mxu0 %v1494
      %2083 = vmatmul.mubr.bf16.gmra.mrb[0].mxu0 %v1493
      %v2084 = vpop.f32.mrb[0].mxu0
      %v2085 = vadd.f32 %v1300, %v2084
      %v2086 = vpop.f32.mrb[0].mxu0
      %v2087 = vpop.f32.mrb[0].mxu0
      %v2088 = vadd.f32 %v1300, %v2087
      %v2089 = vpop.f32.mrb[0].mxu0
      %2090 = vmatprep.mubr.bf16.mxu0 %v1503
      %2091 = vmatmul.mubr.bf16.gmra.mrb[0].mxu0 %v1502
      %v2092 = vpop.f32.mrb[0].mxu0
      %v2093 = vadd.f32 %v1300, %v2092
      %v2094 = vpop.f32.mrb[0].mxu0
      %v2095 = vpop.f32.mrb[0].mxu0
      %v2096 = vadd.f32 %v1300, %v2095
      %v2097 = vpop.f32.mrb[0].mxu0
      %2098 = vmatprep.mubr.bf16.mxu0 %v1512
      %2099 = vmatmul.mubr.bf16.gmra.mrb[0].mxu0 %v1511
      %v2100 = vpop.f32.mrb[0].mxu0
      %v2101 = vadd.f32 %v1300, %v2100
      %v2102 = vpop.f32.mrb[0].mxu0
      %v2103 = vpop.f32.mrb[0].mxu0
      %v2104 = vadd.f32 %v1300, %v2103
      %v2105 = vpop.f32.mrb[0].mxu0
      %2106 = vmatprep.mubr.bf16.mxu0 %v1521
      %2107 = vmatmul.mubr.bf16.gmra.mrb[0].mxu0 %v1520
      %v2108 = vpop.f32.mrb[0].mxu0
      %v2109 = vadd.f32 %v1300, %v2108
      %v2110 = vpop.f32.mrb[0].mxu0
      %v2111 = vpop.f32.mrb[0].mxu0
      %v2112 = vadd.f32 %v1300, %v2111
      %v2113 = vpop.f32.mrb[0].mxu0
      %2114 = vmatprep.mubr.bf16.mxu0 %v1530
      %2115 = vmatmul.mubr.bf16.gmra.mrb[0].mxu0 %v1529
      %v2116 = vpop.f32.mrb[0].mxu0
      %v2117 = vadd.f32 %v1300, %v2116
      %v2118 = vpop.f32.mrb[0].mxu0
      %v2119 = vpop.f32.mrb[0].mxu0
      %v2120 = vadd.f32 %v1300, %v2119
      %v2121 = vpop.f32.mrb[0].mxu0
      %2122 = vmatprep.mubr.bf16.mxu0 %v1539
      %2123 = vmatmul.mubr.bf16.gmra.mrb[0].mxu0 %v1538
      %v2124 = vpop.f32.mrb[0].mxu0
      %v2125 = vadd.f32 %v1300, %v2124
      %v2126 = vpop.f32.mrb[0].mxu0
      %v2127 = vpop.f32.mrb[0].mxu0
      %v2128 = vpop.f32.mrb[0].mxu0
      %2129 = vdwg.mxu0
      %2130 = vmatprep.subr.bf16.mxu0 0
      %2131 = vmatpush1.bf16.msra.mxu0 %v1914
      %2132 = vmatprep.subr.bf16.mxu0 0
      %2133 = vmatpush1.bf16.msra.mxu0 %v1915
      %2134 = vmatprep.subr.bf16.mxu0 0
      %2135 = vmatpush1.bf16.msra.mxu0 %v1916
      %2136 = vmatprep.subr.bf16.mxu0 0
      %2137 = vmatpush1.bf16.msra.mxu0 %v1917
      %2138 = vmatprep.subr.bf16.mxu0 0
      %2139 = vmatpush1.bf16.msra.mxu0 %v1918
      %2140 = vmatprep.subr.bf16.mxu0 0
      %2141 = vmatpush1.bf16.msra.mxu0 %v1919
      %2142 = vmatprep.subr.bf16.mxu0 0
      %2143 = vmatpush1.bf16.msra.mxu0 %v1920
      %2144 = vmatprep.subr.bf16.mxu0 0
      %2145 = vmatpush1.bf16.msra.mxu0 %v1921
      %2146 = vmatprep.subr.bf16.mxu0 0
      %2147 = vmatpush1.bf16.msra.mxu0 %v1922
      %2148 = vmatprep.subr.bf16.mxu0 0
      %2149 = vmatpush1.bf16.msra.mxu0 %v1923
      %2150 = vmatprep.subr.bf16.mxu0 0
      %2151 = vmatpush1.bf16.msra.mxu0 %v1924
      %2152 = vmatprep.subr.bf16.mxu0 0
      %2153 = vmatpush1.bf16.msra.mxu0 %v1925
      %2154 = vmatprep.subr.bf16.mxu0 0
      %2155 = vmatpush1.bf16.msra.mxu0 %v1926
      %2156 = vmatprep.subr.bf16.mxu0 0
      %2157 = vmatpush1.bf16.msra.mxu0 %v1927
      %2158 = vmatprep.subr.bf16.mxu0 0
      %2159 = vmatpush1.bf16.msra.mxu0 %v1928
      %2160 = vmatprep.subr.bf16.mxu0 0
      %2161 = vmatpush1.bf16.msra.mxu0 %v1929
      %2162 = vmatprep.mubr.bf16.mxu0 %v1487
      %2163 = vmatmul.mubr.bf16.gmra.mrb[0].mxu0 %v1486
      %v2164 = vpop.f32.mrb[0].mxu0
      %v2165 = vadd.f32 %v2077, %v2164
      %v2166 = vpop.f32.mrb[0].mxu0
      %v2167 = vpop.f32.mrb[0].mxu0
      %v2168 = vadd.f32 %v2080, %v2167
      %v2169 = vpop.f32.mrb[0].mxu0
      %2170 = vmatprep.mubr.bf16.mxu0 %v1496
      %2171 = vmatmul.mubr.bf16.gmra.mrb[0].mxu0 %v1495
      %v2172 = vpop.f32.mrb[0].mxu0
      %v2173 = vadd.f32 %v2085, %v2172
      %v2174 = vpop.f32.mrb[0].mxu0
      %v2175 = vpop.f32.mrb[0].mxu0
      %v2176 = vadd.f32 %v2088, %v2175
      %v2177 = vpop.f32.mrb[0].mxu0
      %2178 = vmatprep.mubr.bf16.mxu0 %v1505
      %2179 = vmatmul.mubr.bf16.gmra.mrb[0].mxu0 %v1504
      %v2180 = vpop.f32.mrb[0].mxu0
      %v2181 = vadd.f32 %v2093, %v2180
      %v2182 = vpop.f32.mrb[0].mxu0
      %v2183 = vpop.f32.mrb[0].mxu0
      %v2184 = vadd.f32 %v2096, %v2183
      %v2185 = vpop.f32.mrb[0].mxu0
      %2186 = vmatprep.mubr.bf16.mxu0 %v1514
      %2187 = vmatmul.mubr.bf16.gmra.mrb[0].mxu0 %v1513
      %v2188 = vpop.f32.mrb[0].mxu0
      %v2189 = vadd.f32 %v2101, %v2188
      %v2190 = vpop.f32.mrb[0].mxu0
      %v2191 = vpop.f32.mrb[0].mxu0
      %v2192 = vadd.f32 %v2104, %v2191
      %v2193 = vpop.f32.mrb[0].mxu0
      %2194 = vmatprep.mubr.bf16.mxu0 %v1523
      %2195 = vmatmul.mubr.bf16.gmra.mrb[0].mxu0 %v1522
      %v2196 = vpop.f32.mrb[0].mxu0
      %v2197 = vadd.f32 %v2109, %v2196
      %v2198 = vpop.f32.mrb[0].mxu0
      %v2199 = vpop.f32.mrb[0].mxu0
      %v2200 = vadd.f32 %v2112, %v2199
      %v2201 = vpop.f32.mrb[0].mxu0
      %2202 = vmatprep.mubr.bf16.mxu0 %v1532
      %2203 = vmatmul.mubr.bf16.gmra.mrb[0].mxu0 %v1531
      %v2204 = vpop.f32.mrb[0].mxu0
      %v2205 = vadd.f32 %v2117, %v2204
      %v2206 = vpop.f32.mrb[0].mxu0
      %v2207 = vpop.f32.mrb[0].mxu0
      %v2208 = vadd.f32 %v2120, %v2207
      %v2209 = vpop.f32.mrb[0].mxu0
      %2210 = vmatprep.mubr.bf16.mxu0 %v1541
      %2211 = vmatmul.mubr.bf16.gmra.mrb[0].mxu0 %v1540
      %v2212 = vpop.f32.mrb[0].mxu0
      %v2213 = vadd.f32 %v2125, %v2212
      %v2214 = vpop.f32.mrb[0].mxu0
      %v2215 = vpop.f32.mrb[0].mxu0
      %v2216 = vpop.f32.mrb[0].mxu0
      %2217 = vdwg.mxu0
      %2218 = vmatprep.subr.bf16.mxu0 0
      %2219 = vmatpush1.bf16.msra.mxu0 %v1930
      %2220 = vmatprep.subr.bf16.mxu0 0
      %2221 = vmatpush1.bf16.msra.mxu0 %v1931
      %2222 = vmatprep.subr.bf16.mxu0 0
      %2223 = vmatpush1.bf16.msra.mxu0 %v1932
      %2224 = vmatprep.subr.bf16.mxu0 0
      %2225 = vmatpush1.bf16.msra.mxu0 %v1933
      %2226 = vmatprep.subr.bf16.mxu0 0
      %2227 = vmatpush1.bf16.msra.mxu0 %v1934
      %2228 = vmatprep.subr.bf16.mxu0 0
      %2229 = vmatpush1.bf16.msra.mxu0 %v1935
      %2230 = vmatprep.subr.bf16.mxu0 0
      %2231 = vmatpush1.bf16.msra.mxu0 %v1936
      %2232 = vmatprep.subr.bf16.mxu0 0
      %2233 = vmatpush1.bf16.msra.mxu0 %v1937
      %2234 = vmatprep.subr.bf16.mxu0 0
      %2235 = vmatpush1.bf16.msra.mxu0 %v1938
      %2236 = vmatprep.subr.bf16.mxu0 0
      %2237 = vmatpush1.bf16.msra.mxu0 %v1939
      %2238 = vmatprep.subr.bf16.mxu0 0
      %2239 = vmatpush1.bf16.msra.mxu0 %v1940
      %2240 = vmatprep.subr.bf16.mxu0 0
      %2241 = vmatpush1.bf16.msra.mxu0 %v1941
      %2242 = vmatprep.subr.bf16.mxu0 0
      %2243 = vmatpush1.bf16.msra.mxu0 %v1942
      %2244 = vmatprep.subr.bf16.mxu0 0
      %2245 = vmatpush1.bf16.msra.mxu0 %v1943
      %2246 = vmatprep.subr.bf16.mxu0 0
      %2247 = vmatpush1.bf16.msra.mxu0 %v1944
      %2248 = vmatprep.subr.bf16.mxu0 0
      %2249 = vmatpush1.bf16.msra.mxu0 %v1945
      %2250 = vmatprep.mubr.bf16.mxu0 %v1489
      %2251 = vmatmul.mubr.bf16.gmra.mrb[0].mxu0 %v1488
      %v2252 = vpop.f32.mrb[0].mxu0
      %v2253 = vadd.f32 %v2165, %v2252
      %v2254 = vpop.f32.mrb[0].mxu0
      %v2255 = vpop.f32.mrb[0].mxu0
      %v2256 = vadd.f32 %v2168, %v2255
      %v2257 = vpop.f32.mrb[0].mxu0
      %2258 = vmatprep.mubr.bf16.mxu0 %v1498
      %2259 = vmatmul.mubr.bf16.gmra.mrb[0].mxu0 %v1497
      %v2260 = vpop.f32.mrb[0].mxu0
      %v2261 = vadd.f32 %v2173, %v2260
      %v2262 = vpop.f32.mrb[0].mxu0
      %v2263 = vpop.f32.mrb[0].mxu0
      %v2264 = vadd.f32 %v2176, %v2263
      %v2265 = vpop.f32.mrb[0].mxu0
      %2266 = vmatprep.mubr.bf16.mxu0 %v1507
      %2267 = vmatmul.mubr.bf16.gmra.mrb[0].mxu0 %v1506
      %v2268 = vpop.f32.mrb[0].mxu0
      %v2269 = vadd.f32 %v2181, %v2268
      %v2270 = vpop.f32.mrb[0].mxu0
      %v2271 = vpop.f32.mrb[0].mxu0
      %v2272 = vadd.f32 %v2184, %v2271
      %v2273 = vpop.f32.mrb[0].mxu0
      %2274 = vmatprep.mubr.bf16.mxu0 %v1516
      %2275 = vmatmul.mubr.bf16.gmra.mrb[0].mxu0 %v1515
      %v2276 = vpop.f32.mrb[0].mxu0
      %v2277 = vadd.f32 %v2189, %v2276
      %v2278 = vpop.f32.mrb[0].mxu0
      %v2279 = vpop.f32.mrb[0].mxu0
      %v2280 = vadd.f32 %v2192, %v2279
      %v2281 = vpop.f32.mrb[0].mxu0
      %2282 = vmatprep.mubr.bf16.mxu0 %v1525
      %2283 = vmatmul.mubr.bf16.gmra.mrb[0].mxu0 %v1524
      %v2284 = vpop.f32.mrb[0].mxu0
      %v2285 = vadd.f32 %v2197, %v2284
      %v2286 = vpop.f32.mrb[0].mxu0
      %v2287 = vpop.f32.mrb[0].mxu0
      %v2288 = vadd.f32 %v2200, %v2287
      %v2289 = vpop.f32.mrb[0].mxu0
      %2290 = vmatprep.mubr.bf16.mxu0 %v1534
      %2291 = vmatmul.mubr.bf16.gmra.mrb[0].mxu0 %v1533
      %v2292 = vpop.f32.mrb[0].mxu0
      %v2293 = vadd.f32 %v2205, %v2292
      %v2294 = vpop.f32.mrb[0].mxu0
      %v2295 = vpop.f32.mrb[0].mxu0
      %v2296 = vadd.f32 %v2208, %v2295
      %v2297 = vpop.f32.mrb[0].mxu0
      %2298 = vmatprep.mubr.bf16.mxu0 %v1543
      %2299 = vmatmul.mubr.bf16.gmra.mrb[0].mxu0 %v1542
      %v2300 = vpop.f32.mrb[0].mxu0
      %v2301 = vadd.f32 %v2213, %v2300
      %v2302 = vpop.f32.mrb[0].mxu0
      %v2303 = vpop.f32.mrb[0].mxu0
      %v2304 = vpop.f32.mrb[0].mxu0
      %2305 = vdwg.mxu0
      %2306 = vmatprep.subr.bf16.mxu0 0
      %2307 = vmatpush1.bf16.msra.mxu0 %v1946
      %2308 = vmatprep.subr.bf16.mxu0 0
      %2309 = vmatpush1.bf16.msra.mxu0 %v1947
      %2310 = vmatprep.subr.bf16.mxu0 0
      %2311 = vmatpush1.bf16.msra.mxu0 %v1948
      %2312 = vmatprep.subr.bf16.mxu0 0
      %2313 = vmatpush1.bf16.msra.mxu0 %v1949
      %2314 = vmatprep.subr.bf16.mxu0 0
      %2315 = vmatpush1.bf16.msra.mxu0 %v1950
      %2316 = vmatprep.subr.bf16.mxu0 0
      %2317 = vmatpush1.bf16.msra.mxu0 %v1951
      %2318 = vmatprep.subr.bf16.mxu0 0
      %2319 = vmatpush1.bf16.msra.mxu0 %v1952
      %2320 = vmatprep.subr.bf16.mxu0 0
      %2321 = vmatpush1.bf16.msra.mxu0 %v1953
      %2322 = vmatprep.subr.bf16.mxu0 0
      %2323 = vmatpush1.bf16.msra.mxu0 %v1954
      %2324 = vmatprep.subr.bf16.mxu0 0
      %2325 = vmatpush1.bf16.msra.mxu0 %v1955
      %2326 = vmatprep.subr.bf16.mxu0 0
      %2327 = vmatpush1.bf16.msra.mxu0 %v1956
      %2328 = vmatprep.subr.bf16.mxu0 0
      %2329 = vmatpush1.bf16.msra.mxu0 %v1957
      %2330 = vmatprep.subr.bf16.mxu0 0
      %2331 = vmatpush1.bf16.msra.mxu0 %v1958
      %2332 = vmatprep.subr.bf16.mxu0 0
      %2333 = vmatpush1.bf16.msra.mxu0 %v1959
      %2334 = vmatprep.subr.bf16.mxu0 0
      %2335 = vmatpush1.bf16.msra.mxu0 %v1960
      %2336 = vmatprep.subr.bf16.mxu0 0
      %2337 = vmatpush1.bf16.msra.mxu0 %v1961
      %2338 = vmatprep.mubr.bf16.mxu0 %v1491
      %2339 = vmatmul.mubr.bf16.gmra.mrb[0].mxu0 %v1490
      %v2340 = vpop.f32.mrb[0].mxu0
      %v2341 = vadd.f32 %v2253, %v2340
      %v2342 = vpop.f32.mrb[0].mxu0
      %v2343 = vpop.f32.mrb[0].mxu0
      %v2344 = vadd.f32 %v2256, %v2343
      %v2345 = vpop.f32.mrb[0].mxu0
      %2346 = vmatprep.mubr.bf16.mxu0 %v1500
      %2347 = vmatmul.mubr.bf16.gmra.mrb[0].mxu0 %v1499
      %v2348 = vpop.f32.mrb[0].mxu0
      %v2349 = vadd.f32 %v2261, %v2348
      %v2350 = vpop.f32.mrb[0].mxu0
      %v2351 = vpop.f32.mrb[0].mxu0
      %v2352 = vadd.f32 %v2264, %v2351
      %v2353 = vpop.f32.mrb[0].mxu0
      %2354 = vmatprep.mubr.bf16.mxu0 %v1509
      %2355 = vmatmul.mubr.bf16.gmra.mrb[0].mxu0 %v1508
      %v2356 = vpop.f32.mrb[0].mxu0
      %v2357 = vadd.f32 %v2269, %v2356
      %v2358 = vpop.f32.mrb[0].mxu0
      %v2359 = vpop.f32.mrb[0].mxu0
      %v2360 = vadd.f32 %v2272, %v2359
      %v2361 = vpop.f32.mrb[0].mxu0
      %2362 = vmatprep.mubr.bf16.mxu0 %v1518
      %2363 = vmatmul.mubr.bf16.gmra.mrb[0].mxu0 %v1517
      %v2364 = vpop.f32.mrb[0].mxu0
      %v2365 = vadd.f32 %v2277, %v2364
      %v2366 = vpop.f32.mrb[0].mxu0
      %v2367 = vpop.f32.mrb[0].mxu0
      %v2368 = vadd.f32 %v2280, %v2367
      %v2369 = vpop.f32.mrb[0].mxu0
      %2370 = vmatprep.mubr.bf16.mxu0 %v1527
      %2371 = vmatmul.mubr.bf16.gmra.mrb[0].mxu0 %v1526
      %v2372 = vpop.f32.mrb[0].mxu0
      %v2373 = vadd.f32 %v2285, %v2372
      %v2374 = vpop.f32.mrb[0].mxu0
      %v2375 = vpop.f32.mrb[0].mxu0
      %v2376 = vadd.f32 %v2288, %v2375
      %v2377 = vpop.f32.mrb[0].mxu0
      %2378 = vmatprep.mubr.bf16.mxu0 %v1536
      %2379 = vmatmul.mubr.bf16.gmra.mrb[0].mxu0 %v1535
      %v2380 = vpop.f32.mrb[0].mxu0
      %v2381 = vadd.f32 %v2293, %v2380
      %v2382 = vpop.f32.mrb[0].mxu0
      %v2383 = vpop.f32.mrb[0].mxu0
      %v2384 = vadd.f32 %v2296, %v2383
      %v2385 = vpop.f32.mrb[0].mxu0
      %2386 = vmatprep.mubr.bf16.mxu0 %v1545
      %2387 = vmatmul.mubr.bf16.gmra.mrb[0].mxu0 %v1544
      %v2388 = vpop.f32.mrb[0].mxu0
      %v2389 = vadd.f32 %v2301, %v2388
      %v2390 = vpop.f32.mrb[0].mxu0
      %v2391 = vpop.f32.mrb[0].mxu0
      %v2392 = vpop.f32.mrb[0].mxu0
      %2393 = vdwg.mxu0
      %2394 = vmatprep.subr.bf16.mxu0 0
      %2395 = vmatpush1.bf16.msra.mxu0 %v1962
      %2396 = vmatprep.subr.bf16.mxu0 0
      %2397 = vmatpush1.bf16.msra.mxu0 %v1963
      %2398 = vmatprep.subr.bf16.mxu0 0
      %2399 = vmatpush1.bf16.msra.mxu0 %v1964
      %2400 = vmatprep.subr.bf16.mxu0 0
      %2401 = vmatpush1.bf16.msra.mxu0 %v1965
      %2402 = vmatprep.subr.bf16.mxu0 0
      %2403 = vmatpush1.bf16.msra.mxu0 %v1966
      %2404 = vmatprep.subr.bf16.mxu0 0
      %2405 = vmatpush1.bf16.msra.mxu0 %v1967
      %2406 = vmatprep.subr.bf16.mxu0 0
      %2407 = vmatpush1.bf16.msra.mxu0 %v1968
      %2408 = vmatprep.subr.bf16.mxu0 0
      %2409 = vmatpush1.bf16.msra.mxu0 %v1969
      %2410 = vmatprep.subr.bf16.mxu0 0
      %2411 = vmatpush1.bf16.msra.mxu0 0
      %2412 = vmatprep.subr.bf16.mxu0 0
      %2413 = vmatpush1.bf16.msra.mxu0 0
      %2414 = vmatprep.subr.bf16.mxu0 0
      %2415 = vmatpush1.bf16.msra.mxu0 0
      %2416 = vmatprep.subr.bf16.mxu0 0
      %2417 = vmatpush1.bf16.msra.mxu0 0
      %2418 = vmatprep.subr.bf16.mxu0 0
      %2419 = vmatpush1.bf16.msra.mxu0 0
      %2420 = vmatprep.subr.bf16.mxu0 0
      %2421 = vmatpush1.bf16.msra.mxu0 0
      %2422 = vmatprep.subr.bf16.mxu0 0
      %2423 = vmatpush1.bf16.msra.mxu0 0
      %2424 = vmatprep.subr.bf16.mxu0 0
      %2425 = vmatpush1.bf16.msra.mxu0 0
      %2426 = vmatprep.mubr.bf16.mxu0 0
      %2427 = vmatmul.mubr.bf16.gmra.mrb[0].mxu0 %v1492
      %v2428 = vpop.f32.mrb[0].mxu0
      %v2429 = vadd.f32 %v2341, %v2428
      %v2430 = vpop.f32.mrb[0].mxu0
      %v2431 = vpop.f32.mrb[0].mxu0
      %v2432 = vadd.f32 %v2344, %v2431
      %v2433 = vpop.f32.mrb[0].mxu0
      %2434 = vmatprep.mubr.bf16.mxu0 0
      %2435 = vmatmul.mubr.bf16.gmra.mrb[0].mxu0 %v1501
      %v2436 = vpop.f32.mrb[0].mxu0
      %v2437 = vadd.f32 %v2349, %v2436
      %v2438 = vpop.f32.mrb[0].mxu0
      %v2439 = vpop.f32.mrb[0].mxu0
      %v2440 = vadd.f32 %v2352, %v2439
      %v2441 = vpop.f32.mrb[0].mxu0
      %2442 = vmatprep.mubr.bf16.mxu0 0
      %2443 = vmatmul.mubr.bf16.gmra.mrb[0].mxu0 %v1510
      %v2444 = vpop.f32.mrb[0].mxu0
      %v2445 = vadd.f32 %v2357, %v2444
      %v2446 = vpop.f32.mrb[0].mxu0
      %v2447 = vpop.f32.mrb[0].mxu0
      %v2448 = vadd.f32 %v2360, %v2447
      %v2449 = vpop.f32.mrb[0].mxu0
      %2450 = vmatprep.mubr.bf16.mxu0 0
      %2451 = vmatmul.mubr.bf16.gmra.mrb[0].mxu0 %v1519
      %v2452 = vpop.f32.mrb[0].mxu0
      %v2453 = vadd.f32 %v2365, %v2452
      %v2454 = vpop.f32.mrb[0].mxu0
      %v2455 = vpop.f32.mrb[0].mxu0
      %v2456 = vadd.f32 %v2368, %v2455
      %v2457 = vpop.f32.mrb[0].mxu0
      %2458 = vmatprep.mubr.bf16.mxu0 0
      %2459 = vmatmul.mubr.bf16.gmra.mrb[0].mxu0 %v1528
      %v2460 = vpop.f32.mrb[0].mxu0
      %v2461 = vadd.f32 %v2373, %v2460
      %v2462 = vpop.f32.mrb[0].mxu0
      %v2463 = vpop.f32.mrb[0].mxu0
      %v2464 = vadd.f32 %v2376, %v2463
      %v2465 = vpop.f32.mrb[0].mxu0
      %2466 = vmatprep.mubr.bf16.mxu0 0
      %2467 = vmatmul.mubr.bf16.gmra.mrb[0].mxu0 %v1537
      %v2468 = vpop.f32.mrb[0].mxu0
      %v2469 = vadd.f32 %v2381, %v2468
      %v2470 = vpop.f32.mrb[0].mxu0
      %v2471 = vpop.f32.mrb[0].mxu0
      %v2472 = vadd.f32 %v2384, %v2471
      %v2473 = vpop.f32.mrb[0].mxu0
      %2474 = vmatprep.mubr.bf16.mxu0 0
      %2475 = vmatmul.mubr.bf16.gmra.mrb[0].mxu0 %v1546
      %v2476 = vpop.f32.mrb[0].mxu0
      %v2477 = vadd.f32 %v2389, %v2476
      %v2478 = vpop.f32.mrb[0].mxu0
      %v2479 = vpop.f32.mrb[0].mxu0
      %v2480 = vpop.f32.mrb[0].mxu0
      %2481 = vdwg.mxu0
      %v2482 = vmax.f32 %v2429, 0.0
      %v2483 = vmax.f32 %v2432, 0.0
      %v2484 = vmax.f32 %v2437, 0.0
      %v2485 = vmax.f32 %v2440, 0.0
      %v2486 = vmax.f32 %v2445, 0.0
      %v2487 = vmax.f32 %v2448, 0.0
      %v2488 = vmax.f32 %v2453, 0.0
      %v2489 = vmax.f32 %v2456, 0.0
      %v2490 = vmax.f32 %v2461, 0.0
      %v2491 = vmax.f32 %v2464, 0.0
      %v2492 = vmax.f32 %v2469, 0.0
      %v2493 = vmax.f32 %v2472, 0.0
      %v2494 = vmax.f32 %v2477, 0.0
      %2495 = vst [vmem:[%s170] sm:$0xff] %v2482
      %2496 = vst [vmem:[%s170 + $0x8] sm:$0xff] %v2483
      %2497 = vst [vmem:[%s170 + $0x10] sm:$0xff] %v2484
      %2498 = vst [vmem:[%s170 + $0x18] sm:$0xff] %v2485
      %2499 = vst [vmem:[%s170 + $0x20] sm:$0xff] %v2486
      %2500 = vst [vmem:[%s170 + $0x28] sm:$0xff] %v2487
      %2501 = vst [vmem:[%s170 + $0x30] sm:$0xff] %v2488
      %2502 = vst [vmem:[%s170 + $0x38] sm:$0xff] %v2489
      %2503 = vst [vmem:[%s170 + $0x40] sm:$0xff] %v2490
      %2504 = vst [vmem:[%s170 + $0x48] sm:$0xff] %v2491
      %2505 = vst [vmem:[%s170 + $0x50] sm:$0xff] %v2492
      %2506 = vst [vmem:[%s170 + $0x58] sm:$0xff] %v2493
      %2507 = vst [vmem:[%s170 + $0x60] sm:$0xf] %v2494
      %p2508 = scmp.lt.s32.totalorder %s14, 1
      %s2509 = scalar_select %p2508, %s14, 1
      %s2510 = smul.addr %s2509, 13
      %s2511 = smul.addr %s2510, 8
      %s2512 = scalar_lea.vmem %s3, %s2511
      // Predicated region
      $region33: #{lte_forward.11} parent=31 // pred_check
        %p2513 = pneg %p100
      $region34: #{lte_forward.11} parent=31 // pred_check_branch
        %2515 = sbr.rel (%p2513) target = $region36
      $region35: #{lte_forward.11} parent=31 // pred_region
        _
      $region36: #{lte_forward.11} parent=31 // pred_fallthru
        _
    $region32: #{lte_forward.11} parent=5 // pred_fallthru
      _
    %p2516 = scmp.le.s32.totalorder 2, %s9
    // Predicated region
    $region37: #{lte_forward.11} parent=5 // pred_check
      %p2517 = pneg %p2516
    $region38: #{lte_forward.11} parent=5 // pred_check_branch
      %2519 = sbr.rel (%p2517) target = $region40
    $region39: #{lte_forward.11} parent=5 // pred_region
      %s2520 = ssub.s32 %s9, 2
      // Predicated region
      $region41: #{lte_forward.11} parent=39 // pred_check
        %p2521 = pneg %p106
      $region42: #{lte_forward.11} parent=39 // pred_check_branch
        %2523 = sbr.rel (%p2521) target = $region44
      $region43: #{lte_forward.11} parent=39 // pred_region
        %p2524 = scmp.lt.s32.totalorder %s15, 1
        %s2525 = scalar_select %p2524, %s15, 1
        %s2526 = smul.addr %s2525, 13
        %s2527 = smul.addr %s2526, 8
        %s2528 = scalar_lea.vmem %s3, %s2527
      $region44: #{lte_forward.11} parent=39 // pred_fallthru
        _
    $region40: #{lte_forward.11} parent=5 // pred_fallthru
      _
  $region6: #{lte_forward.11} parent=0 // loop_footer
    %s13 = sadd.s32 1, %s9
  $region7: #{lte_forward.11} parent=0 // loop_footer_branch
    %8 = sbr.rel target = $region3
  $region8: #{lte_forward.11} parent=0 // loop_exit
    _

// kernel: lte_forward.13
$region0: #{lte_forward.13}
  #allocation0 [shape = 'u32[]', space=smem, size = 0x4, offset = 0x4, fixed_abs, tag = 'smem constant byte address 0x4 - core index']
  #allocation1 [shape = 'u32[144,128]{1,0:T(1,128)}', space=vmem, size = 0x12000, scoped, tag = 'internal scratch']
  #allocation2 [shape = 'bf16[36,1152]{1,0:T(8,128)(2,1)}', space=vmem, size = 0x16800, scoped, tag = 'scratch operand']
  %s0 = inlined_call_operand.vmem [shape: bf16[2,50,128], index: 0, kind: input, shape index: {}]
  %s1 = inlined_call_operand.vmem [shape: bf16[1152,256], index: 1, kind: input, shape index: {}]
  %s2 = inlined_call_operand.vmem [shape: f32[1,256], index: 2, kind: input, shape index: {}]
  %s3 = inlined_call_operand.vmem [shape: f32[2,36,256], index: 3, kind: output, shape index: {}]
  %s4 = sld [smem:[#allocation0]]
  $region45: #{lte_forward.13} parent=0
    _
  %s6 = ssub.s32 1, %s4
  %s7 = scalar_select 0, %s6, %s4
  loop: start=0, step=1, limit=4
  $region2: #{lte_forward.13} parent=0 // loop_pre_header
    _
  $region3: #{lte_forward.13} parent=0 // loop_header
    %s9 = sphi 0, %s13
    %p10 = scmp.ge.s32.totalorder %s9, 4
    %s19 = sphi 0, %s21
    %s22 = sphi 0, %s19
    %s23 = sphi 0, %s22
    %s39 = sphi 0, %s23
    %s43 = sphi 0, %s43
    %s45 = sphi 0, %s43
    %s46 = sphi 0, %s45
    %s60 = sphi 0, %s46
    %s64 = sphi 0, %s64
    %s66 = sphi 0, %s64
    %s67 = sphi 0, %s66
    %s81 = sphi 0, %s67
    %s87 = sphi 0, %s89
    %s90 = sphi 0, %s87
    %s91 = sphi 0, %s90
    %s107 = sphi 0, %s91
  $region4: #{lte_forward.13} parent=0 // loop_header_branch
    %12 = sbr.rel (%p10) target = $region8
  $region5: #{lte_forward.13} parent=0 // loop_body
    %s14 = ssub.s32 %s9, 1
    %s15 = ssub.s32 %s9, 2
    %s16 = sadd.s32 %s9, 1
    %s17 = ssub.s32 %s9, %s16
    %p18 = scmp.eq.s32.totalorder %s17, 0
    %s20 = sadd.s32 %s19, 1
    %s21 = scalar_select %p18, %s19, %s20
    %p24 = pneg %p18
    %p25 = scmp.eq.s32.totalorder %s9, 1
    %p26 = por %p24, %p25
    %p27 = scmp.ne.s32.totalorder %s19, %s22
    %p28 = scmp.eq.s32.totalorder %s9, 0
    %p29 = por %p27, %p28
    %p30 = scmp.ne.s32.totalorder %s19, %s22
    %p31 = scmp.eq.s32.totalorder %s14, 1
    %p32 = por %p30, %p31
    %p33 = scmp.ne.s32.totalorder %s22, %s23
    %p34 = scmp.eq.s32.totalorder %s14, 0
    %p35 = por %p33, %p34
    %p36 = scmp.ne.s32.totalorder %s22, %s23
    %p37 = scmp.eq.s32.totalorder %s15, 1
    %p38 = por %p36, %p37
    %p40 = scmp.ne.s32.totalorder %s23, %s39
    %p41 = scmp.eq.s32.totalorder %s15, 0
    %p42 = por %p40, %p41
    %s44 = sadd.s32 %s43, 1
    %p47 = scmp.eq.s32.totalorder %s9, 1
    %p48 = scmp.ne.s32.totalorder %s43, %s45
    %p49 = scmp.eq.s32.totalorder %s9, 0
    %p50 = por %p48, %p49
    %p51 = scmp.ne.s32.totalorder %s43, %s45
    %p52 = scmp.eq.s32.totalorder %s14, 1
    %p53 = por %p51, %p52
    %p54 = scmp.ne.s32.totalorder %s45, %s46
    %p55 = scmp.eq.s32.totalorder %s14, 0
    %p56 = por %p54, %p55
    %p57 = scmp.ne.s32.totalorder %s45, %s46
    %p58 = scmp.eq.s32.totalorder %s15, 1
    %p59 = por %p57, %p58
    %p61 = scmp.ne.s32.totalorder %s46, %s60
    %p62 = scmp.eq.s32.totalorder %s15, 0
    %p63 = por %p61, %p62
    %s65 = sadd.s32 %s64, 1
    %p68 = scmp.eq.s32.totalorder %s9, 1
    %p69 = scmp.ne.s32.totalorder %s64, %s66
    %p70 = scmp.eq.s32.totalorder %s9, 0
    %p71 = por %p69, %p70
    %p72 = scmp.ne.s32.totalorder %s64, %s66
    %p73 = scmp.eq.s32.totalorder %s14, 1
    %p74 = por %p72, %p73
    %p75 = scmp.ne.s32.totalorder %s66, %s67
    %p76 = scmp.eq.s32.totalorder %s14, 0
    %p77 = por %p75, %p76
    %p78 = scmp.ne.s32.totalorder %s66, %s67
    %p79 = scmp.eq.s32.totalorder %s15, 1
    %p80 = por %p78, %p79
    %p82 = scmp.ne.s32.totalorder %s67, %s81
    %p83 = scmp.eq.s32.totalorder %s15, 0
    %p84 = por %p82, %p83
    %s85 = ssub.s32 %s9, %s16
    %p86 = scmp.eq.s32.totalorder %s85, 0
    %s88 = sadd.s32 %s87, 1
    %s89 = scalar_select %p86, %s87, %s88
    %p92 = pneg %p86
    %p93 = scmp.eq.s32.totalorder %s9, 1
    %p94 = por %p92, %p93
    %p95 = scmp.ne.s32.totalorder %s87, %s90
    %p96 = scmp.eq.s32.totalorder %s9, 0
    %p97 = por %p95, %p96
    %p98 = scmp.ne.s32.totalorder %s87, %s90
    %p99 = scmp.eq.s32.totalorder %s14, 1
    %p100 = por %p98, %p99
    %p101 = scmp.ne.s32.totalorder %s90, %s91
    %p102 = scmp.eq.s32.totalorder %s14, 0
    %p103 = por %p101, %p102
    %p104 = scmp.ne.s32.totalorder %s90, %s91
    %p105 = scmp.eq.s32.totalorder %s15, 1
    %p106 = por %p104, %p105
    %p108 = scmp.ne.s32.totalorder %s91, %s107
    %p109 = scmp.eq.s32.totalorder %s15, 0
    %p110 = por %p108, %p109
    %p111 = scmp.le.s32.totalorder 1, %s9
    %p112 = scmp.lt.s32.totalorder %s9, 3
    %p113 = pnand %p111, %p112
    %p114 = pneg %p113
    // Predicated region
    $region9: #{lte_forward.13} parent=5 // pred_check
      _
    $region10: #{lte_forward.13} parent=5 // pred_check_branch
      %116 = sbr.rel (%p113) target = $region12
    $region11: #{lte_forward.13} parent=5 // pred_region
      %s117 = ssub.s32 %s9, 1
      // Predicated region
      $region13: #{lte_forward.13} parent=11 // pred_check
        %p118 = pneg %p56
      $region14: #{lte_forward.13} parent=11 // pred_check_branch
        %120 = sbr.rel (%p118) target = $region16
      $region15: #{lte_forward.13} parent=11 // pred_region
        _
      $region16: #{lte_forward.13} parent=11 // pred_fallthru
        _
      // Predicated region
      $region17: #{lte_forward.13} parent=11 // pred_check
        %p121 = pneg %p77
      $region18: #{lte_forward.13} parent=11 // pred_check_branch
        %123 = sbr.rel (%p121) target = $region20
      $region19: #{lte_forward.13} parent=11 // pred_region
        _
      $region20: #{lte_forward.13} parent=11 // pred_fallthru
        _
    $region12: #{lte_forward.13} parent=5 // pred_fallthru
      _
    %p124 = scmp.lt.s32.totalorder %s9, 2
    // Predicated region
    $region21: #{lte_forward.13} parent=5 // pred_check
      %p125 = pneg %p124
    $region22: #{lte_forward.13} parent=5 // pred_check_branch
      %127 = sbr.rel (%p125) target = $region24
    $region23: #{lte_forward.13} parent=5 // pred_region
      // Predicated region
      $region25: #{lte_forward.13} parent=23 // pred_check
        %p128 = pneg %p29
      $region26: #{lte_forward.13} parent=23 // pred_check_branch
        %130 = sbr.rel (%p128) target = $region28
      $region27: #{lte_forward.13} parent=23 // pred_region
        %p131 = scmp.lt.s32.totalorder %s9, 1
        %s132 = scalar_select %p131, %s9, 1
        %s133 = smul.addr %s132, 7
        %s134 = smul.addr %s133, 4
        %s135 = scalar_lea.vmem %s0, %s134
      $region28: #{lte_forward.13} parent=23 // pred_fallthru
        _
    $region24: #{lte_forward.13} parent=5 // pred_fallthru
      _
    %p136 = scmp.le.s32.totalorder 1, %s9
    %p137 = scmp.lt.s32.totalorder %s9, 3
    %p138 = pnand %p136, %p137
    %p139 = pneg %p138
    // Predicated region
    $region29: #{lte_forward.13} parent=5 // pred_check
      _
    $region30: #{lte_forward.13} parent=5 // pred_check_branch
      %141 = sbr.rel (%p138) target = $region32
    $region31: #{lte_forward.13} parent=5 // pred_region
      %s142 = ssub.s32 %s9, 1
      %p143 = scmp.lt.s32.totalorder %s14, 1
      %s144 = scalar_select %p143, %s14, 1
      %s145 = smul.addr %s144, 7
      %s146 = smul.addr %s145, 4
      %s147 = scalar_lea.vmem %s0, %s146
      %p148 = pneg %p35
      %p149 = pneg %p32
      %p150 = pneg %p56
      %p151 = pneg %p53
      %p152 = pneg %p77
      %p153 = pneg %p74
      %p154 = pneg %p103
      %p155 = pneg %p100
      %p156 = scmp.lt.s32.totalorder %s14, 1
      %s157 = scalar_select %p156, %s14, 1
      %s158 = smul.addr %s157, 10
      %s159 = smul.addr %s158, 8
      %s160 = scalar_lea.vmem %s3, %s159
      %p161 = scmp.lt.s32.totalorder %s14, 1
      %s162 = scalar_select %p161, %s14, 1
      %s163 = smul.addr %s162, 7
      %s164 = smul.addr %s163, 4
      %s165 = scalar_lea.vmem %s0, %s164
      %p166 = scmp.lt.s32.totalorder %s14, 1
      %s167 = scalar_select %p166, %s14, 1
      %s168 = smul.addr %s167, 10
      %s169 = smul.addr %s168, 8
      %s170 = scalar_lea.vmem %s3, %s169
      %v172 = vld [vmem:[%s165] sm:$0xf]
      %v173 = vld [vmem:[%s165 + $0x4] sm:$0xf]
      %v174 = vld [vmem:[%s165 + $0x8] sm:$0xf]
      %v175 = vld [vmem:[%s165 + $0xc] sm:$0xf]
      %v176 = vld [vmem:[%s165 + $0x10] sm:$0xf]
      %v177 = vld [vmem:[%s165 + $0x14] sm:$0xf]
      %v178 = vld [vmem:[%s165 + $0x18] sm:$0x1]
      %v179 = vunpack.c.l.bf16 %v172
      %v180 = vunpack.c.l.bf16 %v173
      %v181 = vunpack.c.l.bf16 %v174
      %v182 = vunpack.c.l.bf16 %v175
      %v183 = vunpack.c.l.bf16 %v176
      %v184 = vunpack.c.l.bf16 %v177
      %v185 = vunpack.c.l.bf16 %v178
      %v186 = vpack.c.bf16 %v180, %v179
      %v187 = vpack.c.bf16 %v182, %v181
      %v188 = vpack.c.bf16 %v183, %v183
      %v192 = vunpack.c.l.b16 %v186
      %v193 = vunpack.c.h.b16 %v186
      %v194 = vunpack.c.l.b16 %v187
      %v195 = vunpack.c.h.b16 %v187
      %v196 = vunpack.c.l.b16 %v188
      %v197 = vpack.c.b16 %v192, %v192
      %v198 = vpack.c.b16 %v193, %v193
      %v199 = vpack.c.b16 %v194, %v194
      %v200 = vpack.c.b16 %v195, %v195
      %v201 = vpack.c.b16 %v196, %v196
      %207 = vst [vmem:[#allocation2] sm:$0xf] %v197
      %208 = vst [vmem:[#allocation2 + $0x24] sm:$0xf] %v198
      %209 = vst [vmem:[#allocation2 + $0x48] sm:$0xf] %v199
      %210 = vst [vmem:[#allocation2 + $0x6c] sm:$0xf] %v200
      %211 = vst [vmem:[#allocation2 + $0x90] sm:$0x3] %v201
      %vm212 = vsmask.f32 3328
      %vm213 = vsmask.f32 7440
      %vm214 = vmor %vm212, %vm213
      %v216 = vshrl.u32 %v197, 16
      %v218 = vrot.slane %v216, 4
      %v219 = vshll.u32 %v197, 16
      %v221 = vrot.slane %v219, 5
      %v222 = vor.u32 %v218, %v221
      %v223 = vrot.slane %v222, 4
      %v225 = vshll.u32 %v198, 16
      %v227 = vrot.slane %v225, 5
      %v228 = vsel %vm214, %v223, %v227
      %v229 = vshrl.u32 %v198, 16
      %v231 = vrot.slane %v229, 4
      %v232 = vor.u32 %v231, %v227
      %v233 = vrot.slane %v232, 4
      %v235 = vshll.u32 %v199, 16
      %v237 = vrot.slane %v235, 5
      %v238 = vsel %vm214, %v233, %v237
      %v239 = vshrl.u32 %v199, 16
      %v241 = vrot.slane %v239, 4
      %v242 = vor.u32 %v241, %v237
      %v243 = vrot.slane %v242, 4
      %v245 = vshll.u32 %v200, 16
      %v247 = vrot.slane %v245, 5
      %v248 = vsel %vm214, %v243, %v247
      %v249 = vshrl.u32 %v200, 16
      %v251 = vrot.slane %v249, 4
      %v252 = vor.u32 %v251, %v247
      %v253 = vrot.slane %v252, 4
      %v255 = vshll.u32 %v201, 16
      %v257 = vrot.slane %v255, 5
      %v258 = vsel %vm214, %v253, %v257
      %v259 = vshrl.u32 %v201, 16
      %v261 = vrot.slane %v259, 4
      %v262 = vor.u32 %v261, %v257
      %v263 = vrot.slane %v262, 4
      %269 = vst [vmem:[#allocation2 + $0x4] sm:$0xf] %v228
      %270 = vst [vmem:[#allocation2 + $0x28] sm:$0xf] %v238
      %271 = vst [vmem:[#allocation2 + $0x4c] sm:$0xf] %v248
      %272 = vst [vmem:[#allocation2 + $0x70] sm:$0xf] %v258
      %273 = vst [vmem:[#allocation2 + $0x94] sm:$0x3] %v263
      %vm274 = vcmask 1042432
      %vm275 = vcmask 1046532
      %vm276 = vmor %vm274, %vm275
      %v277 = vrot.slane %v197, 5
      %v278 = vrot.slane %v277, 4
      %v279 = vrot.slane %v198, 5
      %v280 = vsel %vm276, %v278, %v279
      %v281 = vrot.slane %v279, 4
      %v282 = vrot.slane %v199, 5
      %v283 = vsel %vm276, %v281, %v282
      %v284 = vrot.slane %v282, 4
      %v285 = vrot.slane %v200, 5
      %v286 = vsel %vm276, %v284, %v285
      %v287 = vrot.slane %v285, 4
      %v288 = vrot.slane %v201, 5
      %v289 = vsel %vm276, %v287, %v288
      %v290 = vrot.slane %v288, 4
      %296 = vst [vmem:[#allocation2 + $0x8] sm:$0xf] %v280
      %297 = vst [vmem:[#allocation2 + $0x2c] sm:$0xf] %v283
      %298 = vst [vmem:[#allocation2 + $0x50] sm:$0xf] %v286
      %299 = vst [vmem:[#allocation2 + $0x74] sm:$0xf] %v289
      %300 = vst [vmem:[#allocation2 + $0x98] sm:$0x3] %v290
      %v301 = vpack.c.bf16 %v184, %v183
      %v303 = vunpack.c.l.b16 %v301
      %v304 = vunpack.c.h.b16 %v301
      %v305 = vpack.c.b16 %v303, %v303
      %v306 = vpack.c.b16 %v304, %v304
      %vm307 = vcmask 1040384
      %vm308 = vcmask 1044484
      %vm309 = vmor %vm307, %vm308
      %v310 = vrot.slane %v197, 7
      %v311 = vrot.slane %v310, 4
      %v312 = vrot.slane %v198, 7
      %v313 = vsel %vm309, %v311, %v312
      %v314 = vrot.slane %v312, 4
      %v315 = vrot.slane %v199, 7
      %v316 = vsel %vm309, %v314, %v315
      %v317 = vrot.slane %v315, 4
      %v318 = vrot.slane %v200, 7
      %v319 = vsel %vm309, %v317, %v318
      %v320 = vrot.slane %v318, 4
      %v321 = vrot.slane %v305, 7
      %v322 = vsel %vm309, %v320, %v321
      %v323 = vrot.slane %v321, 4
      %v324 = vrot.slane %v306, 7
      %v325 = vsel %vm309, %v323, %v324
      %331 = vst [vmem:[#allocation2 + $0xc] sm:$0xf] %v313
      %332 = vst [vmem:[#allocation2 + $0x30] sm:$0xf] %v316
      %333 = vst [vmem:[#allocation2 + $0x54] sm:$0xf] %v319
      %334 = vst [vmem:[#allocation2 + $0x78] sm:$0xf] %v322
      %335 = vst [vmem:[#allocation2 + $0x9c] sm:$0x3] %v325
      %vm336 = vsmask.f32 256
      %vm337 = vsmask.f32 4368
      %vm338 = vmor %vm336, %vm337
      %v339 = vrot.slane %v216, 7
      %v340 = vrot.slane %v339, 4
      %v341 = vrot.slane %v229, 7
      %v342 = vor.u32 %v341, %v225
      %v343 = vsel %vm338, %v340, %v342
      %v344 = vrot.slane %v341, 4
      %v345 = vrot.slane %v239, 7
      %v346 = vor.u32 %v345, %v235
      %v347 = vsel %vm338, %v344, %v346
      %v348 = vrot.slane %v345, 4
      %v349 = vrot.slane %v249, 7
      %v350 = vor.u32 %v349, %v245
      %v351 = vsel %vm338, %v348, %v350
      %v352 = vrot.slane %v349, 4
      %v354 = vshrl.u32 %v305, 16
      %v356 = vrot.slane %v354, 7
      %v357 = vshll.u32 %v305, 16
      %v359 = vor.u32 %v356, %v357
      %v360 = vsel %vm338, %v352, %v359
      %v361 = vrot.slane %v356, 4
      %v363 = vshrl.u32 %v306, 16
      %v365 = vrot.slane %v363, 7
      %v366 = vshll.u32 %v306, 16
      %v368 = vor.u32 %v365, %v366
      %v369 = vsel %vm338, %v361, %v368
      %375 = vst [vmem:[#allocation2 + $0x10] sm:$0xf] %v343
      %376 = vst [vmem:[#allocation2 + $0x34] sm:$0xf] %v347
      %377 = vst [vmem:[#allocation2 + $0x58] sm:$0xf] %v351
      %378 = vst [vmem:[#allocation2 + $0x7c] sm:$0xf] %v360
      %379 = vst [vmem:[#allocation2 + $0xa0] sm:$0x3] %v369
      %v380 = vpack.c.bf16 %v181, %v180
      %v381 = vpack.c.bf16 %v183, %v182
      %v382 = vpack.c.bf16 %v184, %v184
      %v386 = vunpack.c.l.b16 %v380
      %v387 = vunpack.c.h.b16 %v380
      %v388 = vunpack.c.l.b16 %v381
      %v389 = vunpack.c.h.b16 %v381
      %v390 = vunpack.c.l.b16 %v382
      %v391 = vpack.c.b16 %v386, %v386
      %v392 = vpack.c.b16 %v387, %v387
      %v393 = vpack.c.b16 %v388, %v388
      %v394 = vpack.c.b16 %v389, %v389
      %v395 = vpack.c.b16 %v390, %v390
      %401 = vst [vmem:[#allocation2 + $0x14] sm:$0xf] %v391
      %402 = vst [vmem:[#allocation2 + $0x38] sm:$0xf] %v392
      %403 = vst [vmem:[#allocation2 + $0x5c] sm:$0xf] %v393
      %404 = vst [vmem:[#allocation2 + $0x80] sm:$0xf] %v394
      %405 = vst [vmem:[#allocation2 + $0xa4] sm:$0x3] %v395
      %vm406 = vcmask 1041408
      %vm407 = vcmask 1045508
      %vm408 = vmor %vm406, %vm407
      %v409 = vrot.slane %v391, 6
      %v410 = vrot.slane %v409, 4
      %v411 = vrot.slane %v392, 6
      %v412 = vsel %vm408, %v410, %v411
      %v413 = vrot.slane %v411, 4
      %v414 = vrot.slane %v393, 6
      %v415 = vsel %vm408, %v413, %v414
      %v416 = vrot.slane %v414, 4
      %v417 = vrot.slane %v394, 6
      %v418 = vsel %vm408, %v416, %v417
      %v419 = vrot.slane %v417, 4
      %v420 = vrot.slane %v395, 6
      %v421 = vsel %vm408, %v419, %v420
      %v422 = vrot.slane %v420, 4
      %428 = vst [vmem:[#allocation2 + $0x18] sm:$0xf] %v412
      %429 = vst [vmem:[#allocation2 + $0x3c] sm:$0xf] %v415
      %430 = vst [vmem:[#allocation2 + $0x60] sm:$0xf] %v418
      %431 = vst [vmem:[#allocation2 + $0x84] sm:$0xf] %v421
      %432 = vst [vmem:[#allocation2 + $0xa8] sm:$0x3] %v422
      %v433 = vpack.c.bf16 %v185, %v184
      %v435 = vunpack.c.l.b16 %v433
      %v436 = vunpack.c.h.b16 %v433
      %v437 = vpack.c.b16 %v435, %v435
      %v438 = vpack.c.b16 %v436, %v436
      %vm439 = vsmask.f32 1280
      %vm440 = vsmask.f32 5392
      %vm441 = vmor %vm439, %vm440
      %v443 = vshrl.u32 %v391, 16
      %v445 = vrot.slane %v443, 6
      %v446 = vshll.u32 %v391, 16
      %v448 = vrot.slane %v446, 7
      %v449 = vor.u32 %v445, %v448
      %v450 = vrot.slane %v449, 4
      %v452 = vshrl.u32 %v392, 16
      %v454 = vrot.slane %v452, 6
      %v455 = vshll.u32 %v392, 16
      %v457 = vrot.slane %v455, 7
      %v458 = vor.u32 %v454, %v457
      %v459 = vsel %vm441, %v450, %v458
      %v460 = vrot.slane %v458, 4
      %v462 = vshrl.u32 %v393, 16
      %v464 = vrot.slane %v462, 6
      %v465 = vshll.u32 %v393, 16
      %v467 = vrot.slane %v465, 7
      %v468 = vor.u32 %v464, %v467
      %v469 = vsel %vm441, %v460, %v468
      %v470 = vrot.slane %v468, 4
      %v472 = vshrl.u32 %v394, 16
      %v474 = vrot.slane %v472, 6
      %v475 = vshll.u32 %v394, 16
      %v477 = vrot.slane %v475, 7
      %v478 = vor.u32 %v474, %v477
      %v479 = vsel %vm441, %v470, %v478
      %v480 = vrot.slane %v478, 4
      %v482 = vshrl.u32 %v437, 16
      %v484 = vrot.slane %v482, 6
      %v485 = vshll.u32 %v437, 16
      %v487 = vrot.slane %v485, 7
      %v488 = vor.u32 %v484, %v487
      %v489 = vsel %vm441, %v480, %v488
      %v490 = vrot.slane %v488, 4
      %v492 = vshll.u32 %v438, 16
      %v494 = vrot.slane %v492, 7
      %v495 = vsel %vm441, %v490, %v494
      %501 = vst [vmem:[#allocation2 + $0x1c] sm:$0xf] %v459
      %502 = vst [vmem:[#allocation2 + $0x40] sm:$0xf] %v469
      %503 = vst [vmem:[#allocation2 + $0x64] sm:$0xf] %v479
      %504 = vst [vmem:[#allocation2 + $0x88] sm:$0xf] %v489
      %505 = vst [vmem:[#allocation2 + $0xac] sm:$0x3] %v495
      %v506 = vrot.slane %v391, 7
      %v507 = vrot.slane %v506, 4
      %v508 = vrot.slane %v392, 7
      %v509 = vsel %vm309, %v507, %v508
      %v510 = vrot.slane %v508, 4
      %v511 = vrot.slane %v393, 7
      %v512 = vsel %vm309, %v510, %v511
      %v513 = vrot.slane %v511, 4
      %v514 = vrot.slane %v394, 7
      %v515 = vsel %vm309, %v513, %v514
      %v516 = vrot.slane %v514, 4
      %v517 = vrot.slane %v437, 7
      %v518 = vsel %vm309, %v516, %v517
      %v519 = vrot.slane %v517, 4
      %v520 = vrot.slane %v438, 7
      %v521 = vsel %vm309, %v519, %v520
      %527 = vst [vmem:[#allocation2 + $0x20] sm:$0xf] %v509
      %528 = vst [vmem:[#allocation2 + $0x44] sm:$0xf] %v512
      %529 = vst [vmem:[#allocation2 + $0x68] sm:$0xf] %v515
      %530 = vst [vmem:[#allocation2 + $0x8c] sm:$0xf] %v518
      %531 = vst [vmem:[#allocation2 + $0xb0] sm:$0x3] %v521
      %v532 = vld [vmem:[#allocation2] sm:$0xff]
      %v533 = vld [vmem:[#allocation2 + $0x8] sm:$0xff]
      %v534 = vld [vmem:[#allocation2 + $0x10] sm:$0xff]
      %v535 = vld [vmem:[#allocation2 + $0x18] sm:$0xff]
      %v536 = vld [vmem:[#allocation2 + $0x20] sm:$0xf]
      %v537 = vld [vmem:[#allocation2 + $0x24] sm:$0xff]
      %v538 = vld [vmem:[#allocation2 + $0x2c] sm:$0xff]
      %v539 = vld [vmem:[#allocation2 + $0x34] sm:$0xff]
      %v540 = vld [vmem:[#allocation2 + $0x3c] sm:$0xff]
      %v541 = vld [vmem:[#allocation2 + $0x44] sm:$0xf]
      %v542 = vld [vmem:[#allocation2 + $0x48] sm:$0xff]
      %v543 = vld [vmem:[#allocation2 + $0x50] sm:$0xff]
      %v544 = vld [vmem:[#allocation2 + $0x58] sm:$0xff]
      %v545 = vld [vmem:[#allocation2 + $0x60] sm:$0xff]
      %v546 = vld [vmem:[#allocation2 + $0x68] sm:$0xf]
      %v547 = vld [vmem:[#allocation2 + $0x6c] sm:$0xff]
      %v548 = vld [vmem:[#allocation2 + $0x74] sm:$0xff]
      %v549 = vld [vmem:[#allocation2 + $0x7c] sm:$0xff]
      %v550 = vld [vmem:[#allocation2 + $0x84] sm:$0xff]
      %v551 = vld [vmem:[#allocation2 + $0x8c] sm:$0xf]
      %v552 = vld [vmem:[#allocation2 + $0x90] sm:$0x33]
      %v553 = vld [vmem:[#allocation2 + $0x98] sm:$0x33]
      %v554 = vld [vmem:[#allocation2 + $0xa0] sm:$0x33]
      %v555 = vld [vmem:[#allocation2 + $0xa8] sm:$0x33]
      %v556 = vld [vmem:[#allocation2 + $0xb0] sm:$0x3]
      %v557 = vld [vmem:[%s1] sm:$0xff]
      %v558 = vld [vmem:[%s1 + $0x8] sm:$0xff]
      %v559 = vld [vmem:[%s1 + $0x10] sm:$0xff]
      %v560 = vld [vmem:[%s1 + $0x18] sm:$0xff]
      %v561 = vld [vmem:[%s1 + $0x20] sm:$0xff]
      %v562 = vld [vmem:[%s1 + $0x28] sm:$0xff]
      %v563 = vld [vmem:[%s1 + $0x30] sm:$0xff]
      %v564 = vld [vmem:[%s1 + $0x38] sm:$0xff]
      %v565 = vld [vmem:[%s1 + $0x40] sm:$0xff]
      %v566 = vld [vmem:[%s1 + $0x48] sm:$0xff]
      %v567 = vld [vmem:[%s1 + $0x50] sm:$0xff]
      %v568 = vld [vmem:[%s1 + $0x58] sm:$0xff]
      %v569 = vld [vmem:[%s1 + $0x60] sm:$0xff]
      %v570 = vld [vmem:[%s1 + $0x68] sm:$0xff]
      %v571 = vld [vmem:[%s1 + $0x70] sm:$0xff]
      %v572 = vld [vmem:[%s1 + $0x78] sm:$0xff]
      %v573 = vld [vmem:[%s1 + $0x80] sm:$0xff]
      %v574 = vld [vmem:[%s1 + $0x88] sm:$0xff]
      %v575 = vld [vmem:[%s1 + $0x90] sm:$0xff]
      %v576 = vld [vmem:[%s1 + $0x98] sm:$0xff]
      %v577 = vld [vmem:[%s1 + $0xa0] sm:$0xff]
      %v578 = vld [vmem:[%s1 + $0xa8] sm:$0xff]
      %v579 = vld [vmem:[%s1 + $0xb0] sm:$0xff]
      %v580 = vld [vmem:[%s1 + $0xb8] sm:$0xff]
      %v581 = vld [vmem:[%s1 + $0xc0] sm:$0xff]
      %v582 = vld [vmem:[%s1 + $0xc8] sm:$0xff]
      %v583 = vld [vmem:[%s1 + $0xd0] sm:$0xff]
      %v584 = vld [vmem:[%s1 + $0xd8] sm:$0xff]
      %v585 = vld [vmem:[%s1 + $0xe0] sm:$0xff]
      %v586 = vld [vmem:[%s1 + $0xe8] sm:$0xff]
      %v587 = vld [vmem:[%s1 + $0xf0] sm:$0xff]
      %v588 = vld [vmem:[%s1 + $0xf8] sm:$0xff]
      %v589 = vld [vmem:[%s1 + $0x100] sm:$0xff]
      %v590 = vld [vmem:[%s1 + $0x108] sm:$0xff]
      %v591 = vld [vmem:[%s1 + $0x110] sm:$0xff]
      %v592 = vld [vmem:[%s1 + $0x118] sm:$0xff]
      %v593 = vld [vmem:[%s1 + $0x120] sm:$0xff]
      %v594 = vld [vmem:[%s1 + $0x128] sm:$0xff]
      %v595 = vld [vmem:[%s1 + $0x130] sm:$0xff]
      %v596 = vld [vmem:[%s1 + $0x138] sm:$0xff]
      %v597 = vld [vmem:[%s1 + $0x140] sm:$0xff]
      %v598 = vld [vmem:[%s1 + $0x148] sm:$0xff]
      %v599 = vld [vmem:[%s1 + $0x150] sm:$0xff]
      %v600 = vld [vmem:[%s1 + $0x158] sm:$0xff]
      %v601 = vld [vmem:[%s1 + $0x160] sm:$0xff]
      %v602 = vld [vmem:[%s1 + $0x168] sm:$0xff]
      %v603 = vld [vmem:[%s1 + $0x170] sm:$0xff]
      %v604 = vld [vmem:[%s1 + $0x178] sm:$0xff]
      %v605 = vld [vmem:[%s1 + $0x180] sm:$0xff]
      %v606 = vld [vmem:[%s1 + $0x188] sm:$0xff]
      %v607 = vld [vmem:[%s1 + $0x190] sm:$0xff]
      %v608 = vld [vmem:[%s1 + $0x198] sm:$0xff]
      %v609 = vld [vmem:[%s1 + $0x1a0] sm:$0xff]
      %v610 = vld [vmem:[%s1 + $0x1a8] sm:$0xff]
      %v611 = vld [vmem:[%s1 + $0x1b0] sm:$0xff]
      %v612 = vld [vmem:[%s1 + $0x1b8] sm:$0xff]
      %v613 = vld [vmem:[%s1 + $0x1c0] sm:$0xff]
      %v614 = vld [vmem:[%s1 + $0x1c8] sm:$0xff]
      %v615 = vld [vmem:[%s1 + $0x1d0] sm:$0xff]
      %v616 = vld [vmem:[%s1 + $0x1d8] sm:$0xff]
      %v617 = vld [vmem:[%s1 + $0x1e0] sm:$0xff]
      %v618 = vld [vmem:[%s1 + $0x1e8] sm:$0xff]
      %v619 = vld [vmem:[%s1 + $0x1f0] sm:$0xff]
      %v620 = vld [vmem:[%s1 + $0x1f8] sm:$0xff]
      %v621 = vld [vmem:[%s1 + $0x200] sm:$0xff]
      %v622 = vld [vmem:[%s1 + $0x208] sm:$0xff]
      %v623 = vld [vmem:[%s1 + $0x210] sm:$0xff]
      %v624 = vld [vmem:[%s1 + $0x218] sm:$0xff]
      %v625 = vld [vmem:[%s1 + $0x220] sm:$0xff]
      %v626 = vld [vmem:[%s1 + $0x228] sm:$0xff]
      %v627 = vld [vmem:[%s1 + $0x230] sm:$0xff]
      %v628 = vld [vmem:[%s1 + $0x238] sm:$0xff]
      %v629 = vld [vmem:[%s1 + $0x240] sm:$0xff]
      %v630 = vld [vmem:[%s1 + $0x248] sm:$0xff]
      %v631 = vld [vmem:[%s1 + $0x250] sm:$0xff]
      %v632 = vld [vmem:[%s1 + $0x258] sm:$0xff]
      %v633 = vld [vmem:[%s1 + $0x260] sm:$0xff]
      %v634 = vld [vmem:[%s1 + $0x268] sm:$0xff]
      %v635 = vld [vmem:[%s1 + $0x270] sm:$0xff]
      %v636 = vld [vmem:[%s1 + $0x278] sm:$0xff]
      %v637 = vld [vmem:[%s1 + $0x280] sm:$0xff]
      %v638 = vld [vmem:[%s1 + $0x288] sm:$0xff]
      %v639 = vld [vmem:[%s1 + $0x290] sm:$0xff]
      %v640 = vld [vmem:[%s1 + $0x298] sm:$0xff]
      %v641 = vld [vmem:[%s1 + $0x2a0] sm:$0xff]
      %v642 = vld [vmem:[%s1 + $0x2a8] sm:$0xff]
      %v643 = vld [vmem:[%s1 + $0x2b0] sm:$0xff]
      %v644 = vld [vmem:[%s1 + $0x2b8] sm:$0xff]
      %v645 = vld [vmem:[%s1 + $0x2c0] sm:$0xff]
      %v646 = vld [vmem:[%s1 + $0x2c8] sm:$0xff]
      %v647 = vld [vmem:[%s1 + $0x2d0] sm:$0xff]
      %v648 = vld [vmem:[%s1 + $0x2d8] sm:$0xff]
      %v649 = vld [vmem:[%s1 + $0x2e0] sm:$0xff]
      %v650 = vld [vmem:[%s1 + $0x2e8] sm:$0xff]
      %v651 = vld [vmem:[%s1 + $0x2f0] sm:$0xff]
      %v652 = vld [vmem:[%s1 + $0x2f8] sm:$0xff]
      %v653 = vld [vmem:[%s1 + $0x300] sm:$0xff]
      %v654 = vld [vmem:[%s1 + $0x308] sm:$0xff]
      %v655 = vld [vmem:[%s1 + $0x310] sm:$0xff]
      %v656 = vld [vmem:[%s1 + $0x318] sm:$0xff]
      %v657 = vld [vmem:[%s1 + $0x320] sm:$0xff]
      %v658 = vld [vmem:[%s1 + $0x328] sm:$0xff]
      %v659 = vld [vmem:[%s1 + $0x330] sm:$0xff]
      %v660 = vld [vmem:[%s1 + $0x338] sm:$0xff]
      %v661 = vld [vmem:[%s1 + $0x340] sm:$0xff]
      %v662 = vld [vmem:[%s1 + $0x348] sm:$0xff]
      %v663 = vld [vmem:[%s1 + $0x350] sm:$0xff]
      %v664 = vld [vmem:[%s1 + $0x358] sm:$0xff]
      %v665 = vld [vmem:[%s1 + $0x360] sm:$0xff]
      %v666 = vld [vmem:[%s1 + $0x368] sm:$0xff]
      %v667 = vld [vmem:[%s1 + $0x370] sm:$0xff]
      %v668 = vld [vmem:[%s1 + $0x378] sm:$0xff]
      %v669 = vld [vmem:[%s1 + $0x380] sm:$0xff]
      %v670 = vld [vmem:[%s1 + $0x388] sm:$0xff]
      %v671 = vld [vmem:[%s1 + $0x390] sm:$0xff]
      %v672 = vld [vmem:[%s1 + $0x398] sm:$0xff]
      %v673 = vld [vmem:[%s1 + $0x3a0] sm:$0xff]
      %v674 = vld [vmem:[%s1 + $0x3a8] sm:$0xff]
      %v675 = vld [vmem:[%s1 + $0x3b0] sm:$0xff]
      %v676 = vld [vmem:[%s1 + $0x3b8] sm:$0xff]
      %v677 = vld [vmem:[%s1 + $0x3c0] sm:$0xff]
      %v678 = vld [vmem:[%s1 + $0x3c8] sm:$0xff]
      %v679 = vld [vmem:[%s1 + $0x3d0] sm:$0xff]
      %v680 = vld [vmem:[%s1 + $0x3d8] sm:$0xff]
      %v681 = vld [vmem:[%s1 + $0x3e0] sm:$0xff]
      %v682 = vld [vmem:[%s1 + $0x3e8] sm:$0xff]
      %v683 = vld [vmem:[%s1 + $0x3f0] sm:$0xff]
      %v684 = vld [vmem:[%s1 + $0x3f8] sm:$0xff]
      %v685 = vld [vmem:[%s1 + $0x400] sm:$0xff]
      %v686 = vld [vmem:[%s1 + $0x408] sm:$0xff]
      %v687 = vld [vmem:[%s1 + $0x410] sm:$0xff]
      %v688 = vld [vmem:[%s1 + $0x418] sm:$0xff]
      %v689 = vld [vmem:[%s1 + $0x420] sm:$0xff]
      %v690 = vld [vmem:[%s1 + $0x428] sm:$0xff]
      %v691 = vld [vmem:[%s1 + $0x430] sm:$0xff]
      %v692 = vld [vmem:[%s1 + $0x438] sm:$0xff]
      %v693 = vld [vmem:[%s1 + $0x440] sm:$0xff]
      %v694 = vld [vmem:[%s1 + $0x448] sm:$0xff]
      %v695 = vld [vmem:[%s1 + $0x450] sm:$0xff]
      %v696 = vld [vmem:[%s1 + $0x458] sm:$0xff]
      %v697 = vld [vmem:[%s1 + $0x460] sm:$0xff]
      %v698 = vld [vmem:[%s1 + $0x468] sm:$0xff]
      %v699 = vld [vmem:[%s1 + $0x470] sm:$0xff]
      %v700 = vld [vmem:[%s1 + $0x478] sm:$0xff]
      %v701 = vld [vmem:[%s2] sm:$0x3]
      %v703 = vlaneseq
      %v704 = vshrl.u32 %v703, 7
      %v705 = vsub.s32 0, %v704
      %v706 = vrot.slane %v701, %v705
      %v707 = vlaneseq
      %v708 = vshrl.u32 %v707, 7
      %v709 = vsub.s32 1, %v708
      %v710 = vrot.slane %v701, %v709
      %v738 = vunpack.c.l.b16 %v532
      %v739 = vunpack.c.h.b16 %v532
      %v740 = vunpack.c.l.b16 %v533
      %v741 = vunpack.c.h.b16 %v533
      %v742 = vunpack.c.l.b16 %v534
      %v743 = vunpack.c.h.b16 %v534
      %v744 = vunpack.c.l.b16 %v535
      %v745 = vunpack.c.h.b16 %v535
      %v746 = vunpack.c.l.b16 %v536
      %v747 = vunpack.c.l.b16 %v537
      %v748 = vunpack.c.h.b16 %v537
      %v749 = vunpack.c.l.b16 %v538
      %v750 = vunpack.c.h.b16 %v538
      %v751 = vunpack.c.l.b16 %v539
      %v752 = vunpack.c.h.b16 %v539
      %v753 = vunpack.c.l.b16 %v540
      %v754 = vunpack.c.h.b16 %v540
      %v755 = vunpack.c.l.b16 %v541
      %v756 = vunpack.c.l.b16 %v542
      %v757 = vunpack.c.h.b16 %v542
      %v758 = vunpack.c.l.b16 %v543
      %v759 = vunpack.c.h.b16 %v543
      %v760 = vunpack.c.l.b16 %v544
      %v761 = vunpack.c.h.b16 %v544
      %v762 = vunpack.c.l.b16 %v545
      %v763 = vunpack.c.h.b16 %v545
      %v764 = vunpack.c.l.b16 %v546
      %v765 = vunpack.c.l.b16 %v547
      %v766 = vunpack.c.h.b16 %v547
      %v767 = vunpack.c.l.b16 %v548
      %v768 = vunpack.c.h.b16 %v548
      %v769 = vunpack.c.l.b16 %v549
      %v770 = vunpack.c.h.b16 %v549
      %v771 = vunpack.c.l.b16 %v550
      %v772 = vunpack.c.h.b16 %v550
      %v773 = vunpack.c.l.b16 %v551
      %v774 = vunpack.c.l.b16 %v552
      %v775 = vunpack.c.h.b16 %v552
      %v776 = vunpack.c.l.b16 %v553
      %v777 = vunpack.c.h.b16 %v553
      %v778 = vunpack.c.l.b16 %v554
      %v779 = vunpack.c.h.b16 %v554
      %v780 = vunpack.c.l.b16 %v555
      %v781 = vunpack.c.h.b16 %v555
      %v782 = vunpack.c.l.b16 %v556
      %v783 = vpack.c.b16 %v747, %v738
      %v784 = vpack.c.b16 %v748, %v739
      %v785 = vpack.c.b16 %v749, %v740
      %v786 = vpack.c.b16 %v750, %v741
      %v787 = vpack.c.b16 %v751, %v742
      %v788 = vpack.c.b16 %v752, %v743
      %v789 = vpack.c.b16 %v753, %v744
      %v790 = vpack.c.b16 %v754, %v745
      %v791 = vpack.c.b16 %v755, %v746
      %v792 = vpack.c.b16 %v765, %v756
      %v793 = vpack.c.b16 %v766, %v757
      %v794 = vpack.c.b16 %v767, %v758
      %v795 = vpack.c.b16 %v768, %v759
      %v796 = vpack.c.b16 %v769, %v760
      %v797 = vpack.c.b16 %v770, %v761
      %v798 = vpack.c.b16 %v771, %v762
      %v799 = vpack.c.b16 %v772, %v763
      %v800 = vpack.c.b16 %v773, %v764
      %v801 = vpack.c.b16 %v774, %v774
      %v802 = vpack.c.b16 %v775, %v775
      %v803 = vpack.c.b16 %v776, %v776
      %v804 = vpack.c.b16 %v777, %v777
      %v805 = vpack.c.b16 %v778, %v778
      %v806 = vpack.c.b16 %v779, %v779
      %v807 = vpack.c.b16 %v780, %v780
      %v808 = vpack.c.b16 %v781, %v781
      %v809 = vpack.c.b16 %v782, %v782
      %v981 = vunpack.c.l.b16 %v557
      %v982 = vunpack.c.h.b16 %v557
      %v983 = vunpack.c.l.b16 %v558
      %v984 = vunpack.c.h.b16 %v558
      %v985 = vunpack.c.l.b16 %v559
      %v986 = vunpack.c.h.b16 %v559
      %v987 = vunpack.c.l.b16 %v560
      %v988 = vunpack.c.h.b16 %v560
      %v989 = vunpack.c.l.b16 %v561
      %v990 = vunpack.c.h.b16 %v561
      %v991 = vunpack.c.l.b16 %v562
      %v992 = vunpack.c.h.b16 %v562
      %v993 = vunpack.c.l.b16 %v563
      %v994 = vunpack.c.h.b16 %v563
      %v995 = vunpack.c.l.b16 %v564
      %v996 = vunpack.c.h.b16 %v564
      %v997 = vunpack.c.l.b16 %v565
      %v998 = vunpack.c.h.b16 %v565
      %v999 = vunpack.c.l.b16 %v566
      %v1000 = vunpack.c.h.b16 %v566
      %v1001 = vunpack.c.l.b16 %v567
      %v1002 = vunpack.c.h.b16 %v567
      %v1003 = vunpack.c.l.b16 %v568
      %v1004 = vunpack.c.h.b16 %v568
      %v1005 = vunpack.c.l.b16 %v569
      %v1006 = vunpack.c.h.b16 %v569
      %v1007 = vunpack.c.l.b16 %v570
      %v1008 = vunpack.c.h.b16 %v570
      %v1009 = vunpack.c.l.b16 %v571
      %v1010 = vunpack.c.h.b16 %v571
      %v1011 = vunpack.c.l.b16 %v572
      %v1012 = vunpack.c.h.b16 %v572
      %v1013 = vunpack.c.l.b16 %v573
      %v1014 = vunpack.c.h.b16 %v573
      %v1015 = vunpack.c.l.b16 %v574
      %v1016 = vunpack.c.h.b16 %v574
      %v1017 = vunpack.c.l.b16 %v575
      %v1018 = vunpack.c.h.b16 %v575
      %v1019 = vunpack.c.l.b16 %v576
      %v1020 = vunpack.c.h.b16 %v576
      %v1021 = vunpack.c.l.b16 %v577
      %v1022 = vunpack.c.h.b16 %v577
      %v1023 = vunpack.c.l.b16 %v578
      %v1024 = vunpack.c.h.b16 %v578
      %v1025 = vunpack.c.l.b16 %v579
      %v1026 = vunpack.c.h.b16 %v579
      %v1027 = vunpack.c.l.b16 %v580
      %v1028 = vunpack.c.h.b16 %v580
      %v1029 = vunpack.c.l.b16 %v581
      %v1030 = vunpack.c.h.b16 %v581
      %v1031 = vunpack.c.l.b16 %v582
      %v1032 = vunpack.c.h.b16 %v582
      %v1033 = vunpack.c.l.b16 %v583
      %v1034 = vunpack.c.h.b16 %v583
      %v1035 = vunpack.c.l.b16 %v584
      %v1036 = vunpack.c.h.b16 %v584
      %v1037 = vunpack.c.l.b16 %v585
      %v1038 = vunpack.c.h.b16 %v585
      %v1039 = vunpack.c.l.b16 %v586
      %v1040 = vunpack.c.h.b16 %v586
      %v1041 = vunpack.c.l.b16 %v587
      %v1042 = vunpack.c.h.b16 %v587
      %v1043 = vunpack.c.l.b16 %v588
      %v1044 = vunpack.c.h.b16 %v588
      %v1045 = vunpack.c.l.b16 %v589
      %v1046 = vunpack.c.h.b16 %v589
      %v1047 = vunpack.c.l.b16 %v590
      %v1048 = vunpack.c.h.b16 %v590
      %v1049 = vunpack.c.l.b16 %v591
      %v1050 = vunpack.c.h.b16 %v591
      %v1051 = vunpack.c.l.b16 %v592
      %v1052 = vunpack.c.h.b16 %v592
      %v1053 = vunpack.c.l.b16 %v593
      %v1054 = vunpack.c.h.b16 %v593
      %v1055 = vunpack.c.l.b16 %v594
      %v1056 = vunpack.c.h.b16 %v594
      %v1057 = vunpack.c.l.b16 %v595
      %v1058 = vunpack.c.h.b16 %v595
      %v1059 = vunpack.c.l.b16 %v596
      %v1060 = vunpack.c.h.b16 %v596
      %v1061 = vunpack.c.l.b16 %v597
      %v1062 = vunpack.c.h.b16 %v597
      %v1063 = vunpack.c.l.b16 %v598
      %v1064 = vunpack.c.h.b16 %v598
      %v1065 = vunpack.c.l.b16 %v599
      %v1066 = vunpack.c.h.b16 %v599
      %v1067 = vunpack.c.l.b16 %v600
      %v1068 = vunpack.c.h.b16 %v600
      %v1069 = vunpack.c.l.b16 %v601
      %v1070 = vunpack.c.h.b16 %v601
      %v1071 = vunpack.c.l.b16 %v602
      %v1072 = vunpack.c.h.b16 %v602
      %v1073 = vunpack.c.l.b16 %v603
      %v1074 = vunpack.c.h.b16 %v603
      %v1075 = vunpack.c.l.b16 %v604
      %v1076 = vunpack.c.h.b16 %v604
      %v1077 = vunpack.c.l.b16 %v605
      %v1078 = vunpack.c.h.b16 %v605
      %v1079 = vunpack.c.l.b16 %v606
      %v1080 = vunpack.c.h.b16 %v606
      %v1081 = vunpack.c.l.b16 %v607
      %v1082 = vunpack.c.h.b16 %v607
      %v1083 = vunpack.c.l.b16 %v608
      %v1084 = vunpack.c.h.b16 %v608
      %v1085 = vunpack.c.l.b16 %v609
      %v1086 = vunpack.c.h.b16 %v609
      %v1087 = vunpack.c.l.b16 %v610
      %v1088 = vunpack.c.h.b16 %v610
      %v1089 = vunpack.c.l.b16 %v611
      %v1090 = vunpack.c.h.b16 %v611
      %v1091 = vunpack.c.l.b16 %v612
      %v1092 = vunpack.c.h.b16 %v612
      %v1093 = vunpack.c.l.b16 %v613
      %v1094 = vunpack.c.h.b16 %v613
      %v1095 = vunpack.c.l.b16 %v614
      %v1096 = vunpack.c.h.b16 %v614
      %v1097 = vunpack.c.l.b16 %v615
      %v1098 = vunpack.c.h.b16 %v615
      %v1099 = vunpack.c.l.b16 %v616
      %v1100 = vunpack.c.h.b16 %v616
      %v1101 = vunpack.c.l.b16 %v617
      %v1102 = vunpack.c.h.b16 %v617
      %v1103 = vunpack.c.l.b16 %v618
      %v1104 = vunpack.c.h.b16 %v618
      %v1105 = vunpack.c.l.b16 %v619
      %v1106 = vunpack.c.h.b16 %v619
      %v1107 = vunpack.c.l.b16 %v620
      %v1108 = vunpack.c.h.b16 %v620
      %v1109 = vunpack.c.l.b16 %v621
      %v1110 = vunpack.c.h.b16 %v621
      %v1111 = vunpack.c.l.b16 %v622
      %v1112 = vunpack.c.h.b16 %v622
      %v1113 = vunpack.c.l.b16 %v623
      %v1114 = vunpack.c.h.b16 %v623
      %v1115 = vunpack.c.l.b16 %v624
      %v1116 = vunpack.c.h.b16 %v624
      %v1117 = vunpack.c.l.b16 %v625
      %v1118 = vunpack.c.h.b16 %v625
      %v1119 = vunpack.c.l.b16 %v626
      %v1120 = vunpack.c.h.b16 %v626
      %v1121 = vunpack.c.l.b16 %v627
      %v1122 = vunpack.c.h.b16 %v627
      %v1123 = vunpack.c.l.b16 %v628
      %v1124 = vunpack.c.h.b16 %v628
      %v1125 = vunpack.c.l.b16 %v629
      %v1126 = vunpack.c.h.b16 %v629
      %v1127 = vunpack.c.l.b16 %v630
      %v1128 = vunpack.c.h.b16 %v630
      %v1129 = vunpack.c.l.b16 %v631
      %v1130 = vunpack.c.h.b16 %v631
      %v1131 = vunpack.c.l.b16 %v632
      %v1132 = vunpack.c.h.b16 %v632
      %v1133 = vunpack.c.l.b16 %v633
      %v1134 = vunpack.c.h.b16 %v633
      %v1135 = vunpack.c.l.b16 %v634
      %v1136 = vunpack.c.h.b16 %v634
      %v1137 = vunpack.c.l.b16 %v635
      %v1138 = vunpack.c.h.b16 %v635
      %v1139 = vunpack.c.l.b16 %v636
      %v1140 = vunpack.c.h.b16 %v636
      %v1141 = vunpack.c.l.b16 %v637
      %v1142 = vunpack.c.h.b16 %v637
      %v1143 = vunpack.c.l.b16 %v638
      %v1144 = vunpack.c.h.b16 %v638
      %v1145 = vunpack.c.l.b16 %v639
      %v1146 = vunpack.c.h.b16 %v639
      %v1147 = vunpack.c.l.b16 %v640
      %v1148 = vunpack.c.h.b16 %v640
      %v1149 = vunpack.c.l.b16 %v641
      %v1150 = vunpack.c.h.b16 %v641
      %v1151 = vunpack.c.l.b16 %v642
      %v1152 = vunpack.c.h.b16 %v642
      %v1153 = vunpack.c.l.b16 %v643
      %v1154 = vunpack.c.h.b16 %v643
      %v1155 = vunpack.c.l.b16 %v644
      %v1156 = vunpack.c.h.b16 %v644
      %v1157 = vunpack.c.l.b16 %v645
      %v1158 = vunpack.c.h.b16 %v645
      %v1159 = vunpack.c.l.b16 %v646
      %v1160 = vunpack.c.h.b16 %v646
      %v1161 = vunpack.c.l.b16 %v647
      %v1162 = vunpack.c.h.b16 %v647
      %v1163 = vunpack.c.l.b16 %v648
      %v1164 = vunpack.c.h.b16 %v648
      %v1165 = vunpack.c.l.b16 %v649
      %v1166 = vunpack.c.h.b16 %v649
      %v1167 = vunpack.c.l.b16 %v650
      %v1168 = vunpack.c.h.b16 %v650
      %v1169 = vunpack.c.l.b16 %v651
      %v1170 = vunpack.c.h.b16 %v651
      %v1171 = vunpack.c.l.b16 %v652
      %v1172 = vunpack.c.h.b16 %v652
      %v1173 = vunpack.c.l.b16 %v653
      %v1174 = vunpack.c.h.b16 %v653
      %v1175 = vunpack.c.l.b16 %v654
      %v1176 = vunpack.c.h.b16 %v654
      %v1177 = vunpack.c.l.b16 %v655
      %v1178 = vunpack.c.h.b16 %v655
      %v1179 = vunpack.c.l.b16 %v656
      %v1180 = vunpack.c.h.b16 %v656
      %v1181 = vunpack.c.l.b16 %v657
      %v1182 = vunpack.c.h.b16 %v657
      %v1183 = vunpack.c.l.b16 %v658
      %v1184 = vunpack.c.h.b16 %v658
      %v1185 = vunpack.c.l.b16 %v659
      %v1186 = vunpack.c.h.b16 %v659
      %v1187 = vunpack.c.l.b16 %v660
      %v1188 = vunpack.c.h.b16 %v660
      %v1189 = vunpack.c.l.b16 %v661
      %v1190 = vunpack.c.h.b16 %v661
      %v1191 = vunpack.c.l.b16 %v662
      %v1192 = vunpack.c.h.b16 %v662
      %v1193 = vunpack.c.l.b16 %v663
      %v1194 = vunpack.c.h.b16 %v663
      %v1195 = vunpack.c.l.b16 %v664
      %v1196 = vunpack.c.h.b16 %v664
      %v1197 = vunpack.c.l.b16 %v665
      %v1198 = vunpack.c.h.b16 %v665
      %v1199 = vunpack.c.l.b16 %v666
      %v1200 = vunpack.c.h.b16 %v666
      %v1201 = vunpack.c.l.b16 %v667
      %v1202 = vunpack.c.h.b16 %v667
      %v1203 = vunpack.c.l.b16 %v668
      %v1204 = vunpack.c.h.b16 %v668
      %v1205 = vunpack.c.l.b16 %v669
      %v1206 = vunpack.c.h.b16 %v669
      %v1207 = vunpack.c.l.b16 %v670
      %v1208 = vunpack.c.h.b16 %v670
      %v1209 = vunpack.c.l.b16 %v671
      %v1210 = vunpack.c.h.b16 %v671
      %v1211 = vunpack.c.l.b16 %v672
      %v1212 = vunpack.c.h.b16 %v672
      %v1213 = vunpack.c.l.b16 %v673
      %v1214 = vunpack.c.h.b16 %v673
      %v1215 = vunpack.c.l.b16 %v674
      %v1216 = vunpack.c.h.b16 %v674
      %v1217 = vunpack.c.l.b16 %v675
      %v1218 = vunpack.c.h.b16 %v675
      %v1219 = vunpack.c.l.b16 %v676
      %v1220 = vunpack.c.h.b16 %v676
      %v1221 = vunpack.c.l.b16 %v677
      %v1222 = vunpack.c.h.b16 %v677
      %v1223 = vunpack.c.l.b16 %v678
      %v1224 = vunpack.c.h.b16 %v678
      %v1225 = vunpack.c.l.b16 %v679
      %v1226 = vunpack.c.h.b16 %v679
      %v1227 = vunpack.c.l.b16 %v680
      %v1228 = vunpack.c.h.b16 %v680
      %v1229 = vunpack.c.l.b16 %v681
      %v1230 = vunpack.c.h.b16 %v681
      %v1231 = vunpack.c.l.b16 %v682
      %v1232 = vunpack.c.h.b16 %v682
      %v1233 = vunpack.c.l.b16 %v683
      %v1234 = vunpack.c.h.b16 %v683
      %v1235 = vunpack.c.l.b16 %v684
      %v1236 = vunpack.c.h.b16 %v684
      %v1237 = vunpack.c.l.b16 %v685
      %v1238 = vunpack.c.h.b16 %v685
      %v1239 = vunpack.c.l.b16 %v686
      %v1240 = vunpack.c.h.b16 %v686
      %v1241 = vunpack.c.l.b16 %v687
      %v1242 = vunpack.c.h.b16 %v687
      %v1243 = vunpack.c.l.b16 %v688
      %v1244 = vunpack.c.h.b16 %v688
      %v1245 = vunpack.c.l.b16 %v689
      %v1246 = vunpack.c.h.b16 %v689
      %v1247 = vunpack.c.l.b16 %v690
      %v1248 = vunpack.c.h.b16 %v690
      %v1249 = vunpack.c.l.b16 %v691
      %v1250 = vunpack.c.h.b16 %v691
      %v1251 = vunpack.c.l.b16 %v692
      %v1252 = vunpack.c.h.b16 %v692
      %v1253 = vunpack.c.l.b16 %v693
      %v1254 = vunpack.c.h.b16 %v693
      %v1255 = vunpack.c.l.b16 %v694
      %v1256 = vunpack.c.h.b16 %v694
      %v1257 = vunpack.c.l.b16 %v695
      %v1258 = vunpack.c.h.b16 %v695
      %v1259 = vunpack.c.l.b16 %v696
      %v1260 = vunpack.c.h.b16 %v696
      %v1261 = vunpack.c.l.b16 %v697
      %v1262 = vunpack.c.h.b16 %v697
      %v1263 = vunpack.c.l.b16 %v698
      %v1264 = vunpack.c.h.b16 %v698
      %v1265 = vunpack.c.l.b16 %v699
      %v1266 = vunpack.c.h.b16 %v699
      %v1267 = vunpack.c.l.b16 %v700
      %v1268 = vunpack.c.h.b16 %v700
      %v1269 = vpack.c.b16 %v983, %v981
      %v1270 = vpack.c.b16 %v984, %v982
      %v1271 = vpack.c.b16 %v987, %v985
      %v1272 = vpack.c.b16 %v988, %v986
      %v1273 = vpack.c.b16 %v991, %v989
      %v1274 = vpack.c.b16 %v992, %v990
      %v1275 = vpack.c.b16 %v995, %v993
      %v1276 = vpack.c.b16 %v996, %v994
      %v1277 = vpack.c.b16 %v999, %v997
      %v1278 = vpack.c.b16 %v1000, %v998
      %v1279 = vpack.c.b16 %v1003, %v1001
      %v1280 = vpack.c.b16 %v1004, %v1002
      %v1281 = vpack.c.b16 %v1007, %v1005
      %v1282 = vpack.c.b16 %v1008, %v1006
      %v1283 = vpack.c.b16 %v1011, %v1009
      %v1284 = vpack.c.b16 %v1012, %v1010
      %v1285 = vpack.c.b16 %v1015, %v1013
      %v1286 = vpack.c.b16 %v1016, %v1014
      %v1287 = vpack.c.b16 %v1019, %v1017
      %v1288 = vpack.c.b16 %v1020, %v1018
      %v1289 = vpack.c.b16 %v1023, %v1021
      %v1290 = vpack.c.b16 %v1024, %v1022
      %v1291 = vpack.c.b16 %v1027, %v1025
      %v1292 = vpack.c.b16 %v1028, %v1026
      %v1293 = vpack.c.b16 %v1031, %v1029
      %v1294 = vpack.c.b16 %v1032, %v1030
      %v1295 = vpack.c.b16 %v1035, %v1033
      %v1296 = vpack.c.b16 %v1036, %v1034
      %v1297 = vpack.c.b16 %v1039, %v1037
      %v1298 = vpack.c.b16 %v1040, %v1038
      %v1299 = vpack.c.b16 %v1043, %v1041
      %v1300 = vpack.c.b16 %v1044, %v1042
      %v1301 = vpack.c.b16 %v1047, %v1045
      %v1302 = vpack.c.b16 %v1048, %v1046
      %v1303 = vpack.c.b16 %v1051, %v1049
      %v1304 = vpack.c.b16 %v1052, %v1050
      %v1305 = vpack.c.b16 %v1055, %v1053
      %v1306 = vpack.c.b16 %v1056, %v1054
      %v1307 = vpack.c.b16 %v1059, %v1057
      %v1308 = vpack.c.b16 %v1060, %v1058
      %v1309 = vpack.c.b16 %v1063, %v1061
      %v1310 = vpack.c.b16 %v1064, %v1062
      %v1311 = vpack.c.b16 %v1067, %v1065
      %v1312 = vpack.c.b16 %v1068, %v1066
      %v1313 = vpack.c.b16 %v1071, %v1069
      %v1314 = vpack.c.b16 %v1072, %v1070
      %v1315 = vpack.c.b16 %v1075, %v1073
      %v1316 = vpack.c.b16 %v1076, %v1074
      %v1317 = vpack.c.b16 %v1079, %v1077
      %v1318 = vpack.c.b16 %v1080, %v1078
      %v1319 = vpack.c.b16 %v1083, %v1081
      %v1320 = vpack.c.b16 %v1084, %v1082
      %v1321 = vpack.c.b16 %v1087, %v1085
      %v1322 = vpack.c.b16 %v1088, %v1086
      %v1323 = vpack.c.b16 %v1091, %v1089
      %v1324 = vpack.c.b16 %v1092, %v1090
      %v1325 = vpack.c.b16 %v1095, %v1093
      %v1326 = vpack.c.b16 %v1096, %v1094
      %v1327 = vpack.c.b16 %v1099, %v1097
      %v1328 = vpack.c.b16 %v1100, %v1098
      %v1329 = vpack.c.b16 %v1103, %v1101
      %v1330 = vpack.c.b16 %v1104, %v1102
      %v1331 = vpack.c.b16 %v1107, %v1105
      %v1332 = vpack.c.b16 %v1108, %v1106
      %v1333 = vpack.c.b16 %v1111, %v1109
      %v1334 = vpack.c.b16 %v1112, %v1110
      %v1335 = vpack.c.b16 %v1115, %v1113
      %v1336 = vpack.c.b16 %v1116, %v1114
      %v1337 = vpack.c.b16 %v1119, %v1117
      %v1338 = vpack.c.b16 %v1120, %v1118
      %v1339 = vpack.c.b16 %v1123, %v1121
      %v1340 = vpack.c.b16 %v1124, %v1122
      %v1341 = vpack.c.b16 %v1127, %v1125
      %v1342 = vpack.c.b16 %v1128, %v1126
      %v1343 = vpack.c.b16 %v1131, %v1129
      %v1344 = vpack.c.b16 %v1132, %v1130
      %v1345 = vpack.c.b16 %v1135, %v1133
      %v1346 = vpack.c.b16 %v1136, %v1134
      %v1347 = vpack.c.b16 %v1139, %v1137
      %v1348 = vpack.c.b16 %v1140, %v1138
      %v1349 = vpack.c.b16 %v1143, %v1141
      %v1350 = vpack.c.b16 %v1144, %v1142
      %v1351 = vpack.c.b16 %v1147, %v1145
      %v1352 = vpack.c.b16 %v1148, %v1146
      %v1353 = vpack.c.b16 %v1151, %v1149
      %v1354 = vpack.c.b16 %v1152, %v1150
      %v1355 = vpack.c.b16 %v1155, %v1153
      %v1356 = vpack.c.b16 %v1156, %v1154
      %v1357 = vpack.c.b16 %v1159, %v1157
      %v1358 = vpack.c.b16 %v1160, %v1158
      %v1359 = vpack.c.b16 %v1163, %v1161
      %v1360 = vpack.c.b16 %v1164, %v1162
      %v1361 = vpack.c.b16 %v1167, %v1165
      %v1362 = vpack.c.b16 %v1168, %v1166
      %v1363 = vpack.c.b16 %v1171, %v1169
      %v1364 = vpack.c.b16 %v1172, %v1170
      %v1365 = vpack.c.b16 %v1175, %v1173
      %v1366 = vpack.c.b16 %v1176, %v1174
      %v1367 = vpack.c.b16 %v1179, %v1177
      %v1368 = vpack.c.b16 %v1180, %v1178
      %v1369 = vpack.c.b16 %v1183, %v1181
      %v1370 = vpack.c.b16 %v1184, %v1182
      %v1371 = vpack.c.b16 %v1187, %v1185
      %v1372 = vpack.c.b16 %v1188, %v1186
      %v1373 = vpack.c.b16 %v1191, %v1189
      %v1374 = vpack.c.b16 %v1192, %v1190
      %v1375 = vpack.c.b16 %v1195, %v1193
      %v1376 = vpack.c.b16 %v1196, %v1194
      %v1377 = vpack.c.b16 %v1199, %v1197
      %v1378 = vpack.c.b16 %v1200, %v1198
      %v1379 = vpack.c.b16 %v1203, %v1201
      %v1380 = vpack.c.b16 %v1204, %v1202
      %v1381 = vpack.c.b16 %v1207, %v1205
      %v1382 = vpack.c.b16 %v1208, %v1206
      %v1383 = vpack.c.b16 %v1211, %v1209
      %v1384 = vpack.c.b16 %v1212, %v1210
      %v1385 = vpack.c.b16 %v1215, %v1213
      %v1386 = vpack.c.b16 %v1216, %v1214
      %v1387 = vpack.c.b16 %v1219, %v1217
      %v1388 = vpack.c.b16 %v1220, %v1218
      %v1389 = vpack.c.b16 %v1223, %v1221
      %v1390 = vpack.c.b16 %v1224, %v1222
      %v1391 = vpack.c.b16 %v1227, %v1225
      %v1392 = vpack.c.b16 %v1228, %v1226
      %v1393 = vpack.c.b16 %v1231, %v1229
      %v1394 = vpack.c.b16 %v1232, %v1230
      %v1395 = vpack.c.b16 %v1235, %v1233
      %v1396 = vpack.c.b16 %v1236, %v1234
      %v1397 = vpack.c.b16 %v1239, %v1237
      %v1398 = vpack.c.b16 %v1240, %v1238
      %v1399 = vpack.c.b16 %v1243, %v1241
      %v1400 = vpack.c.b16 %v1244, %v1242
      %v1401 = vpack.c.b16 %v1247, %v1245
      %v1402 = vpack.c.b16 %v1248, %v1246
      %v1403 = vpack.c.b16 %v1251, %v1249
      %v1404 = vpack.c.b16 %v1252, %v1250
      %v1405 = vpack.c.b16 %v1255, %v1253
      %v1406 = vpack.c.b16 %v1256, %v1254
      %v1407 = vpack.c.b16 %v1259, %v1257
      %v1408 = vpack.c.b16 %v1260, %v1258
      %v1409 = vpack.c.b16 %v1263, %v1261
      %v1410 = vpack.c.b16 %v1264, %v1262
      %v1411 = vpack.c.b16 %v1267, %v1265
      %v1412 = vpack.c.b16 %v1268, %v1266
      %1557 = vmatprep.subr.bf16.mxu0 %v1270
      %1558 = vmatpush1.bf16.msra.mxu0 %v1269
      %1559 = vmatprep.subr.bf16.mxu0 %v1272
      %1560 = vmatpush1.bf16.msra.mxu0 %v1271
      %1561 = vmatprep.subr.bf16.mxu0 %v1274
      %1562 = vmatpush1.bf16.msra.mxu0 %v1273
      %1563 = vmatprep.subr.bf16.mxu0 %v1276
      %1564 = vmatpush1.bf16.msra.mxu0 %v1275
      %1565 = vmatprep.subr.bf16.mxu0 %v1278
      %1566 = vmatpush1.bf16.msra.mxu0 %v1277
      %1567 = vmatprep.subr.bf16.mxu0 %v1280
      %1568 = vmatpush1.bf16.msra.mxu0 %v1279
      %1569 = vmatprep.subr.bf16.mxu0 %v1282
      %1570 = vmatpush1.bf16.msra.mxu0 %v1281
      %1571 = vmatprep.subr.bf16.mxu0 %v1284
      %1572 = vmatpush1.bf16.msra.mxu0 %v1283
      %1573 = vmatprep.subr.bf16.mxu0 %v1286
      %1574 = vmatpush1.bf16.msra.mxu0 %v1285
      %1575 = vmatprep.subr.bf16.mxu0 %v1288
      %1576 = vmatpush1.bf16.msra.mxu0 %v1287
      %1577 = vmatprep.subr.bf16.mxu0 %v1290
      %1578 = vmatpush1.bf16.msra.mxu0 %v1289
      %1579 = vmatprep.subr.bf16.mxu0 %v1292
      %1580 = vmatpush1.bf16.msra.mxu0 %v1291
      %1581 = vmatprep.subr.bf16.mxu0 %v1294
      %1582 = vmatpush1.bf16.msra.mxu0 %v1293
      %1583 = vmatprep.subr.bf16.mxu0 %v1296
      %1584 = vmatpush1.bf16.msra.mxu0 %v1295
      %1585 = vmatprep.subr.bf16.mxu0 %v1298
      %1586 = vmatpush1.bf16.msra.mxu0 %v1297
      %1587 = vmatprep.subr.bf16.mxu0 %v1300
      %1588 = vmatpush1.bf16.msra.mxu0 %v1299
      %1589 = vmatprep.mubr.bf16.mxu0 %v784
      %1590 = vmatmul.mubr.bf16.gmra.mrb[0].mxu0 %v783
      %v1591 = vpop.f32.mrb[0].mxu0
      %v1592 = vadd.f32 %v706, %v1591
      %v1593 = vpop.f32.mrb[0].mxu0
      %v1594 = vadd.f32 %v710, %v1593
      %v1595 = vpop.f32.mrb[0].mxu0
      %v1596 = vadd.f32 %v706, %v1595
      %v1597 = vpop.f32.mrb[0].mxu0
      %v1598 = vadd.f32 %v710, %v1597
      %1599 = vmatprep.mubr.bf16.mxu0 %v793
      %1600 = vmatmul.mubr.bf16.gmra.mrb[0].mxu0 %v792
      %v1601 = vpop.f32.mrb[0].mxu0
      %v1602 = vadd.f32 %v706, %v1601
      %v1603 = vpop.f32.mrb[0].mxu0
      %v1604 = vadd.f32 %v710, %v1603
      %v1605 = vpop.f32.mrb[0].mxu0
      %v1606 = vadd.f32 %v706, %v1605
      %v1607 = vpop.f32.mrb[0].mxu0
      %v1608 = vadd.f32 %v710, %v1607
      %1609 = vmatprep.mubr.bf16.mxu0 %v802
      %1610 = vmatmul.mubr.bf16.gmra.mrb[0].mxu0 %v801
      %v1611 = vpop.f32.mrb[0].mxu0
      %v1612 = vadd.f32 %v706, %v1611
      %v1613 = vpop.f32.mrb[0].mxu0
      %v1614 = vadd.f32 %v710, %v1613
      %v1615 = vpop.f32.mrb[0].mxu0
      %v1616 = vpop.f32.mrb[0].mxu0
      %1617 = vdwg.mxu0
      %1618 = vmatprep.subr.bf16.mxu0 %v1302
      %1619 = vmatpush1.bf16.msra.mxu0 %v1301
      %1620 = vmatprep.subr.bf16.mxu0 %v1304
      %1621 = vmatpush1.bf16.msra.mxu0 %v1303
      %1622 = vmatprep.subr.bf16.mxu0 %v1306
      %1623 = vmatpush1.bf16.msra.mxu0 %v1305
      %1624 = vmatprep.subr.bf16.mxu0 %v1308
      %1625 = vmatpush1.bf16.msra.mxu0 %v1307
      %1626 = vmatprep.subr.bf16.mxu0 %v1310
      %1627 = vmatpush1.bf16.msra.mxu0 %v1309
      %1628 = vmatprep.subr.bf16.mxu0 %v1312
      %1629 = vmatpush1.bf16.msra.mxu0 %v1311
      %1630 = vmatprep.subr.bf16.mxu0 %v1314
      %1631 = vmatpush1.bf16.msra.mxu0 %v1313
      %1632 = vmatprep.subr.bf16.mxu0 %v1316
      %1633 = vmatpush1.bf16.msra.mxu0 %v1315
      %1634 = vmatprep.subr.bf16.mxu0 %v1318
      %1635 = vmatpush1.bf16.msra.mxu0 %v1317
      %1636 = vmatprep.subr.bf16.mxu0 %v1320
      %1637 = vmatpush1.bf16.msra.mxu0 %v1319
      %1638 = vmatprep.subr.bf16.mxu0 %v1322
      %1639 = vmatpush1.bf16.msra.mxu0 %v1321
      %1640 = vmatprep.subr.bf16.mxu0 %v1324
      %1641 = vmatpush1.bf16.msra.mxu0 %v1323
      %1642 = vmatprep.subr.bf16.mxu0 %v1326
      %1643 = vmatpush1.bf16.msra.mxu0 %v1325
      %1644 = vmatprep.subr.bf16.mxu0 %v1328
      %1645 = vmatpush1.bf16.msra.mxu0 %v1327
      %1646 = vmatprep.subr.bf16.mxu0 %v1330
      %1647 = vmatpush1.bf16.msra.mxu0 %v1329
      %1648 = vmatprep.subr.bf16.mxu0 %v1332
      %1649 = vmatpush1.bf16.msra.mxu0 %v1331
      %1650 = vmatprep.mubr.bf16.mxu0 %v786
      %1651 = vmatmul.mubr.bf16.gmra.mrb[0].mxu0 %v785
      %v1652 = vpop.f32.mrb[0].mxu0
      %v1653 = vadd.f32 %v1592, %v1652
      %v1654 = vpop.f32.mrb[0].mxu0
      %v1655 = vadd.f32 %v1594, %v1654
      %v1656 = vpop.f32.mrb[0].mxu0
      %v1657 = vadd.f32 %v1596, %v1656
      %v1658 = vpop.f32.mrb[0].mxu0
      %v1659 = vadd.f32 %v1598, %v1658
      %1660 = vmatprep.mubr.bf16.mxu0 %v795
      %1661 = vmatmul.mubr.bf16.gmra.mrb[0].mxu0 %v794
      %v1662 = vpop.f32.mrb[0].mxu0
      %v1663 = vadd.f32 %v1602, %v1662
      %v1664 = vpop.f32.mrb[0].mxu0
      %v1665 = vadd.f32 %v1604, %v1664
      %v1666 = vpop.f32.mrb[0].mxu0
      %v1667 = vadd.f32 %v1606, %v1666
      %v1668 = vpop.f32.mrb[0].mxu0
      %v1669 = vadd.f32 %v1608, %v1668
      %1670 = vmatprep.mubr.bf16.mxu0 %v804
      %1671 = vmatmul.mubr.bf16.gmra.mrb[0].mxu0 %v803
      %v1672 = vpop.f32.mrb[0].mxu0
      %v1673 = vadd.f32 %v1612, %v1672
      %v1674 = vpop.f32.mrb[0].mxu0
      %v1675 = vadd.f32 %v1614, %v1674
      %v1676 = vpop.f32.mrb[0].mxu0
      %v1677 = vpop.f32.mrb[0].mxu0
      %1678 = vdwg.mxu0
      %1679 = vmatprep.subr.bf16.mxu0 %v1334
      %1680 = vmatpush1.bf16.msra.mxu0 %v1333
      %1681 = vmatprep.subr.bf16.mxu0 %v1336
      %1682 = vmatpush1.bf16.msra.mxu0 %v1335
      %1683 = vmatprep.subr.bf16.mxu0 %v1338
      %1684 = vmatpush1.bf16.msra.mxu0 %v1337
      %1685 = vmatprep.subr.bf16.mxu0 %v1340
      %1686 = vmatpush1.bf16.msra.mxu0 %v1339
      %1687 = vmatprep.subr.bf16.mxu0 %v1342
      %1688 = vmatpush1.bf16.msra.mxu0 %v1341
      %1689 = vmatprep.subr.bf16.mxu0 %v1344
      %1690 = vmatpush1.bf16.msra.mxu0 %v1343
      %1691 = vmatprep.subr.bf16.mxu0 %v1346
      %1692 = vmatpush1.bf16.msra.mxu0 %v1345
      %1693 = vmatprep.subr.bf16.mxu0 %v1348
      %1694 = vmatpush1.bf16.msra.mxu0 %v1347
      %1695 = vmatprep.subr.bf16.mxu0 %v1350
      %1696 = vmatpush1.bf16.msra.mxu0 %v1349
      %1697 = vmatprep.subr.bf16.mxu0 %v1352
      %1698 = vmatpush1.bf16.msra.mxu0 %v1351
      %1699 = vmatprep.subr.bf16.mxu0 %v1354
      %1700 = vmatpush1.bf16.msra.mxu0 %v1353
      %1701 = vmatprep.subr.bf16.mxu0 %v1356
      %1702 = vmatpush1.bf16.msra.mxu0 %v1355
      %1703 = vmatprep.subr.bf16.mxu0 %v1358
      %1704 = vmatpush1.bf16.msra.mxu0 %v1357
      %1705 = vmatprep.subr.bf16.mxu0 %v1360
      %1706 = vmatpush1.bf16.msra.mxu0 %v1359
      %1707 = vmatprep.subr.bf16.mxu0 %v1362
      %1708 = vmatpush1.bf16.msra.mxu0 %v1361
      %1709 = vmatprep.subr.bf16.mxu0 %v1364
      %1710 = vmatpush1.bf16.msra.mxu0 %v1363
      %1711 = vmatprep.mubr.bf16.mxu0 %v788
      %1712 = vmatmul.mubr.bf16.gmra.mrb[0].mxu0 %v787
      %v1713 = vpop.f32.mrb[0].mxu0
      %v1714 = vadd.f32 %v1653, %v1713
      %v1715 = vpop.f32.mrb[0].mxu0
      %v1716 = vadd.f32 %v1655, %v1715
      %v1717 = vpop.f32.mrb[0].mxu0
      %v1718 = vadd.f32 %v1657, %v1717
      %v1719 = vpop.f32.mrb[0].mxu0
      %v1720 = vadd.f32 %v1659, %v1719
      %1721 = vmatprep.mubr.bf16.mxu0 %v797
      %1722 = vmatmul.mubr.bf16.gmra.mrb[0].mxu0 %v796
      %v1723 = vpop.f32.mrb[0].mxu0
      %v1724 = vadd.f32 %v1663, %v1723
      %v1725 = vpop.f32.mrb[0].mxu0
      %v1726 = vadd.f32 %v1665, %v1725
      %v1727 = vpop.f32.mrb[0].mxu0
      %v1728 = vadd.f32 %v1667, %v1727
      %v1729 = vpop.f32.mrb[0].mxu0
      %v1730 = vadd.f32 %v1669, %v1729
      %1731 = vmatprep.mubr.bf16.mxu0 %v806
      %1732 = vmatmul.mubr.bf16.gmra.mrb[0].mxu0 %v805
      %v1733 = vpop.f32.mrb[0].mxu0
      %v1734 = vadd.f32 %v1673, %v1733
      %v1735 = vpop.f32.mrb[0].mxu0
      %v1736 = vadd.f32 %v1675, %v1735
      %v1737 = vpop.f32.mrb[0].mxu0
      %v1738 = vpop.f32.mrb[0].mxu0
      %1739 = vdwg.mxu0
      %1740 = vmatprep.subr.bf16.mxu0 %v1366
      %1741 = vmatpush1.bf16.msra.mxu0 %v1365
      %1742 = vmatprep.subr.bf16.mxu0 %v1368
      %1743 = vmatpush1.bf16.msra.mxu0 %v1367
      %1744 = vmatprep.subr.bf16.mxu0 %v1370
      %1745 = vmatpush1.bf16.msra.mxu0 %v1369
      %1746 = vmatprep.subr.bf16.mxu0 %v1372
      %1747 = vmatpush1.bf16.msra.mxu0 %v1371
      %1748 = vmatprep.subr.bf16.mxu0 %v1374
      %1749 = vmatpush1.bf16.msra.mxu0 %v1373
      %1750 = vmatprep.subr.bf16.mxu0 %v1376
      %1751 = vmatpush1.bf16.msra.mxu0 %v1375
      %1752 = vmatprep.subr.bf16.mxu0 %v1378
      %1753 = vmatpush1.bf16.msra.mxu0 %v1377
      %1754 = vmatprep.subr.bf16.mxu0 %v1380
      %1755 = vmatpush1.bf16.msra.mxu0 %v1379
      %1756 = vmatprep.subr.bf16.mxu0 %v1382
      %1757 = vmatpush1.bf16.msra.mxu0 %v1381
      %1758 = vmatprep.subr.bf16.mxu0 %v1384
      %1759 = vmatpush1.bf16.msra.mxu0 %v1383
      %1760 = vmatprep.subr.bf16.mxu0 %v1386
      %1761 = vmatpush1.bf16.msra.mxu0 %v1385
      %1762 = vmatprep.subr.bf16.mxu0 %v1388
      %1763 = vmatpush1.bf16.msra.mxu0 %v1387
      %1764 = vmatprep.subr.bf16.mxu0 %v1390
      %1765 = vmatpush1.bf16.msra.mxu0 %v1389
      %1766 = vmatprep.subr.bf16.mxu0 %v1392
      %1767 = vmatpush1.bf16.msra.mxu0 %v1391
      %1768 = vmatprep.subr.bf16.mxu0 %v1394
      %1769 = vmatpush1.bf16.msra.mxu0 %v1393
      %1770 = vmatprep.subr.bf16.mxu0 %v1396
      %1771 = vmatpush1.bf16.msra.mxu0 %v1395
      %1772 = vmatprep.mubr.bf16.mxu0 %v790
      %1773 = vmatmul.mubr.bf16.gmra.mrb[0].mxu0 %v789
      %v1774 = vpop.f32.mrb[0].mxu0
      %v1775 = vadd.f32 %v1714, %v1774
      %v1776 = vpop.f32.mrb[0].mxu0
      %v1777 = vadd.f32 %v1716, %v1776
      %v1778 = vpop.f32.mrb[0].mxu0
      %v1779 = vadd.f32 %v1718, %v1778
      %v1780 = vpop.f32.mrb[0].mxu0
      %v1781 = vadd.f32 %v1720, %v1780
      %1782 = vmatprep.mubr.bf16.mxu0 %v799
      %1783 = vmatmul.mubr.bf16.gmra.mrb[0].mxu0 %v798
      %v1784 = vpop.f32.mrb[0].mxu0
      %v1785 = vadd.f32 %v1724, %v1784
      %v1786 = vpop.f32.mrb[0].mxu0
      %v1787 = vadd.f32 %v1726, %v1786
      %v1788 = vpop.f32.mrb[0].mxu0
      %v1789 = vadd.f32 %v1728, %v1788
      %v1790 = vpop.f32.mrb[0].mxu0
      %v1791 = vadd.f32 %v1730, %v1790
      %1792 = vmatprep.mubr.bf16.mxu0 %v808
      %1793 = vmatmul.mubr.bf16.gmra.mrb[0].mxu0 %v807
      %v1794 = vpop.f32.mrb[0].mxu0
      %v1795 = vadd.f32 %v1734, %v1794
      %v1796 = vpop.f32.mrb[0].mxu0
      %v1797 = vadd.f32 %v1736, %v1796
      %v1798 = vpop.f32.mrb[0].mxu0
      %v1799 = vpop.f32.mrb[0].mxu0
      %1800 = vdwg.mxu0
      %1801 = vmatprep.subr.bf16.mxu0 %v1398
      %1802 = vmatpush1.bf16.msra.mxu0 %v1397
      %1803 = vmatprep.subr.bf16.mxu0 %v1400
      %1804 = vmatpush1.bf16.msra.mxu0 %v1399
      %1805 = vmatprep.subr.bf16.mxu0 %v1402
      %1806 = vmatpush1.bf16.msra.mxu0 %v1401
      %1807 = vmatprep.subr.bf16.mxu0 %v1404
      %1808 = vmatpush1.bf16.msra.mxu0 %v1403
      %1809 = vmatprep.subr.bf16.mxu0 %v1406
      %1810 = vmatpush1.bf16.msra.mxu0 %v1405
      %1811 = vmatprep.subr.bf16.mxu0 %v1408
      %1812 = vmatpush1.bf16.msra.mxu0 %v1407
      %1813 = vmatprep.subr.bf16.mxu0 %v1410
      %1814 = vmatpush1.bf16.msra.mxu0 %v1409
      %1815 = vmatprep.subr.bf16.mxu0 %v1412
      %1816 = vmatpush1.bf16.msra.mxu0 %v1411
      %1817 = vmatprep.subr.bf16.mxu0 0
      %1818 = vmatpush1.bf16.msra.mxu0 0
      %1819 = vmatprep.subr.bf16.mxu0 0
      %1820 = vmatpush1.bf16.msra.mxu0 0
      %1821 = vmatprep.subr.bf16.mxu0 0
      %1822 = vmatpush1.bf16.msra.mxu0 0
      %1823 = vmatprep.subr.bf16.mxu0 0
      %1824 = vmatpush1.bf16.msra.mxu0 0
      %1825 = vmatprep.subr.bf16.mxu0 0
      %1826 = vmatpush1.bf16.msra.mxu0 0
      %1827 = vmatprep.subr.bf16.mxu0 0
      %1828 = vmatpush1.bf16.msra.mxu0 0
      %1829 = vmatprep.subr.bf16.mxu0 0
      %1830 = vmatpush1.bf16.msra.mxu0 0
      %1831 = vmatprep.subr.bf16.mxu0 0
      %1832 = vmatpush1.bf16.msra.mxu0 0
      %1833 = vmatprep.mubr.bf16.mxu0 0
      %1834 = vmatmul.mubr.bf16.gmra.mrb[0].mxu0 %v791
      %v1835 = vpop.f32.mrb[0].mxu0
      %v1836 = vadd.f32 %v1775, %v1835
      %v1837 = vpop.f32.mrb[0].mxu0
      %v1838 = vadd.f32 %v1777, %v1837
      %v1839 = vpop.f32.mrb[0].mxu0
      %v1840 = vadd.f32 %v1779, %v1839
      %v1841 = vpop.f32.mrb[0].mxu0
      %v1842 = vadd.f32 %v1781, %v1841
      %1843 = vmatprep.mubr.bf16.mxu0 0
      %1844 = vmatmul.mubr.bf16.gmra.mrb[0].mxu0 %v800
      %v1845 = vpop.f32.mrb[0].mxu0
      %v1846 = vadd.f32 %v1785, %v1845
      %v1847 = vpop.f32.mrb[0].mxu0
      %v1848 = vadd.f32 %v1787, %v1847
      %v1849 = vpop.f32.mrb[0].mxu0
      %v1850 = vadd.f32 %v1789, %v1849
      %v1851 = vpop.f32.mrb[0].mxu0
      %v1852 = vadd.f32 %v1791, %v1851
      %1853 = vmatprep.mubr.bf16.mxu0 0
      %1854 = vmatmul.mubr.bf16.gmra.mrb[0].mxu0 %v809
      %v1855 = vpop.f32.mrb[0].mxu0
      %v1856 = vadd.f32 %v1795, %v1855
      %v1857 = vpop.f32.mrb[0].mxu0
      %v1858 = vadd.f32 %v1797, %v1857
      %v1859 = vpop.f32.mrb[0].mxu0
      %v1860 = vpop.f32.mrb[0].mxu0
      %1861 = vdwg.mxu0
      %v1862 = vmax.f32 %v1836, 0.0
      %v1863 = vmax.f32 %v1838, 0.0
      %v1864 = vmax.f32 %v1840, 0.0
      %v1865 = vmax.f32 %v1842, 0.0
      %v1866 = vmax.f32 %v1846, 0.0
      %v1867 = vmax.f32 %v1848, 0.0
      %v1868 = vmax.f32 %v1850, 0.0
      %v1869 = vmax.f32 %v1852, 0.0
      %v1870 = vmax.f32 %v1856, 0.0
      %v1871 = vmax.f32 %v1858, 0.0
      %1872 = vst [vmem:[%s170] sm:$0xff] %v1862
      %1873 = vst [vmem:[%s170 + $0x8] sm:$0xff] %v1863
      %1874 = vst [vmem:[%s170 + $0x10] sm:$0xff] %v1864
      %1875 = vst [vmem:[%s170 + $0x18] sm:$0xff] %v1865
      %1876 = vst [vmem:[%s170 + $0x20] sm:$0xff] %v1866
      %1877 = vst [vmem:[%s170 + $0x28] sm:$0xff] %v1867
      %1878 = vst [vmem:[%s170 + $0x30] sm:$0xff] %v1868
      %1879 = vst [vmem:[%s170 + $0x38] sm:$0xff] %v1869
      %1880 = vst [vmem:[%s170 + $0x40] sm:$0xf] %v1870
      %1881 = vst [vmem:[%s170 + $0x48] sm:$0xf] %v1871
      %p1882 = scmp.lt.s32.totalorder %s14, 1
      %s1883 = scalar_select %p1882, %s14, 1
      %s1884 = smul.addr %s1883, 10
      %s1885 = smul.addr %s1884, 8
      %s1886 = scalar_lea.vmem %s3, %s1885
      // Predicated region
      $region33: #{lte_forward.13} parent=31 // pred_check
        %p1887 = pneg %p100
      $region34: #{lte_forward.13} parent=31 // pred_check_branch
        %1889 = sbr.rel (%p1887) target = $region36
      $region35: #{lte_forward.13} parent=31 // pred_region
        _
      $region36: #{lte_forward.13} parent=31 // pred_fallthru
        _
    $region32: #{lte_forward.13} parent=5 // pred_fallthru
      _
    %p1890 = scmp.le.s32.totalorder 2, %s9
    // Predicated region
    $region37: #{lte_forward.13} parent=5 // pred_check
      %p1891 = pneg %p1890
    $region38: #{lte_forward.13} parent=5 // pred_check_branch
      %1893 = sbr.rel (%p1891) target = $region40
    $region39: #{lte_forward.13} parent=5 // pred_region
      %s1894 = ssub.s32 %s9, 2
      // Predicated region
      $region41: #{lte_forward.13} parent=39 // pred_check
        %p1895 = pneg %p106
      $region42: #{lte_forward.13} parent=39 // pred_check_branch
        %1897 = sbr.rel (%p1895) target = $region44
      $region43: #{lte_forward.13} parent=39 // pred_region
        %p1898 = scmp.lt.s32.totalorder %s15, 1
        %s1899 = scalar_select %p1898, %s15, 1
        %s1900 = smul.addr %s1899, 10
        %s1901 = smul.addr %s1900, 8
        %s1902 = scalar_lea.vmem %s3, %s1901
      $region44: #{lte_forward.13} parent=39 // pred_fallthru
        _
    $region40: #{lte_forward.13} parent=5 // pred_fallthru
      _
  $region6: #{lte_forward.13} parent=0 // loop_footer
    %s13 = sadd.s32 1, %s9
  $region7: #{lte_forward.13} parent=0 // loop_footer_branch
    %8 = sbr.rel target = $region3
  $region8: #{lte_forward.13} parent=0 // loop_exit
    _

</llo_original>
